<compile_context>
chip_gen: v7x
topology: tpu7x:2x2x1
jax: 0.10.0
libtpu: 0.0.40
codegen_flags: <defaults>
</compile_context>

<pallas_src>
import jax
import jax.numpy as jnp
from jax.experimental import pallas as pl
from jax.experimental.pallas import tpu as pltpu


# --------------------------------------------------------------------------- #
# Glue: parameter folding, input preparation, tiling choice
# --------------------------------------------------------------------------- #
def _fold_params(p):
    """Fold dw-3x3 + pw-1x1 + eval-mode ABN affine into (9C, C) weight + (1, C) bias.

      y[o] = sum_{k,i} tap_k[i] * wdw[k,i] * wpw[i,o] * s[o]
             + ((bdw @ wpw + bpw) * s + b)[o]
    """
    c = p["wdw"].shape[1]
    wf = (p["wdw"][:, :, None] * p["wpw"][None, :, :]).reshape(9 * c, c)
    wf = wf * p["scale"]                                  # BN scale folded per out-channel
    bf = (p["bdw"] @ p["wpw"] + p["bpw"]) * p["scale"] + p["bias"]
    return wf.astype(jnp.bfloat16), bf.astype(jnp.float32)


def _prep_input(x_nhwc, stride):
    """Zero-pad by 1 and (for stride 2) split into the 4 sampling phases.

    Returns xin of shape (N, P, Hin, Win, C) in bf16 (P=1 for stride 1, P=4 for
    stride 2) plus the conv output spatial size (ho, wo).  Total data ~1x the
    padded input -- no 9x im2col blow-up in HBM.
    """
    n, h, w, c = x_nhwc.shape
    xp = jnp.pad(x_nhwc, ((0, 0), (1, 1), (1, 1), (0, 0)))
    if stride == 1:
        return xp[:, None].astype(jnp.bfloat16), h, w
    ho = (h - 1) // 2 + 1
    wo = (w - 1) // 2 + 1
    phases = []
    for py in range(2):
        for px in range(2):
            ph = xp[:, py::2, px::2, :]
            ph = jnp.pad(ph, ((0, 0),
                              (0, ho + 1 - ph.shape[1]),
                              (0, wo + 1 - ph.shape[2]),
                              (0, 0)))
            phases.append(ph)
    xin = jnp.stack(phases, axis=1)                       # (N, 4, ho+1, wo+1, C)
    return xin.astype(jnp.bfloat16), ho, wo


def _pick_row_tile(ho, need_even, cap=64):
    """Largest divisor of ho that is <= cap (even if the fused 2x-row-upsample
    residual is attached).  Keeps per-step blocks VMEM-friendly and gives the
    pipeline / megacore more than one step per batch item when ho is large."""
    if ho <= cap and (not need_even or ho % 2 == 0):
        return ho
    for th in range(min(cap, ho), 0, -1):
        if ho % th == 0 and (not need_even or th % 2 == 0):
            return th
    return ho


# --------------------------------------------------------------------------- #
# Pallas kernel
# --------------------------------------------------------------------------- #
def _make_conv_kernel(*, stride, th, wo, c, has_residual, upsample_rows):
    """Fused (depthwise+pointwise+BN) conv + relu [+ nearest-up residual add].

    x_ref: (1, P, Hin, Win, C) bf16 -- padded input (P=1) or 4 phases (P=4)
    w_ref: (9*C, C) bf16           -- folded weights (tap-major rows)
    b_ref: (1, C) f32              -- folded bias
    r_ref: (1, RH, wo, C) f32      -- optional residual (pre-relu'd conv2 out)
    o_ref: (1, th, wo, C)
    """

    def body(x_ref, w_ref, b_ref, r_ref, o_ref):
        t = pl.program_id(1)
        r0 = t * th
        if th % 8 == 0:
            r0 = pl.multiple_of(r0, 8)          # sublane-aligned row offset hint
        m = th * wo
        # Accumulator starts at the folded bias (hoisted broadcast, done once).
        acc = jnp.broadcast_to(b_ref[...], (m, c)).astype(jnp.float32)
        # 9 taps sliced straight out of the in-VMEM padded input; all MACs on
        # the MXU with f32 accumulation.
        for dy in range(3):
            for dx in range(3):
                k = dy * 3 + dx
                if stride == 1:
                    tap = x_ref[0, 0, pl.ds(r0 + dy, th), dx:dx + wo, :]
                else:  # stride 2: phase (dy%2, dx%2), offset (dy//2, dx//2)
                    p = (dy % 2) * 2 + (dx % 2)
                    tap = x_ref[0, p, pl.ds(r0 + dy // 2, th),
                                (dx // 2):(dx // 2) + wo, :]
                acc = acc + jnp.dot(tap.reshape(m, c),
                                    w_ref[k * c:(k + 1) * c, :],
                                    preferred_element_type=jnp.float32)
        y = jnp.maximum(acc, 0.0)          # relu(leaky_relu_0.01(x)) == relu(x)
        y = y.reshape(th, wo, c)
        if has_residual:
            r = r_ref[0].astype(jnp.float32)            # (RH, wo, C)
            if upsample_rows:                           # nearest 2x along rows
                rh = th // 2
                r = jnp.broadcast_to(r[:, None], (rh, 2, wo, c)).reshape(th, wo, c)
            y = y + r
        o_ref[0] = y.astype(o_ref.dtype)

    if has_residual:
        def kernel(x_ref, w_ref, b_ref, r_ref, o_ref):
            body(x_ref, w_ref, b_ref, r_ref, o_ref)
    else:
        def kernel(x_ref, w_ref, b_ref, o_ref):
            body(x_ref, w_ref, b_ref, None, o_ref)
    return kernel


# --------------------------------------------------------------------------- #
# Wrapper: one depth_wise_conv + InPlaceABN + relu stage (optionally fusing the
# upsampled residual add of the module's tail).
# --------------------------------------------------------------------------- #
def branch_conv(x_nhwc, params, stride, residual=None, residual_is_half=False,
                out_dtype=None, row_cap=64):
    n, h, w, c = x_nhwc.shape
    xin, ho, wo = _prep_input(x_nhwc, stride)
    nphase, hin, win = xin.shape[1], xin.shape[2], xin.shape[3]
    wf, bf = _fold_params(params)
    out_dtype = x_nhwc.dtype if out_dtype is None else out_dtype

    th = _pick_row_tile(ho, need_even=residual_is_half, cap=row_cap)
    nt = ho // th

    in_specs = [
        pl.BlockSpec((1, nphase, hin, win, c), lambda b, t: (b, 0, 0, 0, 0)),
        pl.BlockSpec((9 * c, c), lambda b, t: (0, 0)),
        pl.BlockSpec((1, c), lambda b, t: (0, 0)),
    ]
    args = [xin, wf, bf]
    if residual is not None:
        rh = th // 2 if residual_is_half else th
        in_specs.append(pl.BlockSpec((1, rh, wo, c), lambda b, t: (b, t, 0, 0)))
        args.append(residual.astype(jnp.float32))

    kernel = _make_conv_kernel(stride=stride, th=th, wo=wo, c=c,
                               has_residual=residual is not None,
                               upsample_rows=residual_is_half)

    return pl.pallas_call(
        kernel,
        out_shape=jax.ShapeDtypeStruct((n, ho, wo, c), out_dtype),
        grid_spec=pltpu.PrefetchScalarGridSpec(
            num_scalar_prefetch=0,
            grid=(n, nt),
            in_specs=in_specs,
            out_specs=pl.BlockSpec((1, th, wo, c), lambda b, t: (b, t, 0, 0)),
        ),
        compiler_params=pltpu.CompilerParams(
            dimension_semantics=("parallel", "parallel"),
            vmem_limit_bytes=32 * 1024 * 1024,   # safe on v5e/v6e/v7x; blocks are tiny
        ),
    )(*args)


def two_d_branch_forward(features_nchw, params):
    """Forward of Two_D_Branch.  Input/output are NCHW like PyTorch."""
    x = jnp.transpose(features_nchw, (0, 2, 3, 1))        # NCHW -> NHWC
    n, h, w, c = x.shape

    # conv1 feeds only conv2 (which consumes bf16 anyway): emit bf16 directly.
    conv1_out = branch_conv(x, params["conv1"], stride=2, out_dtype=jnp.bfloat16)
    # conv2's output becomes the residual: keep it f32 for the final add.
    conv2_out = branch_conv(conv1_out, params["conv2"], stride=1,
                            out_dtype=jnp.float32)

    h1, w1 = conv2_out.shape[1], conv2_out.shape[2]
    if 2 * h1 == h and 2 * w1 == w:
        # Exact 2x nearest upsample: width repeat is a cheap glue broadcast on the
        # quarter-size tensor; the row repeat + residual add are fused into conv3.
        res = jnp.broadcast_to(conv2_out[:, :, :, None, :],
                               (n, h1, w1, 2, c)).reshape(n, h1, w, c)
        out = branch_conv(x, params["conv3"], stride=1,
                          residual=res, residual_is_half=True)
    else:
        # General nearest (non-integer factor): gather in glue, add still fused.
        idx_h = (jnp.arange(h) * h1) // h
        idx_w = (jnp.arange(w) * w1) // w
        res = jnp.take(jnp.take(conv2_out, idx_h, axis=1), idx_w, axis=2)
        out = branch_conv(x, params["conv3"], stride=1,
                          residual=res, residual_is_half=False)

    return jnp.transpose(out, (0, 3, 1, 2))               # NHWC -> NCHW


# --------------------------------------------------------------------------- #
# Deterministic parameter init (synthetic; matches the module's shapes)
# --------------------------------------------------------------------------- #
def init_branch_params(key, c):
    ks = jax.random.split(key, 8)
    wdw = 0.2 * jax.random.normal(ks[0], (9, c), jnp.float32)          # (C,1,3,3)
    bdw = 0.1 * jax.random.normal(ks[1], (1, c), jnp.float32)
    wpw = jax.random.normal(ks[2], (c, c), jnp.float32) / jnp.sqrt(c)  # (Cout,Cin,1,1)^T
    bpw = 0.1 * jax.random.normal(ks[3], (1, c), jnp.float32)
    gamma = 1.0 + 0.1 * jax.random.normal(ks[4], (1, c), jnp.float32)
    beta = 0.1 * jax.random.normal(ks[5], (1, c), jnp.float32)
    mean = 0.1 * jax.random.normal(ks[6], (1, c), jnp.float32)
    var = jnp.abs(jax.random.normal(ks[7], (1, c), jnp.float32)) + 0.5
    eps = 1e-5
    scale = gamma / jnp.sqrt(var + eps)
    bias = beta - mean * scale
    return dict(wdw=wdw, bdw=bdw, wpw=wpw, bpw=bpw, scale=scale, bias=bias)


# --------------------------------------------------------------------------- #
# Pure-JAX reference (f32 throughout; for the correctness check only)
# --------------------------------------------------------------------------- #
def _ref_branch(x_nhwc, p, stride):
    c = x_nhwc.shape[-1]
    y = jax.lax.conv_general_dilated(
        x_nhwc, p["wdw"].reshape(3, 3, 1, c), (stride, stride), ((1, 1), (1, 1)),
        dimension_numbers=("NHWC", "HWIO", "NHWC"), feature_group_count=c)
    y = y + p["bdw"]
    y = jax.lax.conv_general_dilated(
        y, p["wpw"].reshape(1, 1, c, c), (1, 1), "VALID",
        dimension_numbers=("NHWC", "HWIO", "NHWC"))
    y = y + p["bpw"]
    y = y * p["scale"] + p["bias"]
    y = jnp.where(y >= 0.0, y, 0.01 * y)
    return jnp.maximum(y, 0.0)


def _ref_forward(features_nchw, params):
    x = jnp.transpose(features_nchw, (0, 2, 3, 1))
    _, h, w, _ = x.shape
    c1 = _ref_branch(x, params["conv1"], 2)
    c2 = _ref_branch(c1, params["conv2"], 1)
    hs, ws = c2.shape[1], c2.shape[2]
    idx_h = (jnp.arange(h) * hs) // h
    idx_w = (jnp.arange(w) * ws) // w
    c2_up = jnp.take(jnp.take(c2, idx_h, axis=1), idx_w, axis=2)
    c3 = _ref_branch(x, params["conv3"], 1)
    return jnp.transpose(c2_up + c3, (0, 3, 1, 2))


# --------------------------------------------------------------------------- #
if __name__ == "__main__":
    key = jax.random.PRNGKey(0)
    k_in, k1, k2, k3 = jax.random.split(key, 4)

    N, C, H, W = 2, 32, 16, 16            # backbone_out_channels = 32
    features = jax.random.normal(k_in, (N, C, H, W), jnp.float32)
    params = {
        "conv1": init_branch_params(k1, C),
        "conv2": init_branch_params(k2, C),
        "conv3": init_branch_params(k3, C),
    }

    fwd = jax.jit(two_d_branch_forward)
    out = jax.block_until_ready(fwd(features, params))

    ref = _ref_forward(features, params)
    assert out.shape == (N, C, H, W), out.shape
    max_err = float(jnp.max(jnp.abs(out - ref)))
    # bf16 MXU operands / bf16 conv1->conv2 handoff -> loosened-but-tight
    # tolerance vs the f32 reference.
    if max_err > 5e-2:
        raise AssertionError(f"Pallas result mismatch vs reference: {max_err}")

    print("KERNEL_OK")
</pallas_src>

<mosaic_0001>
module attributes {stable_mosaic.version = 11 : i64} {
  func.func @kernel(%arg0: i32, %arg1: i32, %arg2: memref<1x4x9x9x32xbf16, #tpu.memory_space<vmem>>, %arg3: memref<288x32xbf16, #tpu.memory_space<vmem>>, %arg4: memref<1x32xf32, #tpu.memory_space<vmem>>, %arg5: memref<1x8x8x32xbf16, #tpu.memory_space<vmem>>) attributes {dimension_semantics = [#tpu.dimension_semantics<parallel>, #tpu.dimension_semantics<parallel>], iteration_bounds = array<i64: 2, 1>, scalar_prefetch = 0 : i64, scratch_operands = 0 : i64, tpu.core_type = #tpu.core_type<tc>, window_params = [{transform_indices = @transform_0, window_bounds = array<i64: 1, 4, 9, 9, 32>}, {pipeline_mode = #tpu.pipeline_mode<synchronous>, transform_indices = @transform_1, window_bounds = array<i64: 288, 32>}, {pipeline_mode = #tpu.pipeline_mode<synchronous>, transform_indices = @transform_2, window_bounds = array<i64: 1, 32>}, {transform_indices = @transform_3, window_bounds = array<i64: 1, 8, 8, 32>}]} {
    %c8_i32 = arith.constant 8 : i32
    %0 = arith.muli %arg1, %c8_i32 : i32
    %1 = tpu.assume_multiple %0, 8 : i32
    %c0 = arith.constant 0 : index
    %c0_0 = arith.constant 0 : index
    %2 = vector.load %arg4[%c0, %c0_0] : memref<1x32xf32, #tpu.memory_space<vmem>>, vector<1x32xf32>
    %3 = vector.shape_cast %2 : vector<1x32xf32> to vector<1x32xf32>
    %4 = vector.broadcast %3 : vector<1x32xf32> to vector<64x32xf32>
    %c0_i32 = arith.constant 0 : i32
    %5 = arith.addi %1, %c0_i32 : i32
    %c0_1 = arith.constant 0 : index
    %c0_2 = arith.constant 0 : index
    %6 = arith.index_cast %5 : i32 to index
    %c0_3 = arith.constant 0 : index
    %c0_4 = arith.constant 0 : index
    %7 = vector.load %arg2[%c0_1, %c0_2, %6, %c0_3, %c0_4] : memref<1x4x9x9x32xbf16, #tpu.memory_space<vmem>>, vector<1x1x8x8x32xbf16>
    %8 = vector.shape_cast %7 : vector<1x1x8x8x32xbf16> to vector<8x8x32xbf16>
    %9 = vector.shape_cast %8 : vector<8x8x32xbf16> to vector<64x32xbf16>
    %c0_5 = arith.constant 0 : index
    %c0_6 = arith.constant 0 : index
    %10 = vector.load %arg3[%c0_5, %c0_6] : memref<288x32xbf16, #tpu.memory_space<vmem>>, vector<32x32xbf16>
    %cst = arith.constant dense<0.000000e+00> : vector<64x32xf32>
    %11 = tpu.matmul %9, %10, %cst {dimension_numbers = #tpu.dot_dimension_numbers<[1], [0], [0], [1], [0, 0, 1, 1], [], []>} : vector<64x32xbf16>, vector<32x32xbf16>, vector<64x32xf32> -> vector<64x32xf32>
    %12 = arith.addf %4, %11 : vector<64x32xf32>
    %c0_i32_7 = arith.constant 0 : i32
    %13 = arith.addi %1, %c0_i32_7 : i32
    %c0_8 = arith.constant 0 : index
    %c1 = arith.constant 1 : index
    %14 = arith.index_cast %13 : i32 to index
    %c0_9 = arith.constant 0 : index
    %c0_10 = arith.constant 0 : index
    %15 = vector.load %arg2[%c0_8, %c1, %14, %c0_9, %c0_10] : memref<1x4x9x9x32xbf16, #tpu.memory_space<vmem>>, vector<1x1x8x8x32xbf16>
    %16 = vector.shape_cast %15 : vector<1x1x8x8x32xbf16> to vector<8x8x32xbf16>
    %17 = vector.shape_cast %16 : vector<8x8x32xbf16> to vector<64x32xbf16>
    %c32 = arith.constant 32 : index
    %c0_11 = arith.constant 0 : index
    %18 = vector.load %arg3[%c32, %c0_11] : memref<288x32xbf16, #tpu.memory_space<vmem>>, vector<32x32xbf16>
    %cst_12 = arith.constant dense<0.000000e+00> : vector<64x32xf32>
    %19 = tpu.matmul %17, %18, %cst_12 {dimension_numbers = #tpu.dot_dimension_numbers<[1], [0], [0], [1], [0, 0, 1, 1], [], []>} : vector<64x32xbf16>, vector<32x32xbf16>, vector<64x32xf32> -> vector<64x32xf32>
    %20 = arith.addf %12, %19 : vector<64x32xf32>
    %c0_i32_13 = arith.constant 0 : i32
    %21 = arith.addi %1, %c0_i32_13 : i32
    %c0_14 = arith.constant 0 : index
    %c0_15 = arith.constant 0 : index
    %22 = arith.index_cast %21 : i32 to index
    %c1_16 = arith.constant 1 : index
    %c0_17 = arith.constant 0 : index
    %23 = vector.load %arg2[%c0_14, %c0_15, %22, %c1_16, %c0_17] : memref<1x4x9x9x32xbf16, #tpu.memory_space<vmem>>, vector<1x1x8x8x32xbf16>
    %24 = vector.shape_cast %23 : vector<1x1x8x8x32xbf16> to vector<8x8x32xbf16>
    %25 = vector.shape_cast %24 : vector<8x8x32xbf16> to vector<64x32xbf16>
    %c64 = arith.constant 64 : index
    %c0_18 = arith.constant 0 : index
    %26 = vector.load %arg3[%c64, %c0_18] : memref<288x32xbf16, #tpu.memory_space<vmem>>, vector<32x32xbf16>
    %cst_19 = arith.constant dense<0.000000e+00> : vector<64x32xf32>
    %27 = tpu.matmul %25, %26, %cst_19 {dimension_numbers = #tpu.dot_dimension_numbers<[1], [0], [0], [1], [0, 0, 1, 1], [], []>} : vector<64x32xbf16>, vector<32x32xbf16>, vector<64x32xf32> -> vector<64x32xf32>
    %28 = arith.addf %20, %27 : vector<64x32xf32>
    %c0_i32_20 = arith.constant 0 : i32
    %29 = arith.addi %1, %c0_i32_20 : i32
    %c0_21 = arith.constant 0 : index
    %c2 = arith.constant 2 : index
    %30 = arith.index_cast %29 : i32 to index
    %c0_22 = arith.constant 0 : index
    %c0_23 = arith.constant 0 : index
    %31 = vector.load %arg2[%c0_21, %c2, %30, %c0_22, %c0_23] : memref<1x4x9x9x32xbf16, #tpu.memory_space<vmem>>, vector<1x1x8x8x32xbf16>
    %32 = vector.shape_cast %31 : vector<1x1x8x8x32xbf16> to vector<8x8x32xbf16>
    %33 = vector.shape_cast %32 : vector<8x8x32xbf16> to vector<64x32xbf16>
    %c96 = arith.constant 96 : index
    %c0_24 = arith.constant 0 : index
    %34 = vector.load %arg3[%c96, %c0_24] : memref<288x32xbf16, #tpu.memory_space<vmem>>, vector<32x32xbf16>
    %cst_25 = arith.constant dense<0.000000e+00> : vector<64x32xf32>
    %35 = tpu.matmul %33, %34, %cst_25 {dimension_numbers = #tpu.dot_dimension_numbers<[1], [0], [0], [1], [0, 0, 1, 1], [], []>} : vector<64x32xbf16>, vector<32x32xbf16>, vector<64x32xf32> -> vector<64x32xf32>
    %36 = arith.addf %28, %35 : vector<64x32xf32>
    %c0_i32_26 = arith.constant 0 : i32
    %37 = arith.addi %1, %c0_i32_26 : i32
    %c0_27 = arith.constant 0 : index
    %c3 = arith.constant 3 : index
    %38 = arith.index_cast %37 : i32 to index
    %c0_28 = arith.constant 0 : index
    %c0_29 = arith.constant 0 : index
    %39 = vector.load %arg2[%c0_27, %c3, %38, %c0_28, %c0_29] : memref<1x4x9x9x32xbf16, #tpu.memory_space<vmem>>, vector<1x1x8x8x32xbf16>
    %40 = vector.shape_cast %39 : vector<1x1x8x8x32xbf16> to vector<8x8x32xbf16>
    %41 = vector.shape_cast %40 : vector<8x8x32xbf16> to vector<64x32xbf16>
    %c128 = arith.constant 128 : index
    %c0_30 = arith.constant 0 : index
    %42 = vector.load %arg3[%c128, %c0_30] : memref<288x32xbf16, #tpu.memory_space<vmem>>, vector<32x32xbf16>
    %cst_31 = arith.constant dense<0.000000e+00> : vector<64x32xf32>
    %43 = tpu.matmul %41, %42, %cst_31 {dimension_numbers = #tpu.dot_dimension_numbers<[1], [0], [0], [1], [0, 0, 1, 1], [], []>} : vector<64x32xbf16>, vector<32x32xbf16>, vector<64x32xf32> -> vector<64x32xf32>
    %44 = arith.addf %36, %43 : vector<64x32xf32>
    %c0_i32_32 = arith.constant 0 : i32
    %45 = arith.addi %1, %c0_i32_32 : i32
    %c0_33 = arith.constant 0 : index
    %c2_34 = arith.constant 2 : index
    %46 = arith.index_cast %45 : i32 to index
    %c1_35 = arith.constant 1 : index
    %c0_36 = arith.constant 0 : index
    %47 = vector.load %arg2[%c0_33, %c2_34, %46, %c1_35, %c0_36] : memref<1x4x9x9x32xbf16, #tpu.memory_space<vmem>>, vector<1x1x8x8x32xbf16>
    %48 = vector.shape_cast %47 : vector<1x1x8x8x32xbf16> to vector<8x8x32xbf16>
    %49 = vector.shape_cast %48 : vector<8x8x32xbf16> to vector<64x32xbf16>
    %c160 = arith.constant 160 : index
    %c0_37 = arith.constant 0 : index
    %50 = vector.load %arg3[%c160, %c0_37] : memref<288x32xbf16, #tpu.memory_space<vmem>>, vector<32x32xbf16>
    %cst_38 = arith.constant dense<0.000000e+00> : vector<64x32xf32>
    %51 = tpu.matmul %49, %50, %cst_38 {dimension_numbers = #tpu.dot_dimension_numbers<[1], [0], [0], [1], [0, 0, 1, 1], [], []>} : vector<64x32xbf16>, vector<32x32xbf16>, vector<64x32xf32> -> vector<64x32xf32>
    %52 = arith.addf %44, %51 : vector<64x32xf32>
    %c1_i32 = arith.constant 1 : i32
    %53 = arith.addi %1, %c1_i32 : i32
    %c0_39 = arith.constant 0 : index
    %c0_40 = arith.constant 0 : index
    %54 = arith.index_cast %53 : i32 to index
    %c0_41 = arith.constant 0 : index
    %c0_42 = arith.constant 0 : index
    %55 = vector.load %arg2[%c0_39, %c0_40, %54, %c0_41, %c0_42] : memref<1x4x9x9x32xbf16, #tpu.memory_space<vmem>>, vector<1x1x8x8x32xbf16>
    %56 = vector.shape_cast %55 : vector<1x1x8x8x32xbf16> to vector<8x8x32xbf16>
    %57 = vector.shape_cast %56 : vector<8x8x32xbf16> to vector<64x32xbf16>
    %c192 = arith.constant 192 : index
    %c0_43 = arith.constant 0 : index
    %58 = vector.load %arg3[%c192, %c0_43] : memref<288x32xbf16, #tpu.memory_space<vmem>>, vector<32x32xbf16>
    %cst_44 = arith.constant dense<0.000000e+00> : vector<64x32xf32>
    %59 = tpu.matmul %57, %58, %cst_44 {dimension_numbers = #tpu.dot_dimension_numbers<[1], [0], [0], [1], [0, 0, 1, 1], [], []>} : vector<64x32xbf16>, vector<32x32xbf16>, vector<64x32xf32> -> vector<64x32xf32>
    %60 = arith.addf %52, %59 : vector<64x32xf32>
    %c1_i32_45 = arith.constant 1 : i32
    %61 = arith.addi %1, %c1_i32_45 : i32
    %c0_46 = arith.constant 0 : index
    %c1_47 = arith.constant 1 : index
    %62 = arith.index_cast %61 : i32 to index
    %c0_48 = arith.constant 0 : index
    %c0_49 = arith.constant 0 : index
    %63 = vector.load %arg2[%c0_46, %c1_47, %62, %c0_48, %c0_49] : memref<1x4x9x9x32xbf16, #tpu.memory_space<vmem>>, vector<1x1x8x8x32xbf16>
    %64 = vector.shape_cast %63 : vector<1x1x8x8x32xbf16> to vector<8x8x32xbf16>
    %65 = vector.shape_cast %64 : vector<8x8x32xbf16> to vector<64x32xbf16>
    %c224 = arith.constant 224 : index
    %c0_50 = arith.constant 0 : index
    %66 = vector.load %arg3[%c224, %c0_50] : memref<288x32xbf16, #tpu.memory_space<vmem>>, vector<32x32xbf16>
    %cst_51 = arith.constant dense<0.000000e+00> : vector<64x32xf32>
    %67 = tpu.matmul %65, %66, %cst_51 {dimension_numbers = #tpu.dot_dimension_numbers<[1], [0], [0], [1], [0, 0, 1, 1], [], []>} : vector<64x32xbf16>, vector<32x32xbf16>, vector<64x32xf32> -> vector<64x32xf32>
    %68 = arith.addf %60, %67 : vector<64x32xf32>
    %c1_i32_52 = arith.constant 1 : i32
    %69 = arith.addi %1, %c1_i32_52 : i32
    %c0_53 = arith.constant 0 : index
    %c0_54 = arith.constant 0 : index
    %70 = arith.index_cast %69 : i32 to index
    %c1_55 = arith.constant 1 : index
    %c0_56 = arith.constant 0 : index
    %71 = vector.load %arg2[%c0_53, %c0_54, %70, %c1_55, %c0_56] : memref<1x4x9x9x32xbf16, #tpu.memory_space<vmem>>, vector<1x1x8x8x32xbf16>
    %72 = vector.shape_cast %71 : vector<1x1x8x8x32xbf16> to vector<8x8x32xbf16>
    %73 = vector.shape_cast %72 : vector<8x8x32xbf16> to vector<64x32xbf16>
    %c256 = arith.constant 256 : index
    %c0_57 = arith.constant 0 : index
    %74 = vector.load %arg3[%c256, %c0_57] : memref<288x32xbf16, #tpu.memory_space<vmem>>, vector<32x32xbf16>
    %cst_58 = arith.constant dense<0.000000e+00> : vector<64x32xf32>
    %75 = tpu.matmul %73, %74, %cst_58 {dimension_numbers = #tpu.dot_dimension_numbers<[1], [0], [0], [1], [0, 0, 1, 1], [], []>} : vector<64x32xbf16>, vector<32x32xbf16>, vector<64x32xf32> -> vector<64x32xf32>
    %76 = arith.addf %68, %75 : vector<64x32xf32>
    %cst_59 = arith.constant 0.000000e+00 : f32
    %77 = vector.broadcast %cst_59 : f32 to vector<64x32xf32>
    %78 = arith.maximumf %76, %77 : vector<64x32xf32>
    %79 = vector.shape_cast %78 : vector<64x32xf32> to vector<8x8x32xf32>
    %80 = arith.truncf %79 : vector<8x8x32xf32> to vector<8x8x32xbf16>
    %c0_60 = arith.constant 0 : index
    %c0_61 = arith.constant 0 : index
    %c0_62 = arith.constant 0 : index
    %c0_63 = arith.constant 0 : index
    %81 = vector.load %arg5[%c0_60, %c0_61, %c0_62, %c0_63] : memref<1x8x8x32xbf16, #tpu.memory_space<vmem>>, vector<1x8x8x32xbf16>
    %82 = vector.shape_cast %81 : vector<1x8x8x32xbf16> to vector<8x8x32xbf16>
    %83 = vector.shape_cast %80 : vector<8x8x32xbf16> to vector<1x8x8x32xbf16>
    tpu.vector_store %arg5[%c0_60, %c0_61, %c0_62, %c0_63], %83 {strides = array<i32>} : memref<1x8x8x32xbf16, #tpu.memory_space<vmem>>, vector<1x8x8x32xbf16>,
    return
  }
  func.func @transform_0(%arg0: i32, %arg1: i32) -> (i32, i32, i32, i32, i32) {
    %c0_i32 = arith.constant 0 : i32
    %c0_i32_0 = arith.constant 0 : i32
    %c0_i32_1 = arith.constant 0 : i32
    %c0_i32_2 = arith.constant 0 : i32
    %c0_i32_3 = arith.constant 0 : i32
    return %arg0, %c0_i32, %c0_i32_0, %c0_i32_1, %c0_i32_2 : i32, i32, i32, i32, i32
  }
  func.func @transform_1(%arg0: i32, %arg1: i32) -> (i32, i32) {
    %c0_i32 = arith.constant 0 : i32
    %c0_i32_0 = arith.constant 0 : i32
    %c0_i32_1 = arith.constant 0 : i32
    return %c0_i32, %c0_i32_0 : i32, i32
  }
  func.func @transform_2(%arg0: i32, %arg1: i32) -> (i32, i32) {
    %c0_i32 = arith.constant 0 : i32
    %c0_i32_0 = arith.constant 0 : i32
    %c0_i32_1 = arith.constant 0 : i32
    return %c0_i32, %c0_i32_0 : i32, i32
  }
  func.func @transform_3(%arg0: i32, %arg1: i32) -> (i32, i32, i32, i32) {
    %c0_i32 = arith.constant 0 : i32
    %c0_i32_0 = arith.constant 0 : i32
    %c0_i32_1 = arith.constant 0 : i32
    return %arg0, %arg1, %c0_i32, %c0_i32_0 : i32, i32, i32, i32
  }
}

module attributes {stable_mosaic.version = 11 : i64} {
  func.func @kernel(%arg0: i32, %arg1: i32, %arg2: memref<1x1x10x10x32xbf16, #tpu.memory_space<vmem>>, %arg3: memref<288x32xbf16, #tpu.memory_space<vmem>>, %arg4: memref<1x32xf32, #tpu.memory_space<vmem>>, %arg5: memref<1x8x8x32xf32, #tpu.memory_space<vmem>>) attributes {dimension_semantics = [#tpu.dimension_semantics<parallel>, #tpu.dimension_semantics<parallel>], iteration_bounds = array<i64: 2, 1>, scalar_prefetch = 0 : i64, scratch_operands = 0 : i64, tpu.core_type = #tpu.core_type<tc>, window_params = [{transform_indices = @transform_0, window_bounds = array<i64: 1, 1, 10, 10, 32>}, {pipeline_mode = #tpu.pipeline_mode<synchronous>, transform_indices = @transform_1, window_bounds = array<i64: 288, 32>}, {pipeline_mode = #tpu.pipeline_mode<synchronous>, transform_indices = @transform_2, window_bounds = array<i64: 1, 32>}, {transform_indices = @transform_3, window_bounds = array<i64: 1, 8, 8, 32>}]} {
    %c8_i32 = arith.constant 8 : i32
    %0 = arith.muli %arg1, %c8_i32 : i32
    %1 = tpu.assume_multiple %0, 8 : i32
    %c0 = arith.constant 0 : index
    %c0_0 = arith.constant 0 : index
    %2 = vector.load %arg4[%c0, %c0_0] : memref<1x32xf32, #tpu.memory_space<vmem>>, vector<1x32xf32>
    %3 = vector.shape_cast %2 : vector<1x32xf32> to vector<1x32xf32>
    %4 = vector.broadcast %3 : vector<1x32xf32> to vector<64x32xf32>
    %c0_i32 = arith.constant 0 : i32
    %5 = arith.addi %1, %c0_i32 : i32
    %c0_1 = arith.constant 0 : index
    %c0_2 = arith.constant 0 : index
    %6 = arith.index_cast %5 : i32 to index
    %c0_3 = arith.constant 0 : index
    %c0_4 = arith.constant 0 : index
    %7 = vector.load %arg2[%c0_1, %c0_2, %6, %c0_3, %c0_4] : memref<1x1x10x10x32xbf16, #tpu.memory_space<vmem>>, vector<1x1x8x8x32xbf16>
    %8 = vector.shape_cast %7 : vector<1x1x8x8x32xbf16> to vector<8x8x32xbf16>
    %9 = vector.shape_cast %8 : vector<8x8x32xbf16> to vector<64x32xbf16>
    %c0_5 = arith.constant 0 : index
    %c0_6 = arith.constant 0 : index
    %10 = vector.load %arg3[%c0_5, %c0_6] : memref<288x32xbf16, #tpu.memory_space<vmem>>, vector<32x32xbf16>
    %cst = arith.constant dense<0.000000e+00> : vector<64x32xf32>
    %11 = tpu.matmul %9, %10, %cst {dimension_numbers = #tpu.dot_dimension_numbers<[1], [0], [0], [1], [0, 0, 1, 1], [], []>} : vector<64x32xbf16>, vector<32x32xbf16>, vector<64x32xf32> -> vector<64x32xf32>
    %12 = arith.addf %4, %11 : vector<64x32xf32>
    %c0_i32_7 = arith.constant 0 : i32
    %13 = arith.addi %1, %c0_i32_7 : i32
    %c0_8 = arith.constant 0 : index
    %c0_9 = arith.constant 0 : index
    %14 = arith.index_cast %13 : i32 to index
    %c1 = arith.constant 1 : index
    %c0_10 = arith.constant 0 : index
    %15 = vector.load %arg2[%c0_8, %c0_9, %14, %c1, %c0_10] : memref<1x1x10x10x32xbf16, #tpu.memory_space<vmem>>, vector<1x1x8x8x32xbf16>
    %16 = vector.shape_cast %15 : vector<1x1x8x8x32xbf16> to vector<8x8x32xbf16>
    %17 = vector.shape_cast %16 : vector<8x8x32xbf16> to vector<64x32xbf16>
    %c32 = arith.constant 32 : index
    %c0_11 = arith.constant 0 : index
    %18 = vector.load %arg3[%c32, %c0_11] : memref<288x32xbf16, #tpu.memory_space<vmem>>, vector<32x32xbf16>
    %cst_12 = arith.constant dense<0.000000e+00> : vector<64x32xf32>
    %19 = tpu.matmul %17, %18, %cst_12 {dimension_numbers = #tpu.dot_dimension_numbers<[1], [0], [0], [1], [0, 0, 1, 1], [], []>} : vector<64x32xbf16>, vector<32x32xbf16>, vector<64x32xf32> -> vector<64x32xf32>
    %20 = arith.addf %12, %19 : vector<64x32xf32>
    %c0_i32_13 = arith.constant 0 : i32
    %21 = arith.addi %1, %c0_i32_13 : i32
    %c0_14 = arith.constant 0 : index
    %c0_15 = arith.constant 0 : index
    %22 = arith.index_cast %21 : i32 to index
    %c2 = arith.constant 2 : index
    %c0_16 = arith.constant 0 : index
    %23 = vector.load %arg2[%c0_14, %c0_15, %22, %c2, %c0_16] : memref<1x1x10x10x32xbf16, #tpu.memory_space<vmem>>, vector<1x1x8x8x32xbf16>
    %24 = vector.shape_cast %23 : vector<1x1x8x8x32xbf16> to vector<8x8x32xbf16>
    %25 = vector.shape_cast %24 : vector<8x8x32xbf16> to vector<64x32xbf16>
    %c64 = arith.constant 64 : index
    %c0_17 = arith.constant 0 : index
    %26 = vector.load %arg3[%c64, %c0_17] : memref<288x32xbf16, #tpu.memory_space<vmem>>, vector<32x32xbf16>
    %cst_18 = arith.constant dense<0.000000e+00> : vector<64x32xf32>
    %27 = tpu.matmul %25, %26, %cst_18 {dimension_numbers = #tpu.dot_dimension_numbers<[1], [0], [0], [1], [0, 0, 1, 1], [], []>} : vector<64x32xbf16>, vector<32x32xbf16>, vector<64x32xf32> -> vector<64x32xf32>
    %28 = arith.addf %20, %27 : vector<64x32xf32>
    %c1_i32 = arith.constant 1 : i32
    %29 = arith.addi %1, %c1_i32 : i32
    %c0_19 = arith.constant 0 : index
    %c0_20 = arith.constant 0 : index
    %30 = arith.index_cast %29 : i32 to index
    %c0_21 = arith.constant 0 : index
    %c0_22 = arith.constant 0 : index
    %31 = vector.load %arg2[%c0_19, %c0_20, %30, %c0_21, %c0_22] : memref<1x1x10x10x32xbf16, #tpu.memory_space<vmem>>, vector<1x1x8x8x32xbf16>
    %32 = vector.shape_cast %31 : vector<1x1x8x8x32xbf16> to vector<8x8x32xbf16>
    %33 = vector.shape_cast %32 : vector<8x8x32xbf16> to vector<64x32xbf16>
    %c96 = arith.constant 96 : index
    %c0_23 = arith.constant 0 : index
    %34 = vector.load %arg3[%c96, %c0_23] : memref<288x32xbf16, #tpu.memory_space<vmem>>, vector<32x32xbf16>
    %cst_24 = arith.constant dense<0.000000e+00> : vector<64x32xf32>
    %35 = tpu.matmul %33, %34, %cst_24 {dimension_numbers = #tpu.dot_dimension_numbers<[1], [0], [0], [1], [0, 0, 1, 1], [], []>} : vector<64x32xbf16>, vector<32x32xbf16>, vector<64x32xf32> -> vector<64x32xf32>
    %36 = arith.addf %28, %35 : vector<64x32xf32>
    %c1_i32_25 = arith.constant 1 : i32
    %37 = arith.addi %1, %c1_i32_25 : i32
    %c0_26 = arith.constant 0 : index
    %c0_27 = arith.constant 0 : index
    %38 = arith.index_cast %37 : i32 to index
    %c1_28 = arith.constant 1 : index
    %c0_29 = arith.constant 0 : index
    %39 = vector.load %arg2[%c0_26, %c0_27, %38, %c1_28, %c0_29] : memref<1x1x10x10x32xbf16, #tpu.memory_space<vmem>>, vector<1x1x8x8x32xbf16>
    %40 = vector.shape_cast %39 : vector<1x1x8x8x32xbf16> to vector<8x8x32xbf16>
    %41 = vector.shape_cast %40 : vector<8x8x32xbf16> to vector<64x32xbf16>
    %c128 = arith.constant 128 : index
    %c0_30 = arith.constant 0 : index
    %42 = vector.load %arg3[%c128, %c0_30] : memref<288x32xbf16, #tpu.memory_space<vmem>>, vector<32x32xbf16>
    %cst_31 = arith.constant dense<0.000000e+00> : vector<64x32xf32>
    %43 = tpu.matmul %41, %42, %cst_31 {dimension_numbers = #tpu.dot_dimension_numbers<[1], [0], [0], [1], [0, 0, 1, 1], [], []>} : vector<64x32xbf16>, vector<32x32xbf16>, vector<64x32xf32> -> vector<64x32xf32>
    %44 = arith.addf %36, %43 : vector<64x32xf32>
    %c1_i32_32 = arith.constant 1 : i32
    %45 = arith.addi %1, %c1_i32_32 : i32
    %c0_33 = arith.constant 0 : index
    %c0_34 = arith.constant 0 : index
    %46 = arith.index_cast %45 : i32 to index
    %c2_35 = arith.constant 2 : index
    %c0_36 = arith.constant 0 : index
    %47 = vector.load %arg2[%c0_33, %c0_34, %46, %c2_35, %c0_36] : memref<1x1x10x10x32xbf16, #tpu.memory_space<vmem>>, vector<1x1x8x8x32xbf16>
    %48 = vector.shape_cast %47 : vector<1x1x8x8x32xbf16> to vector<8x8x32xbf16>
    %49 = vector.shape_cast %48 : vector<8x8x32xbf16> to vector<64x32xbf16>
    %c160 = arith.constant 160 : index
    %c0_37 = arith.constant 0 : index
    %50 = vector.load %arg3[%c160, %c0_37] : memref<288x32xbf16, #tpu.memory_space<vmem>>, vector<32x32xbf16>
    %cst_38 = arith.constant dense<0.000000e+00> : vector<64x32xf32>
    %51 = tpu.matmul %49, %50, %cst_38 {dimension_numbers = #tpu.dot_dimension_numbers<[1], [0], [0], [1], [0, 0, 1, 1], [], []>} : vector<64x32xbf16>, vector<32x32xbf16>, vector<64x32xf32> -> vector<64x32xf32>
    %52 = arith.addf %44, %51 : vector<64x32xf32>
    %c2_i32 = arith.constant 2 : i32
    %53 = arith.addi %1, %c2_i32 : i32
    %c0_39 = arith.constant 0 : index
    %c0_40 = arith.constant 0 : index
    %54 = arith.index_cast %53 : i32 to index
    %c0_41 = arith.constant 0 : index
    %c0_42 = arith.constant 0 : index
    %55 = vector.load %arg2[%c0_39, %c0_40, %54, %c0_41, %c0_42] : memref<1x1x10x10x32xbf16, #tpu.memory_space<vmem>>, vector<1x1x8x8x32xbf16>
    %56 = vector.shape_cast %55 : vector<1x1x8x8x32xbf16> to vector<8x8x32xbf16>
    %57 = vector.shape_cast %56 : vector<8x8x32xbf16> to vector<64x32xbf16>
    %c192 = arith.constant 192 : index
    %c0_43 = arith.constant 0 : index
    %58 = vector.load %arg3[%c192, %c0_43] : memref<288x32xbf16, #tpu.memory_space<vmem>>, vector<32x32xbf16>
    %cst_44 = arith.constant dense<0.000000e+00> : vector<64x32xf32>
    %59 = tpu.matmul %57, %58, %cst_44 {dimension_numbers = #tpu.dot_dimension_numbers<[1], [0], [0], [1], [0, 0, 1, 1], [], []>} : vector<64x32xbf16>, vector<32x32xbf16>, vector<64x32xf32> -> vector<64x32xf32>
    %60 = arith.addf %52, %59 : vector<64x32xf32>
    %c2_i32_45 = arith.constant 2 : i32
    %61 = arith.addi %1, %c2_i32_45 : i32
    %c0_46 = arith.constant 0 : index
    %c0_47 = arith.constant 0 : index
    %62 = arith.index_cast %61 : i32 to index
    %c1_48 = arith.constant 1 : index
    %c0_49 = arith.constant 0 : index
    %63 = vector.load %arg2[%c0_46, %c0_47, %62, %c1_48, %c0_49] : memref<1x1x10x10x32xbf16, #tpu.memory_space<vmem>>, vector<1x1x8x8x32xbf16>
    %64 = vector.shape_cast %63 : vector<1x1x8x8x32xbf16> to vector<8x8x32xbf16>
    %65 = vector.shape_cast %64 : vector<8x8x32xbf16> to vector<64x32xbf16>
    %c224 = arith.constant 224 : index
    %c0_50 = arith.constant 0 : index
    %66 = vector.load %arg3[%c224, %c0_50] : memref<288x32xbf16, #tpu.memory_space<vmem>>, vector<32x32xbf16>
    %cst_51 = arith.constant dense<0.000000e+00> : vector<64x32xf32>
    %67 = tpu.matmul %65, %66, %cst_51 {dimension_numbers = #tpu.dot_dimension_numbers<[1], [0], [0], [1], [0, 0, 1, 1], [], []>} : vector<64x32xbf16>, vector<32x32xbf16>, vector<64x32xf32> -> vector<64x32xf32>
    %68 = arith.addf %60, %67 : vector<64x32xf32>
    %c2_i32_52 = arith.constant 2 : i32
    %69 = arith.addi %1, %c2_i32_52 : i32
    %c0_53 = arith.constant 0 : index
    %c0_54 = arith.constant 0 : index
    %70 = arith.index_cast %69 : i32 to index
    %c2_55 = arith.constant 2 : index
    %c0_56 = arith.constant 0 : index
    %71 = vector.load %arg2[%c0_53, %c0_54, %70, %c2_55, %c0_56] : memref<1x1x10x10x32xbf16, #tpu.memory_space<vmem>>, vector<1x1x8x8x32xbf16>
    %72 = vector.shape_cast %71 : vector<1x1x8x8x32xbf16> to vector<8x8x32xbf16>
    %73 = vector.shape_cast %72 : vector<8x8x32xbf16> to vector<64x32xbf16>
    %c256 = arith.constant 256 : index
    %c0_57 = arith.constant 0 : index
    %74 = vector.load %arg3[%c256, %c0_57] : memref<288x32xbf16, #tpu.memory_space<vmem>>, vector<32x32xbf16>
    %cst_58 = arith.constant dense<0.000000e+00> : vector<64x32xf32>
    %75 = tpu.matmul %73, %74, %cst_58 {dimension_numbers = #tpu.dot_dimension_numbers<[1], [0], [0], [1], [0, 0, 1, 1], [], []>} : vector<64x32xbf16>, vector<32x32xbf16>, vector<64x32xf32> -> vector<64x32xf32>
    %76 = arith.addf %68, %75 : vector<64x32xf32>
    %cst_59 = arith.constant 0.000000e+00 : f32
    %77 = vector.broadcast %cst_59 : f32 to vector<64x32xf32>
    %78 = arith.maximumf %76, %77 : vector<64x32xf32>
    %79 = vector.shape_cast %78 : vector<64x32xf32> to vector<8x8x32xf32>
    %c0_60 = arith.constant 0 : index
    %c0_61 = arith.constant 0 : index
    %c0_62 = arith.constant 0 : index
    %c0_63 = arith.constant 0 : index
    %80 = vector.load %arg5[%c0_60, %c0_61, %c0_62, %c0_63] : memref<1x8x8x32xf32, #tpu.memory_space<vmem>>, vector<1x8x8x32xf32>
    %81 = vector.shape_cast %80 : vector<1x8x8x32xf32> to vector<8x8x32xf32>
    %82 = vector.shape_cast %79 : vector<8x8x32xf32> to vector<1x8x8x32xf32>
    tpu.vector_store %arg5[%c0_60, %c0_61, %c0_62, %c0_63], %82 {strides = array<i32>} : memref<1x8x8x32xf32, #tpu.memory_space<vmem>>, vector<1x8x8x32xf32>,
    return
  }
  func.func @transform_0(%arg0: i32, %arg1: i32) -> (i32, i32, i32, i32, i32) {
    %c0_i32 = arith.constant 0 : i32
    %c0_i32_0 = arith.constant 0 : i32
    %c0_i32_1 = arith.constant 0 : i32
    %c0_i32_2 = arith.constant 0 : i32
    %c0_i32_3 = arith.constant 0 : i32
    return %arg0, %c0_i32, %c0_i32_0, %c0_i32_1, %c0_i32_2 : i32, i32, i32, i32, i32
  }
  func.func @transform_1(%arg0: i32, %arg1: i32) -> (i32, i32) {
    %c0_i32 = arith.constant 0 : i32
    %c0_i32_0 = arith.constant 0 : i32
    %c0_i32_1 = arith.constant 0 : i32
    return %c0_i32, %c0_i32_0 : i32, i32
  }
  func.func @transform_2(%arg0: i32, %arg1: i32) -> (i32, i32) {
    %c0_i32 = arith.constant 0 : i32
    %c0_i32_0 = arith.constant 0 : i32
    %c0_i32_1 = arith.constant 0 : i32
    return %c0_i32, %c0_i32_0 : i32, i32
  }
  func.func @transform_3(%arg0: i32, %arg1: i32) -> (i32, i32, i32, i32) {
    %c0_i32 = arith.constant 0 : i32
    %c0_i32_0 = arith.constant 0 : i32
    %c0_i32_1 = arith.constant 0 : i32
    return %arg0, %arg1, %c0_i32, %c0_i32_0 : i32, i32, i32, i32
  }
}

module attributes {stable_mosaic.version = 11 : i64} {
  func.func @kernel(%arg0: i32, %arg1: i32, %arg2: memref<1x1x18x18x32xbf16, #tpu.memory_space<vmem>>, %arg3: memref<288x32xbf16, #tpu.memory_space<vmem>>, %arg4: memref<1x32xf32, #tpu.memory_space<vmem>>, %arg5: memref<1x8x16x32xf32, #tpu.memory_space<vmem>>, %arg6: memref<1x16x16x32xf32, #tpu.memory_space<vmem>>) attributes {dimension_semantics = [#tpu.dimension_semantics<parallel>, #tpu.dimension_semantics<parallel>], iteration_bounds = array<i64: 2, 1>, scalar_prefetch = 0 : i64, scratch_operands = 0 : i64, tpu.core_type = #tpu.core_type<tc>, window_params = [{transform_indices = @transform_0, window_bounds = array<i64: 1, 1, 18, 18, 32>}, {pipeline_mode = #tpu.pipeline_mode<synchronous>, transform_indices = @transform_1, window_bounds = array<i64: 288, 32>}, {pipeline_mode = #tpu.pipeline_mode<synchronous>, transform_indices = @transform_2, window_bounds = array<i64: 1, 32>}, {transform_indices = @transform_3, window_bounds = array<i64: 1, 8, 16, 32>}, {transform_indices = @transform_4, window_bounds = array<i64: 1, 16, 16, 32>}]} {
    %c16_i32 = arith.constant 16 : i32
    %0 = arith.muli %arg1, %c16_i32 : i32
    %1 = tpu.assume_multiple %0, 8 : i32
    %c0 = arith.constant 0 : index
    %c0_0 = arith.constant 0 : index
    %2 = vector.load %arg4[%c0, %c0_0] : memref<1x32xf32, #tpu.memory_space<vmem>>, vector<1x32xf32>
    %3 = vector.shape_cast %2 : vector<1x32xf32> to vector<1x32xf32>
    %4 = vector.broadcast %3 : vector<1x32xf32> to vector<256x32xf32>
    %c0_i32 = arith.constant 0 : i32
    %5 = arith.addi %1, %c0_i32 : i32
    %c0_1 = arith.constant 0 : index
    %c0_2 = arith.constant 0 : index
    %6 = arith.index_cast %5 : i32 to index
    %c0_3 = arith.constant 0 : index
    %c0_4 = arith.constant 0 : index
    %7 = vector.load %arg2[%c0_1, %c0_2, %6, %c0_3, %c0_4] : memref<1x1x18x18x32xbf16, #tpu.memory_space<vmem>>, vector<1x1x16x16x32xbf16>
    %8 = vector.shape_cast %7 : vector<1x1x16x16x32xbf16> to vector<16x16x32xbf16>
    %9 = vector.shape_cast %8 : vector<16x16x32xbf16> to vector<256x32xbf16>
    %c0_5 = arith.constant 0 : index
    %c0_6 = arith.constant 0 : index
    %10 = vector.load %arg3[%c0_5, %c0_6] : memref<288x32xbf16, #tpu.memory_space<vmem>>, vector<32x32xbf16>
    %cst = arith.constant dense<0.000000e+00> : vector<256x32xf32>
    %11 = tpu.matmul %9, %10, %cst {dimension_numbers = #tpu.dot_dimension_numbers<[1], [0], [0], [1], [0, 0, 1, 1], [], []>} : vector<256x32xbf16>, vector<32x32xbf16>, vector<256x32xf32> -> vector<256x32xf32>
    %12 = arith.addf %4, %11 : vector<256x32xf32>
    %c0_i32_7 = arith.constant 0 : i32
    %13 = arith.addi %1, %c0_i32_7 : i32
    %c0_8 = arith.constant 0 : index
    %c0_9 = arith.constant 0 : index
    %14 = arith.index_cast %13 : i32 to index
    %c1 = arith.constant 1 : index
    %c0_10 = arith.constant 0 : index
    %15 = vector.load %arg2[%c0_8, %c0_9, %14, %c1, %c0_10] : memref<1x1x18x18x32xbf16, #tpu.memory_space<vmem>>, vector<1x1x16x16x32xbf16>
    %16 = vector.shape_cast %15 : vector<1x1x16x16x32xbf16> to vector<16x16x32xbf16>
    %17 = vector.shape_cast %16 : vector<16x16x32xbf16> to vector<256x32xbf16>
    %c32 = arith.constant 32 : index
    %c0_11 = arith.constant 0 : index
    %18 = vector.load %arg3[%c32, %c0_11] : memref<288x32xbf16, #tpu.memory_space<vmem>>, vector<32x32xbf16>
    %cst_12 = arith.constant dense<0.000000e+00> : vector<256x32xf32>
    %19 = tpu.matmul %17, %18, %cst_12 {dimension_numbers = #tpu.dot_dimension_numbers<[1], [0], [0], [1], [0, 0, 1, 1], [], []>} : vector<256x32xbf16>, vector<32x32xbf16>, vector<256x32xf32> -> vector<256x32xf32>
    %20 = arith.addf %12, %19 : vector<256x32xf32>
    %c0_i32_13 = arith.constant 0 : i32
    %21 = arith.addi %1, %c0_i32_13 : i32
    %c0_14 = arith.constant 0 : index
    %c0_15 = arith.constant 0 : index
    %22 = arith.index_cast %21 : i32 to index
    %c2 = arith.constant 2 : index
    %c0_16 = arith.constant 0 : index
    %23 = vector.load %arg2[%c0_14, %c0_15, %22, %c2, %c0_16] : memref<1x1x18x18x32xbf16, #tpu.memory_space<vmem>>, vector<1x1x16x16x32xbf16>
    %24 = vector.shape_cast %23 : vector<1x1x16x16x32xbf16> to vector<16x16x32xbf16>
    %25 = vector.shape_cast %24 : vector<16x16x32xbf16> to vector<256x32xbf16>
    %c64 = arith.constant 64 : index
    %c0_17 = arith.constant 0 : index
    %26 = vector.load %arg3[%c64, %c0_17] : memref<288x32xbf16, #tpu.memory_space<vmem>>, vector<32x32xbf16>
    %cst_18 = arith.constant dense<0.000000e+00> : vector<256x32xf32>
    %27 = tpu.matmul %25, %26, %cst_18 {dimension_numbers = #tpu.dot_dimension_numbers<[1], [0], [0], [1], [0, 0, 1, 1], [], []>} : vector<256x32xbf16>, vector<32x32xbf16>, vector<256x32xf32> -> vector<256x32xf32>
    %28 = arith.addf %20, %27 : vector<256x32xf32>
    %c1_i32 = arith.constant 1 : i32
    %29 = arith.addi %1, %c1_i32 : i32
    %c0_19 = arith.constant 0 : index
    %c0_20 = arith.constant 0 : index
    %30 = arith.index_cast %29 : i32 to index
    %c0_21 = arith.constant 0 : index
    %c0_22 = arith.constant 0 : index
    %31 = vector.load %arg2[%c0_19, %c0_20, %30, %c0_21, %c0_22] : memref<1x1x18x18x32xbf16, #tpu.memory_space<vmem>>, vector<1x1x16x16x32xbf16>
    %32 = vector.shape_cast %31 : vector<1x1x16x16x32xbf16> to vector<16x16x32xbf16>
    %33 = vector.shape_cast %32 : vector<16x16x32xbf16> to vector<256x32xbf16>
    %c96 = arith.constant 96 : index
    %c0_23 = arith.constant 0 : index
    %34 = vector.load %arg3[%c96, %c0_23] : memref<288x32xbf16, #tpu.memory_space<vmem>>, vector<32x32xbf16>
    %cst_24 = arith.constant dense<0.000000e+00> : vector<256x32xf32>
    %35 = tpu.matmul %33, %34, %cst_24 {dimension_numbers = #tpu.dot_dimension_numbers<[1], [0], [0], [1], [0, 0, 1, 1], [], []>} : vector<256x32xbf16>, vector<32x32xbf16>, vector<256x32xf32> -> vector<256x32xf32>
    %36 = arith.addf %28, %35 : vector<256x32xf32>
    %c1_i32_25 = arith.constant 1 : i32
    %37 = arith.addi %1, %c1_i32_25 : i32
    %c0_26 = arith.constant 0 : index
    %c0_27 = arith.constant 0 : index
    %38 = arith.index_cast %37 : i32 to index
    %c1_28 = arith.constant 1 : index
    %c0_29 = arith.constant 0 : index
    %39 = vector.load %arg2[%c0_26, %c0_27, %38, %c1_28, %c0_29] : memref<1x1x18x18x32xbf16, #tpu.memory_space<vmem>>, vector<1x1x16x16x32xbf16>
    %40 = vector.shape_cast %39 : vector<1x1x16x16x32xbf16> to vector<16x16x32xbf16>
    %41 = vector.shape_cast %40 : vector<16x16x32xbf16> to vector<256x32xbf16>
    %c128 = arith.constant 128 : index
    %c0_30 = arith.constant 0 : index
    %42 = vector.load %arg3[%c128, %c0_30] : memref<288x32xbf16, #tpu.memory_space<vmem>>, vector<32x32xbf16>
    %cst_31 = arith.constant dense<0.000000e+00> : vector<256x32xf32>
    %43 = tpu.matmul %41, %42, %cst_31 {dimension_numbers = #tpu.dot_dimension_numbers<[1], [0], [0], [1], [0, 0, 1, 1], [], []>} : vector<256x32xbf16>, vector<32x32xbf16>, vector<256x32xf32> -> vector<256x32xf32>
    %44 = arith.addf %36, %43 : vector<256x32xf32>
    %c1_i32_32 = arith.constant 1 : i32
    %45 = arith.addi %1, %c1_i32_32 : i32
    %c0_33 = arith.constant 0 : index
    %c0_34 = arith.constant 0 : index
    %46 = arith.index_cast %45 : i32 to index
    %c2_35 = arith.constant 2 : index
    %c0_36 = arith.constant 0 : index
    %47 = vector.load %arg2[%c0_33, %c0_34, %46, %c2_35, %c0_36] : memref<1x1x18x18x32xbf16, #tpu.memory_space<vmem>>, vector<1x1x16x16x32xbf16>
    %48 = vector.shape_cast %47 : vector<1x1x16x16x32xbf16> to vector<16x16x32xbf16>
    %49 = vector.shape_cast %48 : vector<16x16x32xbf16> to vector<256x32xbf16>
    %c160 = arith.constant 160 : index
    %c0_37 = arith.constant 0 : index
    %50 = vector.load %arg3[%c160, %c0_37] : memref<288x32xbf16, #tpu.memory_space<vmem>>, vector<32x32xbf16>
    %cst_38 = arith.constant dense<0.000000e+00> : vector<256x32xf32>
    %51 = tpu.matmul %49, %50, %cst_38 {dimension_numbers = #tpu.dot_dimension_numbers<[1], [0], [0], [1], [0, 0, 1, 1], [], []>} : vector<256x32xbf16>, vector<32x32xbf16>, vector<256x32xf32> -> vector<256x32xf32>
    %52 = arith.addf %44, %51 : vector<256x32xf32>
    %c2_i32 = arith.constant 2 : i32
    %53 = arith.addi %1, %c2_i32 : i32
    %c0_39 = arith.constant 0 : index
    %c0_40 = arith.constant 0 : index
    %54 = arith.index_cast %53 : i32 to index
    %c0_41 = arith.constant 0 : index
    %c0_42 = arith.constant 0 : index
    %55 = vector.load %arg2[%c0_39, %c0_40, %54, %c0_41, %c0_42] : memref<1x1x18x18x32xbf16, #tpu.memory_space<vmem>>, vector<1x1x16x16x32xbf16>
    %56 = vector.shape_cast %55 : vector<1x1x16x16x32xbf16> to vector<16x16x32xbf16>
    %57 = vector.shape_cast %56 : vector<16x16x32xbf16> to vector<256x32xbf16>
    %c192 = arith.constant 192 : index
    %c0_43 = arith.constant 0 : index
    %58 = vector.load %arg3[%c192, %c0_43] : memref<288x32xbf16, #tpu.memory_space<vmem>>, vector<32x32xbf16>
    %cst_44 = arith.constant dense<0.000000e+00> : vector<256x32xf32>
    %59 = tpu.matmul %57, %58, %cst_44 {dimension_numbers = #tpu.dot_dimension_numbers<[1], [0], [0], [1], [0, 0, 1, 1], [], []>} : vector<256x32xbf16>, vector<32x32xbf16>, vector<256x32xf32> -> vector<256x32xf32>
    %60 = arith.addf %52, %59 : vector<256x32xf32>
    %c2_i32_45 = arith.constant 2 : i32
    %61 = arith.addi %1, %c2_i32_45 : i32
    %c0_46 = arith.constant 0 : index
    %c0_47 = arith.constant 0 : index
    %62 = arith.index_cast %61 : i32 to index
    %c1_48 = arith.constant 1 : index
    %c0_49 = arith.constant 0 : index
    %63 = vector.load %arg2[%c0_46, %c0_47, %62, %c1_48, %c0_49] : memref<1x1x18x18x32xbf16, #tpu.memory_space<vmem>>, vector<1x1x16x16x32xbf16>
    %64 = vector.shape_cast %63 : vector<1x1x16x16x32xbf16> to vector<16x16x32xbf16>
    %65 = vector.shape_cast %64 : vector<16x16x32xbf16> to vector<256x32xbf16>
    %c224 = arith.constant 224 : index
    %c0_50 = arith.constant 0 : index
    %66 = vector.load %arg3[%c224, %c0_50] : memref<288x32xbf16, #tpu.memory_space<vmem>>, vector<32x32xbf16>
    %cst_51 = arith.constant dense<0.000000e+00> : vector<256x32xf32>
    %67 = tpu.matmul %65, %66, %cst_51 {dimension_numbers = #tpu.dot_dimension_numbers<[1], [0], [0], [1], [0, 0, 1, 1], [], []>} : vector<256x32xbf16>, vector<32x32xbf16>, vector<256x32xf32> -> vector<256x32xf32>
    %68 = arith.addf %60, %67 : vector<256x32xf32>
    %c2_i32_52 = arith.constant 2 : i32
    %69 = arith.addi %1, %c2_i32_52 : i32
    %c0_53 = arith.constant 0 : index
    %c0_54 = arith.constant 0 : index
    %70 = arith.index_cast %69 : i32 to index
    %c2_55 = arith.constant 2 : index
    %c0_56 = arith.constant 0 : index
    %71 = vector.load %arg2[%c0_53, %c0_54, %70, %c2_55, %c0_56] : memref<1x1x18x18x32xbf16, #tpu.memory_space<vmem>>, vector<1x1x16x16x32xbf16>
    %72 = vector.shape_cast %71 : vector<1x1x16x16x32xbf16> to vector<16x16x32xbf16>
    %73 = vector.shape_cast %72 : vector<16x16x32xbf16> to vector<256x32xbf16>
    %c256 = arith.constant 256 : index
    %c0_57 = arith.constant 0 : index
    %74 = vector.load %arg3[%c256, %c0_57] : memref<288x32xbf16, #tpu.memory_space<vmem>>, vector<32x32xbf16>
    %cst_58 = arith.constant dense<0.000000e+00> : vector<256x32xf32>
    %75 = tpu.matmul %73, %74, %cst_58 {dimension_numbers = #tpu.dot_dimension_numbers<[1], [0], [0], [1], [0, 0, 1, 1], [], []>} : vector<256x32xbf16>, vector<32x32xbf16>, vector<256x32xf32> -> vector<256x32xf32>
    %76 = arith.addf %68, %75 : vector<256x32xf32>
    %cst_59 = arith.constant 0.000000e+00 : f32
    %77 = vector.broadcast %cst_59 : f32 to vector<256x32xf32>
    %78 = arith.maximumf %76, %77 : vector<256x32xf32>
    %79 = vector.shape_cast %78 : vector<256x32xf32> to vector<16x16x32xf32>
    %c0_60 = arith.constant 0 : index
    %c0_61 = arith.constant 0 : index
    %c0_62 = arith.constant 0 : index
    %c0_63 = arith.constant 0 : index
    %80 = vector.load %arg5[%c0_60, %c0_61, %c0_62, %c0_63] : memref<1x8x16x32xf32, #tpu.memory_space<vmem>>, vector<1x8x16x32xf32>
    %81 = vector.shape_cast %80 : vector<1x8x16x32xf32> to vector<8x16x32xf32>
    %82 = vector.shape_cast %81 : vector<8x16x32xf32> to vector<8x1x16x32xf32>
    %83 = vector.shape_cast %82 : vector<8x1x16x32xf32> to vector<8x1x16x32xf32>
    %84 = vector.broadcast %83 : vector<8x1x16x32xf32> to vector<8x2x16x32xf32>
    %85 = vector.shape_cast %84 : vector<8x2x16x32xf32> to vector<16x16x32xf32>
    %86 = arith.addf %79, %85 : vector<16x16x32xf32>
    %c0_64 = arith.constant 0 : index
    %c0_65 = arith.constant 0 : index
    %c0_66 = arith.constant 0 : index
    %c0_67 = arith.constant 0 : index
    %87 = vector.load %arg6[%c0_64, %c0_65, %c0_66, %c0_67] : memref<1x16x16x32xf32, #tpu.memory_space<vmem>>, vector<1x16x16x32xf32>
    %88 = vector.shape_cast %87 : vector<1x16x16x32xf32> to vector<16x16x32xf32>
    %89 = vector.shape_cast %86 : vector<16x16x32xf32> to vector<1x16x16x32xf32>
    tpu.vector_store %arg6[%c0_64, %c0_65, %c0_66, %c0_67], %89 {strides = array<i32>} : memref<1x16x16x32xf32, #tpu.memory_space<vmem>>, vector<1x16x16x32xf32>,
    return
  }
  func.func @transform_0(%arg0: i32, %arg1: i32) -> (i32, i32, i32, i32, i32) {
    %c0_i32 = arith.constant 0 : i32
    %c0_i32_0 = arith.constant 0 : i32
    %c0_i32_1 = arith.constant 0 : i32
    %c0_i32_2 = arith.constant 0 : i32
    %c0_i32_3 = arith.constant 0 : i32
    return %arg0, %c0_i32, %c0_i32_0, %c0_i32_1, %c0_i32_2 : i32, i32, i32, i32, i32
  }
  func.func @transform_1(%arg0: i32, %arg1: i32) -> (i32, i32) {
    %c0_i32 = arith.constant 0 : i32
    %c0_i32_0 = arith.constant 0 : i32
    %c0_i32_1 = arith.constant 0 : i32
    return %c0_i32, %c0_i32_0 : i32, i32
  }
  func.func @transform_2(%arg0: i32, %arg1: i32) -> (i32, i32) {
    %c0_i32 = arith.constant 0 : i32
    %c0_i32_0 = arith.constant 0 : i32
    %c0_i32_1 = arith.constant 0 : i32
    return %c0_i32, %c0_i32_0 : i32, i32
  }
  func.func @transform_3(%arg0: i32, %arg1: i32) -> (i32, i32, i32, i32) {
    %c0_i32 = arith.constant 0 : i32
    %c0_i32_0 = arith.constant 0 : i32
    %c0_i32_1 = arith.constant 0 : i32
    return %arg0, %arg1, %c0_i32, %c0_i32_0 : i32, i32, i32, i32
  }
  func.func @transform_4(%arg0: i32, %arg1: i32) -> (i32, i32, i32, i32) {
    %c0_i32 = arith.constant 0 : i32
    %c0_i32_0 = arith.constant 0 : i32
    %c0_i32_1 = arith.constant 0 : i32
    return %arg0, %arg1, %c0_i32, %c0_i32_0 : i32, i32, i32, i32
  }
}

</mosaic_0001>

<llo_original>
// kernel: two_d_branch_forward.3
$region0: #{two_d_branch_forward.3}
  #allocation0 [shape = 'u32[]', space=smem, size = 0x4, offset = 0x4, fixed_abs, tag = 'smem constant byte address 0x4 - core index']
  #allocation1 [shape = 'u32[144,128]{1,0:T(1,128)}', space=vmem, size = 0x12000, scoped, tag = 'internal scratch']
  %s0 = inlined_call_operand.vmem [shape: bf16[2,4,9,9,32], index: 0, kind: input, shape index: {}]
  %s1 = inlined_call_operand.vmem [shape: bf16[288,32], index: 1, kind: input, shape index: {}]
  %s2 = inlined_call_operand.vmem [shape: f32[1,32], index: 2, kind: input, shape index: {}]
  %s3 = inlined_call_operand.vmem [shape: bf16[2,8,8,32], index: 3, kind: output, shape index: {}]
  %s4 = sld [smem:[#allocation0]]
  $region45: #{two_d_branch_forward.3} parent=0
    _
  %s6 = ssub.s32 1, %s4
  %s7 = scalar_select 0, %s6, %s4
  loop: start=0, step=1, limit=4
  $region2: #{two_d_branch_forward.3} parent=0 // loop_pre_header
    _
  $region3: #{two_d_branch_forward.3} parent=0 // loop_header
    %s9 = sphi 0, %s13
    %p10 = scmp.ge.s32.totalorder %s9, 4
    %s16 = sphi 0, %s28
    %s17 = sphi 0, %s24
    %s18 = sphi 0, %s16
    %s19 = sphi 0, %s17
    %s20 = sphi 0, %s18
    %s21 = sphi 0, %s19
    %s31 = sphi 0, %s33
    %s34 = sphi 0, %s31
    %s35 = sphi 0, %s34
    %s51 = sphi 0, %s35
    %s55 = sphi 0, %s55
    %s57 = sphi 0, %s55
    %s58 = sphi 0, %s57
    %s72 = sphi 0, %s58
    %s76 = sphi 0, %s76
    %s78 = sphi 0, %s76
    %s79 = sphi 0, %s78
    %s93 = sphi 0, %s79
    %s101 = sphi 0, %s103
    %s104 = sphi 0, %s101
    %s105 = sphi 0, %s104
    %s121 = sphi 0, %s105
  $region4: #{two_d_branch_forward.3} parent=0 // loop_header_branch
    %12 = sbr.rel (%p10) target = $region8
  $region5: #{two_d_branch_forward.3} parent=0 // loop_body
    %s14 = ssub.s32 %s9, 1
    %s15 = ssub.s32 %s9, 2
    %s22 = sadd.s32 1, %s17
    %p23 = scmp.ge.s32.totalorder %s22, 1
    %s24 = scalar_select %p23, 0, %s22
    %s25 = sadd.s32 1, %s16
    %s26 = scalar_select %p23, %s25, %s16
    %p27 = scmp.ge.s32.totalorder %s26, 2
    %s28 = scalar_select %p27, 0, %s26
    %s29 = ssub.s32 %s16, %s28
    %p30 = scmp.eq.s32.totalorder %s29, 0
    %s32 = sadd.s32 %s31, 1
    %s33 = scalar_select %p30, %s31, %s32
    %p36 = pneg %p30
    %p37 = scmp.eq.s32.totalorder %s9, 1
    %p38 = por %p36, %p37
    %p39 = scmp.ne.s32.totalorder %s31, %s34
    %p40 = scmp.eq.s32.totalorder %s9, 0
    %p41 = por %p39, %p40
    %p42 = scmp.ne.s32.totalorder %s31, %s34
    %p43 = scmp.eq.s32.totalorder %s14, 1
    %p44 = por %p42, %p43
    %p45 = scmp.ne.s32.totalorder %s34, %s35
    %p46 = scmp.eq.s32.totalorder %s14, 0
    %p47 = por %p45, %p46
    %p48 = scmp.ne.s32.totalorder %s34, %s35
    %p49 = scmp.eq.s32.totalorder %s15, 1
    %p50 = por %p48, %p49
    %p52 = scmp.ne.s32.totalorder %s35, %s51
    %p53 = scmp.eq.s32.totalorder %s15, 0
    %p54 = por %p52, %p53
    %s56 = sadd.s32 %s55, 1
    %p59 = scmp.eq.s32.totalorder %s9, 1
    %p60 = scmp.ne.s32.totalorder %s55, %s57
    %p61 = scmp.eq.s32.totalorder %s9, 0
    %p62 = por %p60, %p61
    %p63 = scmp.ne.s32.totalorder %s55, %s57
    %p64 = scmp.eq.s32.totalorder %s14, 1
    %p65 = por %p63, %p64
    %p66 = scmp.ne.s32.totalorder %s57, %s58
    %p67 = scmp.eq.s32.totalorder %s14, 0
    %p68 = por %p66, %p67
    %p69 = scmp.ne.s32.totalorder %s57, %s58
    %p70 = scmp.eq.s32.totalorder %s15, 1
    %p71 = por %p69, %p70
    %p73 = scmp.ne.s32.totalorder %s58, %s72
    %p74 = scmp.eq.s32.totalorder %s15, 0
    %p75 = por %p73, %p74
    %s77 = sadd.s32 %s76, 1
    %p80 = scmp.eq.s32.totalorder %s9, 1
    %p81 = scmp.ne.s32.totalorder %s76, %s78
    %p82 = scmp.eq.s32.totalorder %s9, 0
    %p83 = por %p81, %p82
    %p84 = scmp.ne.s32.totalorder %s76, %s78
    %p85 = scmp.eq.s32.totalorder %s14, 1
    %p86 = por %p84, %p85
    %p87 = scmp.ne.s32.totalorder %s78, %s79
    %p88 = scmp.eq.s32.totalorder %s14, 0
    %p89 = por %p87, %p88
    %p90 = scmp.ne.s32.totalorder %s78, %s79
    %p91 = scmp.eq.s32.totalorder %s15, 1
    %p92 = por %p90, %p91
    %p94 = scmp.ne.s32.totalorder %s79, %s93
    %p95 = scmp.eq.s32.totalorder %s15, 0
    %p96 = por %p94, %p95
    %s97 = ssub.s32 %s16, %s28
    %s98 = ssub.s32 %s17, %s24
    %s99 = sor.u32 %s97, %s98
    %p100 = scmp.eq.s32.totalorder %s99, 0
    %s102 = sadd.s32 %s101, 1
    %s103 = scalar_select %p100, %s101, %s102
    %p106 = pneg %p100
    %p107 = scmp.eq.s32.totalorder %s9, 1
    %p108 = por %p106, %p107
    %p109 = scmp.ne.s32.totalorder %s101, %s104
    %p110 = scmp.eq.s32.totalorder %s9, 0
    %p111 = por %p109, %p110
    %p112 = scmp.ne.s32.totalorder %s101, %s104
    %p113 = scmp.eq.s32.totalorder %s14, 1
    %p114 = por %p112, %p113
    %p115 = scmp.ne.s32.totalorder %s104, %s105
    %p116 = scmp.eq.s32.totalorder %s14, 0
    %p117 = por %p115, %p116
    %p118 = scmp.ne.s32.totalorder %s104, %s105
    %p119 = scmp.eq.s32.totalorder %s15, 1
    %p120 = por %p118, %p119
    %p122 = scmp.ne.s32.totalorder %s105, %s121
    %p123 = scmp.eq.s32.totalorder %s15, 0
    %p124 = por %p122, %p123
    %p125 = scmp.le.s32.totalorder 1, %s9
    %p126 = scmp.lt.s32.totalorder %s9, 3
    %p127 = pnand %p125, %p126
    %p128 = pneg %p127
    // Predicated region
    $region9: #{two_d_branch_forward.3} parent=5 // pred_check
      _
    $region10: #{two_d_branch_forward.3} parent=5 // pred_check_branch
      %130 = sbr.rel (%p127) target = $region12
    $region11: #{two_d_branch_forward.3} parent=5 // pred_region
      %s131 = ssub.s32 %s9, 1
      // Predicated region
      $region13: #{two_d_branch_forward.3} parent=11 // pred_check
        %p132 = pneg %p68
      $region14: #{two_d_branch_forward.3} parent=11 // pred_check_branch
        %134 = sbr.rel (%p132) target = $region16
      $region15: #{two_d_branch_forward.3} parent=11 // pred_region
        _
      $region16: #{two_d_branch_forward.3} parent=11 // pred_fallthru
        _
      // Predicated region
      $region17: #{two_d_branch_forward.3} parent=11 // pred_check
        %p135 = pneg %p89
      $region18: #{two_d_branch_forward.3} parent=11 // pred_check_branch
        %137 = sbr.rel (%p135) target = $region20
      $region19: #{two_d_branch_forward.3} parent=11 // pred_region
        _
      $region20: #{two_d_branch_forward.3} parent=11 // pred_fallthru
        _
    $region12: #{two_d_branch_forward.3} parent=5 // pred_fallthru
      _
    %p138 = scmp.lt.s32.totalorder %s9, 2
    // Predicated region
    $region21: #{two_d_branch_forward.3} parent=5 // pred_check
      %p139 = pneg %p138
    $region22: #{two_d_branch_forward.3} parent=5 // pred_check_branch
      %141 = sbr.rel (%p139) target = $region24
    $region23: #{two_d_branch_forward.3} parent=5 // pred_region
      // Predicated region
      $region25: #{two_d_branch_forward.3} parent=23 // pred_check
        %p142 = pneg %p41
      $region26: #{two_d_branch_forward.3} parent=23 // pred_check_branch
        %144 = sbr.rel (%p142) target = $region28
      $region27: #{two_d_branch_forward.3} parent=23 // pred_region
        %p145 = scmp.lt.s32.totalorder %s16, 1
        %s146 = scalar_select %p145, %s16, 1
        %s147 = smul.addr %s146, 72
        %s148 = smul.addr %s147, 4
        %s149 = scalar_lea.vmem %s0, %s148
      $region28: #{two_d_branch_forward.3} parent=23 // pred_fallthru
        _
    $region24: #{two_d_branch_forward.3} parent=5 // pred_fallthru
      _
    %p150 = scmp.le.s32.totalorder 1, %s9
    %p151 = scmp.lt.s32.totalorder %s9, 3
    %p152 = pnand %p150, %p151
    %p153 = pneg %p152
    // Predicated region
    $region29: #{two_d_branch_forward.3} parent=5 // pred_check
      _
    $region30: #{two_d_branch_forward.3} parent=5 // pred_check_branch
      %155 = sbr.rel (%p152) target = $region32
    $region31: #{two_d_branch_forward.3} parent=5 // pred_region
      %s156 = ssub.s32 %s9, 1
      %p157 = scmp.lt.s32.totalorder %s18, 1
      %s158 = scalar_select %p157, %s18, 1
      %s159 = smul.addr %s158, 72
      %s160 = smul.addr %s159, 4
      %s161 = scalar_lea.vmem %s0, %s160
      %p162 = pneg %p47
      %p163 = pneg %p44
      %p164 = pneg %p68
      %p165 = pneg %p65
      %p166 = pneg %p89
      %p167 = pneg %p86
      %p168 = pneg %p117
      %p169 = pneg %p114
      %s170 = smul.u32 8, %s19
      %p171 = scmp.lt.s32.totalorder %s18, 1
      %s172 = scalar_select %p171, %s18, 1
      %p173 = scmp.lt.s32.totalorder %s170, 7
      %s174 = scalar_select %p173, %s170, 7
      %s175 = smul.addr %s172, 8
      %s176 = sadd.s32 %s174, %s175
      %s177 = smul.addr %s176, 4
      %s178 = scalar_lea.vmem %s3, %s177
      %p179 = scmp.lt.s32.totalorder %s18, 1
      %s180 = scalar_select %p179, %s18, 1
      %s181 = smul.addr %s180, 72
      %s182 = smul.addr %s181, 4
      %s183 = scalar_lea.vmem %s0, %s182
      %s184 = smul.u32 8, %s19
      %p185 = scmp.lt.s32.totalorder %s18, 1
      %s186 = scalar_select %p185, %s18, 1
      %p187 = scmp.lt.s32.totalorder %s184, 7
      %s188 = scalar_select %p187, %s184, 7
      %s189 = smul.addr %s186, 8
      %s190 = sadd.s32 %s188, %s189
      %s191 = smul.addr %s190, 4
      %s192 = scalar_lea.vmem %s3, %s191
      %s193 = smul.u32 8, %s19
      %s195 = smul.u32 %s19, 8
      %v196 = vld [vmem:[%s2] sm:$0x1]
      %v198 = vlaneseq
      %v199 = vshrl.u32 %v198, 7
      %v200 = vsub.s32 0, %v199
      %v201 = vrot.slane %v196, %v200
      %s203 = smul.u32 %s195, 2
      %s204 = smul.addr %s203, 4
      %s205 = scalar_lea.vmem %s183, %s204
      %v206 = vld [vmem:[%s205] sm:$0xf]
      %v207 = vld [vmem:[%s205 + $0x8] sm:$0xf]
      %v208 = vld [vmem:[%s205 + $0x10] sm:$0xf]
      %v209 = vld [vmem:[%s205 + $0x18] sm:$0xf]
      %v210 = vld [vmem:[%s205 + $0x20] sm:$0xf]
      %v211 = vld [vmem:[%s205 + $0x28] sm:$0xf]
      %v212 = vld [vmem:[%s205 + $0x30] sm:$0xf]
      %v213 = vld [vmem:[%s205 + $0x38] sm:$0xf]
      %v214 = vld [vmem:[%s1] sm:$0xf]
      %v215 = vld [vmem:[%s1 + $0x4] sm:$0xf]
      %v216 = vld [vmem:[%s1 + $0x8] sm:$0xf]
      %v217 = vld [vmem:[%s1 + $0xc] sm:$0xf]
      %v226 = vunpack.c.l.b16 %v206
      %v227 = vunpack.c.l.b16 %v207
      %v228 = vunpack.c.l.b16 %v208
      %v229 = vunpack.c.l.b16 %v209
      %v230 = vunpack.c.l.b16 %v210
      %v231 = vunpack.c.l.b16 %v211
      %v232 = vunpack.c.l.b16 %v212
      %v233 = vunpack.c.l.b16 %v213
      %v234 = vpack.c.b16 %v227, %v226
      %v235 = vpack.c.b16 %v229, %v228
      %v236 = vpack.c.b16 %v231, %v230
      %v237 = vpack.c.b16 %v233, %v232
      %v242 = vunpack.c.l.b16 %v214
      %v243 = vunpack.c.l.b16 %v215
      %v244 = vunpack.c.l.b16 %v216
      %v245 = vunpack.c.l.b16 %v217
      %v246 = vpack.c.b16 %v243, %v242
      %v247 = vpack.c.b16 %v245, %v244
      %vm250 = vcmask 261120
      %v252 = vsel %vm250, %v234, 0
      %v255 = vsel %vm250, %v235, 0
      %v258 = vsel %vm250, %v236, 0
      %v261 = vsel %vm250, %v237, 0
      %263 = vmatprep.subr.bf16.mxu0 0
      %264 = vmatpush1.bf16.msra.mxu0 %v246
      %265 = vmatprep.subr.bf16.mxu0 0
      %266 = vmatpush1.bf16.msra.mxu0 %v247
      %267 = vmatprep.subr.bf16.mxu0 0
      %268 = vmatpush1.bf16.msra.mxu0 0
      %269 = vmatprep.subr.bf16.mxu0 0
      %270 = vmatpush1.bf16.msra.mxu0 0
      %271 = vmatprep.subr.bf16.mxu0 0
      %272 = vmatpush1.bf16.msra.mxu0 0
      %273 = vmatprep.subr.bf16.mxu0 0
      %274 = vmatpush1.bf16.msra.mxu0 0
      %275 = vmatprep.subr.bf16.mxu0 0
      %276 = vmatpush1.bf16.msra.mxu0 0
      %277 = vmatprep.subr.bf16.mxu0 0
      %278 = vmatpush1.bf16.msra.mxu0 0
      %279 = vmatprep.subr.bf16.mxu0 0
      %280 = vmatpush1.bf16.msra.mxu0 0
      %281 = vmatprep.subr.bf16.mxu0 0
      %282 = vmatpush1.bf16.msra.mxu0 0
      %283 = vmatprep.subr.bf16.mxu0 0
      %284 = vmatpush1.bf16.msra.mxu0 0
      %285 = vmatprep.subr.bf16.mxu0 0
      %286 = vmatpush1.bf16.msra.mxu0 0
      %287 = vmatprep.subr.bf16.mxu0 0
      %288 = vmatpush1.bf16.msra.mxu0 0
      %289 = vmatprep.subr.bf16.mxu0 0
      %290 = vmatpush1.bf16.msra.mxu0 0
      %291 = vmatprep.subr.bf16.mxu0 0
      %292 = vmatpush1.bf16.msra.mxu0 0
      %293 = vmatprep.subr.bf16.mxu0 0
      %294 = vmatpush1.bf16.msra.mxu0 0
      %295 = vmatprep.mubr.bf16.mxu0 0
      %296 = vmatmul.mubr.bf16.gmra.mrb[0].mxu0 %v252
      %v297 = vpop.f32.mrb[0].mxu0
      %v298 = vadd.f32 0.0, %v297
      %v299 = vpop.f32.mrb[0].mxu0
      %v300 = vpop.f32.mrb[0].mxu0
      %v301 = vadd.f32 0.0, %v300
      %v302 = vpop.f32.mrb[0].mxu0
      %303 = vmatprep.mubr.bf16.mxu0 0
      %304 = vmatmul.mubr.bf16.gmra.mrb[0].mxu0 %v255
      %v305 = vpop.f32.mrb[0].mxu0
      %v306 = vadd.f32 0.0, %v305
      %v307 = vpop.f32.mrb[0].mxu0
      %v308 = vpop.f32.mrb[0].mxu0
      %v309 = vadd.f32 0.0, %v308
      %v310 = vpop.f32.mrb[0].mxu0
      %311 = vmatprep.mubr.bf16.mxu0 0
      %312 = vmatmul.mubr.bf16.gmra.mrb[0].mxu0 %v258
      %v313 = vpop.f32.mrb[0].mxu0
      %v314 = vadd.f32 0.0, %v313
      %v315 = vpop.f32.mrb[0].mxu0
      %v316 = vpop.f32.mrb[0].mxu0
      %v317 = vadd.f32 0.0, %v316
      %v318 = vpop.f32.mrb[0].mxu0
      %319 = vmatprep.mubr.bf16.mxu0 0
      %320 = vmatmul.mubr.bf16.gmra.mrb[0].mxu0 %v261
      %v321 = vpop.f32.mrb[0].mxu0
      %v322 = vadd.f32 0.0, %v321
      %v323 = vpop.f32.mrb[0].mxu0
      %v324 = vpop.f32.mrb[0].mxu0
      %v325 = vadd.f32 0.0, %v324
      %v326 = vpop.f32.mrb[0].mxu0
      %327 = vdwg.mxu0
      %v328 = vadd.f32 %v201, %v298
      %v329 = vadd.f32 %v201, %v301
      %v330 = vadd.f32 %v201, %v306
      %v331 = vadd.f32 %v201, %v309
      %v332 = vadd.f32 %v201, %v314
      %v333 = vadd.f32 %v201, %v317
      %v334 = vadd.f32 %v201, %v322
      %v335 = vadd.f32 %v201, %v325
      %s336 = sadd.s32 %s203, 18
      %s337 = smul.addr %s336, 4
      %s338 = scalar_lea.vmem %s183, %s337
      %v339 = vld [vmem:[%s338] sm:$0xf]
      %v340 = vld [vmem:[%s338 + $0x8] sm:$0xf]
      %v341 = vld [vmem:[%s338 + $0x10] sm:$0xf]
      %v342 = vld [vmem:[%s338 + $0x18] sm:$0xf]
      %v343 = vld [vmem:[%s338 + $0x20] sm:$0xf]
      %v344 = vld [vmem:[%s338 + $0x28] sm:$0xf]
      %v345 = vld [vmem:[%s338 + $0x30] sm:$0xf]
      %v346 = vld [vmem:[%s338 + $0x38] sm:$0xf]
      %v347 = vld [vmem:[%s1 + $0x10] sm:$0xf]
      %v348 = vld [vmem:[%s1 + $0x14] sm:$0xf]
      %v349 = vld [vmem:[%s1 + $0x18] sm:$0xf]
      %v350 = vld [vmem:[%s1 + $0x1c] sm:$0xf]
      %v359 = vunpack.c.l.b16 %v339
      %v360 = vunpack.c.l.b16 %v340
      %v361 = vunpack.c.l.b16 %v341
      %v362 = vunpack.c.l.b16 %v342
      %v363 = vunpack.c.l.b16 %v343
      %v364 = vunpack.c.l.b16 %v344
      %v365 = vunpack.c.l.b16 %v345
      %v366 = vunpack.c.l.b16 %v346
      %v367 = vpack.c.b16 %v360, %v359
      %v368 = vpack.c.b16 %v362, %v361
      %v369 = vpack.c.b16 %v364, %v363
      %v370 = vpack.c.b16 %v366, %v365
      %v375 = vunpack.c.l.b16 %v347
      %v376 = vunpack.c.l.b16 %v348
      %v377 = vunpack.c.l.b16 %v349
      %v378 = vunpack.c.l.b16 %v350
      %v379 = vpack.c.b16 %v376, %v375
      %v380 = vpack.c.b16 %v378, %v377
      %v384 = vsel %vm250, %v367, 0
      %v387 = vsel %vm250, %v368, 0
      %v390 = vsel %vm250, %v369, 0
      %v393 = vsel %vm250, %v370, 0
      %395 = vmatprep.subr.bf16.mxu0 0
      %396 = vmatpush1.bf16.msra.mxu0 %v379
      %397 = vmatprep.subr.bf16.mxu0 0
      %398 = vmatpush1.bf16.msra.mxu0 %v380
      %399 = vmatprep.subr.bf16.mxu0 0
      %400 = vmatpush1.bf16.msra.mxu0 0
      %401 = vmatprep.subr.bf16.mxu0 0
      %402 = vmatpush1.bf16.msra.mxu0 0
      %403 = vmatprep.subr.bf16.mxu0 0
      %404 = vmatpush1.bf16.msra.mxu0 0
      %405 = vmatprep.subr.bf16.mxu0 0
      %406 = vmatpush1.bf16.msra.mxu0 0
      %407 = vmatprep.subr.bf16.mxu0 0
      %408 = vmatpush1.bf16.msra.mxu0 0
      %409 = vmatprep.subr.bf16.mxu0 0
      %410 = vmatpush1.bf16.msra.mxu0 0
      %411 = vmatprep.subr.bf16.mxu0 0
      %412 = vmatpush1.bf16.msra.mxu0 0
      %413 = vmatprep.subr.bf16.mxu0 0
      %414 = vmatpush1.bf16.msra.mxu0 0
      %415 = vmatprep.subr.bf16.mxu0 0
      %416 = vmatpush1.bf16.msra.mxu0 0
      %417 = vmatprep.subr.bf16.mxu0 0
      %418 = vmatpush1.bf16.msra.mxu0 0
      %419 = vmatprep.subr.bf16.mxu0 0
      %420 = vmatpush1.bf16.msra.mxu0 0
      %421 = vmatprep.subr.bf16.mxu0 0
      %422 = vmatpush1.bf16.msra.mxu0 0
      %423 = vmatprep.subr.bf16.mxu0 0
      %424 = vmatpush1.bf16.msra.mxu0 0
      %425 = vmatprep.subr.bf16.mxu0 0
      %426 = vmatpush1.bf16.msra.mxu0 0
      %427 = vmatprep.mubr.bf16.mxu0 0
      %428 = vmatmul.mubr.bf16.gmra.mrb[0].mxu0 %v384
      %v429 = vpop.f32.mrb[0].mxu0
      %v430 = vadd.f32 0.0, %v429
      %v431 = vpop.f32.mrb[0].mxu0
      %v432 = vpop.f32.mrb[0].mxu0
      %v433 = vadd.f32 0.0, %v432
      %v434 = vpop.f32.mrb[0].mxu0
      %435 = vmatprep.mubr.bf16.mxu0 0
      %436 = vmatmul.mubr.bf16.gmra.mrb[0].mxu0 %v387
      %v437 = vpop.f32.mrb[0].mxu0
      %v438 = vadd.f32 0.0, %v437
      %v439 = vpop.f32.mrb[0].mxu0
      %v440 = vpop.f32.mrb[0].mxu0
      %v441 = vadd.f32 0.0, %v440
      %v442 = vpop.f32.mrb[0].mxu0
      %443 = vmatprep.mubr.bf16.mxu0 0
      %444 = vmatmul.mubr.bf16.gmra.mrb[0].mxu0 %v390
      %v445 = vpop.f32.mrb[0].mxu0
      %v446 = vadd.f32 0.0, %v445
      %v447 = vpop.f32.mrb[0].mxu0
      %v448 = vpop.f32.mrb[0].mxu0
      %v449 = vadd.f32 0.0, %v448
      %v450 = vpop.f32.mrb[0].mxu0
      %451 = vmatprep.mubr.bf16.mxu0 0
      %452 = vmatmul.mubr.bf16.gmra.mrb[0].mxu0 %v393
      %v453 = vpop.f32.mrb[0].mxu0
      %v454 = vadd.f32 0.0, %v453
      %v455 = vpop.f32.mrb[0].mxu0
      %v456 = vpop.f32.mrb[0].mxu0
      %v457 = vadd.f32 0.0, %v456
      %v458 = vpop.f32.mrb[0].mxu0
      %459 = vdwg.mxu0
      %v460 = vadd.f32 %v328, %v430
      %v461 = vadd.f32 %v329, %v433
      %v462 = vadd.f32 %v330, %v438
      %v463 = vadd.f32 %v331, %v441
      %v464 = vadd.f32 %v332, %v446
      %v465 = vadd.f32 %v333, %v449
      %v466 = vadd.f32 %v334, %v454
      %v467 = vadd.f32 %v335, %v457
      %v468 = vld [vmem:[%s205] sm:$0xf]
      %v469 = vld [vmem:[%s205 + $0x4] sm:$0x1]
      %v470 = vld [vmem:[%s205 + $0x8] sm:$0xf]
      %v471 = vld [vmem:[%s205 + $0xc] sm:$0x1]
      %v472 = vld [vmem:[%s205 + $0x10] sm:$0xf]
      %v473 = vld [vmem:[%s205 + $0x14] sm:$0x1]
      %v474 = vld [vmem:[%s205 + $0x18] sm:$0xf]
      %v475 = vld [vmem:[%s205 + $0x1c] sm:$0x1]
      %v476 = vld [vmem:[%s205 + $0x20] sm:$0xf]
      %v477 = vld [vmem:[%s205 + $0x24] sm:$0x1]
      %v478 = vld [vmem:[%s205 + $0x28] sm:$0xf]
      %v479 = vld [vmem:[%s205 + $0x2c] sm:$0x1]
      %v480 = vld [vmem:[%s205 + $0x30] sm:$0xf]
      %v481 = vld [vmem:[%s205 + $0x34] sm:$0x1]
      %v482 = vld [vmem:[%s205 + $0x38] sm:$0xf]
      %v483 = vld [vmem:[%s205 + $0x3c] sm:$0x1]
      %vm484 = vsmask.f32 3328
      %vm485 = vsmask.f32 7440
      %vm486 = vmor %vm484, %vm485
      %v488 = vshrl.u32 %v468, 16
      %v490 = vrot.slane %v488, 4
      %v491 = vshll.u32 %v468, 16
      %v493 = vrot.slane %v491, 5
      %v494 = vor.u32 %v490, %v493
      %v495 = vrot.slane %v494, 4
      %v497 = vshll.u32 %v469, 16
      %v499 = vrot.slane %v497, 5
      %v500 = vsel %vm486, %v495, %v499
      %v502 = vshrl.u32 %v470, 16
      %v504 = vrot.slane %v502, 4
      %v505 = vshll.u32 %v470, 16
      %v507 = vrot.slane %v505, 5
      %v508 = vor.u32 %v504, %v507
      %v509 = vrot.slane %v508, 4
      %v511 = vshll.u32 %v471, 16
      %v513 = vrot.slane %v511, 5
      %v514 = vsel %vm486, %v509, %v513
      %v516 = vshrl.u32 %v472, 16
      %v518 = vrot.slane %v516, 4
      %v519 = vshll.u32 %v472, 16
      %v521 = vrot.slane %v519, 5
      %v522 = vor.u32 %v518, %v521
      %v523 = vrot.slane %v522, 4
      %v525 = vshll.u32 %v473, 16
      %v527 = vrot.slane %v525, 5
      %v528 = vsel %vm486, %v523, %v527
      %v530 = vshrl.u32 %v474, 16
      %v532 = vrot.slane %v530, 4
      %v533 = vshll.u32 %v474, 16
      %v535 = vrot.slane %v533, 5
      %v536 = vor.u32 %v532, %v535
      %v537 = vrot.slane %v536, 4
      %v539 = vshll.u32 %v475, 16
      %v541 = vrot.slane %v539, 5
      %v542 = vsel %vm486, %v537, %v541
      %v544 = vshrl.u32 %v476, 16
      %v546 = vrot.slane %v544, 4
      %v547 = vshll.u32 %v476, 16
      %v549 = vrot.slane %v547, 5
      %v550 = vor.u32 %v546, %v549
      %v551 = vrot.slane %v550, 4
      %v553 = vshll.u32 %v477, 16
      %v555 = vrot.slane %v553, 5
      %v556 = vsel %vm486, %v551, %v555
      %v558 = vshrl.u32 %v478, 16
      %v560 = vrot.slane %v558, 4
      %v561 = vshll.u32 %v478, 16
      %v563 = vrot.slane %v561, 5
      %v564 = vor.u32 %v560, %v563
      %v565 = vrot.slane %v564, 4
      %v567 = vshll.u32 %v479, 16
      %v569 = vrot.slane %v567, 5
      %v570 = vsel %vm486, %v565, %v569
      %v572 = vshrl.u32 %v480, 16
      %v574 = vrot.slane %v572, 4
      %v575 = vshll.u32 %v480, 16
      %v577 = vrot.slane %v575, 5
      %v578 = vor.u32 %v574, %v577
      %v579 = vrot.slane %v578, 4
      %v581 = vshll.u32 %v481, 16
      %v583 = vrot.slane %v581, 5
      %v584 = vsel %vm486, %v579, %v583
      %v586 = vshrl.u32 %v482, 16
      %v588 = vrot.slane %v586, 4
      %v589 = vshll.u32 %v482, 16
      %v591 = vrot.slane %v589, 5
      %v592 = vor.u32 %v588, %v591
      %v593 = vrot.slane %v592, 4
      %v595 = vshll.u32 %v483, 16
      %v597 = vrot.slane %v595, 5
      %v598 = vsel %vm486, %v593, %v597
      %v599 = vld [vmem:[%s1 + $0x20] sm:$0xf]
      %v600 = vld [vmem:[%s1 + $0x24] sm:$0xf]
      %v601 = vld [vmem:[%s1 + $0x28] sm:$0xf]
      %v602 = vld [vmem:[%s1 + $0x2c] sm:$0xf]
      %v603 = vunpack.c.l.b16 %v500
      %v604 = vunpack.c.l.b16 %v514
      %v605 = vunpack.c.l.b16 %v528
      %v606 = vunpack.c.l.b16 %v542
      %v607 = vunpack.c.l.b16 %v556
      %v608 = vunpack.c.l.b16 %v570
      %v609 = vunpack.c.l.b16 %v584
      %v610 = vunpack.c.l.b16 %v598
      %v611 = vpack.c.b16 %v604, %v603
      %v612 = vpack.c.b16 %v606, %v605
      %v613 = vpack.c.b16 %v608, %v607
      %v614 = vpack.c.b16 %v610, %v609
      %v619 = vunpack.c.l.b16 %v599
      %v620 = vunpack.c.l.b16 %v600
      %v621 = vunpack.c.l.b16 %v601
      %v622 = vunpack.c.l.b16 %v602
      %v623 = vpack.c.b16 %v620, %v619
      %v624 = vpack.c.b16 %v622, %v621
      %v628 = vsel %vm250, %v611, 0
      %v631 = vsel %vm250, %v612, 0
      %v634 = vsel %vm250, %v613, 0
      %v637 = vsel %vm250, %v614, 0
      %639 = vmatprep.subr.bf16.mxu0 0
      %640 = vmatpush1.bf16.msra.mxu0 %v623
      %641 = vmatprep.subr.bf16.mxu0 0
      %642 = vmatpush1.bf16.msra.mxu0 %v624
      %643 = vmatprep.subr.bf16.mxu0 0
      %644 = vmatpush1.bf16.msra.mxu0 0
      %645 = vmatprep.subr.bf16.mxu0 0
      %646 = vmatpush1.bf16.msra.mxu0 0
      %647 = vmatprep.subr.bf16.mxu0 0
      %648 = vmatpush1.bf16.msra.mxu0 0
      %649 = vmatprep.subr.bf16.mxu0 0
      %650 = vmatpush1.bf16.msra.mxu0 0
      %651 = vmatprep.subr.bf16.mxu0 0
      %652 = vmatpush1.bf16.msra.mxu0 0
      %653 = vmatprep.subr.bf16.mxu0 0
      %654 = vmatpush1.bf16.msra.mxu0 0
      %655 = vmatprep.subr.bf16.mxu0 0
      %656 = vmatpush1.bf16.msra.mxu0 0
      %657 = vmatprep.subr.bf16.mxu0 0
      %658 = vmatpush1.bf16.msra.mxu0 0
      %659 = vmatprep.subr.bf16.mxu0 0
      %660 = vmatpush1.bf16.msra.mxu0 0
      %661 = vmatprep.subr.bf16.mxu0 0
      %662 = vmatpush1.bf16.msra.mxu0 0
      %663 = vmatprep.subr.bf16.mxu0 0
      %664 = vmatpush1.bf16.msra.mxu0 0
      %665 = vmatprep.subr.bf16.mxu0 0
      %666 = vmatpush1.bf16.msra.mxu0 0
      %667 = vmatprep.subr.bf16.mxu0 0
      %668 = vmatpush1.bf16.msra.mxu0 0
      %669 = vmatprep.subr.bf16.mxu0 0
      %670 = vmatpush1.bf16.msra.mxu0 0
      %671 = vmatprep.mubr.bf16.mxu0 0
      %672 = vmatmul.mubr.bf16.gmra.mrb[0].mxu0 %v628
      %v673 = vpop.f32.mrb[0].mxu0
      %v674 = vadd.f32 0.0, %v673
      %v675 = vpop.f32.mrb[0].mxu0
      %v676 = vpop.f32.mrb[0].mxu0
      %v677 = vadd.f32 0.0, %v676
      %v678 = vpop.f32.mrb[0].mxu0
      %679 = vmatprep.mubr.bf16.mxu0 0
      %680 = vmatmul.mubr.bf16.gmra.mrb[0].mxu0 %v631
      %v681 = vpop.f32.mrb[0].mxu0
      %v682 = vadd.f32 0.0, %v681
      %v683 = vpop.f32.mrb[0].mxu0
      %v684 = vpop.f32.mrb[0].mxu0
      %v685 = vadd.f32 0.0, %v684
      %v686 = vpop.f32.mrb[0].mxu0
      %687 = vmatprep.mubr.bf16.mxu0 0
      %688 = vmatmul.mubr.bf16.gmra.mrb[0].mxu0 %v634
      %v689 = vpop.f32.mrb[0].mxu0
      %v690 = vadd.f32 0.0, %v689
      %v691 = vpop.f32.mrb[0].mxu0
      %v692 = vpop.f32.mrb[0].mxu0
      %v693 = vadd.f32 0.0, %v692
      %v694 = vpop.f32.mrb[0].mxu0
      %695 = vmatprep.mubr.bf16.mxu0 0
      %696 = vmatmul.mubr.bf16.gmra.mrb[0].mxu0 %v637
      %v697 = vpop.f32.mrb[0].mxu0
      %v698 = vadd.f32 0.0, %v697
      %v699 = vpop.f32.mrb[0].mxu0
      %v700 = vpop.f32.mrb[0].mxu0
      %v701 = vadd.f32 0.0, %v700
      %v702 = vpop.f32.mrb[0].mxu0
      %703 = vdwg.mxu0
      %v704 = vadd.f32 %v460, %v674
      %v705 = vadd.f32 %v461, %v677
      %v706 = vadd.f32 %v462, %v682
      %v707 = vadd.f32 %v463, %v685
      %v708 = vadd.f32 %v464, %v690
      %v709 = vadd.f32 %v465, %v693
      %v710 = vadd.f32 %v466, %v698
      %v711 = vadd.f32 %v467, %v701
      %s712 = sadd.s32 %s203, 36
      %s713 = smul.addr %s712, 4
      %s714 = scalar_lea.vmem %s183, %s713
      %v715 = vld [vmem:[%s714] sm:$0xf]
      %v716 = vld [vmem:[%s714 + $0x8] sm:$0xf]
      %v717 = vld [vmem:[%s714 + $0x10] sm:$0xf]
      %v718 = vld [vmem:[%s714 + $0x18] sm:$0xf]
      %v719 = vld [vmem:[%s714 + $0x20] sm:$0xf]
      %v720 = vld [vmem:[%s714 + $0x28] sm:$0xf]
      %v721 = vld [vmem:[%s714 + $0x30] sm:$0xf]
      %v722 = vld [vmem:[%s714 + $0x38] sm:$0xf]
      %v723 = vld [vmem:[%s1 + $0x30] sm:$0xf]
      %v724 = vld [vmem:[%s1 + $0x34] sm:$0xf]
      %v725 = vld [vmem:[%s1 + $0x38] sm:$0xf]
      %v726 = vld [vmem:[%s1 + $0x3c] sm:$0xf]
      %v735 = vunpack.c.l.b16 %v715
      %v736 = vunpack.c.l.b16 %v716
      %v737 = vunpack.c.l.b16 %v717
      %v738 = vunpack.c.l.b16 %v718
      %v739 = vunpack.c.l.b16 %v719
      %v740 = vunpack.c.l.b16 %v720
      %v741 = vunpack.c.l.b16 %v721
      %v742 = vunpack.c.l.b16 %v722
      %v743 = vpack.c.b16 %v736, %v735
      %v744 = vpack.c.b16 %v738, %v737
      %v745 = vpack.c.b16 %v740, %v739
      %v746 = vpack.c.b16 %v742, %v741
      %v751 = vunpack.c.l.b16 %v723
      %v752 = vunpack.c.l.b16 %v724
      %v753 = vunpack.c.l.b16 %v725
      %v754 = vunpack.c.l.b16 %v726
      %v755 = vpack.c.b16 %v752, %v751
      %v756 = vpack.c.b16 %v754, %v753
      %v760 = vsel %vm250, %v743, 0
      %v763 = vsel %vm250, %v744, 0
      %v766 = vsel %vm250, %v745, 0
      %v769 = vsel %vm250, %v746, 0
      %771 = vmatprep.subr.bf16.mxu0 0
      %772 = vmatpush1.bf16.msra.mxu0 %v755
      %773 = vmatprep.subr.bf16.mxu0 0
      %774 = vmatpush1.bf16.msra.mxu0 %v756
      %775 = vmatprep.subr.bf16.mxu0 0
      %776 = vmatpush1.bf16.msra.mxu0 0
      %777 = vmatprep.subr.bf16.mxu0 0
      %778 = vmatpush1.bf16.msra.mxu0 0
      %779 = vmatprep.subr.bf16.mxu0 0
      %780 = vmatpush1.bf16.msra.mxu0 0
      %781 = vmatprep.subr.bf16.mxu0 0
      %782 = vmatpush1.bf16.msra.mxu0 0
      %783 = vmatprep.subr.bf16.mxu0 0
      %784 = vmatpush1.bf16.msra.mxu0 0
      %785 = vmatprep.subr.bf16.mxu0 0
      %786 = vmatpush1.bf16.msra.mxu0 0
      %787 = vmatprep.subr.bf16.mxu0 0
      %788 = vmatpush1.bf16.msra.mxu0 0
      %789 = vmatprep.subr.bf16.mxu0 0
      %790 = vmatpush1.bf16.msra.mxu0 0
      %791 = vmatprep.subr.bf16.mxu0 0
      %792 = vmatpush1.bf16.msra.mxu0 0
      %793 = vmatprep.subr.bf16.mxu0 0
      %794 = vmatpush1.bf16.msra.mxu0 0
      %795 = vmatprep.subr.bf16.mxu0 0
      %796 = vmatpush1.bf16.msra.mxu0 0
      %797 = vmatprep.subr.bf16.mxu0 0
      %798 = vmatpush1.bf16.msra.mxu0 0
      %799 = vmatprep.subr.bf16.mxu0 0
      %800 = vmatpush1.bf16.msra.mxu0 0
      %801 = vmatprep.subr.bf16.mxu0 0
      %802 = vmatpush1.bf16.msra.mxu0 0
      %803 = vmatprep.mubr.bf16.mxu0 0
      %804 = vmatmul.mubr.bf16.gmra.mrb[0].mxu0 %v760
      %v805 = vpop.f32.mrb[0].mxu0
      %v806 = vadd.f32 0.0, %v805
      %v807 = vpop.f32.mrb[0].mxu0
      %v808 = vpop.f32.mrb[0].mxu0
      %v809 = vadd.f32 0.0, %v808
      %v810 = vpop.f32.mrb[0].mxu0
      %811 = vmatprep.mubr.bf16.mxu0 0
      %812 = vmatmul.mubr.bf16.gmra.mrb[0].mxu0 %v763
      %v813 = vpop.f32.mrb[0].mxu0
      %v814 = vadd.f32 0.0, %v813
      %v815 = vpop.f32.mrb[0].mxu0
      %v816 = vpop.f32.mrb[0].mxu0
      %v817 = vadd.f32 0.0, %v816
      %v818 = vpop.f32.mrb[0].mxu0
      %819 = vmatprep.mubr.bf16.mxu0 0
      %820 = vmatmul.mubr.bf16.gmra.mrb[0].mxu0 %v766
      %v821 = vpop.f32.mrb[0].mxu0
      %v822 = vadd.f32 0.0, %v821
      %v823 = vpop.f32.mrb[0].mxu0
      %v824 = vpop.f32.mrb[0].mxu0
      %v825 = vadd.f32 0.0, %v824
      %v826 = vpop.f32.mrb[0].mxu0
      %827 = vmatprep.mubr.bf16.mxu0 0
      %828 = vmatmul.mubr.bf16.gmra.mrb[0].mxu0 %v769
      %v829 = vpop.f32.mrb[0].mxu0
      %v830 = vadd.f32 0.0, %v829
      %v831 = vpop.f32.mrb[0].mxu0
      %v832 = vpop.f32.mrb[0].mxu0
      %v833 = vadd.f32 0.0, %v832
      %v834 = vpop.f32.mrb[0].mxu0
      %835 = vdwg.mxu0
      %v836 = vadd.f32 %v704, %v806
      %v837 = vadd.f32 %v705, %v809
      %v838 = vadd.f32 %v706, %v814
      %v839 = vadd.f32 %v707, %v817
      %v840 = vadd.f32 %v708, %v822
      %v841 = vadd.f32 %v709, %v825
      %v842 = vadd.f32 %v710, %v830
      %v843 = vadd.f32 %v711, %v833
      %s844 = sadd.s32 %s203, 54
      %s845 = smul.addr %s844, 4
      %s846 = scalar_lea.vmem %s183, %s845
      %v847 = vld [vmem:[%s846] sm:$0xf]
      %v848 = vld [vmem:[%s846 + $0x8] sm:$0xf]
      %v849 = vld [vmem:[%s846 + $0x10] sm:$0xf]
      %v850 = vld [vmem:[%s846 + $0x18] sm:$0xf]
      %v851 = vld [vmem:[%s846 + $0x20] sm:$0xf]
      %v852 = vld [vmem:[%s846 + $0x28] sm:$0xf]
      %v853 = vld [vmem:[%s846 + $0x30] sm:$0xf]
      %v854 = vld [vmem:[%s846 + $0x38] sm:$0xf]
      %v855 = vld [vmem:[%s1 + $0x40] sm:$0xf]
      %v856 = vld [vmem:[%s1 + $0x44] sm:$0xf]
      %v857 = vld [vmem:[%s1 + $0x48] sm:$0xf]
      %v858 = vld [vmem:[%s1 + $0x4c] sm:$0xf]
      %v867 = vunpack.c.l.b16 %v847
      %v868 = vunpack.c.l.b16 %v848
      %v869 = vunpack.c.l.b16 %v849
      %v870 = vunpack.c.l.b16 %v850
      %v871 = vunpack.c.l.b16 %v851
      %v872 = vunpack.c.l.b16 %v852
      %v873 = vunpack.c.l.b16 %v853
      %v874 = vunpack.c.l.b16 %v854
      %v875 = vpack.c.b16 %v868, %v867
      %v876 = vpack.c.b16 %v870, %v869
      %v877 = vpack.c.b16 %v872, %v871
      %v878 = vpack.c.b16 %v874, %v873
      %v883 = vunpack.c.l.b16 %v855
      %v884 = vunpack.c.l.b16 %v856
      %v885 = vunpack.c.l.b16 %v857
      %v886 = vunpack.c.l.b16 %v858
      %v887 = vpack.c.b16 %v884, %v883
      %v888 = vpack.c.b16 %v886, %v885
      %v892 = vsel %vm250, %v875, 0
      %v895 = vsel %vm250, %v876, 0
      %v898 = vsel %vm250, %v877, 0
      %v901 = vsel %vm250, %v878, 0
      %903 = vmatprep.subr.bf16.mxu0 0
      %904 = vmatpush1.bf16.msra.mxu0 %v887
      %905 = vmatprep.subr.bf16.mxu0 0
      %906 = vmatpush1.bf16.msra.mxu0 %v888
      %907 = vmatprep.subr.bf16.mxu0 0
      %908 = vmatpush1.bf16.msra.mxu0 0
      %909 = vmatprep.subr.bf16.mxu0 0
      %910 = vmatpush1.bf16.msra.mxu0 0
      %911 = vmatprep.subr.bf16.mxu0 0
      %912 = vmatpush1.bf16.msra.mxu0 0
      %913 = vmatprep.subr.bf16.mxu0 0
      %914 = vmatpush1.bf16.msra.mxu0 0
      %915 = vmatprep.subr.bf16.mxu0 0
      %916 = vmatpush1.bf16.msra.mxu0 0
      %917 = vmatprep.subr.bf16.mxu0 0
      %918 = vmatpush1.bf16.msra.mxu0 0
      %919 = vmatprep.subr.bf16.mxu0 0
      %920 = vmatpush1.bf16.msra.mxu0 0
      %921 = vmatprep.subr.bf16.mxu0 0
      %922 = vmatpush1.bf16.msra.mxu0 0
      %923 = vmatprep.subr.bf16.mxu0 0
      %924 = vmatpush1.bf16.msra.mxu0 0
      %925 = vmatprep.subr.bf16.mxu0 0
      %926 = vmatpush1.bf16.msra.mxu0 0
      %927 = vmatprep.subr.bf16.mxu0 0
      %928 = vmatpush1.bf16.msra.mxu0 0
      %929 = vmatprep.subr.bf16.mxu0 0
      %930 = vmatpush1.bf16.msra.mxu0 0
      %931 = vmatprep.subr.bf16.mxu0 0
      %932 = vmatpush1.bf16.msra.mxu0 0
      %933 = vmatprep.subr.bf16.mxu0 0
      %934 = vmatpush1.bf16.msra.mxu0 0
      %935 = vmatprep.mubr.bf16.mxu0 0
      %936 = vmatmul.mubr.bf16.gmra.mrb[0].mxu0 %v892
      %v937 = vpop.f32.mrb[0].mxu0
      %v938 = vadd.f32 0.0, %v937
      %v939 = vpop.f32.mrb[0].mxu0
      %v940 = vpop.f32.mrb[0].mxu0
      %v941 = vadd.f32 0.0, %v940
      %v942 = vpop.f32.mrb[0].mxu0
      %943 = vmatprep.mubr.bf16.mxu0 0
      %944 = vmatmul.mubr.bf16.gmra.mrb[0].mxu0 %v895
      %v945 = vpop.f32.mrb[0].mxu0
      %v946 = vadd.f32 0.0, %v945
      %v947 = vpop.f32.mrb[0].mxu0
      %v948 = vpop.f32.mrb[0].mxu0
      %v949 = vadd.f32 0.0, %v948
      %v950 = vpop.f32.mrb[0].mxu0
      %951 = vmatprep.mubr.bf16.mxu0 0
      %952 = vmatmul.mubr.bf16.gmra.mrb[0].mxu0 %v898
      %v953 = vpop.f32.mrb[0].mxu0
      %v954 = vadd.f32 0.0, %v953
      %v955 = vpop.f32.mrb[0].mxu0
      %v956 = vpop.f32.mrb[0].mxu0
      %v957 = vadd.f32 0.0, %v956
      %v958 = vpop.f32.mrb[0].mxu0
      %959 = vmatprep.mubr.bf16.mxu0 0
      %960 = vmatmul.mubr.bf16.gmra.mrb[0].mxu0 %v901
      %v961 = vpop.f32.mrb[0].mxu0
      %v962 = vadd.f32 0.0, %v961
      %v963 = vpop.f32.mrb[0].mxu0
      %v964 = vpop.f32.mrb[0].mxu0
      %v965 = vadd.f32 0.0, %v964
      %v966 = vpop.f32.mrb[0].mxu0
      %967 = vdwg.mxu0
      %v968 = vadd.f32 %v836, %v938
      %v969 = vadd.f32 %v837, %v941
      %v970 = vadd.f32 %v838, %v946
      %v971 = vadd.f32 %v839, %v949
      %v972 = vadd.f32 %v840, %v954
      %v973 = vadd.f32 %v841, %v957
      %v974 = vadd.f32 %v842, %v962
      %v975 = vadd.f32 %v843, %v965
      %v976 = vld [vmem:[%s714] sm:$0xf]
      %v977 = vld [vmem:[%s714 + $0x4] sm:$0x1]
      %v978 = vld [vmem:[%s714 + $0x8] sm:$0xf]
      %v979 = vld [vmem:[%s714 + $0xc] sm:$0x1]
      %v980 = vld [vmem:[%s714 + $0x10] sm:$0xf]
      %v981 = vld [vmem:[%s714 + $0x14] sm:$0x1]
      %v982 = vld [vmem:[%s714 + $0x18] sm:$0xf]
      %v983 = vld [vmem:[%s714 + $0x1c] sm:$0x1]
      %v984 = vld [vmem:[%s714 + $0x20] sm:$0xf]
      %v985 = vld [vmem:[%s714 + $0x24] sm:$0x1]
      %v986 = vld [vmem:[%s714 + $0x28] sm:$0xf]
      %v987 = vld [vmem:[%s714 + $0x2c] sm:$0x1]
      %v988 = vld [vmem:[%s714 + $0x30] sm:$0xf]
      %v989 = vld [vmem:[%s714 + $0x34] sm:$0x1]
      %v990 = vld [vmem:[%s714 + $0x38] sm:$0xf]
      %v991 = vld [vmem:[%s714 + $0x3c] sm:$0x1]
      %v993 = vshrl.u32 %v976, 16
      %v995 = vrot.slane %v993, 4
      %v996 = vshll.u32 %v976, 16
      %v998 = vrot.slane %v996, 5
      %v999 = vor.u32 %v995, %v998
      %v1000 = vrot.slane %v999, 4
      %v1002 = vshll.u32 %v977, 16
      %v1004 = vrot.slane %v1002, 5
      %v1005 = vsel %vm486, %v1000, %v1004
      %v1007 = vshrl.u32 %v978, 16
      %v1009 = vrot.slane %v1007, 4
      %v1010 = vshll.u32 %v978, 16
      %v1012 = vrot.slane %v1010, 5
      %v1013 = vor.u32 %v1009, %v1012
      %v1014 = vrot.slane %v1013, 4
      %v1016 = vshll.u32 %v979, 16
      %v1018 = vrot.slane %v1016, 5
      %v1019 = vsel %vm486, %v1014, %v1018
      %v1021 = vshrl.u32 %v980, 16
      %v1023 = vrot.slane %v1021, 4
      %v1024 = vshll.u32 %v980, 16
      %v1026 = vrot.slane %v1024, 5
      %v1027 = vor.u32 %v1023, %v1026
      %v1028 = vrot.slane %v1027, 4
      %v1030 = vshll.u32 %v981, 16
      %v1032 = vrot.slane %v1030, 5
      %v1033 = vsel %vm486, %v1028, %v1032
      %v1035 = vshrl.u32 %v982, 16
      %v1037 = vrot.slane %v1035, 4
      %v1038 = vshll.u32 %v982, 16
      %v1040 = vrot.slane %v1038, 5
      %v1041 = vor.u32 %v1037, %v1040
      %v1042 = vrot.slane %v1041, 4
      %v1044 = vshll.u32 %v983, 16
      %v1046 = vrot.slane %v1044, 5
      %v1047 = vsel %vm486, %v1042, %v1046
      %v1049 = vshrl.u32 %v984, 16
      %v1051 = vrot.slane %v1049, 4
      %v1052 = vshll.u32 %v984, 16
      %v1054 = vrot.slane %v1052, 5
      %v1055 = vor.u32 %v1051, %v1054
      %v1056 = vrot.slane %v1055, 4
      %v1058 = vshll.u32 %v985, 16
      %v1060 = vrot.slane %v1058, 5
      %v1061 = vsel %vm486, %v1056, %v1060
      %v1063 = vshrl.u32 %v986, 16
      %v1065 = vrot.slane %v1063, 4
      %v1066 = vshll.u32 %v986, 16
      %v1068 = vrot.slane %v1066, 5
      %v1069 = vor.u32 %v1065, %v1068
      %v1070 = vrot.slane %v1069, 4
      %v1072 = vshll.u32 %v987, 16
      %v1074 = vrot.slane %v1072, 5
      %v1075 = vsel %vm486, %v1070, %v1074
      %v1077 = vshrl.u32 %v988, 16
      %v1079 = vrot.slane %v1077, 4
      %v1080 = vshll.u32 %v988, 16
      %v1082 = vrot.slane %v1080, 5
      %v1083 = vor.u32 %v1079, %v1082
      %v1084 = vrot.slane %v1083, 4
      %v1086 = vshll.u32 %v989, 16
      %v1088 = vrot.slane %v1086, 5
      %v1089 = vsel %vm486, %v1084, %v1088
      %v1091 = vshrl.u32 %v990, 16
      %v1093 = vrot.slane %v1091, 4
      %v1094 = vshll.u32 %v990, 16
      %v1096 = vrot.slane %v1094, 5
      %v1097 = vor.u32 %v1093, %v1096
      %v1098 = vrot.slane %v1097, 4
      %v1100 = vshll.u32 %v991, 16
      %v1102 = vrot.slane %v1100, 5
      %v1103 = vsel %vm486, %v1098, %v1102
      %v1104 = vld [vmem:[%s1 + $0x50] sm:$0xf]
      %v1105 = vld [vmem:[%s1 + $0x54] sm:$0xf]
      %v1106 = vld [vmem:[%s1 + $0x58] sm:$0xf]
      %v1107 = vld [vmem:[%s1 + $0x5c] sm:$0xf]
      %v1108 = vunpack.c.l.b16 %v1005
      %v1109 = vunpack.c.l.b16 %v1019
      %v1110 = vunpack.c.l.b16 %v1033
      %v1111 = vunpack.c.l.b16 %v1047
      %v1112 = vunpack.c.l.b16 %v1061
      %v1113 = vunpack.c.l.b16 %v1075
      %v1114 = vunpack.c.l.b16 %v1089
      %v1115 = vunpack.c.l.b16 %v1103
      %v1116 = vpack.c.b16 %v1109, %v1108
      %v1117 = vpack.c.b16 %v1111, %v1110
      %v1118 = vpack.c.b16 %v1113, %v1112
      %v1119 = vpack.c.b16 %v1115, %v1114
      %v1124 = vunpack.c.l.b16 %v1104
      %v1125 = vunpack.c.l.b16 %v1105
      %v1126 = vunpack.c.l.b16 %v1106
      %v1127 = vunpack.c.l.b16 %v1107
      %v1128 = vpack.c.b16 %v1125, %v1124
      %v1129 = vpack.c.b16 %v1127, %v1126
      %v1133 = vsel %vm250, %v1116, 0
      %v1136 = vsel %vm250, %v1117, 0
      %v1139 = vsel %vm250, %v1118, 0
      %v1142 = vsel %vm250, %v1119, 0
      %1144 = vmatprep.subr.bf16.mxu0 0
      %1145 = vmatpush1.bf16.msra.mxu0 %v1128
      %1146 = vmatprep.subr.bf16.mxu0 0
      %1147 = vmatpush1.bf16.msra.mxu0 %v1129
      %1148 = vmatprep.subr.bf16.mxu0 0
      %1149 = vmatpush1.bf16.msra.mxu0 0
      %1150 = vmatprep.subr.bf16.mxu0 0
      %1151 = vmatpush1.bf16.msra.mxu0 0
      %1152 = vmatprep.subr.bf16.mxu0 0
      %1153 = vmatpush1.bf16.msra.mxu0 0
      %1154 = vmatprep.subr.bf16.mxu0 0
      %1155 = vmatpush1.bf16.msra.mxu0 0
      %1156 = vmatprep.subr.bf16.mxu0 0
      %1157 = vmatpush1.bf16.msra.mxu0 0
      %1158 = vmatprep.subr.bf16.mxu0 0
      %1159 = vmatpush1.bf16.msra.mxu0 0
      %1160 = vmatprep.subr.bf16.mxu0 0
      %1161 = vmatpush1.bf16.msra.mxu0 0
      %1162 = vmatprep.subr.bf16.mxu0 0
      %1163 = vmatpush1.bf16.msra.mxu0 0
      %1164 = vmatprep.subr.bf16.mxu0 0
      %1165 = vmatpush1.bf16.msra.mxu0 0
      %1166 = vmatprep.subr.bf16.mxu0 0
      %1167 = vmatpush1.bf16.msra.mxu0 0
      %1168 = vmatprep.subr.bf16.mxu0 0
      %1169 = vmatpush1.bf16.msra.mxu0 0
      %1170 = vmatprep.subr.bf16.mxu0 0
      %1171 = vmatpush1.bf16.msra.mxu0 0
      %1172 = vmatprep.subr.bf16.mxu0 0
      %1173 = vmatpush1.bf16.msra.mxu0 0
      %1174 = vmatprep.subr.bf16.mxu0 0
      %1175 = vmatpush1.bf16.msra.mxu0 0
      %1176 = vmatprep.mubr.bf16.mxu0 0
      %1177 = vmatmul.mubr.bf16.gmra.mrb[0].mxu0 %v1133
      %v1178 = vpop.f32.mrb[0].mxu0
      %v1179 = vadd.f32 0.0, %v1178
      %v1180 = vpop.f32.mrb[0].mxu0
      %v1181 = vpop.f32.mrb[0].mxu0
      %v1182 = vadd.f32 0.0, %v1181
      %v1183 = vpop.f32.mrb[0].mxu0
      %1184 = vmatprep.mubr.bf16.mxu0 0
      %1185 = vmatmul.mubr.bf16.gmra.mrb[0].mxu0 %v1136
      %v1186 = vpop.f32.mrb[0].mxu0
      %v1187 = vadd.f32 0.0, %v1186
      %v1188 = vpop.f32.mrb[0].mxu0
      %v1189 = vpop.f32.mrb[0].mxu0
      %v1190 = vadd.f32 0.0, %v1189
      %v1191 = vpop.f32.mrb[0].mxu0
      %1192 = vmatprep.mubr.bf16.mxu0 0
      %1193 = vmatmul.mubr.bf16.gmra.mrb[0].mxu0 %v1139
      %v1194 = vpop.f32.mrb[0].mxu0
      %v1195 = vadd.f32 0.0, %v1194
      %v1196 = vpop.f32.mrb[0].mxu0
      %v1197 = vpop.f32.mrb[0].mxu0
      %v1198 = vadd.f32 0.0, %v1197
      %v1199 = vpop.f32.mrb[0].mxu0
      %1200 = vmatprep.mubr.bf16.mxu0 0
      %1201 = vmatmul.mubr.bf16.gmra.mrb[0].mxu0 %v1142
      %v1202 = vpop.f32.mrb[0].mxu0
      %v1203 = vadd.f32 0.0, %v1202
      %v1204 = vpop.f32.mrb[0].mxu0
      %v1205 = vpop.f32.mrb[0].mxu0
      %v1206 = vadd.f32 0.0, %v1205
      %v1207 = vpop.f32.mrb[0].mxu0
      %1208 = vdwg.mxu0
      %v1209 = vadd.f32 %v968, %v1179
      %v1210 = vadd.f32 %v969, %v1182
      %v1211 = vadd.f32 %v970, %v1187
      %v1212 = vadd.f32 %v971, %v1190
      %v1213 = vadd.f32 %v972, %v1195
      %v1214 = vadd.f32 %v973, %v1198
      %v1215 = vadd.f32 %v974, %v1203
      %v1216 = vadd.f32 %v975, %v1206
      %s1217 = sadd.s32 %s195, 1
      %s1218 = smul.u32 %s1217, 2
      %s1219 = smul.addr %s1218, 4
      %s1220 = scalar_lea.vmem %s183, %s1219
      %v1221 = vld [vmem:[%s1220] sm:$0xf]
      %v1222 = vld [vmem:[%s1220 + $0x8] sm:$0xf]
      %v1223 = vld [vmem:[%s1220 + $0x10] sm:$0xf]
      %v1224 = vld [vmem:[%s1220 + $0x18] sm:$0xf]
      %v1225 = vld [vmem:[%s1220 + $0x20] sm:$0xf]
      %v1226 = vld [vmem:[%s1220 + $0x28] sm:$0xf]
      %v1227 = vld [vmem:[%s1220 + $0x30] sm:$0xf]
      %v1228 = vld [vmem:[%s1220 + $0x38] sm:$0xf]
      %v1229 = vld [vmem:[%s1 + $0x60] sm:$0xf]
      %v1230 = vld [vmem:[%s1 + $0x64] sm:$0xf]
      %v1231 = vld [vmem:[%s1 + $0x68] sm:$0xf]
      %v1232 = vld [vmem:[%s1 + $0x6c] sm:$0xf]
      %v1241 = vunpack.c.l.b16 %v1221
      %v1242 = vunpack.c.l.b16 %v1222
      %v1243 = vunpack.c.l.b16 %v1223
      %v1244 = vunpack.c.l.b16 %v1224
      %v1245 = vunpack.c.l.b16 %v1225
      %v1246 = vunpack.c.l.b16 %v1226
      %v1247 = vunpack.c.l.b16 %v1227
      %v1248 = vunpack.c.l.b16 %v1228
      %v1249 = vpack.c.b16 %v1242, %v1241
      %v1250 = vpack.c.b16 %v1244, %v1243
      %v1251 = vpack.c.b16 %v1246, %v1245
      %v1252 = vpack.c.b16 %v1248, %v1247
      %v1257 = vunpack.c.l.b16 %v1229
      %v1258 = vunpack.c.l.b16 %v1230
      %v1259 = vunpack.c.l.b16 %v1231
      %v1260 = vunpack.c.l.b16 %v1232
      %v1261 = vpack.c.b16 %v1258, %v1257
      %v1262 = vpack.c.b16 %v1260, %v1259
      %v1266 = vsel %vm250, %v1249, 0
      %v1269 = vsel %vm250, %v1250, 0
      %v1272 = vsel %vm250, %v1251, 0
      %v1275 = vsel %vm250, %v1252, 0
      %1277 = vmatprep.subr.bf16.mxu0 0
      %1278 = vmatpush1.bf16.msra.mxu0 %v1261
      %1279 = vmatprep.subr.bf16.mxu0 0
      %1280 = vmatpush1.bf16.msra.mxu0 %v1262
      %1281 = vmatprep.subr.bf16.mxu0 0
      %1282 = vmatpush1.bf16.msra.mxu0 0
      %1283 = vmatprep.subr.bf16.mxu0 0
      %1284 = vmatpush1.bf16.msra.mxu0 0
      %1285 = vmatprep.subr.bf16.mxu0 0
      %1286 = vmatpush1.bf16.msra.mxu0 0
      %1287 = vmatprep.subr.bf16.mxu0 0
      %1288 = vmatpush1.bf16.msra.mxu0 0
      %1289 = vmatprep.subr.bf16.mxu0 0
      %1290 = vmatpush1.bf16.msra.mxu0 0
      %1291 = vmatprep.subr.bf16.mxu0 0
      %1292 = vmatpush1.bf16.msra.mxu0 0
      %1293 = vmatprep.subr.bf16.mxu0 0
      %1294 = vmatpush1.bf16.msra.mxu0 0
      %1295 = vmatprep.subr.bf16.mxu0 0
      %1296 = vmatpush1.bf16.msra.mxu0 0
      %1297 = vmatprep.subr.bf16.mxu0 0
      %1298 = vmatpush1.bf16.msra.mxu0 0
      %1299 = vmatprep.subr.bf16.mxu0 0
      %1300 = vmatpush1.bf16.msra.mxu0 0
      %1301 = vmatprep.subr.bf16.mxu0 0
      %1302 = vmatpush1.bf16.msra.mxu0 0
      %1303 = vmatprep.subr.bf16.mxu0 0
      %1304 = vmatpush1.bf16.msra.mxu0 0
      %1305 = vmatprep.subr.bf16.mxu0 0
      %1306 = vmatpush1.bf16.msra.mxu0 0
      %1307 = vmatprep.subr.bf16.mxu0 0
      %1308 = vmatpush1.bf16.msra.mxu0 0
      %1309 = vmatprep.mubr.bf16.mxu0 0
      %1310 = vmatmul.mubr.bf16.gmra.mrb[0].mxu0 %v1266
      %v1311 = vpop.f32.mrb[0].mxu0
      %v1312 = vadd.f32 0.0, %v1311
      %v1313 = vpop.f32.mrb[0].mxu0
      %v1314 = vpop.f32.mrb[0].mxu0
      %v1315 = vadd.f32 0.0, %v1314
      %v1316 = vpop.f32.mrb[0].mxu0
      %1317 = vmatprep.mubr.bf16.mxu0 0
      %1318 = vmatmul.mubr.bf16.gmra.mrb[0].mxu0 %v1269
      %v1319 = vpop.f32.mrb[0].mxu0
      %v1320 = vadd.f32 0.0, %v1319
      %v1321 = vpop.f32.mrb[0].mxu0
      %v1322 = vpop.f32.mrb[0].mxu0
      %v1323 = vadd.f32 0.0, %v1322
      %v1324 = vpop.f32.mrb[0].mxu0
      %1325 = vmatprep.mubr.bf16.mxu0 0
      %1326 = vmatmul.mubr.bf16.gmra.mrb[0].mxu0 %v1272
      %v1327 = vpop.f32.mrb[0].mxu0
      %v1328 = vadd.f32 0.0, %v1327
      %v1329 = vpop.f32.mrb[0].mxu0
      %v1330 = vpop.f32.mrb[0].mxu0
      %v1331 = vadd.f32 0.0, %v1330
      %v1332 = vpop.f32.mrb[0].mxu0
      %1333 = vmatprep.mubr.bf16.mxu0 0
      %1334 = vmatmul.mubr.bf16.gmra.mrb[0].mxu0 %v1275
      %v1335 = vpop.f32.mrb[0].mxu0
      %v1336 = vadd.f32 0.0, %v1335
      %v1337 = vpop.f32.mrb[0].mxu0
      %v1338 = vpop.f32.mrb[0].mxu0
      %v1339 = vadd.f32 0.0, %v1338
      %v1340 = vpop.f32.mrb[0].mxu0
      %1341 = vdwg.mxu0
      %v1342 = vadd.f32 %v1209, %v1312
      %v1343 = vadd.f32 %v1210, %v1315
      %v1344 = vadd.f32 %v1211, %v1320
      %v1345 = vadd.f32 %v1212, %v1323
      %v1346 = vadd.f32 %v1213, %v1328
      %v1347 = vadd.f32 %v1214, %v1331
      %v1348 = vadd.f32 %v1215, %v1336
      %v1349 = vadd.f32 %v1216, %v1339
      %s1350 = sadd.s32 %s1218, 18
      %s1351 = smul.addr %s1350, 4
      %s1352 = scalar_lea.vmem %s183, %s1351
      %v1353 = vld [vmem:[%s1352] sm:$0xf]
      %v1354 = vld [vmem:[%s1352 + $0x8] sm:$0xf]
      %v1355 = vld [vmem:[%s1352 + $0x10] sm:$0xf]
      %v1356 = vld [vmem:[%s1352 + $0x18] sm:$0xf]
      %v1357 = vld [vmem:[%s1352 + $0x20] sm:$0xf]
      %v1358 = vld [vmem:[%s1352 + $0x28] sm:$0xf]
      %v1359 = vld [vmem:[%s1352 + $0x30] sm:$0xf]
      %v1360 = vld [vmem:[%s1352 + $0x38] sm:$0xf]
      %v1361 = vld [vmem:[%s1 + $0x70] sm:$0xf]
      %v1362 = vld [vmem:[%s1 + $0x74] sm:$0xf]
      %v1363 = vld [vmem:[%s1 + $0x78] sm:$0xf]
      %v1364 = vld [vmem:[%s1 + $0x7c] sm:$0xf]
      %v1373 = vunpack.c.l.b16 %v1353
      %v1374 = vunpack.c.l.b16 %v1354
      %v1375 = vunpack.c.l.b16 %v1355
      %v1376 = vunpack.c.l.b16 %v1356
      %v1377 = vunpack.c.l.b16 %v1357
      %v1378 = vunpack.c.l.b16 %v1358
      %v1379 = vunpack.c.l.b16 %v1359
      %v1380 = vunpack.c.l.b16 %v1360
      %v1381 = vpack.c.b16 %v1374, %v1373
      %v1382 = vpack.c.b16 %v1376, %v1375
      %v1383 = vpack.c.b16 %v1378, %v1377
      %v1384 = vpack.c.b16 %v1380, %v1379
      %v1389 = vunpack.c.l.b16 %v1361
      %v1390 = vunpack.c.l.b16 %v1362
      %v1391 = vunpack.c.l.b16 %v1363
      %v1392 = vunpack.c.l.b16 %v1364
      %v1393 = vpack.c.b16 %v1390, %v1389
      %v1394 = vpack.c.b16 %v1392, %v1391
      %v1398 = vsel %vm250, %v1381, 0
      %v1401 = vsel %vm250, %v1382, 0
      %v1404 = vsel %vm250, %v1383, 0
      %v1407 = vsel %vm250, %v1384, 0
      %1409 = vmatprep.subr.bf16.mxu0 0
      %1410 = vmatpush1.bf16.msra.mxu0 %v1393
      %1411 = vmatprep.subr.bf16.mxu0 0
      %1412 = vmatpush1.bf16.msra.mxu0 %v1394
      %1413 = vmatprep.subr.bf16.mxu0 0
      %1414 = vmatpush1.bf16.msra.mxu0 0
      %1415 = vmatprep.subr.bf16.mxu0 0
      %1416 = vmatpush1.bf16.msra.mxu0 0
      %1417 = vmatprep.subr.bf16.mxu0 0
      %1418 = vmatpush1.bf16.msra.mxu0 0
      %1419 = vmatprep.subr.bf16.mxu0 0
      %1420 = vmatpush1.bf16.msra.mxu0 0
      %1421 = vmatprep.subr.bf16.mxu0 0
      %1422 = vmatpush1.bf16.msra.mxu0 0
      %1423 = vmatprep.subr.bf16.mxu0 0
      %1424 = vmatpush1.bf16.msra.mxu0 0
      %1425 = vmatprep.subr.bf16.mxu0 0
      %1426 = vmatpush1.bf16.msra.mxu0 0
      %1427 = vmatprep.subr.bf16.mxu0 0
      %1428 = vmatpush1.bf16.msra.mxu0 0
      %1429 = vmatprep.subr.bf16.mxu0 0
      %1430 = vmatpush1.bf16.msra.mxu0 0
      %1431 = vmatprep.subr.bf16.mxu0 0
      %1432 = vmatpush1.bf16.msra.mxu0 0
      %1433 = vmatprep.subr.bf16.mxu0 0
      %1434 = vmatpush1.bf16.msra.mxu0 0
      %1435 = vmatprep.subr.bf16.mxu0 0
      %1436 = vmatpush1.bf16.msra.mxu0 0
      %1437 = vmatprep.subr.bf16.mxu0 0
      %1438 = vmatpush1.bf16.msra.mxu0 0
      %1439 = vmatprep.subr.bf16.mxu0 0
      %1440 = vmatpush1.bf16.msra.mxu0 0
      %1441 = vmatprep.mubr.bf16.mxu0 0
      %1442 = vmatmul.mubr.bf16.gmra.mrb[0].mxu0 %v1398
      %v1443 = vpop.f32.mrb[0].mxu0
      %v1444 = vadd.f32 0.0, %v1443
      %v1445 = vpop.f32.mrb[0].mxu0
      %v1446 = vpop.f32.mrb[0].mxu0
      %v1447 = vadd.f32 0.0, %v1446
      %v1448 = vpop.f32.mrb[0].mxu0
      %1449 = vmatprep.mubr.bf16.mxu0 0
      %1450 = vmatmul.mubr.bf16.gmra.mrb[0].mxu0 %v1401
      %v1451 = vpop.f32.mrb[0].mxu0
      %v1452 = vadd.f32 0.0, %v1451
      %v1453 = vpop.f32.mrb[0].mxu0
      %v1454 = vpop.f32.mrb[0].mxu0
      %v1455 = vadd.f32 0.0, %v1454
      %v1456 = vpop.f32.mrb[0].mxu0
      %1457 = vmatprep.mubr.bf16.mxu0 0
      %1458 = vmatmul.mubr.bf16.gmra.mrb[0].mxu0 %v1404
      %v1459 = vpop.f32.mrb[0].mxu0
      %v1460 = vadd.f32 0.0, %v1459
      %v1461 = vpop.f32.mrb[0].mxu0
      %v1462 = vpop.f32.mrb[0].mxu0
      %v1463 = vadd.f32 0.0, %v1462
      %v1464 = vpop.f32.mrb[0].mxu0
      %1465 = vmatprep.mubr.bf16.mxu0 0
      %1466 = vmatmul.mubr.bf16.gmra.mrb[0].mxu0 %v1407
      %v1467 = vpop.f32.mrb[0].mxu0
      %v1468 = vadd.f32 0.0, %v1467
      %v1469 = vpop.f32.mrb[0].mxu0
      %v1470 = vpop.f32.mrb[0].mxu0
      %v1471 = vadd.f32 0.0, %v1470
      %v1472 = vpop.f32.mrb[0].mxu0
      %1473 = vdwg.mxu0
      %v1474 = vadd.f32 %v1342, %v1444
      %v1475 = vadd.f32 %v1343, %v1447
      %v1476 = vadd.f32 %v1344, %v1452
      %v1477 = vadd.f32 %v1345, %v1455
      %v1478 = vadd.f32 %v1346, %v1460
      %v1479 = vadd.f32 %v1347, %v1463
      %v1480 = vadd.f32 %v1348, %v1468
      %v1481 = vadd.f32 %v1349, %v1471
      %v1482 = vld [vmem:[%s1220] sm:$0xf]
      %v1483 = vld [vmem:[%s1220 + $0x4] sm:$0x1]
      %v1484 = vld [vmem:[%s1220 + $0x8] sm:$0xf]
      %v1485 = vld [vmem:[%s1220 + $0xc] sm:$0x1]
      %v1486 = vld [vmem:[%s1220 + $0x10] sm:$0xf]
      %v1487 = vld [vmem:[%s1220 + $0x14] sm:$0x1]
      %v1488 = vld [vmem:[%s1220 + $0x18] sm:$0xf]
      %v1489 = vld [vmem:[%s1220 + $0x1c] sm:$0x1]
      %v1490 = vld [vmem:[%s1220 + $0x20] sm:$0xf]
      %v1491 = vld [vmem:[%s1220 + $0x24] sm:$0x1]
      %v1492 = vld [vmem:[%s1220 + $0x28] sm:$0xf]
      %v1493 = vld [vmem:[%s1220 + $0x2c] sm:$0x1]
      %v1494 = vld [vmem:[%s1220 + $0x30] sm:$0xf]
      %v1495 = vld [vmem:[%s1220 + $0x34] sm:$0x1]
      %v1496 = vld [vmem:[%s1220 + $0x38] sm:$0xf]
      %v1497 = vld [vmem:[%s1220 + $0x3c] sm:$0x1]
      %v1499 = vshrl.u32 %v1482, 16
      %v1501 = vrot.slane %v1499, 4
      %v1502 = vshll.u32 %v1482, 16
      %v1504 = vrot.slane %v1502, 5
      %v1505 = vor.u32 %v1501, %v1504
      %v1506 = vrot.slane %v1505, 4
      %v1508 = vshll.u32 %v1483, 16
      %v1510 = vrot.slane %v1508, 5
      %v1511 = vsel %vm486, %v1506, %v1510
      %v1513 = vshrl.u32 %v1484, 16
      %v1515 = vrot.slane %v1513, 4
      %v1516 = vshll.u32 %v1484, 16
      %v1518 = vrot.slane %v1516, 5
      %v1519 = vor.u32 %v1515, %v1518
      %v1520 = vrot.slane %v1519, 4
      %v1522 = vshll.u32 %v1485, 16
      %v1524 = vrot.slane %v1522, 5
      %v1525 = vsel %vm486, %v1520, %v1524
      %v1527 = vshrl.u32 %v1486, 16
      %v1529 = vrot.slane %v1527, 4
      %v1530 = vshll.u32 %v1486, 16
      %v1532 = vrot.slane %v1530, 5
      %v1533 = vor.u32 %v1529, %v1532
      %v1534 = vrot.slane %v1533, 4
      %v1536 = vshll.u32 %v1487, 16
      %v1538 = vrot.slane %v1536, 5
      %v1539 = vsel %vm486, %v1534, %v1538
      %v1541 = vshrl.u32 %v1488, 16
      %v1543 = vrot.slane %v1541, 4
      %v1544 = vshll.u32 %v1488, 16
      %v1546 = vrot.slane %v1544, 5
      %v1547 = vor.u32 %v1543, %v1546
      %v1548 = vrot.slane %v1547, 4
      %v1550 = vshll.u32 %v1489, 16
      %v1552 = vrot.slane %v1550, 5
      %v1553 = vsel %vm486, %v1548, %v1552
      %v1555 = vshrl.u32 %v1490, 16
      %v1557 = vrot.slane %v1555, 4
      %v1558 = vshll.u32 %v1490, 16
      %v1560 = vrot.slane %v1558, 5
      %v1561 = vor.u32 %v1557, %v1560
      %v1562 = vrot.slane %v1561, 4
      %v1564 = vshll.u32 %v1491, 16
      %v1566 = vrot.slane %v1564, 5
      %v1567 = vsel %vm486, %v1562, %v1566
      %v1569 = vshrl.u32 %v1492, 16
      %v1571 = vrot.slane %v1569, 4
      %v1572 = vshll.u32 %v1492, 16
      %v1574 = vrot.slane %v1572, 5
      %v1575 = vor.u32 %v1571, %v1574
      %v1576 = vrot.slane %v1575, 4
      %v1578 = vshll.u32 %v1493, 16
      %v1580 = vrot.slane %v1578, 5
      %v1581 = vsel %vm486, %v1576, %v1580
      %v1583 = vshrl.u32 %v1494, 16
      %v1585 = vrot.slane %v1583, 4
      %v1586 = vshll.u32 %v1494, 16
      %v1588 = vrot.slane %v1586, 5
      %v1589 = vor.u32 %v1585, %v1588
      %v1590 = vrot.slane %v1589, 4
      %v1592 = vshll.u32 %v1495, 16
      %v1594 = vrot.slane %v1592, 5
      %v1595 = vsel %vm486, %v1590, %v1594
      %v1597 = vshrl.u32 %v1496, 16
      %v1599 = vrot.slane %v1597, 4
      %v1600 = vshll.u32 %v1496, 16
      %v1602 = vrot.slane %v1600, 5
      %v1603 = vor.u32 %v1599, %v1602
      %v1604 = vrot.slane %v1603, 4
      %v1606 = vshll.u32 %v1497, 16
      %v1608 = vrot.slane %v1606, 5
      %v1609 = vsel %vm486, %v1604, %v1608
      %v1610 = vld [vmem:[%s1 + $0x80] sm:$0xf]
      %v1611 = vld [vmem:[%s1 + $0x84] sm:$0xf]
      %v1612 = vld [vmem:[%s1 + $0x88] sm:$0xf]
      %v1613 = vld [vmem:[%s1 + $0x8c] sm:$0xf]
      %v1614 = vunpack.c.l.b16 %v1511
      %v1615 = vunpack.c.l.b16 %v1525
      %v1616 = vunpack.c.l.b16 %v1539
      %v1617 = vunpack.c.l.b16 %v1553
      %v1618 = vunpack.c.l.b16 %v1567
      %v1619 = vunpack.c.l.b16 %v1581
      %v1620 = vunpack.c.l.b16 %v1595
      %v1621 = vunpack.c.l.b16 %v1609
      %v1622 = vpack.c.b16 %v1615, %v1614
      %v1623 = vpack.c.b16 %v1617, %v1616
      %v1624 = vpack.c.b16 %v1619, %v1618
      %v1625 = vpack.c.b16 %v1621, %v1620
      %v1630 = vunpack.c.l.b16 %v1610
      %v1631 = vunpack.c.l.b16 %v1611
      %v1632 = vunpack.c.l.b16 %v1612
      %v1633 = vunpack.c.l.b16 %v1613
      %v1634 = vpack.c.b16 %v1631, %v1630
      %v1635 = vpack.c.b16 %v1633, %v1632
      %v1639 = vsel %vm250, %v1622, 0
      %v1642 = vsel %vm250, %v1623, 0
      %v1645 = vsel %vm250, %v1624, 0
      %v1648 = vsel %vm250, %v1625, 0
      %1650 = vmatprep.subr.bf16.mxu0 0
      %1651 = vmatpush1.bf16.msra.mxu0 %v1634
      %1652 = vmatprep.subr.bf16.mxu0 0
      %1653 = vmatpush1.bf16.msra.mxu0 %v1635
      %1654 = vmatprep.subr.bf16.mxu0 0
      %1655 = vmatpush1.bf16.msra.mxu0 0
      %1656 = vmatprep.subr.bf16.mxu0 0
      %1657 = vmatpush1.bf16.msra.mxu0 0
      %1658 = vmatprep.subr.bf16.mxu0 0
      %1659 = vmatpush1.bf16.msra.mxu0 0
      %1660 = vmatprep.subr.bf16.mxu0 0
      %1661 = vmatpush1.bf16.msra.mxu0 0
      %1662 = vmatprep.subr.bf16.mxu0 0
      %1663 = vmatpush1.bf16.msra.mxu0 0
      %1664 = vmatprep.subr.bf16.mxu0 0
      %1665 = vmatpush1.bf16.msra.mxu0 0
      %1666 = vmatprep.subr.bf16.mxu0 0
      %1667 = vmatpush1.bf16.msra.mxu0 0
      %1668 = vmatprep.subr.bf16.mxu0 0
      %1669 = vmatpush1.bf16.msra.mxu0 0
      %1670 = vmatprep.subr.bf16.mxu0 0
      %1671 = vmatpush1.bf16.msra.mxu0 0
      %1672 = vmatprep.subr.bf16.mxu0 0
      %1673 = vmatpush1.bf16.msra.mxu0 0
      %1674 = vmatprep.subr.bf16.mxu0 0
      %1675 = vmatpush1.bf16.msra.mxu0 0
      %1676 = vmatprep.subr.bf16.mxu0 0
      %1677 = vmatpush1.bf16.msra.mxu0 0
      %1678 = vmatprep.subr.bf16.mxu0 0
      %1679 = vmatpush1.bf16.msra.mxu0 0
      %1680 = vmatprep.subr.bf16.mxu0 0
      %1681 = vmatpush1.bf16.msra.mxu0 0
      %1682 = vmatprep.mubr.bf16.mxu0 0
      %1683 = vmatmul.mubr.bf16.gmra.mrb[0].mxu0 %v1639
      %v1684 = vpop.f32.mrb[0].mxu0
      %v1685 = vadd.f32 0.0, %v1684
      %v1686 = vpop.f32.mrb[0].mxu0
      %v1687 = vpop.f32.mrb[0].mxu0
      %v1688 = vadd.f32 0.0, %v1687
      %v1689 = vpop.f32.mrb[0].mxu0
      %1690 = vmatprep.mubr.bf16.mxu0 0
      %1691 = vmatmul.mubr.bf16.gmra.mrb[0].mxu0 %v1642
      %v1692 = vpop.f32.mrb[0].mxu0
      %v1693 = vadd.f32 0.0, %v1692
      %v1694 = vpop.f32.mrb[0].mxu0
      %v1695 = vpop.f32.mrb[0].mxu0
      %v1696 = vadd.f32 0.0, %v1695
      %v1697 = vpop.f32.mrb[0].mxu0
      %1698 = vmatprep.mubr.bf16.mxu0 0
      %1699 = vmatmul.mubr.bf16.gmra.mrb[0].mxu0 %v1645
      %v1700 = vpop.f32.mrb[0].mxu0
      %v1701 = vadd.f32 0.0, %v1700
      %v1702 = vpop.f32.mrb[0].mxu0
      %v1703 = vpop.f32.mrb[0].mxu0
      %v1704 = vadd.f32 0.0, %v1703
      %v1705 = vpop.f32.mrb[0].mxu0
      %1706 = vmatprep.mubr.bf16.mxu0 0
      %1707 = vmatmul.mubr.bf16.gmra.mrb[0].mxu0 %v1648
      %v1708 = vpop.f32.mrb[0].mxu0
      %v1709 = vadd.f32 0.0, %v1708
      %v1710 = vpop.f32.mrb[0].mxu0
      %v1711 = vpop.f32.mrb[0].mxu0
      %v1712 = vadd.f32 0.0, %v1711
      %v1713 = vpop.f32.mrb[0].mxu0
      %1714 = vdwg.mxu0
      %v1715 = vadd.f32 %v1474, %v1685
      %v1716 = vadd.f32 %v1475, %v1688
      %v1717 = vadd.f32 %v1476, %v1693
      %v1718 = vadd.f32 %v1477, %v1696
      %v1719 = vadd.f32 %v1478, %v1701
      %v1720 = vadd.f32 %v1479, %v1704
      %v1721 = vadd.f32 %v1480, %v1709
      %v1722 = vadd.f32 %v1481, %v1712
      %v1723 = vmax.f32 %v1715, 0.0
      %v1724 = vmax.f32 %v1716, 0.0
      %v1725 = vmax.f32 %v1717, 0.0
      %v1726 = vmax.f32 %v1718, 0.0
      %v1727 = vmax.f32 %v1719, 0.0
      %v1728 = vmax.f32 %v1720, 0.0
      %v1729 = vmax.f32 %v1721, 0.0
      %v1730 = vmax.f32 %v1722, 0.0
      %v1731 = vpack.c.bf16 %v1723, %v1723
      %v1732 = vpack.c.bf16 %v1724, %v1724
      %v1733 = vpack.c.bf16 %v1725, %v1725
      %v1734 = vpack.c.bf16 %v1726, %v1726
      %v1735 = vpack.c.bf16 %v1727, %v1727
      %v1736 = vpack.c.bf16 %v1728, %v1728
      %v1737 = vpack.c.bf16 %v1729, %v1729
      %v1738 = vpack.c.bf16 %v1730, %v1730
      %vm1739 = vcmask 257024
      %1740 = vst.msk [vmem:[%s192] sm:$0xf] %vm1739, %v1731
      %1741 = vst.msk [vmem:[%s192 + $0x4] sm:$0xf] %vm1739, %v1732
      %1742 = vst.msk [vmem:[%s192 + $0x8] sm:$0xf] %vm1739, %v1733
      %1743 = vst.msk [vmem:[%s192 + $0xc] sm:$0xf] %vm1739, %v1734
      %1744 = vst.msk [vmem:[%s192 + $0x10] sm:$0xf] %vm1739, %v1735
      %1745 = vst.msk [vmem:[%s192 + $0x14] sm:$0xf] %vm1739, %v1736
      %1746 = vst.msk [vmem:[%s192 + $0x18] sm:$0xf] %vm1739, %v1737
      %1747 = vst.msk [vmem:[%s192 + $0x1c] sm:$0xf] %vm1739, %v1738
      %s1748 = smul.u32 8, %s19
      %p1749 = scmp.lt.s32.totalorder %s18, 1
      %s1750 = scalar_select %p1749, %s18, 1
      %p1751 = scmp.lt.s32.totalorder %s1748, 7
      %s1752 = scalar_select %p1751, %s1748, 7
      %s1753 = smul.addr %s1750, 8
      %s1754 = sadd.s32 %s1752, %s1753
      %s1755 = smul.addr %s1754, 4
      %s1756 = scalar_lea.vmem %s3, %s1755
      // Predicated region
      $region33: #{two_d_branch_forward.3} parent=31 // pred_check
        %p1757 = pneg %p114
      $region34: #{two_d_branch_forward.3} parent=31 // pred_check_branch
        %1759 = sbr.rel (%p1757) target = $region36
      $region35: #{two_d_branch_forward.3} parent=31 // pred_region
        %s1760 = smul.u32 8, %s19
      $region36: #{two_d_branch_forward.3} parent=31 // pred_fallthru
        _
    $region32: #{two_d_branch_forward.3} parent=5 // pred_fallthru
      _
    %p1761 = scmp.le.s32.totalorder 2, %s9
    // Predicated region
    $region37: #{two_d_branch_forward.3} parent=5 // pred_check
      %p1762 = pneg %p1761
    $region38: #{two_d_branch_forward.3} parent=5 // pred_check_branch
      %1764 = sbr.rel (%p1762) target = $region40
    $region39: #{two_d_branch_forward.3} parent=5 // pred_region
      %s1765 = ssub.s32 %s9, 2
      // Predicated region
      $region41: #{two_d_branch_forward.3} parent=39 // pred_check
        %p1766 = pneg %p120
      $region42: #{two_d_branch_forward.3} parent=39 // pred_check_branch
        %1768 = sbr.rel (%p1766) target = $region44
      $region43: #{two_d_branch_forward.3} parent=39 // pred_region
        %s1769 = smul.u32 8, %s21
        %p1770 = scmp.lt.s32.totalorder %s20, 1
        %s1771 = scalar_select %p1770, %s20, 1
        %p1772 = scmp.lt.s32.totalorder %s1769, 7
        %s1773 = scalar_select %p1772, %s1769, 7
        %s1774 = smul.addr %s1771, 8
        %s1775 = sadd.s32 %s1773, %s1774
        %s1776 = smul.addr %s1775, 4
        %s1777 = scalar_lea.vmem %s3, %s1776
      $region44: #{two_d_branch_forward.3} parent=39 // pred_fallthru
        _
    $region40: #{two_d_branch_forward.3} parent=5 // pred_fallthru
      _
  $region6: #{two_d_branch_forward.3} parent=0 // loop_footer
    %s13 = sadd.s32 1, %s9
  $region7: #{two_d_branch_forward.3} parent=0 // loop_footer_branch
    %8 = sbr.rel target = $region3
  $region8: #{two_d_branch_forward.3} parent=0 // loop_exit
    _

// kernel: two_d_branch_forward.4
$region0: #{two_d_branch_forward.4}
  #allocation0 [shape = 'u32[]', space=smem, size = 0x4, offset = 0x4, fixed_abs, tag = 'smem constant byte address 0x4 - core index']
  #allocation1 [shape = 'u32[144,128]{1,0:T(1,128)}', space=vmem, size = 0x12000, scoped, tag = 'internal scratch']
  %s0 = inlined_call_operand.vmem [shape: bf16[2,1,10,10,32], index: 0, kind: input, shape index: {}]
  %s1 = inlined_call_operand.vmem [shape: bf16[288,32], index: 1, kind: input, shape index: {}]
  %s2 = inlined_call_operand.vmem [shape: f32[1,32], index: 2, kind: input, shape index: {}]
  %s3 = inlined_call_operand.vmem [shape: f32[2,8,8,32], index: 3, kind: output, shape index: {}]
  %s4 = sld [smem:[#allocation0]]
  $region45: #{two_d_branch_forward.4} parent=0
    _
  %s6 = ssub.s32 1, %s4
  %s7 = scalar_select 0, %s6, %s4
  loop: start=0, step=1, limit=4
  $region2: #{two_d_branch_forward.4} parent=0 // loop_pre_header
    _
  $region3: #{two_d_branch_forward.4} parent=0 // loop_header
    %s9 = sphi 0, %s13
    %p10 = scmp.ge.s32.totalorder %s9, 4
    %s16 = sphi 0, %s28
    %s17 = sphi 0, %s24
    %s18 = sphi 0, %s16
    %s19 = sphi 0, %s17
    %s20 = sphi 0, %s18
    %s21 = sphi 0, %s19
    %s31 = sphi 0, %s33
    %s34 = sphi 0, %s31
    %s35 = sphi 0, %s34
    %s51 = sphi 0, %s35
    %s55 = sphi 0, %s55
    %s57 = sphi 0, %s55
    %s58 = sphi 0, %s57
    %s72 = sphi 0, %s58
    %s76 = sphi 0, %s76
    %s78 = sphi 0, %s76
    %s79 = sphi 0, %s78
    %s93 = sphi 0, %s79
    %s101 = sphi 0, %s103
    %s104 = sphi 0, %s101
    %s105 = sphi 0, %s104
    %s121 = sphi 0, %s105
  $region4: #{two_d_branch_forward.4} parent=0 // loop_header_branch
    %12 = sbr.rel (%p10) target = $region8
  $region5: #{two_d_branch_forward.4} parent=0 // loop_body
    %s14 = ssub.s32 %s9, 1
    %s15 = ssub.s32 %s9, 2
    %s22 = sadd.s32 1, %s17
    %p23 = scmp.ge.s32.totalorder %s22, 1
    %s24 = scalar_select %p23, 0, %s22
    %s25 = sadd.s32 1, %s16
    %s26 = scalar_select %p23, %s25, %s16
    %p27 = scmp.ge.s32.totalorder %s26, 2
    %s28 = scalar_select %p27, 0, %s26
    %s29 = ssub.s32 %s16, %s28
    %p30 = scmp.eq.s32.totalorder %s29, 0
    %s32 = sadd.s32 %s31, 1
    %s33 = scalar_select %p30, %s31, %s32
    %p36 = pneg %p30
    %p37 = scmp.eq.s32.totalorder %s9, 1
    %p38 = por %p36, %p37
    %p39 = scmp.ne.s32.totalorder %s31, %s34
    %p40 = scmp.eq.s32.totalorder %s9, 0
    %p41 = por %p39, %p40
    %p42 = scmp.ne.s32.totalorder %s31, %s34
    %p43 = scmp.eq.s32.totalorder %s14, 1
    %p44 = por %p42, %p43
    %p45 = scmp.ne.s32.totalorder %s34, %s35
    %p46 = scmp.eq.s32.totalorder %s14, 0
    %p47 = por %p45, %p46
    %p48 = scmp.ne.s32.totalorder %s34, %s35
    %p49 = scmp.eq.s32.totalorder %s15, 1
    %p50 = por %p48, %p49
    %p52 = scmp.ne.s32.totalorder %s35, %s51
    %p53 = scmp.eq.s32.totalorder %s15, 0
    %p54 = por %p52, %p53
    %s56 = sadd.s32 %s55, 1
    %p59 = scmp.eq.s32.totalorder %s9, 1
    %p60 = scmp.ne.s32.totalorder %s55, %s57
    %p61 = scmp.eq.s32.totalorder %s9, 0
    %p62 = por %p60, %p61
    %p63 = scmp.ne.s32.totalorder %s55, %s57
    %p64 = scmp.eq.s32.totalorder %s14, 1
    %p65 = por %p63, %p64
    %p66 = scmp.ne.s32.totalorder %s57, %s58
    %p67 = scmp.eq.s32.totalorder %s14, 0
    %p68 = por %p66, %p67
    %p69 = scmp.ne.s32.totalorder %s57, %s58
    %p70 = scmp.eq.s32.totalorder %s15, 1
    %p71 = por %p69, %p70
    %p73 = scmp.ne.s32.totalorder %s58, %s72
    %p74 = scmp.eq.s32.totalorder %s15, 0
    %p75 = por %p73, %p74
    %s77 = sadd.s32 %s76, 1
    %p80 = scmp.eq.s32.totalorder %s9, 1
    %p81 = scmp.ne.s32.totalorder %s76, %s78
    %p82 = scmp.eq.s32.totalorder %s9, 0
    %p83 = por %p81, %p82
    %p84 = scmp.ne.s32.totalorder %s76, %s78
    %p85 = scmp.eq.s32.totalorder %s14, 1
    %p86 = por %p84, %p85
    %p87 = scmp.ne.s32.totalorder %s78, %s79
    %p88 = scmp.eq.s32.totalorder %s14, 0
    %p89 = por %p87, %p88
    %p90 = scmp.ne.s32.totalorder %s78, %s79
    %p91 = scmp.eq.s32.totalorder %s15, 1
    %p92 = por %p90, %p91
    %p94 = scmp.ne.s32.totalorder %s79, %s93
    %p95 = scmp.eq.s32.totalorder %s15, 0
    %p96 = por %p94, %p95
    %s97 = ssub.s32 %s16, %s28
    %s98 = ssub.s32 %s17, %s24
    %s99 = sor.u32 %s97, %s98
    %p100 = scmp.eq.s32.totalorder %s99, 0
    %s102 = sadd.s32 %s101, 1
    %s103 = scalar_select %p100, %s101, %s102
    %p106 = pneg %p100
    %p107 = scmp.eq.s32.totalorder %s9, 1
    %p108 = por %p106, %p107
    %p109 = scmp.ne.s32.totalorder %s101, %s104
    %p110 = scmp.eq.s32.totalorder %s9, 0
    %p111 = por %p109, %p110
    %p112 = scmp.ne.s32.totalorder %s101, %s104
    %p113 = scmp.eq.s32.totalorder %s14, 1
    %p114 = por %p112, %p113
    %p115 = scmp.ne.s32.totalorder %s104, %s105
    %p116 = scmp.eq.s32.totalorder %s14, 0
    %p117 = por %p115, %p116
    %p118 = scmp.ne.s32.totalorder %s104, %s105
    %p119 = scmp.eq.s32.totalorder %s15, 1
    %p120 = por %p118, %p119
    %p122 = scmp.ne.s32.totalorder %s105, %s121
    %p123 = scmp.eq.s32.totalorder %s15, 0
    %p124 = por %p122, %p123
    %p125 = scmp.le.s32.totalorder 1, %s9
    %p126 = scmp.lt.s32.totalorder %s9, 3
    %p127 = pnand %p125, %p126
    %p128 = pneg %p127
    // Predicated region
    $region9: #{two_d_branch_forward.4} parent=5 // pred_check
      _
    $region10: #{two_d_branch_forward.4} parent=5 // pred_check_branch
      %130 = sbr.rel (%p127) target = $region12
    $region11: #{two_d_branch_forward.4} parent=5 // pred_region
      %s131 = ssub.s32 %s9, 1
      // Predicated region
      $region13: #{two_d_branch_forward.4} parent=11 // pred_check
        %p132 = pneg %p68
      $region14: #{two_d_branch_forward.4} parent=11 // pred_check_branch
        %134 = sbr.rel (%p132) target = $region16
      $region15: #{two_d_branch_forward.4} parent=11 // pred_region
        _
      $region16: #{two_d_branch_forward.4} parent=11 // pred_fallthru
        _
      // Predicated region
      $region17: #{two_d_branch_forward.4} parent=11 // pred_check
        %p135 = pneg %p89
      $region18: #{two_d_branch_forward.4} parent=11 // pred_check_branch
        %137 = sbr.rel (%p135) target = $region20
      $region19: #{two_d_branch_forward.4} parent=11 // pred_region
        _
      $region20: #{two_d_branch_forward.4} parent=11 // pred_fallthru
        _
    $region12: #{two_d_branch_forward.4} parent=5 // pred_fallthru
      _
    %p138 = scmp.lt.s32.totalorder %s9, 2
    // Predicated region
    $region21: #{two_d_branch_forward.4} parent=5 // pred_check
      %p139 = pneg %p138
    $region22: #{two_d_branch_forward.4} parent=5 // pred_check_branch
      %141 = sbr.rel (%p139) target = $region24
    $region23: #{two_d_branch_forward.4} parent=5 // pred_region
      // Predicated region
      $region25: #{two_d_branch_forward.4} parent=23 // pred_check
        %p142 = pneg %p41
      $region26: #{two_d_branch_forward.4} parent=23 // pred_check_branch
        %144 = sbr.rel (%p142) target = $region28
      $region27: #{two_d_branch_forward.4} parent=23 // pred_region
        %p145 = scmp.lt.s32.totalorder %s16, 1
        %s146 = scalar_select %p145, %s16, 1
        %s147 = smul.addr %s146, 20
        %s148 = smul.addr %s147, 4
        %s149 = scalar_lea.vmem %s0, %s148
      $region28: #{two_d_branch_forward.4} parent=23 // pred_fallthru
        _
    $region24: #{two_d_branch_forward.4} parent=5 // pred_fallthru
      _
    %p150 = scmp.le.s32.totalorder 1, %s9
    %p151 = scmp.lt.s32.totalorder %s9, 3
    %p152 = pnand %p150, %p151
    %p153 = pneg %p152
    // Predicated region
    $region29: #{two_d_branch_forward.4} parent=5 // pred_check
      _
    $region30: #{two_d_branch_forward.4} parent=5 // pred_check_branch
      %155 = sbr.rel (%p152) target = $region32
    $region31: #{two_d_branch_forward.4} parent=5 // pred_region
      %s156 = ssub.s32 %s9, 1
      %p157 = scmp.lt.s32.totalorder %s18, 1
      %s158 = scalar_select %p157, %s18, 1
      %s159 = smul.addr %s158, 20
      %s160 = smul.addr %s159, 4
      %s161 = scalar_lea.vmem %s0, %s160
      %p162 = pneg %p47
      %p163 = pneg %p44
      %p164 = pneg %p68
      %p165 = pneg %p65
      %p166 = pneg %p89
      %p167 = pneg %p86
      %p168 = pneg %p117
      %p169 = pneg %p114
      %s170 = smul.u32 8, %s19
      %p171 = scmp.lt.s32.totalorder %s18, 1
      %s172 = scalar_select %p171, %s18, 1
      %p173 = scmp.lt.s32.totalorder %s170, 7
      %s174 = scalar_select %p173, %s170, 7
      %s175 = smul.addr %s172, 8
      %s176 = sadd.s32 %s174, %s175
      %s177 = smul.addr %s176, 8
      %s178 = scalar_lea.vmem %s3, %s177
      %p179 = scmp.lt.s32.totalorder %s18, 1
      %s180 = scalar_select %p179, %s18, 1
      %s181 = smul.addr %s180, 20
      %s182 = smul.addr %s181, 4
      %s183 = scalar_lea.vmem %s0, %s182
      %s184 = smul.u32 8, %s19
      %p185 = scmp.lt.s32.totalorder %s18, 1
      %s186 = scalar_select %p185, %s18, 1
      %p187 = scmp.lt.s32.totalorder %s184, 7
      %s188 = scalar_select %p187, %s184, 7
      %s189 = smul.addr %s186, 8
      %s190 = sadd.s32 %s188, %s189
      %s191 = smul.addr %s190, 8
      %s192 = scalar_lea.vmem %s3, %s191
      %s193 = smul.u32 8, %s19
      %s195 = smul.u32 %s19, 8
      %v196 = vld [vmem:[%s2] sm:$0x1]
      %v198 = vlaneseq
      %v199 = vshrl.u32 %v198, 7
      %v200 = vsub.s32 0, %v199
      %v201 = vrot.slane %v196, %v200
      %s203 = smul.u32 %s195, 2
      %s204 = smul.addr %s203, 4
      %s205 = scalar_lea.vmem %s183, %s204
      %v206 = vld [vmem:[%s205] sm:$0xf]
      %v207 = vld [vmem:[%s205 + $0x8] sm:$0xf]
      %v208 = vld [vmem:[%s205 + $0x10] sm:$0xf]
      %v209 = vld [vmem:[%s205 + $0x18] sm:$0xf]
      %v210 = vld [vmem:[%s205 + $0x20] sm:$0xf]
      %v211 = vld [vmem:[%s205 + $0x28] sm:$0xf]
      %v212 = vld [vmem:[%s205 + $0x30] sm:$0xf]
      %v213 = vld [vmem:[%s205 + $0x38] sm:$0xf]
      %v214 = vld [vmem:[%s1] sm:$0xf]
      %v215 = vld [vmem:[%s1 + $0x4] sm:$0xf]
      %v216 = vld [vmem:[%s1 + $0x8] sm:$0xf]
      %v217 = vld [vmem:[%s1 + $0xc] sm:$0xf]
      %v226 = vunpack.c.l.b16 %v206
      %v227 = vunpack.c.l.b16 %v207
      %v228 = vunpack.c.l.b16 %v208
      %v229 = vunpack.c.l.b16 %v209
      %v230 = vunpack.c.l.b16 %v210
      %v231 = vunpack.c.l.b16 %v211
      %v232 = vunpack.c.l.b16 %v212
      %v233 = vunpack.c.l.b16 %v213
      %v234 = vpack.c.b16 %v227, %v226
      %v235 = vpack.c.b16 %v229, %v228
      %v236 = vpack.c.b16 %v231, %v230
      %v237 = vpack.c.b16 %v233, %v232
      %v242 = vunpack.c.l.b16 %v214
      %v243 = vunpack.c.l.b16 %v215
      %v244 = vunpack.c.l.b16 %v216
      %v245 = vunpack.c.l.b16 %v217
      %v246 = vpack.c.b16 %v243, %v242
      %v247 = vpack.c.b16 %v245, %v244
      %vm250 = vcmask 261120
      %v252 = vsel %vm250, %v234, 0
      %v255 = vsel %vm250, %v235, 0
      %v258 = vsel %vm250, %v236, 0
      %v261 = vsel %vm250, %v237, 0
      %263 = vmatprep.subr.bf16.mxu0 0
      %264 = vmatpush1.bf16.msra.mxu0 %v246
      %265 = vmatprep.subr.bf16.mxu0 0
      %266 = vmatpush1.bf16.msra.mxu0 %v247
      %267 = vmatprep.subr.bf16.mxu0 0
      %268 = vmatpush1.bf16.msra.mxu0 0
      %269 = vmatprep.subr.bf16.mxu0 0
      %270 = vmatpush1.bf16.msra.mxu0 0
      %271 = vmatprep.subr.bf16.mxu0 0
      %272 = vmatpush1.bf16.msra.mxu0 0
      %273 = vmatprep.subr.bf16.mxu0 0
      %274 = vmatpush1.bf16.msra.mxu0 0
      %275 = vmatprep.subr.bf16.mxu0 0
      %276 = vmatpush1.bf16.msra.mxu0 0
      %277 = vmatprep.subr.bf16.mxu0 0
      %278 = vmatpush1.bf16.msra.mxu0 0
      %279 = vmatprep.subr.bf16.mxu0 0
      %280 = vmatpush1.bf16.msra.mxu0 0
      %281 = vmatprep.subr.bf16.mxu0 0
      %282 = vmatpush1.bf16.msra.mxu0 0
      %283 = vmatprep.subr.bf16.mxu0 0
      %284 = vmatpush1.bf16.msra.mxu0 0
      %285 = vmatprep.subr.bf16.mxu0 0
      %286 = vmatpush1.bf16.msra.mxu0 0
      %287 = vmatprep.subr.bf16.mxu0 0
      %288 = vmatpush1.bf16.msra.mxu0 0
      %289 = vmatprep.subr.bf16.mxu0 0
      %290 = vmatpush1.bf16.msra.mxu0 0
      %291 = vmatprep.subr.bf16.mxu0 0
      %292 = vmatpush1.bf16.msra.mxu0 0
      %293 = vmatprep.subr.bf16.mxu0 0
      %294 = vmatpush1.bf16.msra.mxu0 0
      %295 = vmatprep.mubr.bf16.mxu0 0
      %296 = vmatmul.mubr.bf16.gmra.mrb[0].mxu0 %v252
      %v297 = vpop.f32.mrb[0].mxu0
      %v298 = vadd.f32 0.0, %v297
      %v299 = vpop.f32.mrb[0].mxu0
      %v300 = vpop.f32.mrb[0].mxu0
      %v301 = vadd.f32 0.0, %v300
      %v302 = vpop.f32.mrb[0].mxu0
      %303 = vmatprep.mubr.bf16.mxu0 0
      %304 = vmatmul.mubr.bf16.gmra.mrb[0].mxu0 %v255
      %v305 = vpop.f32.mrb[0].mxu0
      %v306 = vadd.f32 0.0, %v305
      %v307 = vpop.f32.mrb[0].mxu0
      %v308 = vpop.f32.mrb[0].mxu0
      %v309 = vadd.f32 0.0, %v308
      %v310 = vpop.f32.mrb[0].mxu0
      %311 = vmatprep.mubr.bf16.mxu0 0
      %312 = vmatmul.mubr.bf16.gmra.mrb[0].mxu0 %v258
      %v313 = vpop.f32.mrb[0].mxu0
      %v314 = vadd.f32 0.0, %v313
      %v315 = vpop.f32.mrb[0].mxu0
      %v316 = vpop.f32.mrb[0].mxu0
      %v317 = vadd.f32 0.0, %v316
      %v318 = vpop.f32.mrb[0].mxu0
      %319 = vmatprep.mubr.bf16.mxu0 0
      %320 = vmatmul.mubr.bf16.gmra.mrb[0].mxu0 %v261
      %v321 = vpop.f32.mrb[0].mxu0
      %v322 = vadd.f32 0.0, %v321
      %v323 = vpop.f32.mrb[0].mxu0
      %v324 = vpop.f32.mrb[0].mxu0
      %v325 = vadd.f32 0.0, %v324
      %v326 = vpop.f32.mrb[0].mxu0
      %327 = vdwg.mxu0
      %v328 = vadd.f32 %v201, %v298
      %v329 = vadd.f32 %v201, %v301
      %v330 = vadd.f32 %v201, %v306
      %v331 = vadd.f32 %v201, %v309
      %v332 = vadd.f32 %v201, %v314
      %v333 = vadd.f32 %v201, %v317
      %v334 = vadd.f32 %v201, %v322
      %v335 = vadd.f32 %v201, %v325
      %v336 = vld [vmem:[%s205] sm:$0xf]
      %v337 = vld [vmem:[%s205 + $0x4] sm:$0x1]
      %v338 = vld [vmem:[%s205 + $0x8] sm:$0xf]
      %v339 = vld [vmem:[%s205 + $0xc] sm:$0x1]
      %v340 = vld [vmem:[%s205 + $0x10] sm:$0xf]
      %v341 = vld [vmem:[%s205 + $0x14] sm:$0x1]
      %v342 = vld [vmem:[%s205 + $0x18] sm:$0xf]
      %v343 = vld [vmem:[%s205 + $0x1c] sm:$0x1]
      %v344 = vld [vmem:[%s205 + $0x20] sm:$0xf]
      %v345 = vld [vmem:[%s205 + $0x24] sm:$0x1]
      %v346 = vld [vmem:[%s205 + $0x28] sm:$0xf]
      %v347 = vld [vmem:[%s205 + $0x2c] sm:$0x1]
      %v348 = vld [vmem:[%s205 + $0x30] sm:$0xf]
      %v349 = vld [vmem:[%s205 + $0x34] sm:$0x1]
      %v350 = vld [vmem:[%s205 + $0x38] sm:$0xf]
      %v351 = vld [vmem:[%s205 + $0x3c] sm:$0x1]
      %vm352 = vsmask.f32 3328
      %vm353 = vsmask.f32 7440
      %vm354 = vmor %vm352, %vm353
      %v356 = vshrl.u32 %v336, 16
      %v358 = vrot.slane %v356, 4
      %v359 = vshll.u32 %v336, 16
      %v361 = vrot.slane %v359, 5
      %v362 = vor.u32 %v358, %v361
      %v363 = vrot.slane %v362, 4
      %v365 = vshll.u32 %v337, 16
      %v367 = vrot.slane %v365, 5
      %v368 = vsel %vm354, %v363, %v367
      %v370 = vshrl.u32 %v338, 16
      %v372 = vrot.slane %v370, 4
      %v373 = vshll.u32 %v338, 16
      %v375 = vrot.slane %v373, 5
      %v376 = vor.u32 %v372, %v375
      %v377 = vrot.slane %v376, 4
      %v379 = vshll.u32 %v339, 16
      %v381 = vrot.slane %v379, 5
      %v382 = vsel %vm354, %v377, %v381
      %v384 = vshrl.u32 %v340, 16
      %v386 = vrot.slane %v384, 4
      %v387 = vshll.u32 %v340, 16
      %v389 = vrot.slane %v387, 5
      %v390 = vor.u32 %v386, %v389
      %v391 = vrot.slane %v390, 4
      %v393 = vshll.u32 %v341, 16
      %v395 = vrot.slane %v393, 5
      %v396 = vsel %vm354, %v391, %v395
      %v398 = vshrl.u32 %v342, 16
      %v400 = vrot.slane %v398, 4
      %v401 = vshll.u32 %v342, 16
      %v403 = vrot.slane %v401, 5
      %v404 = vor.u32 %v400, %v403
      %v405 = vrot.slane %v404, 4
      %v407 = vshll.u32 %v343, 16
      %v409 = vrot.slane %v407, 5
      %v410 = vsel %vm354, %v405, %v409
      %v412 = vshrl.u32 %v344, 16
      %v414 = vrot.slane %v412, 4
      %v415 = vshll.u32 %v344, 16
      %v417 = vrot.slane %v415, 5
      %v418 = vor.u32 %v414, %v417
      %v419 = vrot.slane %v418, 4
      %v421 = vshll.u32 %v345, 16
      %v423 = vrot.slane %v421, 5
      %v424 = vsel %vm354, %v419, %v423
      %v426 = vshrl.u32 %v346, 16
      %v428 = vrot.slane %v426, 4
      %v429 = vshll.u32 %v346, 16
      %v431 = vrot.slane %v429, 5
      %v432 = vor.u32 %v428, %v431
      %v433 = vrot.slane %v432, 4
      %v435 = vshll.u32 %v347, 16
      %v437 = vrot.slane %v435, 5
      %v438 = vsel %vm354, %v433, %v437
      %v440 = vshrl.u32 %v348, 16
      %v442 = vrot.slane %v440, 4
      %v443 = vshll.u32 %v348, 16
      %v445 = vrot.slane %v443, 5
      %v446 = vor.u32 %v442, %v445
      %v447 = vrot.slane %v446, 4
      %v449 = vshll.u32 %v349, 16
      %v451 = vrot.slane %v449, 5
      %v452 = vsel %vm354, %v447, %v451
      %v454 = vshrl.u32 %v350, 16
      %v456 = vrot.slane %v454, 4
      %v457 = vshll.u32 %v350, 16
      %v459 = vrot.slane %v457, 5
      %v460 = vor.u32 %v456, %v459
      %v461 = vrot.slane %v460, 4
      %v463 = vshll.u32 %v351, 16
      %v465 = vrot.slane %v463, 5
      %v466 = vsel %vm354, %v461, %v465
      %v467 = vld [vmem:[%s1 + $0x10] sm:$0xf]
      %v468 = vld [vmem:[%s1 + $0x14] sm:$0xf]
      %v469 = vld [vmem:[%s1 + $0x18] sm:$0xf]
      %v470 = vld [vmem:[%s1 + $0x1c] sm:$0xf]
      %v471 = vunpack.c.l.b16 %v368
      %v472 = vunpack.c.l.b16 %v382
      %v473 = vunpack.c.l.b16 %v396
      %v474 = vunpack.c.l.b16 %v410
      %v475 = vunpack.c.l.b16 %v424
      %v476 = vunpack.c.l.b16 %v438
      %v477 = vunpack.c.l.b16 %v452
      %v478 = vunpack.c.l.b16 %v466
      %v479 = vpack.c.b16 %v472, %v471
      %v480 = vpack.c.b16 %v474, %v473
      %v481 = vpack.c.b16 %v476, %v475
      %v482 = vpack.c.b16 %v478, %v477
      %v487 = vunpack.c.l.b16 %v467
      %v488 = vunpack.c.l.b16 %v468
      %v489 = vunpack.c.l.b16 %v469
      %v490 = vunpack.c.l.b16 %v470
      %v491 = vpack.c.b16 %v488, %v487
      %v492 = vpack.c.b16 %v490, %v489
      %v496 = vsel %vm250, %v479, 0
      %v499 = vsel %vm250, %v480, 0
      %v502 = vsel %vm250, %v481, 0
      %v505 = vsel %vm250, %v482, 0
      %507 = vmatprep.subr.bf16.mxu0 0
      %508 = vmatpush1.bf16.msra.mxu0 %v491
      %509 = vmatprep.subr.bf16.mxu0 0
      %510 = vmatpush1.bf16.msra.mxu0 %v492
      %511 = vmatprep.subr.bf16.mxu0 0
      %512 = vmatpush1.bf16.msra.mxu0 0
      %513 = vmatprep.subr.bf16.mxu0 0
      %514 = vmatpush1.bf16.msra.mxu0 0
      %515 = vmatprep.subr.bf16.mxu0 0
      %516 = vmatpush1.bf16.msra.mxu0 0
      %517 = vmatprep.subr.bf16.mxu0 0
      %518 = vmatpush1.bf16.msra.mxu0 0
      %519 = vmatprep.subr.bf16.mxu0 0
      %520 = vmatpush1.bf16.msra.mxu0 0
      %521 = vmatprep.subr.bf16.mxu0 0
      %522 = vmatpush1.bf16.msra.mxu0 0
      %523 = vmatprep.subr.bf16.mxu0 0
      %524 = vmatpush1.bf16.msra.mxu0 0
      %525 = vmatprep.subr.bf16.mxu0 0
      %526 = vmatpush1.bf16.msra.mxu0 0
      %527 = vmatprep.subr.bf16.mxu0 0
      %528 = vmatpush1.bf16.msra.mxu0 0
      %529 = vmatprep.subr.bf16.mxu0 0
      %530 = vmatpush1.bf16.msra.mxu0 0
      %531 = vmatprep.subr.bf16.mxu0 0
      %532 = vmatpush1.bf16.msra.mxu0 0
      %533 = vmatprep.subr.bf16.mxu0 0
      %534 = vmatpush1.bf16.msra.mxu0 0
      %535 = vmatprep.subr.bf16.mxu0 0
      %536 = vmatpush1.bf16.msra.mxu0 0
      %537 = vmatprep.subr.bf16.mxu0 0
      %538 = vmatpush1.bf16.msra.mxu0 0
      %539 = vmatprep.mubr.bf16.mxu0 0
      %540 = vmatmul.mubr.bf16.gmra.mrb[0].mxu0 %v496
      %v541 = vpop.f32.mrb[0].mxu0
      %v542 = vadd.f32 0.0, %v541
      %v543 = vpop.f32.mrb[0].mxu0
      %v544 = vpop.f32.mrb[0].mxu0
      %v545 = vadd.f32 0.0, %v544
      %v546 = vpop.f32.mrb[0].mxu0
      %547 = vmatprep.mubr.bf16.mxu0 0
      %548 = vmatmul.mubr.bf16.gmra.mrb[0].mxu0 %v499
      %v549 = vpop.f32.mrb[0].mxu0
      %v550 = vadd.f32 0.0, %v549
      %v551 = vpop.f32.mrb[0].mxu0
      %v552 = vpop.f32.mrb[0].mxu0
      %v553 = vadd.f32 0.0, %v552
      %v554 = vpop.f32.mrb[0].mxu0
      %555 = vmatprep.mubr.bf16.mxu0 0
      %556 = vmatmul.mubr.bf16.gmra.mrb[0].mxu0 %v502
      %v557 = vpop.f32.mrb[0].mxu0
      %v558 = vadd.f32 0.0, %v557
      %v559 = vpop.f32.mrb[0].mxu0
      %v560 = vpop.f32.mrb[0].mxu0
      %v561 = vadd.f32 0.0, %v560
      %v562 = vpop.f32.mrb[0].mxu0
      %563 = vmatprep.mubr.bf16.mxu0 0
      %564 = vmatmul.mubr.bf16.gmra.mrb[0].mxu0 %v505
      %v565 = vpop.f32.mrb[0].mxu0
      %v566 = vadd.f32 0.0, %v565
      %v567 = vpop.f32.mrb[0].mxu0
      %v568 = vpop.f32.mrb[0].mxu0
      %v569 = vadd.f32 0.0, %v568
      %v570 = vpop.f32.mrb[0].mxu0
      %571 = vdwg.mxu0
      %v572 = vadd.f32 %v328, %v542
      %v573 = vadd.f32 %v329, %v545
      %v574 = vadd.f32 %v330, %v550
      %v575 = vadd.f32 %v331, %v553
      %v576 = vadd.f32 %v332, %v558
      %v577 = vadd.f32 %v333, %v561
      %v578 = vadd.f32 %v334, %v566
      %v579 = vadd.f32 %v335, %v569
      %v580 = vld [vmem:[%s205] sm:$0xe]
      %v581 = vld [vmem:[%s205 + $0x8] sm:$0xe]
      %v582 = vld [vmem:[%s205 + $0x10] sm:$0xe]
      %v583 = vld [vmem:[%s205 + $0x18] sm:$0xe]
      %v584 = vld [vmem:[%s205 + $0x20] sm:$0xe]
      %v585 = vld [vmem:[%s205 + $0x28] sm:$0xe]
      %v586 = vld [vmem:[%s205 + $0x30] sm:$0xe]
      %v587 = vld [vmem:[%s205 + $0x38] sm:$0xe]
      %vm604 = vcmask 1042432
      %vm605 = vcmask 1046532
      %vm606 = vmor %vm604, %vm605
      %v607 = vrot.slane %v580, 5
      %v608 = vrot.slane %v607, 4
      %v609 = vrot.slane %v337, 5
      %v610 = vsel %vm606, %v608, %v609
      %v611 = vrot.slane %v581, 5
      %v612 = vrot.slane %v611, 4
      %v613 = vrot.slane %v339, 5
      %v614 = vsel %vm606, %v612, %v613
      %v615 = vrot.slane %v582, 5
      %v616 = vrot.slane %v615, 4
      %v617 = vrot.slane %v341, 5
      %v618 = vsel %vm606, %v616, %v617
      %v619 = vrot.slane %v583, 5
      %v620 = vrot.slane %v619, 4
      %v621 = vrot.slane %v343, 5
      %v622 = vsel %vm606, %v620, %v621
      %v623 = vrot.slane %v584, 5
      %v624 = vrot.slane %v623, 4
      %v625 = vrot.slane %v345, 5
      %v626 = vsel %vm606, %v624, %v625
      %v627 = vrot.slane %v585, 5
      %v628 = vrot.slane %v627, 4
      %v629 = vrot.slane %v347, 5
      %v630 = vsel %vm606, %v628, %v629
      %v631 = vrot.slane %v586, 5
      %v632 = vrot.slane %v631, 4
      %v633 = vrot.slane %v349, 5
      %v634 = vsel %vm606, %v632, %v633
      %v635 = vrot.slane %v587, 5
      %v636 = vrot.slane %v635, 4
      %v637 = vrot.slane %v351, 5
      %v638 = vsel %vm606, %v636, %v637
      %v639 = vld [vmem:[%s1 + $0x20] sm:$0xf]
      %v640 = vld [vmem:[%s1 + $0x24] sm:$0xf]
      %v641 = vld [vmem:[%s1 + $0x28] sm:$0xf]
      %v642 = vld [vmem:[%s1 + $0x2c] sm:$0xf]
      %v643 = vunpack.c.l.b16 %v610
      %v644 = vunpack.c.l.b16 %v614
      %v645 = vunpack.c.l.b16 %v618
      %v646 = vunpack.c.l.b16 %v622
      %v647 = vunpack.c.l.b16 %v626
      %v648 = vunpack.c.l.b16 %v630
      %v649 = vunpack.c.l.b16 %v634
      %v650 = vunpack.c.l.b16 %v638
      %v651 = vpack.c.b16 %v644, %v643
      %v652 = vpack.c.b16 %v646, %v645
      %v653 = vpack.c.b16 %v648, %v647
      %v654 = vpack.c.b16 %v650, %v649
      %v659 = vunpack.c.l.b16 %v639
      %v660 = vunpack.c.l.b16 %v640
      %v661 = vunpack.c.l.b16 %v641
      %v662 = vunpack.c.l.b16 %v642
      %v663 = vpack.c.b16 %v660, %v659
      %v664 = vpack.c.b16 %v662, %v661
      %v668 = vsel %vm250, %v651, 0
      %v671 = vsel %vm250, %v652, 0
      %v674 = vsel %vm250, %v653, 0
      %v677 = vsel %vm250, %v654, 0
      %679 = vmatprep.subr.bf16.mxu0 0
      %680 = vmatpush1.bf16.msra.mxu0 %v663
      %681 = vmatprep.subr.bf16.mxu0 0
      %682 = vmatpush1.bf16.msra.mxu0 %v664
      %683 = vmatprep.subr.bf16.mxu0 0
      %684 = vmatpush1.bf16.msra.mxu0 0
      %685 = vmatprep.subr.bf16.mxu0 0
      %686 = vmatpush1.bf16.msra.mxu0 0
      %687 = vmatprep.subr.bf16.mxu0 0
      %688 = vmatpush1.bf16.msra.mxu0 0
      %689 = vmatprep.subr.bf16.mxu0 0
      %690 = vmatpush1.bf16.msra.mxu0 0
      %691 = vmatprep.subr.bf16.mxu0 0
      %692 = vmatpush1.bf16.msra.mxu0 0
      %693 = vmatprep.subr.bf16.mxu0 0
      %694 = vmatpush1.bf16.msra.mxu0 0
      %695 = vmatprep.subr.bf16.mxu0 0
      %696 = vmatpush1.bf16.msra.mxu0 0
      %697 = vmatprep.subr.bf16.mxu0 0
      %698 = vmatpush1.bf16.msra.mxu0 0
      %699 = vmatprep.subr.bf16.mxu0 0
      %700 = vmatpush1.bf16.msra.mxu0 0
      %701 = vmatprep.subr.bf16.mxu0 0
      %702 = vmatpush1.bf16.msra.mxu0 0
      %703 = vmatprep.subr.bf16.mxu0 0
      %704 = vmatpush1.bf16.msra.mxu0 0
      %705 = vmatprep.subr.bf16.mxu0 0
      %706 = vmatpush1.bf16.msra.mxu0 0
      %707 = vmatprep.subr.bf16.mxu0 0
      %708 = vmatpush1.bf16.msra.mxu0 0
      %709 = vmatprep.subr.bf16.mxu0 0
      %710 = vmatpush1.bf16.msra.mxu0 0
      %711 = vmatprep.mubr.bf16.mxu0 0
      %712 = vmatmul.mubr.bf16.gmra.mrb[0].mxu0 %v668
      %v713 = vpop.f32.mrb[0].mxu0
      %v714 = vadd.f32 0.0, %v713
      %v715 = vpop.f32.mrb[0].mxu0
      %v716 = vpop.f32.mrb[0].mxu0
      %v717 = vadd.f32 0.0, %v716
      %v718 = vpop.f32.mrb[0].mxu0
      %719 = vmatprep.mubr.bf16.mxu0 0
      %720 = vmatmul.mubr.bf16.gmra.mrb[0].mxu0 %v671
      %v721 = vpop.f32.mrb[0].mxu0
      %v722 = vadd.f32 0.0, %v721
      %v723 = vpop.f32.mrb[0].mxu0
      %v724 = vpop.f32.mrb[0].mxu0
      %v725 = vadd.f32 0.0, %v724
      %v726 = vpop.f32.mrb[0].mxu0
      %727 = vmatprep.mubr.bf16.mxu0 0
      %728 = vmatmul.mubr.bf16.gmra.mrb[0].mxu0 %v674
      %v729 = vpop.f32.mrb[0].mxu0
      %v730 = vadd.f32 0.0, %v729
      %v731 = vpop.f32.mrb[0].mxu0
      %v732 = vpop.f32.mrb[0].mxu0
      %v733 = vadd.f32 0.0, %v732
      %v734 = vpop.f32.mrb[0].mxu0
      %735 = vmatprep.mubr.bf16.mxu0 0
      %736 = vmatmul.mubr.bf16.gmra.mrb[0].mxu0 %v677
      %v737 = vpop.f32.mrb[0].mxu0
      %v738 = vadd.f32 0.0, %v737
      %v739 = vpop.f32.mrb[0].mxu0
      %v740 = vpop.f32.mrb[0].mxu0
      %v741 = vadd.f32 0.0, %v740
      %v742 = vpop.f32.mrb[0].mxu0
      %743 = vdwg.mxu0
      %v744 = vadd.f32 %v572, %v714
      %v745 = vadd.f32 %v573, %v717
      %v746 = vadd.f32 %v574, %v722
      %v747 = vadd.f32 %v575, %v725
      %v748 = vadd.f32 %v576, %v730
      %v749 = vadd.f32 %v577, %v733
      %v750 = vadd.f32 %v578, %v738
      %v751 = vadd.f32 %v579, %v741
      %s752 = sadd.s32 %s195, 1
      %s753 = smul.u32 %s752, 2
      %s754 = smul.addr %s753, 4
      %s755 = scalar_lea.vmem %s183, %s754
      %v756 = vld [vmem:[%s755] sm:$0xf]
      %v757 = vld [vmem:[%s755 + $0x8] sm:$0xf]
      %v758 = vld [vmem:[%s755 + $0x10] sm:$0xf]
      %v759 = vld [vmem:[%s755 + $0x18] sm:$0xf]
      %v760 = vld [vmem:[%s755 + $0x20] sm:$0xf]
      %v761 = vld [vmem:[%s755 + $0x28] sm:$0xf]
      %v762 = vld [vmem:[%s755 + $0x30] sm:$0xf]
      %v763 = vld [vmem:[%s755 + $0x38] sm:$0xf]
      %v764 = vld [vmem:[%s1 + $0x30] sm:$0xf]
      %v765 = vld [vmem:[%s1 + $0x34] sm:$0xf]
      %v766 = vld [vmem:[%s1 + $0x38] sm:$0xf]
      %v767 = vld [vmem:[%s1 + $0x3c] sm:$0xf]
      %v776 = vunpack.c.l.b16 %v756
      %v777 = vunpack.c.l.b16 %v757
      %v778 = vunpack.c.l.b16 %v758
      %v779 = vunpack.c.l.b16 %v759
      %v780 = vunpack.c.l.b16 %v760
      %v781 = vunpack.c.l.b16 %v761
      %v782 = vunpack.c.l.b16 %v762
      %v783 = vunpack.c.l.b16 %v763
      %v784 = vpack.c.b16 %v777, %v776
      %v785 = vpack.c.b16 %v779, %v778
      %v786 = vpack.c.b16 %v781, %v780
      %v787 = vpack.c.b16 %v783, %v782
      %v792 = vunpack.c.l.b16 %v764
      %v793 = vunpack.c.l.b16 %v765
      %v794 = vunpack.c.l.b16 %v766
      %v795 = vunpack.c.l.b16 %v767
      %v796 = vpack.c.b16 %v793, %v792
      %v797 = vpack.c.b16 %v795, %v794
      %v801 = vsel %vm250, %v784, 0
      %v804 = vsel %vm250, %v785, 0
      %v807 = vsel %vm250, %v786, 0
      %v810 = vsel %vm250, %v787, 0
      %812 = vmatprep.subr.bf16.mxu0 0
      %813 = vmatpush1.bf16.msra.mxu0 %v796
      %814 = vmatprep.subr.bf16.mxu0 0
      %815 = vmatpush1.bf16.msra.mxu0 %v797
      %816 = vmatprep.subr.bf16.mxu0 0
      %817 = vmatpush1.bf16.msra.mxu0 0
      %818 = vmatprep.subr.bf16.mxu0 0
      %819 = vmatpush1.bf16.msra.mxu0 0
      %820 = vmatprep.subr.bf16.mxu0 0
      %821 = vmatpush1.bf16.msra.mxu0 0
      %822 = vmatprep.subr.bf16.mxu0 0
      %823 = vmatpush1.bf16.msra.mxu0 0
      %824 = vmatprep.subr.bf16.mxu0 0
      %825 = vmatpush1.bf16.msra.mxu0 0
      %826 = vmatprep.subr.bf16.mxu0 0
      %827 = vmatpush1.bf16.msra.mxu0 0
      %828 = vmatprep.subr.bf16.mxu0 0
      %829 = vmatpush1.bf16.msra.mxu0 0
      %830 = vmatprep.subr.bf16.mxu0 0
      %831 = vmatpush1.bf16.msra.mxu0 0
      %832 = vmatprep.subr.bf16.mxu0 0
      %833 = vmatpush1.bf16.msra.mxu0 0
      %834 = vmatprep.subr.bf16.mxu0 0
      %835 = vmatpush1.bf16.msra.mxu0 0
      %836 = vmatprep.subr.bf16.mxu0 0
      %837 = vmatpush1.bf16.msra.mxu0 0
      %838 = vmatprep.subr.bf16.mxu0 0
      %839 = vmatpush1.bf16.msra.mxu0 0
      %840 = vmatprep.subr.bf16.mxu0 0
      %841 = vmatpush1.bf16.msra.mxu0 0
      %842 = vmatprep.subr.bf16.mxu0 0
      %843 = vmatpush1.bf16.msra.mxu0 0
      %844 = vmatprep.mubr.bf16.mxu0 0
      %845 = vmatmul.mubr.bf16.gmra.mrb[0].mxu0 %v801
      %v846 = vpop.f32.mrb[0].mxu0
      %v847 = vadd.f32 0.0, %v846
      %v848 = vpop.f32.mrb[0].mxu0
      %v849 = vpop.f32.mrb[0].mxu0
      %v850 = vadd.f32 0.0, %v849
      %v851 = vpop.f32.mrb[0].mxu0
      %852 = vmatprep.mubr.bf16.mxu0 0
      %853 = vmatmul.mubr.bf16.gmra.mrb[0].mxu0 %v804
      %v854 = vpop.f32.mrb[0].mxu0
      %v855 = vadd.f32 0.0, %v854
      %v856 = vpop.f32.mrb[0].mxu0
      %v857 = vpop.f32.mrb[0].mxu0
      %v858 = vadd.f32 0.0, %v857
      %v859 = vpop.f32.mrb[0].mxu0
      %860 = vmatprep.mubr.bf16.mxu0 0
      %861 = vmatmul.mubr.bf16.gmra.mrb[0].mxu0 %v807
      %v862 = vpop.f32.mrb[0].mxu0
      %v863 = vadd.f32 0.0, %v862
      %v864 = vpop.f32.mrb[0].mxu0
      %v865 = vpop.f32.mrb[0].mxu0
      %v866 = vadd.f32 0.0, %v865
      %v867 = vpop.f32.mrb[0].mxu0
      %868 = vmatprep.mubr.bf16.mxu0 0
      %869 = vmatmul.mubr.bf16.gmra.mrb[0].mxu0 %v810
      %v870 = vpop.f32.mrb[0].mxu0
      %v871 = vadd.f32 0.0, %v870
      %v872 = vpop.f32.mrb[0].mxu0
      %v873 = vpop.f32.mrb[0].mxu0
      %v874 = vadd.f32 0.0, %v873
      %v875 = vpop.f32.mrb[0].mxu0
      %876 = vdwg.mxu0
      %v877 = vadd.f32 %v744, %v847
      %v878 = vadd.f32 %v745, %v850
      %v879 = vadd.f32 %v746, %v855
      %v880 = vadd.f32 %v747, %v858
      %v881 = vadd.f32 %v748, %v863
      %v882 = vadd.f32 %v749, %v866
      %v883 = vadd.f32 %v750, %v871
      %v884 = vadd.f32 %v751, %v874
      %v885 = vld [vmem:[%s755] sm:$0xf]
      %v886 = vld [vmem:[%s755 + $0x4] sm:$0x1]
      %v887 = vld [vmem:[%s755 + $0x8] sm:$0xf]
      %v888 = vld [vmem:[%s755 + $0xc] sm:$0x1]
      %v889 = vld [vmem:[%s755 + $0x10] sm:$0xf]
      %v890 = vld [vmem:[%s755 + $0x14] sm:$0x1]
      %v891 = vld [vmem:[%s755 + $0x18] sm:$0xf]
      %v892 = vld [vmem:[%s755 + $0x1c] sm:$0x1]
      %v893 = vld [vmem:[%s755 + $0x20] sm:$0xf]
      %v894 = vld [vmem:[%s755 + $0x24] sm:$0x1]
      %v895 = vld [vmem:[%s755 + $0x28] sm:$0xf]
      %v896 = vld [vmem:[%s755 + $0x2c] sm:$0x1]
      %v897 = vld [vmem:[%s755 + $0x30] sm:$0xf]
      %v898 = vld [vmem:[%s755 + $0x34] sm:$0x1]
      %v899 = vld [vmem:[%s755 + $0x38] sm:$0xf]
      %v900 = vld [vmem:[%s755 + $0x3c] sm:$0x1]
      %v902 = vshrl.u32 %v885, 16
      %v904 = vrot.slane %v902, 4
      %v905 = vshll.u32 %v885, 16
      %v907 = vrot.slane %v905, 5
      %v908 = vor.u32 %v904, %v907
      %v909 = vrot.slane %v908, 4
      %v911 = vshll.u32 %v886, 16
      %v913 = vrot.slane %v911, 5
      %v914 = vsel %vm354, %v909, %v913
      %v916 = vshrl.u32 %v887, 16
      %v918 = vrot.slane %v916, 4
      %v919 = vshll.u32 %v887, 16
      %v921 = vrot.slane %v919, 5
      %v922 = vor.u32 %v918, %v921
      %v923 = vrot.slane %v922, 4
      %v925 = vshll.u32 %v888, 16
      %v927 = vrot.slane %v925, 5
      %v928 = vsel %vm354, %v923, %v927
      %v930 = vshrl.u32 %v889, 16
      %v932 = vrot.slane %v930, 4
      %v933 = vshll.u32 %v889, 16
      %v935 = vrot.slane %v933, 5
      %v936 = vor.u32 %v932, %v935
      %v937 = vrot.slane %v936, 4
      %v939 = vshll.u32 %v890, 16
      %v941 = vrot.slane %v939, 5
      %v942 = vsel %vm354, %v937, %v941
      %v944 = vshrl.u32 %v891, 16
      %v946 = vrot.slane %v944, 4
      %v947 = vshll.u32 %v891, 16
      %v949 = vrot.slane %v947, 5
      %v950 = vor.u32 %v946, %v949
      %v951 = vrot.slane %v950, 4
      %v953 = vshll.u32 %v892, 16
      %v955 = vrot.slane %v953, 5
      %v956 = vsel %vm354, %v951, %v955
      %v958 = vshrl.u32 %v893, 16
      %v960 = vrot.slane %v958, 4
      %v961 = vshll.u32 %v893, 16
      %v963 = vrot.slane %v961, 5
      %v964 = vor.u32 %v960, %v963
      %v965 = vrot.slane %v964, 4
      %v967 = vshll.u32 %v894, 16
      %v969 = vrot.slane %v967, 5
      %v970 = vsel %vm354, %v965, %v969
      %v972 = vshrl.u32 %v895, 16
      %v974 = vrot.slane %v972, 4
      %v975 = vshll.u32 %v895, 16
      %v977 = vrot.slane %v975, 5
      %v978 = vor.u32 %v974, %v977
      %v979 = vrot.slane %v978, 4
      %v981 = vshll.u32 %v896, 16
      %v983 = vrot.slane %v981, 5
      %v984 = vsel %vm354, %v979, %v983
      %v986 = vshrl.u32 %v897, 16
      %v988 = vrot.slane %v986, 4
      %v989 = vshll.u32 %v897, 16
      %v991 = vrot.slane %v989, 5
      %v992 = vor.u32 %v988, %v991
      %v993 = vrot.slane %v992, 4
      %v995 = vshll.u32 %v898, 16
      %v997 = vrot.slane %v995, 5
      %v998 = vsel %vm354, %v993, %v997
      %v1000 = vshrl.u32 %v899, 16
      %v1002 = vrot.slane %v1000, 4
      %v1003 = vshll.u32 %v899, 16
      %v1005 = vrot.slane %v1003, 5
      %v1006 = vor.u32 %v1002, %v1005
      %v1007 = vrot.slane %v1006, 4
      %v1009 = vshll.u32 %v900, 16
      %v1011 = vrot.slane %v1009, 5
      %v1012 = vsel %vm354, %v1007, %v1011
      %v1013 = vld [vmem:[%s1 + $0x40] sm:$0xf]
      %v1014 = vld [vmem:[%s1 + $0x44] sm:$0xf]
      %v1015 = vld [vmem:[%s1 + $0x48] sm:$0xf]
      %v1016 = vld [vmem:[%s1 + $0x4c] sm:$0xf]
      %v1017 = vunpack.c.l.b16 %v914
      %v1018 = vunpack.c.l.b16 %v928
      %v1019 = vunpack.c.l.b16 %v942
      %v1020 = vunpack.c.l.b16 %v956
      %v1021 = vunpack.c.l.b16 %v970
      %v1022 = vunpack.c.l.b16 %v984
      %v1023 = vunpack.c.l.b16 %v998
      %v1024 = vunpack.c.l.b16 %v1012
      %v1025 = vpack.c.b16 %v1018, %v1017
      %v1026 = vpack.c.b16 %v1020, %v1019
      %v1027 = vpack.c.b16 %v1022, %v1021
      %v1028 = vpack.c.b16 %v1024, %v1023
      %v1033 = vunpack.c.l.b16 %v1013
      %v1034 = vunpack.c.l.b16 %v1014
      %v1035 = vunpack.c.l.b16 %v1015
      %v1036 = vunpack.c.l.b16 %v1016
      %v1037 = vpack.c.b16 %v1034, %v1033
      %v1038 = vpack.c.b16 %v1036, %v1035
      %v1042 = vsel %vm250, %v1025, 0
      %v1045 = vsel %vm250, %v1026, 0
      %v1048 = vsel %vm250, %v1027, 0
      %v1051 = vsel %vm250, %v1028, 0
      %1053 = vmatprep.subr.bf16.mxu0 0
      %1054 = vmatpush1.bf16.msra.mxu0 %v1037
      %1055 = vmatprep.subr.bf16.mxu0 0
      %1056 = vmatpush1.bf16.msra.mxu0 %v1038
      %1057 = vmatprep.subr.bf16.mxu0 0
      %1058 = vmatpush1.bf16.msra.mxu0 0
      %1059 = vmatprep.subr.bf16.mxu0 0
      %1060 = vmatpush1.bf16.msra.mxu0 0
      %1061 = vmatprep.subr.bf16.mxu0 0
      %1062 = vmatpush1.bf16.msra.mxu0 0
      %1063 = vmatprep.subr.bf16.mxu0 0
      %1064 = vmatpush1.bf16.msra.mxu0 0
      %1065 = vmatprep.subr.bf16.mxu0 0
      %1066 = vmatpush1.bf16.msra.mxu0 0
      %1067 = vmatprep.subr.bf16.mxu0 0
      %1068 = vmatpush1.bf16.msra.mxu0 0
      %1069 = vmatprep.subr.bf16.mxu0 0
      %1070 = vmatpush1.bf16.msra.mxu0 0
      %1071 = vmatprep.subr.bf16.mxu0 0
      %1072 = vmatpush1.bf16.msra.mxu0 0
      %1073 = vmatprep.subr.bf16.mxu0 0
      %1074 = vmatpush1.bf16.msra.mxu0 0
      %1075 = vmatprep.subr.bf16.mxu0 0
      %1076 = vmatpush1.bf16.msra.mxu0 0
      %1077 = vmatprep.subr.bf16.mxu0 0
      %1078 = vmatpush1.bf16.msra.mxu0 0
      %1079 = vmatprep.subr.bf16.mxu0 0
      %1080 = vmatpush1.bf16.msra.mxu0 0
      %1081 = vmatprep.subr.bf16.mxu0 0
      %1082 = vmatpush1.bf16.msra.mxu0 0
      %1083 = vmatprep.subr.bf16.mxu0 0
      %1084 = vmatpush1.bf16.msra.mxu0 0
      %1085 = vmatprep.mubr.bf16.mxu0 0
      %1086 = vmatmul.mubr.bf16.gmra.mrb[0].mxu0 %v1042
      %v1087 = vpop.f32.mrb[0].mxu0
      %v1088 = vadd.f32 0.0, %v1087
      %v1089 = vpop.f32.mrb[0].mxu0
      %v1090 = vpop.f32.mrb[0].mxu0
      %v1091 = vadd.f32 0.0, %v1090
      %v1092 = vpop.f32.mrb[0].mxu0
      %1093 = vmatprep.mubr.bf16.mxu0 0
      %1094 = vmatmul.mubr.bf16.gmra.mrb[0].mxu0 %v1045
      %v1095 = vpop.f32.mrb[0].mxu0
      %v1096 = vadd.f32 0.0, %v1095
      %v1097 = vpop.f32.mrb[0].mxu0
      %v1098 = vpop.f32.mrb[0].mxu0
      %v1099 = vadd.f32 0.0, %v1098
      %v1100 = vpop.f32.mrb[0].mxu0
      %1101 = vmatprep.mubr.bf16.mxu0 0
      %1102 = vmatmul.mubr.bf16.gmra.mrb[0].mxu0 %v1048
      %v1103 = vpop.f32.mrb[0].mxu0
      %v1104 = vadd.f32 0.0, %v1103
      %v1105 = vpop.f32.mrb[0].mxu0
      %v1106 = vpop.f32.mrb[0].mxu0
      %v1107 = vadd.f32 0.0, %v1106
      %v1108 = vpop.f32.mrb[0].mxu0
      %1109 = vmatprep.mubr.bf16.mxu0 0
      %1110 = vmatmul.mubr.bf16.gmra.mrb[0].mxu0 %v1051
      %v1111 = vpop.f32.mrb[0].mxu0
      %v1112 = vadd.f32 0.0, %v1111
      %v1113 = vpop.f32.mrb[0].mxu0
      %v1114 = vpop.f32.mrb[0].mxu0
      %v1115 = vadd.f32 0.0, %v1114
      %v1116 = vpop.f32.mrb[0].mxu0
      %1117 = vdwg.mxu0
      %v1118 = vadd.f32 %v877, %v1088
      %v1119 = vadd.f32 %v878, %v1091
      %v1120 = vadd.f32 %v879, %v1096
      %v1121 = vadd.f32 %v880, %v1099
      %v1122 = vadd.f32 %v881, %v1104
      %v1123 = vadd.f32 %v882, %v1107
      %v1124 = vadd.f32 %v883, %v1112
      %v1125 = vadd.f32 %v884, %v1115
      %v1126 = vld [vmem:[%s755] sm:$0xe]
      %v1127 = vld [vmem:[%s755 + $0x8] sm:$0xe]
      %v1128 = vld [vmem:[%s755 + $0x10] sm:$0xe]
      %v1129 = vld [vmem:[%s755 + $0x18] sm:$0xe]
      %v1130 = vld [vmem:[%s755 + $0x20] sm:$0xe]
      %v1131 = vld [vmem:[%s755 + $0x28] sm:$0xe]
      %v1132 = vld [vmem:[%s755 + $0x30] sm:$0xe]
      %v1133 = vld [vmem:[%s755 + $0x38] sm:$0xe]
      %v1150 = vrot.slane %v1126, 5
      %v1151 = vrot.slane %v1150, 4
      %v1152 = vrot.slane %v886, 5
      %v1153 = vsel %vm606, %v1151, %v1152
      %v1154 = vrot.slane %v1127, 5
      %v1155 = vrot.slane %v1154, 4
      %v1156 = vrot.slane %v888, 5
      %v1157 = vsel %vm606, %v1155, %v1156
      %v1158 = vrot.slane %v1128, 5
      %v1159 = vrot.slane %v1158, 4
      %v1160 = vrot.slane %v890, 5
      %v1161 = vsel %vm606, %v1159, %v1160
      %v1162 = vrot.slane %v1129, 5
      %v1163 = vrot.slane %v1162, 4
      %v1164 = vrot.slane %v892, 5
      %v1165 = vsel %vm606, %v1163, %v1164
      %v1166 = vrot.slane %v1130, 5
      %v1167 = vrot.slane %v1166, 4
      %v1168 = vrot.slane %v894, 5
      %v1169 = vsel %vm606, %v1167, %v1168
      %v1170 = vrot.slane %v1131, 5
      %v1171 = vrot.slane %v1170, 4
      %v1172 = vrot.slane %v896, 5
      %v1173 = vsel %vm606, %v1171, %v1172
      %v1174 = vrot.slane %v1132, 5
      %v1175 = vrot.slane %v1174, 4
      %v1176 = vrot.slane %v898, 5
      %v1177 = vsel %vm606, %v1175, %v1176
      %v1178 = vrot.slane %v1133, 5
      %v1179 = vrot.slane %v1178, 4
      %v1180 = vrot.slane %v900, 5
      %v1181 = vsel %vm606, %v1179, %v1180
      %v1182 = vld [vmem:[%s1 + $0x50] sm:$0xf]
      %v1183 = vld [vmem:[%s1 + $0x54] sm:$0xf]
      %v1184 = vld [vmem:[%s1 + $0x58] sm:$0xf]
      %v1185 = vld [vmem:[%s1 + $0x5c] sm:$0xf]
      %v1186 = vunpack.c.l.b16 %v1153
      %v1187 = vunpack.c.l.b16 %v1157
      %v1188 = vunpack.c.l.b16 %v1161
      %v1189 = vunpack.c.l.b16 %v1165
      %v1190 = vunpack.c.l.b16 %v1169
      %v1191 = vunpack.c.l.b16 %v1173
      %v1192 = vunpack.c.l.b16 %v1177
      %v1193 = vunpack.c.l.b16 %v1181
      %v1194 = vpack.c.b16 %v1187, %v1186
      %v1195 = vpack.c.b16 %v1189, %v1188
      %v1196 = vpack.c.b16 %v1191, %v1190
      %v1197 = vpack.c.b16 %v1193, %v1192
      %v1202 = vunpack.c.l.b16 %v1182
      %v1203 = vunpack.c.l.b16 %v1183
      %v1204 = vunpack.c.l.b16 %v1184
      %v1205 = vunpack.c.l.b16 %v1185
      %v1206 = vpack.c.b16 %v1203, %v1202
      %v1207 = vpack.c.b16 %v1205, %v1204
      %v1211 = vsel %vm250, %v1194, 0
      %v1214 = vsel %vm250, %v1195, 0
      %v1217 = vsel %vm250, %v1196, 0
      %v1220 = vsel %vm250, %v1197, 0
      %1222 = vmatprep.subr.bf16.mxu0 0
      %1223 = vmatpush1.bf16.msra.mxu0 %v1206
      %1224 = vmatprep.subr.bf16.mxu0 0
      %1225 = vmatpush1.bf16.msra.mxu0 %v1207
      %1226 = vmatprep.subr.bf16.mxu0 0
      %1227 = vmatpush1.bf16.msra.mxu0 0
      %1228 = vmatprep.subr.bf16.mxu0 0
      %1229 = vmatpush1.bf16.msra.mxu0 0
      %1230 = vmatprep.subr.bf16.mxu0 0
      %1231 = vmatpush1.bf16.msra.mxu0 0
      %1232 = vmatprep.subr.bf16.mxu0 0
      %1233 = vmatpush1.bf16.msra.mxu0 0
      %1234 = vmatprep.subr.bf16.mxu0 0
      %1235 = vmatpush1.bf16.msra.mxu0 0
      %1236 = vmatprep.subr.bf16.mxu0 0
      %1237 = vmatpush1.bf16.msra.mxu0 0
      %1238 = vmatprep.subr.bf16.mxu0 0
      %1239 = vmatpush1.bf16.msra.mxu0 0
      %1240 = vmatprep.subr.bf16.mxu0 0
      %1241 = vmatpush1.bf16.msra.mxu0 0
      %1242 = vmatprep.subr.bf16.mxu0 0
      %1243 = vmatpush1.bf16.msra.mxu0 0
      %1244 = vmatprep.subr.bf16.mxu0 0
      %1245 = vmatpush1.bf16.msra.mxu0 0
      %1246 = vmatprep.subr.bf16.mxu0 0
      %1247 = vmatpush1.bf16.msra.mxu0 0
      %1248 = vmatprep.subr.bf16.mxu0 0
      %1249 = vmatpush1.bf16.msra.mxu0 0
      %1250 = vmatprep.subr.bf16.mxu0 0
      %1251 = vmatpush1.bf16.msra.mxu0 0
      %1252 = vmatprep.subr.bf16.mxu0 0
      %1253 = vmatpush1.bf16.msra.mxu0 0
      %1254 = vmatprep.mubr.bf16.mxu0 0
      %1255 = vmatmul.mubr.bf16.gmra.mrb[0].mxu0 %v1211
      %v1256 = vpop.f32.mrb[0].mxu0
      %v1257 = vadd.f32 0.0, %v1256
      %v1258 = vpop.f32.mrb[0].mxu0
      %v1259 = vpop.f32.mrb[0].mxu0
      %v1260 = vadd.f32 0.0, %v1259
      %v1261 = vpop.f32.mrb[0].mxu0
      %1262 = vmatprep.mubr.bf16.mxu0 0
      %1263 = vmatmul.mubr.bf16.gmra.mrb[0].mxu0 %v1214
      %v1264 = vpop.f32.mrb[0].mxu0
      %v1265 = vadd.f32 0.0, %v1264
      %v1266 = vpop.f32.mrb[0].mxu0
      %v1267 = vpop.f32.mrb[0].mxu0
      %v1268 = vadd.f32 0.0, %v1267
      %v1269 = vpop.f32.mrb[0].mxu0
      %1270 = vmatprep.mubr.bf16.mxu0 0
      %1271 = vmatmul.mubr.bf16.gmra.mrb[0].mxu0 %v1217
      %v1272 = vpop.f32.mrb[0].mxu0
      %v1273 = vadd.f32 0.0, %v1272
      %v1274 = vpop.f32.mrb[0].mxu0
      %v1275 = vpop.f32.mrb[0].mxu0
      %v1276 = vadd.f32 0.0, %v1275
      %v1277 = vpop.f32.mrb[0].mxu0
      %1278 = vmatprep.mubr.bf16.mxu0 0
      %1279 = vmatmul.mubr.bf16.gmra.mrb[0].mxu0 %v1220
      %v1280 = vpop.f32.mrb[0].mxu0
      %v1281 = vadd.f32 0.0, %v1280
      %v1282 = vpop.f32.mrb[0].mxu0
      %v1283 = vpop.f32.mrb[0].mxu0
      %v1284 = vadd.f32 0.0, %v1283
      %v1285 = vpop.f32.mrb[0].mxu0
      %1286 = vdwg.mxu0
      %v1287 = vadd.f32 %v1118, %v1257
      %v1288 = vadd.f32 %v1119, %v1260
      %v1289 = vadd.f32 %v1120, %v1265
      %v1290 = vadd.f32 %v1121, %v1268
      %v1291 = vadd.f32 %v1122, %v1273
      %v1292 = vadd.f32 %v1123, %v1276
      %v1293 = vadd.f32 %v1124, %v1281
      %v1294 = vadd.f32 %v1125, %v1284
      %s1295 = sadd.s32 %s195, 2
      %s1296 = smul.u32 %s1295, 2
      %s1297 = smul.addr %s1296, 4
      %s1298 = scalar_lea.vmem %s183, %s1297
      %v1299 = vld [vmem:[%s1298] sm:$0xf]
      %v1300 = vld [vmem:[%s1298 + $0x8] sm:$0xf]
      %v1301 = vld [vmem:[%s1298 + $0x10] sm:$0xf]
      %v1302 = vld [vmem:[%s1298 + $0x18] sm:$0xf]
      %v1303 = vld [vmem:[%s1298 + $0x20] sm:$0xf]
      %v1304 = vld [vmem:[%s1298 + $0x28] sm:$0xf]
      %v1305 = vld [vmem:[%s1298 + $0x30] sm:$0xf]
      %v1306 = vld [vmem:[%s1298 + $0x38] sm:$0xf]
      %v1307 = vld [vmem:[%s1 + $0x60] sm:$0xf]
      %v1308 = vld [vmem:[%s1 + $0x64] sm:$0xf]
      %v1309 = vld [vmem:[%s1 + $0x68] sm:$0xf]
      %v1310 = vld [vmem:[%s1 + $0x6c] sm:$0xf]
      %v1319 = vunpack.c.l.b16 %v1299
      %v1320 = vunpack.c.l.b16 %v1300
      %v1321 = vunpack.c.l.b16 %v1301
      %v1322 = vunpack.c.l.b16 %v1302
      %v1323 = vunpack.c.l.b16 %v1303
      %v1324 = vunpack.c.l.b16 %v1304
      %v1325 = vunpack.c.l.b16 %v1305
      %v1326 = vunpack.c.l.b16 %v1306
      %v1327 = vpack.c.b16 %v1320, %v1319
      %v1328 = vpack.c.b16 %v1322, %v1321
      %v1329 = vpack.c.b16 %v1324, %v1323
      %v1330 = vpack.c.b16 %v1326, %v1325
      %v1335 = vunpack.c.l.b16 %v1307
      %v1336 = vunpack.c.l.b16 %v1308
      %v1337 = vunpack.c.l.b16 %v1309
      %v1338 = vunpack.c.l.b16 %v1310
      %v1339 = vpack.c.b16 %v1336, %v1335
      %v1340 = vpack.c.b16 %v1338, %v1337
      %v1344 = vsel %vm250, %v1327, 0
      %v1347 = vsel %vm250, %v1328, 0
      %v1350 = vsel %vm250, %v1329, 0
      %v1353 = vsel %vm250, %v1330, 0
      %1355 = vmatprep.subr.bf16.mxu0 0
      %1356 = vmatpush1.bf16.msra.mxu0 %v1339
      %1357 = vmatprep.subr.bf16.mxu0 0
      %1358 = vmatpush1.bf16.msra.mxu0 %v1340
      %1359 = vmatprep.subr.bf16.mxu0 0
      %1360 = vmatpush1.bf16.msra.mxu0 0
      %1361 = vmatprep.subr.bf16.mxu0 0
      %1362 = vmatpush1.bf16.msra.mxu0 0
      %1363 = vmatprep.subr.bf16.mxu0 0
      %1364 = vmatpush1.bf16.msra.mxu0 0
      %1365 = vmatprep.subr.bf16.mxu0 0
      %1366 = vmatpush1.bf16.msra.mxu0 0
      %1367 = vmatprep.subr.bf16.mxu0 0
      %1368 = vmatpush1.bf16.msra.mxu0 0
      %1369 = vmatprep.subr.bf16.mxu0 0
      %1370 = vmatpush1.bf16.msra.mxu0 0
      %1371 = vmatprep.subr.bf16.mxu0 0
      %1372 = vmatpush1.bf16.msra.mxu0 0
      %1373 = vmatprep.subr.bf16.mxu0 0
      %1374 = vmatpush1.bf16.msra.mxu0 0
      %1375 = vmatprep.subr.bf16.mxu0 0
      %1376 = vmatpush1.bf16.msra.mxu0 0
      %1377 = vmatprep.subr.bf16.mxu0 0
      %1378 = vmatpush1.bf16.msra.mxu0 0
      %1379 = vmatprep.subr.bf16.mxu0 0
      %1380 = vmatpush1.bf16.msra.mxu0 0
      %1381 = vmatprep.subr.bf16.mxu0 0
      %1382 = vmatpush1.bf16.msra.mxu0 0
      %1383 = vmatprep.subr.bf16.mxu0 0
      %1384 = vmatpush1.bf16.msra.mxu0 0
      %1385 = vmatprep.subr.bf16.mxu0 0
      %1386 = vmatpush1.bf16.msra.mxu0 0
      %1387 = vmatprep.mubr.bf16.mxu0 0
      %1388 = vmatmul.mubr.bf16.gmra.mrb[0].mxu0 %v1344
      %v1389 = vpop.f32.mrb[0].mxu0
      %v1390 = vadd.f32 0.0, %v1389
      %v1391 = vpop.f32.mrb[0].mxu0
      %v1392 = vpop.f32.mrb[0].mxu0
      %v1393 = vadd.f32 0.0, %v1392
      %v1394 = vpop.f32.mrb[0].mxu0
      %1395 = vmatprep.mubr.bf16.mxu0 0
      %1396 = vmatmul.mubr.bf16.gmra.mrb[0].mxu0 %v1347
      %v1397 = vpop.f32.mrb[0].mxu0
      %v1398 = vadd.f32 0.0, %v1397
      %v1399 = vpop.f32.mrb[0].mxu0
      %v1400 = vpop.f32.mrb[0].mxu0
      %v1401 = vadd.f32 0.0, %v1400
      %v1402 = vpop.f32.mrb[0].mxu0
      %1403 = vmatprep.mubr.bf16.mxu0 0
      %1404 = vmatmul.mubr.bf16.gmra.mrb[0].mxu0 %v1350
      %v1405 = vpop.f32.mrb[0].mxu0
      %v1406 = vadd.f32 0.0, %v1405
      %v1407 = vpop.f32.mrb[0].mxu0
      %v1408 = vpop.f32.mrb[0].mxu0
      %v1409 = vadd.f32 0.0, %v1408
      %v1410 = vpop.f32.mrb[0].mxu0
      %1411 = vmatprep.mubr.bf16.mxu0 0
      %1412 = vmatmul.mubr.bf16.gmra.mrb[0].mxu0 %v1353
      %v1413 = vpop.f32.mrb[0].mxu0
      %v1414 = vadd.f32 0.0, %v1413
      %v1415 = vpop.f32.mrb[0].mxu0
      %v1416 = vpop.f32.mrb[0].mxu0
      %v1417 = vadd.f32 0.0, %v1416
      %v1418 = vpop.f32.mrb[0].mxu0
      %1419 = vdwg.mxu0
      %v1420 = vadd.f32 %v1287, %v1390
      %v1421 = vadd.f32 %v1288, %v1393
      %v1422 = vadd.f32 %v1289, %v1398
      %v1423 = vadd.f32 %v1290, %v1401
      %v1424 = vadd.f32 %v1291, %v1406
      %v1425 = vadd.f32 %v1292, %v1409
      %v1426 = vadd.f32 %v1293, %v1414
      %v1427 = vadd.f32 %v1294, %v1417
      %v1428 = vld [vmem:[%s1298] sm:$0xf]
      %v1429 = vld [vmem:[%s1298 + $0x4] sm:$0x1]
      %v1430 = vld [vmem:[%s1298 + $0x8] sm:$0xf]
      %v1431 = vld [vmem:[%s1298 + $0xc] sm:$0x1]
      %v1432 = vld [vmem:[%s1298 + $0x10] sm:$0xf]
      %v1433 = vld [vmem:[%s1298 + $0x14] sm:$0x1]
      %v1434 = vld [vmem:[%s1298 + $0x18] sm:$0xf]
      %v1435 = vld [vmem:[%s1298 + $0x1c] sm:$0x1]
      %v1436 = vld [vmem:[%s1298 + $0x20] sm:$0xf]
      %v1437 = vld [vmem:[%s1298 + $0x24] sm:$0x1]
      %v1438 = vld [vmem:[%s1298 + $0x28] sm:$0xf]
      %v1439 = vld [vmem:[%s1298 + $0x2c] sm:$0x1]
      %v1440 = vld [vmem:[%s1298 + $0x30] sm:$0xf]
      %v1441 = vld [vmem:[%s1298 + $0x34] sm:$0x1]
      %v1442 = vld [vmem:[%s1298 + $0x38] sm:$0xf]
      %v1443 = vld [vmem:[%s1298 + $0x3c] sm:$0x1]
      %v1445 = vshrl.u32 %v1428, 16
      %v1447 = vrot.slane %v1445, 4
      %v1448 = vshll.u32 %v1428, 16
      %v1450 = vrot.slane %v1448, 5
      %v1451 = vor.u32 %v1447, %v1450
      %v1452 = vrot.slane %v1451, 4
      %v1454 = vshll.u32 %v1429, 16
      %v1456 = vrot.slane %v1454, 5
      %v1457 = vsel %vm354, %v1452, %v1456
      %v1459 = vshrl.u32 %v1430, 16
      %v1461 = vrot.slane %v1459, 4
      %v1462 = vshll.u32 %v1430, 16
      %v1464 = vrot.slane %v1462, 5
      %v1465 = vor.u32 %v1461, %v1464
      %v1466 = vrot.slane %v1465, 4
      %v1468 = vshll.u32 %v1431, 16
      %v1470 = vrot.slane %v1468, 5
      %v1471 = vsel %vm354, %v1466, %v1470
      %v1473 = vshrl.u32 %v1432, 16
      %v1475 = vrot.slane %v1473, 4
      %v1476 = vshll.u32 %v1432, 16
      %v1478 = vrot.slane %v1476, 5
      %v1479 = vor.u32 %v1475, %v1478
      %v1480 = vrot.slane %v1479, 4
      %v1482 = vshll.u32 %v1433, 16
      %v1484 = vrot.slane %v1482, 5
      %v1485 = vsel %vm354, %v1480, %v1484
      %v1487 = vshrl.u32 %v1434, 16
      %v1489 = vrot.slane %v1487, 4
      %v1490 = vshll.u32 %v1434, 16
      %v1492 = vrot.slane %v1490, 5
      %v1493 = vor.u32 %v1489, %v1492
      %v1494 = vrot.slane %v1493, 4
      %v1496 = vshll.u32 %v1435, 16
      %v1498 = vrot.slane %v1496, 5
      %v1499 = vsel %vm354, %v1494, %v1498
      %v1501 = vshrl.u32 %v1436, 16
      %v1503 = vrot.slane %v1501, 4
      %v1504 = vshll.u32 %v1436, 16
      %v1506 = vrot.slane %v1504, 5
      %v1507 = vor.u32 %v1503, %v1506
      %v1508 = vrot.slane %v1507, 4
      %v1510 = vshll.u32 %v1437, 16
      %v1512 = vrot.slane %v1510, 5
      %v1513 = vsel %vm354, %v1508, %v1512
      %v1515 = vshrl.u32 %v1438, 16
      %v1517 = vrot.slane %v1515, 4
      %v1518 = vshll.u32 %v1438, 16
      %v1520 = vrot.slane %v1518, 5
      %v1521 = vor.u32 %v1517, %v1520
      %v1522 = vrot.slane %v1521, 4
      %v1524 = vshll.u32 %v1439, 16
      %v1526 = vrot.slane %v1524, 5
      %v1527 = vsel %vm354, %v1522, %v1526
      %v1529 = vshrl.u32 %v1440, 16
      %v1531 = vrot.slane %v1529, 4
      %v1532 = vshll.u32 %v1440, 16
      %v1534 = vrot.slane %v1532, 5
      %v1535 = vor.u32 %v1531, %v1534
      %v1536 = vrot.slane %v1535, 4
      %v1538 = vshll.u32 %v1441, 16
      %v1540 = vrot.slane %v1538, 5
      %v1541 = vsel %vm354, %v1536, %v1540
      %v1543 = vshrl.u32 %v1442, 16
      %v1545 = vrot.slane %v1543, 4
      %v1546 = vshll.u32 %v1442, 16
      %v1548 = vrot.slane %v1546, 5
      %v1549 = vor.u32 %v1545, %v1548
      %v1550 = vrot.slane %v1549, 4
      %v1552 = vshll.u32 %v1443, 16
      %v1554 = vrot.slane %v1552, 5
      %v1555 = vsel %vm354, %v1550, %v1554
      %v1556 = vld [vmem:[%s1 + $0x70] sm:$0xf]
      %v1557 = vld [vmem:[%s1 + $0x74] sm:$0xf]
      %v1558 = vld [vmem:[%s1 + $0x78] sm:$0xf]
      %v1559 = vld [vmem:[%s1 + $0x7c] sm:$0xf]
      %v1560 = vunpack.c.l.b16 %v1457
      %v1561 = vunpack.c.l.b16 %v1471
      %v1562 = vunpack.c.l.b16 %v1485
      %v1563 = vunpack.c.l.b16 %v1499
      %v1564 = vunpack.c.l.b16 %v1513
      %v1565 = vunpack.c.l.b16 %v1527
      %v1566 = vunpack.c.l.b16 %v1541
      %v1567 = vunpack.c.l.b16 %v1555
      %v1568 = vpack.c.b16 %v1561, %v1560
      %v1569 = vpack.c.b16 %v1563, %v1562
      %v1570 = vpack.c.b16 %v1565, %v1564
      %v1571 = vpack.c.b16 %v1567, %v1566
      %v1576 = vunpack.c.l.b16 %v1556
      %v1577 = vunpack.c.l.b16 %v1557
      %v1578 = vunpack.c.l.b16 %v1558
      %v1579 = vunpack.c.l.b16 %v1559
      %v1580 = vpack.c.b16 %v1577, %v1576
      %v1581 = vpack.c.b16 %v1579, %v1578
      %v1585 = vsel %vm250, %v1568, 0
      %v1588 = vsel %vm250, %v1569, 0
      %v1591 = vsel %vm250, %v1570, 0
      %v1594 = vsel %vm250, %v1571, 0
      %1596 = vmatprep.subr.bf16.mxu0 0
      %1597 = vmatpush1.bf16.msra.mxu0 %v1580
      %1598 = vmatprep.subr.bf16.mxu0 0
      %1599 = vmatpush1.bf16.msra.mxu0 %v1581
      %1600 = vmatprep.subr.bf16.mxu0 0
      %1601 = vmatpush1.bf16.msra.mxu0 0
      %1602 = vmatprep.subr.bf16.mxu0 0
      %1603 = vmatpush1.bf16.msra.mxu0 0
      %1604 = vmatprep.subr.bf16.mxu0 0
      %1605 = vmatpush1.bf16.msra.mxu0 0
      %1606 = vmatprep.subr.bf16.mxu0 0
      %1607 = vmatpush1.bf16.msra.mxu0 0
      %1608 = vmatprep.subr.bf16.mxu0 0
      %1609 = vmatpush1.bf16.msra.mxu0 0
      %1610 = vmatprep.subr.bf16.mxu0 0
      %1611 = vmatpush1.bf16.msra.mxu0 0
      %1612 = vmatprep.subr.bf16.mxu0 0
      %1613 = vmatpush1.bf16.msra.mxu0 0
      %1614 = vmatprep.subr.bf16.mxu0 0
      %1615 = vmatpush1.bf16.msra.mxu0 0
      %1616 = vmatprep.subr.bf16.mxu0 0
      %1617 = vmatpush1.bf16.msra.mxu0 0
      %1618 = vmatprep.subr.bf16.mxu0 0
      %1619 = vmatpush1.bf16.msra.mxu0 0
      %1620 = vmatprep.subr.bf16.mxu0 0
      %1621 = vmatpush1.bf16.msra.mxu0 0
      %1622 = vmatprep.subr.bf16.mxu0 0
      %1623 = vmatpush1.bf16.msra.mxu0 0
      %1624 = vmatprep.subr.bf16.mxu0 0
      %1625 = vmatpush1.bf16.msra.mxu0 0
      %1626 = vmatprep.subr.bf16.mxu0 0
      %1627 = vmatpush1.bf16.msra.mxu0 0
      %1628 = vmatprep.mubr.bf16.mxu0 0
      %1629 = vmatmul.mubr.bf16.gmra.mrb[0].mxu0 %v1585
      %v1630 = vpop.f32.mrb[0].mxu0
      %v1631 = vadd.f32 0.0, %v1630
      %v1632 = vpop.f32.mrb[0].mxu0
      %v1633 = vpop.f32.mrb[0].mxu0
      %v1634 = vadd.f32 0.0, %v1633
      %v1635 = vpop.f32.mrb[0].mxu0
      %1636 = vmatprep.mubr.bf16.mxu0 0
      %1637 = vmatmul.mubr.bf16.gmra.mrb[0].mxu0 %v1588
      %v1638 = vpop.f32.mrb[0].mxu0
      %v1639 = vadd.f32 0.0, %v1638
      %v1640 = vpop.f32.mrb[0].mxu0
      %v1641 = vpop.f32.mrb[0].mxu0
      %v1642 = vadd.f32 0.0, %v1641
      %v1643 = vpop.f32.mrb[0].mxu0
      %1644 = vmatprep.mubr.bf16.mxu0 0
      %1645 = vmatmul.mubr.bf16.gmra.mrb[0].mxu0 %v1591
      %v1646 = vpop.f32.mrb[0].mxu0
      %v1647 = vadd.f32 0.0, %v1646
      %v1648 = vpop.f32.mrb[0].mxu0
      %v1649 = vpop.f32.mrb[0].mxu0
      %v1650 = vadd.f32 0.0, %v1649
      %v1651 = vpop.f32.mrb[0].mxu0
      %1652 = vmatprep.mubr.bf16.mxu0 0
      %1653 = vmatmul.mubr.bf16.gmra.mrb[0].mxu0 %v1594
      %v1654 = vpop.f32.mrb[0].mxu0
      %v1655 = vadd.f32 0.0, %v1654
      %v1656 = vpop.f32.mrb[0].mxu0
      %v1657 = vpop.f32.mrb[0].mxu0
      %v1658 = vadd.f32 0.0, %v1657
      %v1659 = vpop.f32.mrb[0].mxu0
      %1660 = vdwg.mxu0
      %v1661 = vadd.f32 %v1420, %v1631
      %v1662 = vadd.f32 %v1421, %v1634
      %v1663 = vadd.f32 %v1422, %v1639
      %v1664 = vadd.f32 %v1423, %v1642
      %v1665 = vadd.f32 %v1424, %v1647
      %v1666 = vadd.f32 %v1425, %v1650
      %v1667 = vadd.f32 %v1426, %v1655
      %v1668 = vadd.f32 %v1427, %v1658
      %v1669 = vld [vmem:[%s1298] sm:$0xe]
      %v1670 = vld [vmem:[%s1298 + $0x8] sm:$0xe]
      %v1671 = vld [vmem:[%s1298 + $0x10] sm:$0xe]
      %v1672 = vld [vmem:[%s1298 + $0x18] sm:$0xe]
      %v1673 = vld [vmem:[%s1298 + $0x20] sm:$0xe]
      %v1674 = vld [vmem:[%s1298 + $0x28] sm:$0xe]
      %v1675 = vld [vmem:[%s1298 + $0x30] sm:$0xe]
      %v1676 = vld [vmem:[%s1298 + $0x38] sm:$0xe]
      %v1693 = vrot.slane %v1669, 5
      %v1694 = vrot.slane %v1693, 4
      %v1695 = vrot.slane %v1429, 5
      %v1696 = vsel %vm606, %v1694, %v1695
      %v1697 = vrot.slane %v1670, 5
      %v1698 = vrot.slane %v1697, 4
      %v1699 = vrot.slane %v1431, 5
      %v1700 = vsel %vm606, %v1698, %v1699
      %v1701 = vrot.slane %v1671, 5
      %v1702 = vrot.slane %v1701, 4
      %v1703 = vrot.slane %v1433, 5
      %v1704 = vsel %vm606, %v1702, %v1703
      %v1705 = vrot.slane %v1672, 5
      %v1706 = vrot.slane %v1705, 4
      %v1707 = vrot.slane %v1435, 5
      %v1708 = vsel %vm606, %v1706, %v1707
      %v1709 = vrot.slane %v1673, 5
      %v1710 = vrot.slane %v1709, 4
      %v1711 = vrot.slane %v1437, 5
      %v1712 = vsel %vm606, %v1710, %v1711
      %v1713 = vrot.slane %v1674, 5
      %v1714 = vrot.slane %v1713, 4
      %v1715 = vrot.slane %v1439, 5
      %v1716 = vsel %vm606, %v1714, %v1715
      %v1717 = vrot.slane %v1675, 5
      %v1718 = vrot.slane %v1717, 4
      %v1719 = vrot.slane %v1441, 5
      %v1720 = vsel %vm606, %v1718, %v1719
      %v1721 = vrot.slane %v1676, 5
      %v1722 = vrot.slane %v1721, 4
      %v1723 = vrot.slane %v1443, 5
      %v1724 = vsel %vm606, %v1722, %v1723
      %v1725 = vld [vmem:[%s1 + $0x80] sm:$0xf]
      %v1726 = vld [vmem:[%s1 + $0x84] sm:$0xf]
      %v1727 = vld [vmem:[%s1 + $0x88] sm:$0xf]
      %v1728 = vld [vmem:[%s1 + $0x8c] sm:$0xf]
      %v1729 = vunpack.c.l.b16 %v1696
      %v1730 = vunpack.c.l.b16 %v1700
      %v1731 = vunpack.c.l.b16 %v1704
      %v1732 = vunpack.c.l.b16 %v1708
      %v1733 = vunpack.c.l.b16 %v1712
      %v1734 = vunpack.c.l.b16 %v1716
      %v1735 = vunpack.c.l.b16 %v1720
      %v1736 = vunpack.c.l.b16 %v1724
      %v1737 = vpack.c.b16 %v1730, %v1729
      %v1738 = vpack.c.b16 %v1732, %v1731
      %v1739 = vpack.c.b16 %v1734, %v1733
      %v1740 = vpack.c.b16 %v1736, %v1735
      %v1745 = vunpack.c.l.b16 %v1725
      %v1746 = vunpack.c.l.b16 %v1726
      %v1747 = vunpack.c.l.b16 %v1727
      %v1748 = vunpack.c.l.b16 %v1728
      %v1749 = vpack.c.b16 %v1746, %v1745
      %v1750 = vpack.c.b16 %v1748, %v1747
      %v1754 = vsel %vm250, %v1737, 0
      %v1757 = vsel %vm250, %v1738, 0
      %v1760 = vsel %vm250, %v1739, 0
      %v1763 = vsel %vm250, %v1740, 0
      %1765 = vmatprep.subr.bf16.mxu0 0
      %1766 = vmatpush1.bf16.msra.mxu0 %v1749
      %1767 = vmatprep.subr.bf16.mxu0 0
      %1768 = vmatpush1.bf16.msra.mxu0 %v1750
      %1769 = vmatprep.subr.bf16.mxu0 0
      %1770 = vmatpush1.bf16.msra.mxu0 0
      %1771 = vmatprep.subr.bf16.mxu0 0
      %1772 = vmatpush1.bf16.msra.mxu0 0
      %1773 = vmatprep.subr.bf16.mxu0 0
      %1774 = vmatpush1.bf16.msra.mxu0 0
      %1775 = vmatprep.subr.bf16.mxu0 0
      %1776 = vmatpush1.bf16.msra.mxu0 0
      %1777 = vmatprep.subr.bf16.mxu0 0
      %1778 = vmatpush1.bf16.msra.mxu0 0
      %1779 = vmatprep.subr.bf16.mxu0 0
      %1780 = vmatpush1.bf16.msra.mxu0 0
      %1781 = vmatprep.subr.bf16.mxu0 0
      %1782 = vmatpush1.bf16.msra.mxu0 0
      %1783 = vmatprep.subr.bf16.mxu0 0
      %1784 = vmatpush1.bf16.msra.mxu0 0
      %1785 = vmatprep.subr.bf16.mxu0 0
      %1786 = vmatpush1.bf16.msra.mxu0 0
      %1787 = vmatprep.subr.bf16.mxu0 0
      %1788 = vmatpush1.bf16.msra.mxu0 0
      %1789 = vmatprep.subr.bf16.mxu0 0
      %1790 = vmatpush1.bf16.msra.mxu0 0
      %1791 = vmatprep.subr.bf16.mxu0 0
      %1792 = vmatpush1.bf16.msra.mxu0 0
      %1793 = vmatprep.subr.bf16.mxu0 0
      %1794 = vmatpush1.bf16.msra.mxu0 0
      %1795 = vmatprep.subr.bf16.mxu0 0
      %1796 = vmatpush1.bf16.msra.mxu0 0
      %1797 = vmatprep.mubr.bf16.mxu0 0
      %1798 = vmatmul.mubr.bf16.gmra.mrb[0].mxu0 %v1754
      %v1799 = vpop.f32.mrb[0].mxu0
      %v1800 = vadd.f32 0.0, %v1799
      %v1801 = vpop.f32.mrb[0].mxu0
      %v1802 = vpop.f32.mrb[0].mxu0
      %v1803 = vadd.f32 0.0, %v1802
      %v1804 = vpop.f32.mrb[0].mxu0
      %1805 = vmatprep.mubr.bf16.mxu0 0
      %1806 = vmatmul.mubr.bf16.gmra.mrb[0].mxu0 %v1757
      %v1807 = vpop.f32.mrb[0].mxu0
      %v1808 = vadd.f32 0.0, %v1807
      %v1809 = vpop.f32.mrb[0].mxu0
      %v1810 = vpop.f32.mrb[0].mxu0
      %v1811 = vadd.f32 0.0, %v1810
      %v1812 = vpop.f32.mrb[0].mxu0
      %1813 = vmatprep.mubr.bf16.mxu0 0
      %1814 = vmatmul.mubr.bf16.gmra.mrb[0].mxu0 %v1760
      %v1815 = vpop.f32.mrb[0].mxu0
      %v1816 = vadd.f32 0.0, %v1815
      %v1817 = vpop.f32.mrb[0].mxu0
      %v1818 = vpop.f32.mrb[0].mxu0
      %v1819 = vadd.f32 0.0, %v1818
      %v1820 = vpop.f32.mrb[0].mxu0
      %1821 = vmatprep.mubr.bf16.mxu0 0
      %1822 = vmatmul.mubr.bf16.gmra.mrb[0].mxu0 %v1763
      %v1823 = vpop.f32.mrb[0].mxu0
      %v1824 = vadd.f32 0.0, %v1823
      %v1825 = vpop.f32.mrb[0].mxu0
      %v1826 = vpop.f32.mrb[0].mxu0
      %v1827 = vadd.f32 0.0, %v1826
      %v1828 = vpop.f32.mrb[0].mxu0
      %1829 = vdwg.mxu0
      %v1830 = vadd.f32 %v1661, %v1800
      %v1831 = vadd.f32 %v1662, %v1803
      %v1832 = vadd.f32 %v1663, %v1808
      %v1833 = vadd.f32 %v1664, %v1811
      %v1834 = vadd.f32 %v1665, %v1816
      %v1835 = vadd.f32 %v1666, %v1819
      %v1836 = vadd.f32 %v1667, %v1824
      %v1837 = vadd.f32 %v1668, %v1827
      %v1838 = vmax.f32 %v1830, 0.0
      %v1839 = vmax.f32 %v1831, 0.0
      %v1840 = vmax.f32 %v1832, 0.0
      %v1841 = vmax.f32 %v1833, 0.0
      %v1842 = vmax.f32 %v1834, 0.0
      %v1843 = vmax.f32 %v1835, 0.0
      %v1844 = vmax.f32 %v1836, 0.0
      %v1845 = vmax.f32 %v1837, 0.0
      %1846 = vst.msk [vmem:[%s192] sm:$0xff] %vm250, %v1838
      %1847 = vst.msk [vmem:[%s192 + $0x8] sm:$0xff] %vm250, %v1839
      %1848 = vst.msk [vmem:[%s192 + $0x10] sm:$0xff] %vm250, %v1840
      %1849 = vst.msk [vmem:[%s192 + $0x18] sm:$0xff] %vm250, %v1841
      %1850 = vst.msk [vmem:[%s192 + $0x20] sm:$0xff] %vm250, %v1842
      %1851 = vst.msk [vmem:[%s192 + $0x28] sm:$0xff] %vm250, %v1843
      %1852 = vst.msk [vmem:[%s192 + $0x30] sm:$0xff] %vm250, %v1844
      %1853 = vst.msk [vmem:[%s192 + $0x38] sm:$0xff] %vm250, %v1845
      %s1854 = smul.u32 8, %s19
      %p1855 = scmp.lt.s32.totalorder %s18, 1
      %s1856 = scalar_select %p1855, %s18, 1
      %p1857 = scmp.lt.s32.totalorder %s1854, 7
      %s1858 = scalar_select %p1857, %s1854, 7
      %s1859 = smul.addr %s1856, 8
      %s1860 = sadd.s32 %s1858, %s1859
      %s1861 = smul.addr %s1860, 8
      %s1862 = scalar_lea.vmem %s3, %s1861
      // Predicated region
      $region33: #{two_d_branch_forward.4} parent=31 // pred_check
        %p1863 = pneg %p114
      $region34: #{two_d_branch_forward.4} parent=31 // pred_check_branch
        %1865 = sbr.rel (%p1863) target = $region36
      $region35: #{two_d_branch_forward.4} parent=31 // pred_region
        %s1866 = smul.u32 8, %s19
      $region36: #{two_d_branch_forward.4} parent=31 // pred_fallthru
        _
    $region32: #{two_d_branch_forward.4} parent=5 // pred_fallthru
      _
    %p1867 = scmp.le.s32.totalorder 2, %s9
    // Predicated region
    $region37: #{two_d_branch_forward.4} parent=5 // pred_check
      %p1868 = pneg %p1867
    $region38: #{two_d_branch_forward.4} parent=5 // pred_check_branch
      %1870 = sbr.rel (%p1868) target = $region40
    $region39: #{two_d_branch_forward.4} parent=5 // pred_region
      %s1871 = ssub.s32 %s9, 2
      // Predicated region
      $region41: #{two_d_branch_forward.4} parent=39 // pred_check
        %p1872 = pneg %p120
      $region42: #{two_d_branch_forward.4} parent=39 // pred_check_branch
        %1874 = sbr.rel (%p1872) target = $region44
      $region43: #{two_d_branch_forward.4} parent=39 // pred_region
        %s1875 = smul.u32 8, %s21
        %p1876 = scmp.lt.s32.totalorder %s20, 1
        %s1877 = scalar_select %p1876, %s20, 1
        %p1878 = scmp.lt.s32.totalorder %s1875, 7
        %s1879 = scalar_select %p1878, %s1875, 7
        %s1880 = smul.addr %s1877, 8
        %s1881 = sadd.s32 %s1879, %s1880
        %s1882 = smul.addr %s1881, 8
        %s1883 = scalar_lea.vmem %s3, %s1882
      $region44: #{two_d_branch_forward.4} parent=39 // pred_fallthru
        _
    $region40: #{two_d_branch_forward.4} parent=5 // pred_fallthru
      _
  $region6: #{two_d_branch_forward.4} parent=0 // loop_footer
    %s13 = sadd.s32 1, %s9
  $region7: #{two_d_branch_forward.4} parent=0 // loop_footer_branch
    %8 = sbr.rel target = $region3
  $region8: #{two_d_branch_forward.4} parent=0 // loop_exit
    _

// kernel: two_d_branch_forward.5
$region0: #{two_d_branch_forward.5}
  #allocation0 [shape = 'u32[]', space=smem, size = 0x4, offset = 0x4, fixed_abs, tag = 'smem constant byte address 0x4 - core index']
  #allocation1 [shape = 'u32[144,128]{1,0:T(1,128)}', space=vmem, size = 0x12000, scoped, tag = 'internal scratch']
  %s0 = inlined_call_operand.vmem [shape: bf16[2,1,18,18,32], index: 0, kind: input, shape index: {}]
  %s1 = inlined_call_operand.vmem [shape: bf16[288,32], index: 1, kind: input, shape index: {}]
  %s2 = inlined_call_operand.vmem [shape: f32[1,32], index: 2, kind: input, shape index: {}]
  %s3 = inlined_call_operand.vmem [shape: f32[2,8,16,32], index: 3, kind: input, shape index: {}]
  %s4 = inlined_call_operand.hbm [shape: f32[2,16,16,32], index: 4, kind: output, shape index: {}]
  %s5 = sld [smem:[#allocation0]]
  $region49: #{two_d_branch_forward.5} parent=0
    _
  %s7 = ssub.s32 1, %s5
  %s8 = scalar_select 0, %s7, %s5
  $region1: #{two_d_branch_forward.5} parent=0
    #allocation2 [shape = 'u8[262144]{0}', space=vmem, size = 0x40000, scoped, tag = 'output window, operand 0']
    #allocation3 [shape = 's32[2]{0}', space=sflag, size = 0x8, scoped, tag = 'scoped memory for two_d_branch_forward.5']
    %9 = vsyncpa [#allocation3], 0
    %s10 = scalar_lea.sflag [#allocation3], 1
    %11 = vsyncpa %s10, 0
    loop: start=0, step=1, limit=4
    $region2: #{two_d_branch_forward.5} parent=1 // loop_pre_header
      _
    $region3: #{two_d_branch_forward.5} parent=1 // loop_header
      %s13 = sphi 0, %s17
      %p14 = scmp.ge.s32.totalorder %s13, 4
      %s20 = sphi 0, %s32
      %s21 = sphi 0, %s28
      %s22 = sphi 0, %s20
      %s23 = sphi 0, %s21
      %s24 = sphi 0, %s22
      %s25 = sphi 0, %s23
      %s35 = sphi 0, %s37
      %s38 = sphi 0, %s35
      %s39 = sphi 0, %s38
      %s55 = sphi 0, %s39
      %s59 = sphi 0, %s59
      %s61 = sphi 0, %s59
      %s62 = sphi 0, %s61
      %s76 = sphi 0, %s62
      %s80 = sphi 0, %s80
      %s82 = sphi 0, %s80
      %s83 = sphi 0, %s82
      %s97 = sphi 0, %s83
      %s105 = sphi 0, %s107
      %s108 = sphi 0, %s105
      %s109 = sphi 0, %s108
      %s125 = sphi 0, %s109
      %s133 = sphi 0, %s135
      %s136 = sphi 0, %s133
      %s137 = sphi 0, %s136
      %s153 = sphi 0, %s137
    $region4: #{two_d_branch_forward.5} parent=1 // loop_header_branch
      %16 = sbr.rel (%p14) target = $region8
    $region5: #{two_d_branch_forward.5} parent=1 // loop_body
      %s18 = ssub.s32 %s13, 1
      %s19 = ssub.s32 %s13, 2
      %s26 = sadd.s32 1, %s21
      %p27 = scmp.ge.s32.totalorder %s26, 1
      %s28 = scalar_select %p27, 0, %s26
      %s29 = sadd.s32 1, %s20
      %s30 = scalar_select %p27, %s29, %s20
      %p31 = scmp.ge.s32.totalorder %s30, 2
      %s32 = scalar_select %p31, 0, %s30
      %s33 = ssub.s32 %s20, %s32
      %p34 = scmp.eq.s32.totalorder %s33, 0
      %s36 = sadd.s32 %s35, 1
      %s37 = scalar_select %p34, %s35, %s36
      %p40 = pneg %p34
      %p41 = scmp.eq.s32.totalorder %s13, 1
      %p42 = por %p40, %p41
      %p43 = scmp.ne.s32.totalorder %s35, %s38
      %p44 = scmp.eq.s32.totalorder %s13, 0
      %p45 = por %p43, %p44
      %p46 = scmp.ne.s32.totalorder %s35, %s38
      %p47 = scmp.eq.s32.totalorder %s18, 1
      %p48 = por %p46, %p47
      %p49 = scmp.ne.s32.totalorder %s38, %s39
      %p50 = scmp.eq.s32.totalorder %s18, 0
      %p51 = por %p49, %p50
      %p52 = scmp.ne.s32.totalorder %s38, %s39
      %p53 = scmp.eq.s32.totalorder %s19, 1
      %p54 = por %p52, %p53
      %p56 = scmp.ne.s32.totalorder %s39, %s55
      %p57 = scmp.eq.s32.totalorder %s19, 0
      %p58 = por %p56, %p57
      %s60 = sadd.s32 %s59, 1
      %p63 = scmp.eq.s32.totalorder %s13, 1
      %p64 = scmp.ne.s32.totalorder %s59, %s61
      %p65 = scmp.eq.s32.totalorder %s13, 0
      %p66 = por %p64, %p65
      %p67 = scmp.ne.s32.totalorder %s59, %s61
      %p68 = scmp.eq.s32.totalorder %s18, 1
      %p69 = por %p67, %p68
      %p70 = scmp.ne.s32.totalorder %s61, %s62
      %p71 = scmp.eq.s32.totalorder %s18, 0
      %p72 = por %p70, %p71
      %p73 = scmp.ne.s32.totalorder %s61, %s62
      %p74 = scmp.eq.s32.totalorder %s19, 1
      %p75 = por %p73, %p74
      %p77 = scmp.ne.s32.totalorder %s62, %s76
      %p78 = scmp.eq.s32.totalorder %s19, 0
      %p79 = por %p77, %p78
      %s81 = sadd.s32 %s80, 1
      %p84 = scmp.eq.s32.totalorder %s13, 1
      %p85 = scmp.ne.s32.totalorder %s80, %s82
      %p86 = scmp.eq.s32.totalorder %s13, 0
      %p87 = por %p85, %p86
      %p88 = scmp.ne.s32.totalorder %s80, %s82
      %p89 = scmp.eq.s32.totalorder %s18, 1
      %p90 = por %p88, %p89
      %p91 = scmp.ne.s32.totalorder %s82, %s83
      %p92 = scmp.eq.s32.totalorder %s18, 0
      %p93 = por %p91, %p92
      %p94 = scmp.ne.s32.totalorder %s82, %s83
      %p95 = scmp.eq.s32.totalorder %s19, 1
      %p96 = por %p94, %p95
      %p98 = scmp.ne.s32.totalorder %s83, %s97
      %p99 = scmp.eq.s32.totalorder %s19, 0
      %p100 = por %p98, %p99
      %s101 = ssub.s32 %s20, %s32
      %s102 = ssub.s32 %s21, %s28
      %s103 = sor.u32 %s101, %s102
      %p104 = scmp.eq.s32.totalorder %s103, 0
      %s106 = sadd.s32 %s105, 1
      %s107 = scalar_select %p104, %s105, %s106
      %p110 = pneg %p104
      %p111 = scmp.eq.s32.totalorder %s13, 1
      %p112 = por %p110, %p111
      %p113 = scmp.ne.s32.totalorder %s105, %s108
      %p114 = scmp.eq.s32.totalorder %s13, 0
      %p115 = por %p113, %p114
      %p116 = scmp.ne.s32.totalorder %s105, %s108
      %p117 = scmp.eq.s32.totalorder %s18, 1
      %p118 = por %p116, %p117
      %p119 = scmp.ne.s32.totalorder %s108, %s109
      %p120 = scmp.eq.s32.totalorder %s18, 0
      %p121 = por %p119, %p120
      %p122 = scmp.ne.s32.totalorder %s108, %s109
      %p123 = scmp.eq.s32.totalorder %s19, 1
      %p124 = por %p122, %p123
      %p126 = scmp.ne.s32.totalorder %s109, %s125
      %p127 = scmp.eq.s32.totalorder %s19, 0
      %p128 = por %p126, %p127
      %s129 = ssub.s32 %s20, %s32
      %s130 = ssub.s32 %s21, %s28
      %s131 = sor.u32 %s129, %s130
      %p132 = scmp.eq.s32.totalorder %s131, 0
      %s134 = sadd.s32 %s133, 1
      %s135 = scalar_select %p132, %s133, %s134
      %p138 = pneg %p132
      %p139 = scmp.eq.s32.totalorder %s13, 1
      %p140 = por %p138, %p139
      %p141 = scmp.ne.s32.totalorder %s133, %s136
      %p142 = scmp.eq.s32.totalorder %s13, 0
      %p143 = por %p141, %p142
      %p144 = scmp.ne.s32.totalorder %s133, %s136
      %p145 = scmp.eq.s32.totalorder %s18, 1
      %p146 = por %p144, %p145
      %p147 = scmp.ne.s32.totalorder %s136, %s137
      %p148 = scmp.eq.s32.totalorder %s18, 0
      %p149 = por %p147, %p148
      %p150 = scmp.ne.s32.totalorder %s136, %s137
      %p151 = scmp.eq.s32.totalorder %s19, 1
      %p152 = por %p150, %p151
      %p154 = scmp.ne.s32.totalorder %s137, %s153
      %p155 = scmp.eq.s32.totalorder %s19, 0
      %p156 = por %p154, %p155
      %p157 = scmp.le.s32.totalorder 1, %s13
      %p158 = scmp.lt.s32.totalorder %s13, 3
      %p159 = pnand %p157, %p158
      %p160 = pneg %p159
      // Predicated region
      $region9: #{two_d_branch_forward.5} parent=5 // pred_check
        _
      $region10: #{two_d_branch_forward.5} parent=5 // pred_check_branch
        %162 = sbr.rel (%p159) target = $region12
      $region11: #{two_d_branch_forward.5} parent=5 // pred_region
        %s163 = ssub.s32 %s13, 1
        // Predicated region
        $region13: #{two_d_branch_forward.5} parent=11 // pred_check
          %p164 = pneg %p72
        $region14: #{two_d_branch_forward.5} parent=11 // pred_check_branch
          %166 = sbr.rel (%p164) target = $region16
        $region15: #{two_d_branch_forward.5} parent=11 // pred_region
          _
        $region16: #{two_d_branch_forward.5} parent=11 // pred_fallthru
          _
        // Predicated region
        $region17: #{two_d_branch_forward.5} parent=11 // pred_check
          %p167 = pneg %p93
        $region18: #{two_d_branch_forward.5} parent=11 // pred_check_branch
          %169 = sbr.rel (%p167) target = $region20
        $region19: #{two_d_branch_forward.5} parent=11 // pred_region
          _
        $region20: #{two_d_branch_forward.5} parent=11 // pred_fallthru
          _
      $region12: #{two_d_branch_forward.5} parent=5 // pred_fallthru
        _
      %p170 = scmp.lt.s32.totalorder %s13, 2
      // Predicated region
      $region21: #{two_d_branch_forward.5} parent=5 // pred_check
        %p171 = pneg %p170
      $region22: #{two_d_branch_forward.5} parent=5 // pred_check_branch
        %173 = sbr.rel (%p171) target = $region24
      $region23: #{two_d_branch_forward.5} parent=5 // pred_region
        // Predicated region
        $region25: #{two_d_branch_forward.5} parent=23 // pred_check
          %p174 = pneg %p45
        $region26: #{two_d_branch_forward.5} parent=23 // pred_check_branch
          %176 = sbr.rel (%p174) target = $region28
        $region27: #{two_d_branch_forward.5} parent=23 // pred_region
          %p177 = scmp.lt.s32.totalorder %s20, 1
          %s178 = scalar_select %p177, %s20, 1
          %s179 = smul.addr %s178, 54
          %s180 = smul.addr %s179, 4
          %s181 = scalar_lea.vmem %s0, %s180
        $region28: #{two_d_branch_forward.5} parent=23 // pred_fallthru
          _
        // Predicated region
        $region29: #{two_d_branch_forward.5} parent=23 // pred_check
          %p182 = pneg %p115
        $region30: #{two_d_branch_forward.5} parent=23 // pred_check_branch
          %184 = sbr.rel (%p182) target = $region32
        $region31: #{two_d_branch_forward.5} parent=23 // pred_region
          %s185 = smul.u32 8, %s21
          %p186 = scmp.lt.s32.totalorder %s20, 1
          %s187 = scalar_select %p186, %s20, 1
          %p188 = scmp.lt.s32.totalorder %s185, 7
          %s189 = scalar_select %p188, %s185, 7
          %s190 = smul.addr %s189, 2
          %s191 = smul.addr %s187, 16
          %s192 = sadd.s32 %s190, %s191
          %s193 = smul.addr %s192, 8
          %s194 = scalar_lea.vmem %s3, %s193
          %s195 = smul.u32 8, %s21
        $region32: #{two_d_branch_forward.5} parent=23 // pred_fallthru
          _
      $region24: #{two_d_branch_forward.5} parent=5 // pred_fallthru
        _
      %p196 = scmp.le.s32.totalorder 1, %s13
      %p197 = scmp.lt.s32.totalorder %s13, 3
      %p198 = pnand %p196, %p197
      %p199 = pneg %p198
      // Predicated region
      $region33: #{two_d_branch_forward.5} parent=5 // pred_check
        _
      $region34: #{two_d_branch_forward.5} parent=5 // pred_check_branch
        %201 = sbr.rel (%p198) target = $region36
      $region35: #{two_d_branch_forward.5} parent=5 // pred_region
        %s202 = ssub.s32 %s13, 1
        %p203 = scmp.lt.s32.totalorder %s22, 1
        %s204 = scalar_select %p203, %s22, 1
        %s205 = smul.addr %s204, 54
        %s206 = smul.addr %s205, 4
        %s207 = scalar_lea.vmem %s0, %s206
        %p208 = pneg %p51
        %p209 = pneg %p48
        %p210 = pneg %p72
        %p211 = pneg %p69
        %p212 = pneg %p93
        %p213 = pneg %p90
        %s214 = smul.u32 8, %s23
        %p215 = scmp.lt.s32.totalorder %s22, 1
        %s216 = scalar_select %p215, %s22, 1
        %p217 = scmp.lt.s32.totalorder %s214, 7
        %s218 = scalar_select %p217, %s214, 7
        %s219 = smul.addr %s218, 2
        %s220 = smul.addr %s216, 16
        %s221 = sadd.s32 %s219, %s220
        %s222 = smul.addr %s221, 8
        %s223 = scalar_lea.vmem %s3, %s222
        %p224 = pneg %p121
        %p225 = pneg %p118
        %p226 = pneg %p149
        %p227 = pneg %p146
        %s228 = sand.u32 %s136, 1
        %s229 = scalar_lea.sflag [#allocation3], %s228
        %s230 = sand.u32 %s136, 1
        %s231 = smul.addr %s230, 256
        %s232 = scalar_lea.vmem [#allocation2], %s231
        %p233 = scmp.lt.s32.totalorder %s22, 1
        %s234 = scalar_select %p233, %s22, 1
        %s235 = smul.addr %s234, 54
        %s236 = smul.addr %s235, 4
        %s237 = scalar_lea.vmem %s0, %s236
        %s238 = smul.u32 8, %s23
        %p239 = scmp.lt.s32.totalorder %s22, 1
        %s240 = scalar_select %p239, %s22, 1
        %p241 = scmp.lt.s32.totalorder %s238, 7
        %s242 = scalar_select %p241, %s238, 7
        %s243 = smul.addr %s242, 2
        %s244 = smul.addr %s240, 16
        %s245 = sadd.s32 %s243, %s244
        %s246 = smul.addr %s245, 8
        %s247 = scalar_lea.vmem %s3, %s246
        %s248 = smul.u32 8, %s23
        %s249 = smul.u32 16, %s23
        %s251 = smul.u32 %s23, 16
        %v252 = vld [vmem:[%s2] sm:$0x1]
        %v254 = vlaneseq
        %v255 = vshrl.u32 %v254, 7
        %v256 = vsub.s32 0, %v255
        %v257 = vrot.slane %v252, %v256
        %s259 = smul.u32 %s251, 3
        %s260 = smul.addr %s259, 4
        %s261 = scalar_lea.vmem %s237, %s260
        %v262 = vld [vmem:[%s261] sm:$0xf]
        %v263 = vld [vmem:[%s261 + $0x4] sm:$0xf]
        %v264 = vld [vmem:[%s261 + $0xc] sm:$0xf]
        %v265 = vld [vmem:[%s261 + $0x10] sm:$0xf]
        %v266 = vld [vmem:[%s261 + $0x18] sm:$0xf]
        %v267 = vld [vmem:[%s261 + $0x1c] sm:$0xf]
        %v268 = vld [vmem:[%s261 + $0x24] sm:$0xf]
        %v269 = vld [vmem:[%s261 + $0x28] sm:$0xf]
        %v270 = vld [vmem:[%s261 + $0x30] sm:$0xf]
        %v271 = vld [vmem:[%s261 + $0x34] sm:$0xf]
        %v272 = vld [vmem:[%s261 + $0x3c] sm:$0xf]
        %v273 = vld [vmem:[%s261 + $0x40] sm:$0xf]
        %v274 = vld [vmem:[%s261 + $0x48] sm:$0xf]
        %v275 = vld [vmem:[%s261 + $0x4c] sm:$0xf]
        %v276 = vld [vmem:[%s261 + $0x54] sm:$0xf]
        %v277 = vld [vmem:[%s261 + $0x58] sm:$0xf]
        %v278 = vld [vmem:[%s261 + $0x60] sm:$0xf]
        %v279 = vld [vmem:[%s261 + $0x64] sm:$0xf]
        %v280 = vld [vmem:[%s261 + $0x6c] sm:$0xf]
        %v281 = vld [vmem:[%s261 + $0x70] sm:$0xf]
        %v282 = vld [vmem:[%s261 + $0x78] sm:$0xf]
        %v283 = vld [vmem:[%s261 + $0x7c] sm:$0xf]
        %v284 = vld [vmem:[%s261 + $0x84] sm:$0xf]
        %v285 = vld [vmem:[%s261 + $0x88] sm:$0xf]
        %v286 = vld [vmem:[%s261 + $0x90] sm:$0xf]
        %v287 = vld [vmem:[%s261 + $0x94] sm:$0xf]
        %v288 = vld [vmem:[%s261 + $0x9c] sm:$0xf]
        %v289 = vld [vmem:[%s261 + $0xa0] sm:$0xf]
        %v290 = vld [vmem:[%s261 + $0xa8] sm:$0xf]
        %v291 = vld [vmem:[%s261 + $0xac] sm:$0xf]
        %v292 = vld [vmem:[%s261 + $0xb4] sm:$0xf]
        %v293 = vld [vmem:[%s261 + $0xb8] sm:$0xf]
        %v294 = vld [vmem:[%s1] sm:$0xf]
        %v295 = vld [vmem:[%s1 + $0x4] sm:$0xf]
        %v296 = vld [vmem:[%s1 + $0x8] sm:$0xf]
        %v297 = vld [vmem:[%s1 + $0xc] sm:$0xf]
        %v330 = vunpack.c.l.b16 %v262
        %v331 = vunpack.c.l.b16 %v263
        %v332 = vunpack.c.l.b16 %v264
        %v333 = vunpack.c.l.b16 %v265
        %v334 = vunpack.c.l.b16 %v266
        %v335 = vunpack.c.l.b16 %v267
        %v336 = vunpack.c.l.b16 %v268
        %v337 = vunpack.c.l.b16 %v269
        %v338 = vunpack.c.l.b16 %v270
        %v339 = vunpack.c.l.b16 %v271
        %v340 = vunpack.c.l.b16 %v272
        %v341 = vunpack.c.l.b16 %v273
        %v342 = vunpack.c.l.b16 %v274
        %v343 = vunpack.c.l.b16 %v275
        %v344 = vunpack.c.l.b16 %v276
        %v345 = vunpack.c.l.b16 %v277
        %v346 = vunpack.c.l.b16 %v278
        %v347 = vunpack.c.l.b16 %v279
        %v348 = vunpack.c.l.b16 %v280
        %v349 = vunpack.c.l.b16 %v281
        %v350 = vunpack.c.l.b16 %v282
        %v351 = vunpack.c.l.b16 %v283
        %v352 = vunpack.c.l.b16 %v284
        %v353 = vunpack.c.l.b16 %v285
        %v354 = vunpack.c.l.b16 %v286
        %v355 = vunpack.c.l.b16 %v287
        %v356 = vunpack.c.l.b16 %v288
        %v357 = vunpack.c.l.b16 %v289
        %v358 = vunpack.c.l.b16 %v290
        %v359 = vunpack.c.l.b16 %v291
        %v360 = vunpack.c.l.b16 %v292
        %v361 = vunpack.c.l.b16 %v293
        %v362 = vpack.c.b16 %v331, %v330
        %v363 = vpack.c.b16 %v333, %v332
        %v364 = vpack.c.b16 %v335, %v334
        %v365 = vpack.c.b16 %v337, %v336
        %v366 = vpack.c.b16 %v339, %v338
        %v367 = vpack.c.b16 %v341, %v340
        %v368 = vpack.c.b16 %v343, %v342
        %v369 = vpack.c.b16 %v345, %v344
        %v370 = vpack.c.b16 %v347, %v346
        %v371 = vpack.c.b16 %v349, %v348
        %v372 = vpack.c.b16 %v351, %v350
        %v373 = vpack.c.b16 %v353, %v352
        %v374 = vpack.c.b16 %v355, %v354
        %v375 = vpack.c.b16 %v357, %v356
        %v376 = vpack.c.b16 %v359, %v358
        %v377 = vpack.c.b16 %v361, %v360
        %v382 = vunpack.c.l.b16 %v294
        %v383 = vunpack.c.l.b16 %v295
        %v384 = vunpack.c.l.b16 %v296
        %v385 = vunpack.c.l.b16 %v297
        %v386 = vpack.c.b16 %v383, %v382
        %v387 = vpack.c.b16 %v385, %v384
        %vm390 = vcmask 261120
        %v392 = vsel %vm390, %v362, 0
        %v395 = vsel %vm390, %v363, 0
        %v398 = vsel %vm390, %v364, 0
        %v401 = vsel %vm390, %v365, 0
        %v404 = vsel %vm390, %v366, 0
        %v407 = vsel %vm390, %v367, 0
        %v410 = vsel %vm390, %v368, 0
        %v413 = vsel %vm390, %v369, 0
        %v416 = vsel %vm390, %v370, 0
        %v419 = vsel %vm390, %v371, 0
        %v422 = vsel %vm390, %v372, 0
        %v425 = vsel %vm390, %v373, 0
        %v428 = vsel %vm390, %v374, 0
        %v431 = vsel %vm390, %v375, 0
        %v434 = vsel %vm390, %v376, 0
        %v437 = vsel %vm390, %v377, 0
        %439 = vmatprep.subr.bf16.mxu0 0
        %440 = vmatpush1.bf16.msra.mxu0 %v386
        %441 = vmatprep.subr.bf16.mxu0 0
        %442 = vmatpush1.bf16.msra.mxu0 %v387
        %443 = vmatprep.subr.bf16.mxu0 0
        %444 = vmatpush1.bf16.msra.mxu0 0
        %445 = vmatprep.subr.bf16.mxu0 0
        %446 = vmatpush1.bf16.msra.mxu0 0
        %447 = vmatprep.subr.bf16.mxu0 0
        %448 = vmatpush1.bf16.msra.mxu0 0
        %449 = vmatprep.subr.bf16.mxu0 0
        %450 = vmatpush1.bf16.msra.mxu0 0
        %451 = vmatprep.subr.bf16.mxu0 0
        %452 = vmatpush1.bf16.msra.mxu0 0
        %453 = vmatprep.subr.bf16.mxu0 0
        %454 = vmatpush1.bf16.msra.mxu0 0
        %455 = vmatprep.subr.bf16.mxu0 0
        %456 = vmatpush1.bf16.msra.mxu0 0
        %457 = vmatprep.subr.bf16.mxu0 0
        %458 = vmatpush1.bf16.msra.mxu0 0
        %459 = vmatprep.subr.bf16.mxu0 0
        %460 = vmatpush1.bf16.msra.mxu0 0
        %461 = vmatprep.subr.bf16.mxu0 0
        %462 = vmatpush1.bf16.msra.mxu0 0
        %463 = vmatprep.subr.bf16.mxu0 0
        %464 = vmatpush1.bf16.msra.mxu0 0
        %465 = vmatprep.subr.bf16.mxu0 0
        %466 = vmatpush1.bf16.msra.mxu0 0
        %467 = vmatprep.subr.bf16.mxu0 0
        %468 = vmatpush1.bf16.msra.mxu0 0
        %469 = vmatprep.subr.bf16.mxu0 0
        %470 = vmatpush1.bf16.msra.mxu0 0
        %471 = vmatprep.mubr.bf16.mxu0 0
        %472 = vmatmul.mubr.bf16.gmra.mrb[0].mxu0 %v392
        %v473 = vpop.f32.mrb[0].mxu0
        %v474 = vadd.f32 0.0, %v473
        %v475 = vpop.f32.mrb[0].mxu0
        %v476 = vpop.f32.mrb[0].mxu0
        %v477 = vadd.f32 0.0, %v476
        %v478 = vpop.f32.mrb[0].mxu0
        %479 = vmatprep.mubr.bf16.mxu0 0
        %480 = vmatmul.mubr.bf16.gmra.mrb[0].mxu0 %v395
        %v481 = vpop.f32.mrb[0].mxu0
        %v482 = vadd.f32 0.0, %v481
        %v483 = vpop.f32.mrb[0].mxu0
        %v484 = vpop.f32.mrb[0].mxu0
        %v485 = vadd.f32 0.0, %v484
        %v486 = vpop.f32.mrb[0].mxu0
        %487 = vmatprep.mubr.bf16.mxu0 0
        %488 = vmatmul.mubr.bf16.gmra.mrb[0].mxu0 %v398
        %v489 = vpop.f32.mrb[0].mxu0
        %v490 = vadd.f32 0.0, %v489
        %v491 = vpop.f32.mrb[0].mxu0
        %v492 = vpop.f32.mrb[0].mxu0
        %v493 = vadd.f32 0.0, %v492
        %v494 = vpop.f32.mrb[0].mxu0
        %495 = vmatprep.mubr.bf16.mxu0 0
        %496 = vmatmul.mubr.bf16.gmra.mrb[0].mxu0 %v401
        %v497 = vpop.f32.mrb[0].mxu0
        %v498 = vadd.f32 0.0, %v497
        %v499 = vpop.f32.mrb[0].mxu0
        %v500 = vpop.f32.mrb[0].mxu0
        %v501 = vadd.f32 0.0, %v500
        %v502 = vpop.f32.mrb[0].mxu0
        %503 = vmatprep.mubr.bf16.mxu0 0
        %504 = vmatmul.mubr.bf16.gmra.mrb[0].mxu0 %v404
        %v505 = vpop.f32.mrb[0].mxu0
        %v506 = vadd.f32 0.0, %v505
        %v507 = vpop.f32.mrb[0].mxu0
        %v508 = vpop.f32.mrb[0].mxu0
        %v509 = vadd.f32 0.0, %v508
        %v510 = vpop.f32.mrb[0].mxu0
        %511 = vmatprep.mubr.bf16.mxu0 0
        %512 = vmatmul.mubr.bf16.gmra.mrb[0].mxu0 %v407
        %v513 = vpop.f32.mrb[0].mxu0
        %v514 = vadd.f32 0.0, %v513
        %v515 = vpop.f32.mrb[0].mxu0
        %v516 = vpop.f32.mrb[0].mxu0
        %v517 = vadd.f32 0.0, %v516
        %v518 = vpop.f32.mrb[0].mxu0
        %519 = vmatprep.mubr.bf16.mxu0 0
        %520 = vmatmul.mubr.bf16.gmra.mrb[0].mxu0 %v410
        %v521 = vpop.f32.mrb[0].mxu0
        %v522 = vadd.f32 0.0, %v521
        %v523 = vpop.f32.mrb[0].mxu0
        %v524 = vpop.f32.mrb[0].mxu0
        %v525 = vadd.f32 0.0, %v524
        %v526 = vpop.f32.mrb[0].mxu0
        %527 = vmatprep.mubr.bf16.mxu0 0
        %528 = vmatmul.mubr.bf16.gmra.mrb[0].mxu0 %v413
        %v529 = vpop.f32.mrb[0].mxu0
        %v530 = vadd.f32 0.0, %v529
        %v531 = vpop.f32.mrb[0].mxu0
        %v532 = vpop.f32.mrb[0].mxu0
        %v533 = vadd.f32 0.0, %v532
        %v534 = vpop.f32.mrb[0].mxu0
        %535 = vmatprep.mubr.bf16.mxu0 0
        %536 = vmatmul.mubr.bf16.gmra.mrb[0].mxu0 %v416
        %v537 = vpop.f32.mrb[0].mxu0
        %v538 = vadd.f32 0.0, %v537
        %v539 = vpop.f32.mrb[0].mxu0
        %v540 = vpop.f32.mrb[0].mxu0
        %v541 = vadd.f32 0.0, %v540
        %v542 = vpop.f32.mrb[0].mxu0
        %543 = vmatprep.mubr.bf16.mxu0 0
        %544 = vmatmul.mubr.bf16.gmra.mrb[0].mxu0 %v419
        %v545 = vpop.f32.mrb[0].mxu0
        %v546 = vadd.f32 0.0, %v545
        %v547 = vpop.f32.mrb[0].mxu0
        %v548 = vpop.f32.mrb[0].mxu0
        %v549 = vadd.f32 0.0, %v548
        %v550 = vpop.f32.mrb[0].mxu0
        %551 = vmatprep.mubr.bf16.mxu0 0
        %552 = vmatmul.mubr.bf16.gmra.mrb[0].mxu0 %v422
        %v553 = vpop.f32.mrb[0].mxu0
        %v554 = vadd.f32 0.0, %v553
        %v555 = vpop.f32.mrb[0].mxu0
        %v556 = vpop.f32.mrb[0].mxu0
        %v557 = vadd.f32 0.0, %v556
        %v558 = vpop.f32.mrb[0].mxu0
        %559 = vmatprep.mubr.bf16.mxu0 0
        %560 = vmatmul.mubr.bf16.gmra.mrb[0].mxu0 %v425
        %v561 = vpop.f32.mrb[0].mxu0
        %v562 = vadd.f32 0.0, %v561
        %v563 = vpop.f32.mrb[0].mxu0
        %v564 = vpop.f32.mrb[0].mxu0
        %v565 = vadd.f32 0.0, %v564
        %v566 = vpop.f32.mrb[0].mxu0
        %567 = vmatprep.mubr.bf16.mxu0 0
        %568 = vmatmul.mubr.bf16.gmra.mrb[0].mxu0 %v428
        %v569 = vpop.f32.mrb[0].mxu0
        %v570 = vadd.f32 0.0, %v569
        %v571 = vpop.f32.mrb[0].mxu0
        %v572 = vpop.f32.mrb[0].mxu0
        %v573 = vadd.f32 0.0, %v572
        %v574 = vpop.f32.mrb[0].mxu0
        %575 = vmatprep.mubr.bf16.mxu0 0
        %576 = vmatmul.mubr.bf16.gmra.mrb[0].mxu0 %v431
        %v577 = vpop.f32.mrb[0].mxu0
        %v578 = vadd.f32 0.0, %v577
        %v579 = vpop.f32.mrb[0].mxu0
        %v580 = vpop.f32.mrb[0].mxu0
        %v581 = vadd.f32 0.0, %v580
        %v582 = vpop.f32.mrb[0].mxu0
        %583 = vmatprep.mubr.bf16.mxu0 0
        %584 = vmatmul.mubr.bf16.gmra.mrb[0].mxu0 %v434
        %v585 = vpop.f32.mrb[0].mxu0
        %v586 = vadd.f32 0.0, %v585
        %v587 = vpop.f32.mrb[0].mxu0
        %v588 = vpop.f32.mrb[0].mxu0
        %v589 = vadd.f32 0.0, %v588
        %v590 = vpop.f32.mrb[0].mxu0
        %591 = vmatprep.mubr.bf16.mxu0 0
        %592 = vmatmul.mubr.bf16.gmra.mrb[0].mxu0 %v437
        %v593 = vpop.f32.mrb[0].mxu0
        %v594 = vadd.f32 0.0, %v593
        %v595 = vpop.f32.mrb[0].mxu0
        %v596 = vpop.f32.mrb[0].mxu0
        %v597 = vadd.f32 0.0, %v596
        %v598 = vpop.f32.mrb[0].mxu0
        %599 = vdwg.mxu0
        %v600 = vadd.f32 %v257, %v474
        %v601 = vadd.f32 %v257, %v477
        %v602 = vadd.f32 %v257, %v482
        %v603 = vadd.f32 %v257, %v485
        %v604 = vadd.f32 %v257, %v490
        %v605 = vadd.f32 %v257, %v493
        %v606 = vadd.f32 %v257, %v498
        %v607 = vadd.f32 %v257, %v501
        %v608 = vadd.f32 %v257, %v506
        %v609 = vadd.f32 %v257, %v509
        %v610 = vadd.f32 %v257, %v514
        %v611 = vadd.f32 %v257, %v517
        %v612 = vadd.f32 %v257, %v522
        %v613 = vadd.f32 %v257, %v525
        %v614 = vadd.f32 %v257, %v530
        %v615 = vadd.f32 %v257, %v533
        %v616 = vadd.f32 %v257, %v538
        %v617 = vadd.f32 %v257, %v541
        %v618 = vadd.f32 %v257, %v546
        %v619 = vadd.f32 %v257, %v549
        %v620 = vadd.f32 %v257, %v554
        %v621 = vadd.f32 %v257, %v557
        %v622 = vadd.f32 %v257, %v562
        %v623 = vadd.f32 %v257, %v565
        %v624 = vadd.f32 %v257, %v570
        %v625 = vadd.f32 %v257, %v573
        %v626 = vadd.f32 %v257, %v578
        %v627 = vadd.f32 %v257, %v581
        %v628 = vadd.f32 %v257, %v586
        %v629 = vadd.f32 %v257, %v589
        %v630 = vadd.f32 %v257, %v594
        %v631 = vadd.f32 %v257, %v597
        %v632 = vld [vmem:[%s261] sm:$0xf]
        %v633 = vld [vmem:[%s261 + $0x4] sm:$0xf]
        %v634 = vld [vmem:[%s261 + $0x8] sm:$0x1]
        %v635 = vld [vmem:[%s261 + $0xc] sm:$0xf]
        %v636 = vld [vmem:[%s261 + $0x10] sm:$0xf]
        %v637 = vld [vmem:[%s261 + $0x14] sm:$0x1]
        %v638 = vld [vmem:[%s261 + $0x18] sm:$0xf]
        %v639 = vld [vmem:[%s261 + $0x1c] sm:$0xf]
        %v640 = vld [vmem:[%s261 + $0x20] sm:$0x1]
        %v641 = vld [vmem:[%s261 + $0x24] sm:$0xf]
        %v642 = vld [vmem:[%s261 + $0x28] sm:$0xf]
        %v643 = vld [vmem:[%s261 + $0x2c] sm:$0x1]
        %v644 = vld [vmem:[%s261 + $0x30] sm:$0xf]
        %v645 = vld [vmem:[%s261 + $0x34] sm:$0xf]
        %v646 = vld [vmem:[%s261 + $0x38] sm:$0x1]
        %v647 = vld [vmem:[%s261 + $0x3c] sm:$0xf]
        %v648 = vld [vmem:[%s261 + $0x40] sm:$0xf]
        %v649 = vld [vmem:[%s261 + $0x44] sm:$0x1]
        %v650 = vld [vmem:[%s261 + $0x48] sm:$0xf]
        %v651 = vld [vmem:[%s261 + $0x4c] sm:$0xf]
        %v652 = vld [vmem:[%s261 + $0x50] sm:$0x1]
        %v653 = vld [vmem:[%s261 + $0x54] sm:$0xf]
        %v654 = vld [vmem:[%s261 + $0x58] sm:$0xf]
        %v655 = vld [vmem:[%s261 + $0x5c] sm:$0x1]
        %v656 = vld [vmem:[%s261 + $0x60] sm:$0xf]
        %v657 = vld [vmem:[%s261 + $0x64] sm:$0xf]
        %v658 = vld [vmem:[%s261 + $0x68] sm:$0x1]
        %v659 = vld [vmem:[%s261 + $0x6c] sm:$0xf]
        %v660 = vld [vmem:[%s261 + $0x70] sm:$0xf]
        %v661 = vld [vmem:[%s261 + $0x74] sm:$0x1]
        %v662 = vld [vmem:[%s261 + $0x78] sm:$0xf]
        %v663 = vld [vmem:[%s261 + $0x7c] sm:$0xf]
        %v664 = vld [vmem:[%s261 + $0x80] sm:$0x1]
        %v665 = vld [vmem:[%s261 + $0x84] sm:$0xf]
        %v666 = vld [vmem:[%s261 + $0x88] sm:$0xf]
        %v667 = vld [vmem:[%s261 + $0x8c] sm:$0x1]
        %v668 = vld [vmem:[%s261 + $0x90] sm:$0xf]
        %v669 = vld [vmem:[%s261 + $0x94] sm:$0xf]
        %v670 = vld [vmem:[%s261 + $0x98] sm:$0x1]
        %v671 = vld [vmem:[%s261 + $0x9c] sm:$0xf]
        %v672 = vld [vmem:[%s261 + $0xa0] sm:$0xf]
        %v673 = vld [vmem:[%s261 + $0xa4] sm:$0x1]
        %v674 = vld [vmem:[%s261 + $0xa8] sm:$0xf]
        %v675 = vld [vmem:[%s261 + $0xac] sm:$0xf]
        %v676 = vld [vmem:[%s261 + $0xb0] sm:$0x1]
        %v677 = vld [vmem:[%s261 + $0xb4] sm:$0xf]
        %v678 = vld [vmem:[%s261 + $0xb8] sm:$0xf]
        %v679 = vld [vmem:[%s261 + $0xbc] sm:$0x1]
        %vm680 = vsmask.f32 3328
        %vm681 = vsmask.f32 7440
        %vm682 = vmor %vm680, %vm681
        %v684 = vshrl.u32 %v632, 16
        %v686 = vrot.slane %v684, 4
        %v687 = vshll.u32 %v632, 16
        %v689 = vrot.slane %v687, 5
        %v690 = vor.u32 %v686, %v689
        %v691 = vrot.slane %v690, 4
        %v693 = vshll.u32 %v633, 16
        %v695 = vrot.slane %v693, 5
        %v696 = vsel %vm682, %v691, %v695
        %v697 = vshrl.u32 %v633, 16
        %v699 = vrot.slane %v697, 4
        %v700 = vor.u32 %v699, %v695
        %v701 = vrot.slane %v700, 4
        %v703 = vshll.u32 %v634, 16
        %v705 = vrot.slane %v703, 5
        %v706 = vsel %vm682, %v701, %v705
        %v708 = vshrl.u32 %v635, 16
        %v710 = vrot.slane %v708, 4
        %v711 = vshll.u32 %v635, 16
        %v713 = vrot.slane %v711, 5
        %v714 = vor.u32 %v710, %v713
        %v715 = vrot.slane %v714, 4
        %v717 = vshll.u32 %v636, 16
        %v719 = vrot.slane %v717, 5
        %v720 = vsel %vm682, %v715, %v719
        %v721 = vshrl.u32 %v636, 16
        %v723 = vrot.slane %v721, 4
        %v724 = vor.u32 %v723, %v719
        %v725 = vrot.slane %v724, 4
        %v727 = vshll.u32 %v637, 16
        %v729 = vrot.slane %v727, 5
        %v730 = vsel %vm682, %v725, %v729
        %v732 = vshrl.u32 %v638, 16
        %v734 = vrot.slane %v732, 4
        %v735 = vshll.u32 %v638, 16
        %v737 = vrot.slane %v735, 5
        %v738 = vor.u32 %v734, %v737
        %v739 = vrot.slane %v738, 4
        %v741 = vshll.u32 %v639, 16
        %v743 = vrot.slane %v741, 5
        %v744 = vsel %vm682, %v739, %v743
        %v745 = vshrl.u32 %v639, 16
        %v747 = vrot.slane %v745, 4
        %v748 = vor.u32 %v747, %v743
        %v749 = vrot.slane %v748, 4
        %v751 = vshll.u32 %v640, 16
        %v753 = vrot.slane %v751, 5
        %v754 = vsel %vm682, %v749, %v753
        %v756 = vshrl.u32 %v641, 16
        %v758 = vrot.slane %v756, 4
        %v759 = vshll.u32 %v641, 16
        %v761 = vrot.slane %v759, 5
        %v762 = vor.u32 %v758, %v761
        %v763 = vrot.slane %v762, 4
        %v765 = vshll.u32 %v642, 16
        %v767 = vrot.slane %v765, 5
        %v768 = vsel %vm682, %v763, %v767
        %v769 = vshrl.u32 %v642, 16
        %v771 = vrot.slane %v769, 4
        %v772 = vor.u32 %v771, %v767
        %v773 = vrot.slane %v772, 4
        %v775 = vshll.u32 %v643, 16
        %v777 = vrot.slane %v775, 5
        %v778 = vsel %vm682, %v773, %v777
        %v780 = vshrl.u32 %v644, 16
        %v782 = vrot.slane %v780, 4
        %v783 = vshll.u32 %v644, 16
        %v785 = vrot.slane %v783, 5
        %v786 = vor.u32 %v782, %v785
        %v787 = vrot.slane %v786, 4
        %v789 = vshll.u32 %v645, 16
        %v791 = vrot.slane %v789, 5
        %v792 = vsel %vm682, %v787, %v791
        %v793 = vshrl.u32 %v645, 16
        %v795 = vrot.slane %v793, 4
        %v796 = vor.u32 %v795, %v791
        %v797 = vrot.slane %v796, 4
        %v799 = vshll.u32 %v646, 16
        %v801 = vrot.slane %v799, 5
        %v802 = vsel %vm682, %v797, %v801
        %v804 = vshrl.u32 %v647, 16
        %v806 = vrot.slane %v804, 4
        %v807 = vshll.u32 %v647, 16
        %v809 = vrot.slane %v807, 5
        %v810 = vor.u32 %v806, %v809
        %v811 = vrot.slane %v810, 4
        %v813 = vshll.u32 %v648, 16
        %v815 = vrot.slane %v813, 5
        %v816 = vsel %vm682, %v811, %v815
        %v817 = vshrl.u32 %v648, 16
        %v819 = vrot.slane %v817, 4
        %v820 = vor.u32 %v819, %v815
        %v821 = vrot.slane %v820, 4
        %v823 = vshll.u32 %v649, 16
        %v825 = vrot.slane %v823, 5
        %v826 = vsel %vm682, %v821, %v825
        %v828 = vshrl.u32 %v650, 16
        %v830 = vrot.slane %v828, 4
        %v831 = vshll.u32 %v650, 16
        %v833 = vrot.slane %v831, 5
        %v834 = vor.u32 %v830, %v833
        %v835 = vrot.slane %v834, 4
        %v837 = vshll.u32 %v651, 16
        %v839 = vrot.slane %v837, 5
        %v840 = vsel %vm682, %v835, %v839
        %v841 = vshrl.u32 %v651, 16
        %v843 = vrot.slane %v841, 4
        %v844 = vor.u32 %v843, %v839
        %v845 = vrot.slane %v844, 4
        %v847 = vshll.u32 %v652, 16
        %v849 = vrot.slane %v847, 5
        %v850 = vsel %vm682, %v845, %v849
        %v852 = vshrl.u32 %v653, 16
        %v854 = vrot.slane %v852, 4
        %v855 = vshll.u32 %v653, 16
        %v857 = vrot.slane %v855, 5
        %v858 = vor.u32 %v854, %v857
        %v859 = vrot.slane %v858, 4
        %v861 = vshll.u32 %v654, 16
        %v863 = vrot.slane %v861, 5
        %v864 = vsel %vm682, %v859, %v863
        %v865 = vshrl.u32 %v654, 16
        %v867 = vrot.slane %v865, 4
        %v868 = vor.u32 %v867, %v863
        %v869 = vrot.slane %v868, 4
        %v871 = vshll.u32 %v655, 16
        %v873 = vrot.slane %v871, 5
        %v874 = vsel %vm682, %v869, %v873
        %v876 = vshrl.u32 %v656, 16
        %v878 = vrot.slane %v876, 4
        %v879 = vshll.u32 %v656, 16
        %v881 = vrot.slane %v879, 5
        %v882 = vor.u32 %v878, %v881
        %v883 = vrot.slane %v882, 4
        %v885 = vshll.u32 %v657, 16
        %v887 = vrot.slane %v885, 5
        %v888 = vsel %vm682, %v883, %v887
        %v889 = vshrl.u32 %v657, 16
        %v891 = vrot.slane %v889, 4
        %v892 = vor.u32 %v891, %v887
        %v893 = vrot.slane %v892, 4
        %v895 = vshll.u32 %v658, 16
        %v897 = vrot.slane %v895, 5
        %v898 = vsel %vm682, %v893, %v897
        %v900 = vshrl.u32 %v659, 16
        %v902 = vrot.slane %v900, 4
        %v903 = vshll.u32 %v659, 16
        %v905 = vrot.slane %v903, 5
        %v906 = vor.u32 %v902, %v905
        %v907 = vrot.slane %v906, 4
        %v909 = vshll.u32 %v660, 16
        %v911 = vrot.slane %v909, 5
        %v912 = vsel %vm682, %v907, %v911
        %v913 = vshrl.u32 %v660, 16
        %v915 = vrot.slane %v913, 4
        %v916 = vor.u32 %v915, %v911
        %v917 = vrot.slane %v916, 4
        %v919 = vshll.u32 %v661, 16
        %v921 = vrot.slane %v919, 5
        %v922 = vsel %vm682, %v917, %v921
        %v924 = vshrl.u32 %v662, 16
        %v926 = vrot.slane %v924, 4
        %v927 = vshll.u32 %v662, 16
        %v929 = vrot.slane %v927, 5
        %v930 = vor.u32 %v926, %v929
        %v931 = vrot.slane %v930, 4
        %v933 = vshll.u32 %v663, 16
        %v935 = vrot.slane %v933, 5
        %v936 = vsel %vm682, %v931, %v935
        %v937 = vshrl.u32 %v663, 16
        %v939 = vrot.slane %v937, 4
        %v940 = vor.u32 %v939, %v935
        %v941 = vrot.slane %v940, 4
        %v943 = vshll.u32 %v664, 16
        %v945 = vrot.slane %v943, 5
        %v946 = vsel %vm682, %v941, %v945
        %v948 = vshrl.u32 %v665, 16
        %v950 = vrot.slane %v948, 4
        %v951 = vshll.u32 %v665, 16
        %v953 = vrot.slane %v951, 5
        %v954 = vor.u32 %v950, %v953
        %v955 = vrot.slane %v954, 4
        %v957 = vshll.u32 %v666, 16
        %v959 = vrot.slane %v957, 5
        %v960 = vsel %vm682, %v955, %v959
        %v961 = vshrl.u32 %v666, 16
        %v963 = vrot.slane %v961, 4
        %v964 = vor.u32 %v963, %v959
        %v965 = vrot.slane %v964, 4
        %v967 = vshll.u32 %v667, 16
        %v969 = vrot.slane %v967, 5
        %v970 = vsel %vm682, %v965, %v969
        %v972 = vshrl.u32 %v668, 16
        %v974 = vrot.slane %v972, 4
        %v975 = vshll.u32 %v668, 16
        %v977 = vrot.slane %v975, 5
        %v978 = vor.u32 %v974, %v977
        %v979 = vrot.slane %v978, 4
        %v981 = vshll.u32 %v669, 16
        %v983 = vrot.slane %v981, 5
        %v984 = vsel %vm682, %v979, %v983
        %v985 = vshrl.u32 %v669, 16
        %v987 = vrot.slane %v985, 4
        %v988 = vor.u32 %v987, %v983
        %v989 = vrot.slane %v988, 4
        %v991 = vshll.u32 %v670, 16
        %v993 = vrot.slane %v991, 5
        %v994 = vsel %vm682, %v989, %v993
        %v996 = vshrl.u32 %v671, 16
        %v998 = vrot.slane %v996, 4
        %v999 = vshll.u32 %v671, 16
        %v1001 = vrot.slane %v999, 5
        %v1002 = vor.u32 %v998, %v1001
        %v1003 = vrot.slane %v1002, 4
        %v1005 = vshll.u32 %v672, 16
        %v1007 = vrot.slane %v1005, 5
        %v1008 = vsel %vm682, %v1003, %v1007
        %v1009 = vshrl.u32 %v672, 16
        %v1011 = vrot.slane %v1009, 4
        %v1012 = vor.u32 %v1011, %v1007
        %v1013 = vrot.slane %v1012, 4
        %v1015 = vshll.u32 %v673, 16
        %v1017 = vrot.slane %v1015, 5
        %v1018 = vsel %vm682, %v1013, %v1017
        %v1020 = vshrl.u32 %v674, 16
        %v1022 = vrot.slane %v1020, 4
        %v1023 = vshll.u32 %v674, 16
        %v1025 = vrot.slane %v1023, 5
        %v1026 = vor.u32 %v1022, %v1025
        %v1027 = vrot.slane %v1026, 4
        %v1029 = vshll.u32 %v675, 16
        %v1031 = vrot.slane %v1029, 5
        %v1032 = vsel %vm682, %v1027, %v1031
        %v1033 = vshrl.u32 %v675, 16
        %v1035 = vrot.slane %v1033, 4
        %v1036 = vor.u32 %v1035, %v1031
        %v1037 = vrot.slane %v1036, 4
        %v1039 = vshll.u32 %v676, 16
        %v1041 = vrot.slane %v1039, 5
        %v1042 = vsel %vm682, %v1037, %v1041
        %v1044 = vshrl.u32 %v677, 16
        %v1046 = vrot.slane %v1044, 4
        %v1047 = vshll.u32 %v677, 16
        %v1049 = vrot.slane %v1047, 5
        %v1050 = vor.u32 %v1046, %v1049
        %v1051 = vrot.slane %v1050, 4
        %v1053 = vshll.u32 %v678, 16
        %v1055 = vrot.slane %v1053, 5
        %v1056 = vsel %vm682, %v1051, %v1055
        %v1057 = vshrl.u32 %v678, 16
        %v1059 = vrot.slane %v1057, 4
        %v1060 = vor.u32 %v1059, %v1055
        %v1061 = vrot.slane %v1060, 4
        %v1063 = vshll.u32 %v679, 16
        %v1065 = vrot.slane %v1063, 5
        %v1066 = vsel %vm682, %v1061, %v1065
        %v1067 = vld [vmem:[%s1 + $0x10] sm:$0xf]
        %v1068 = vld [vmem:[%s1 + $0x14] sm:$0xf]
        %v1069 = vld [vmem:[%s1 + $0x18] sm:$0xf]
        %v1070 = vld [vmem:[%s1 + $0x1c] sm:$0xf]
        %v1071 = vunpack.c.l.b16 %v696
        %v1072 = vunpack.c.l.b16 %v706
        %v1073 = vunpack.c.l.b16 %v720
        %v1074 = vunpack.c.l.b16 %v730
        %v1075 = vunpack.c.l.b16 %v744
        %v1076 = vunpack.c.l.b16 %v754
        %v1077 = vunpack.c.l.b16 %v768
        %v1078 = vunpack.c.l.b16 %v778
        %v1079 = vunpack.c.l.b16 %v792
        %v1080 = vunpack.c.l.b16 %v802
        %v1081 = vunpack.c.l.b16 %v816
        %v1082 = vunpack.c.l.b16 %v826
        %v1083 = vunpack.c.l.b16 %v840
        %v1084 = vunpack.c.l.b16 %v850
        %v1085 = vunpack.c.l.b16 %v864
        %v1086 = vunpack.c.l.b16 %v874
        %v1087 = vunpack.c.l.b16 %v888
        %v1088 = vunpack.c.l.b16 %v898
        %v1089 = vunpack.c.l.b16 %v912
        %v1090 = vunpack.c.l.b16 %v922
        %v1091 = vunpack.c.l.b16 %v936
        %v1092 = vunpack.c.l.b16 %v946
        %v1093 = vunpack.c.l.b16 %v960
        %v1094 = vunpack.c.l.b16 %v970
        %v1095 = vunpack.c.l.b16 %v984
        %v1096 = vunpack.c.l.b16 %v994
        %v1097 = vunpack.c.l.b16 %v1008
        %v1098 = vunpack.c.l.b16 %v1018
        %v1099 = vunpack.c.l.b16 %v1032
        %v1100 = vunpack.c.l.b16 %v1042
        %v1101 = vunpack.c.l.b16 %v1056
        %v1102 = vunpack.c.l.b16 %v1066
        %v1103 = vpack.c.b16 %v1072, %v1071
        %v1104 = vpack.c.b16 %v1074, %v1073
        %v1105 = vpack.c.b16 %v1076, %v1075
        %v1106 = vpack.c.b16 %v1078, %v1077
        %v1107 = vpack.c.b16 %v1080, %v1079
        %v1108 = vpack.c.b16 %v1082, %v1081
        %v1109 = vpack.c.b16 %v1084, %v1083
        %v1110 = vpack.c.b16 %v1086, %v1085
        %v1111 = vpack.c.b16 %v1088, %v1087
        %v1112 = vpack.c.b16 %v1090, %v1089
        %v1113 = vpack.c.b16 %v1092, %v1091
        %v1114 = vpack.c.b16 %v1094, %v1093
        %v1115 = vpack.c.b16 %v1096, %v1095
        %v1116 = vpack.c.b16 %v1098, %v1097
        %v1117 = vpack.c.b16 %v1100, %v1099
        %v1118 = vpack.c.b16 %v1102, %v1101
        %v1123 = vunpack.c.l.b16 %v1067
        %v1124 = vunpack.c.l.b16 %v1068
        %v1125 = vunpack.c.l.b16 %v1069
        %v1126 = vunpack.c.l.b16 %v1070
        %v1127 = vpack.c.b16 %v1124, %v1123
        %v1128 = vpack.c.b16 %v1126, %v1125
        %v1132 = vsel %vm390, %v1103, 0
        %v1135 = vsel %vm390, %v1104, 0
        %v1138 = vsel %vm390, %v1105, 0
        %v1141 = vsel %vm390, %v1106, 0
        %v1144 = vsel %vm390, %v1107, 0
        %v1147 = vsel %vm390, %v1108, 0
        %v1150 = vsel %vm390, %v1109, 0
        %v1153 = vsel %vm390, %v1110, 0
        %v1156 = vsel %vm390, %v1111, 0
        %v1159 = vsel %vm390, %v1112, 0
        %v1162 = vsel %vm390, %v1113, 0
        %v1165 = vsel %vm390, %v1114, 0
        %v1168 = vsel %vm390, %v1115, 0
        %v1171 = vsel %vm390, %v1116, 0
        %v1174 = vsel %vm390, %v1117, 0
        %v1177 = vsel %vm390, %v1118, 0
        %1179 = vmatprep.subr.bf16.mxu0 0
        %1180 = vmatpush1.bf16.msra.mxu0 %v1127
        %1181 = vmatprep.subr.bf16.mxu0 0
        %1182 = vmatpush1.bf16.msra.mxu0 %v1128
        %1183 = vmatprep.subr.bf16.mxu0 0
        %1184 = vmatpush1.bf16.msra.mxu0 0
        %1185 = vmatprep.subr.bf16.mxu0 0
        %1186 = vmatpush1.bf16.msra.mxu0 0
        %1187 = vmatprep.subr.bf16.mxu0 0
        %1188 = vmatpush1.bf16.msra.mxu0 0
        %1189 = vmatprep.subr.bf16.mxu0 0
        %1190 = vmatpush1.bf16.msra.mxu0 0
        %1191 = vmatprep.subr.bf16.mxu0 0
        %1192 = vmatpush1.bf16.msra.mxu0 0
        %1193 = vmatprep.subr.bf16.mxu0 0
        %1194 = vmatpush1.bf16.msra.mxu0 0
        %1195 = vmatprep.subr.bf16.mxu0 0
        %1196 = vmatpush1.bf16.msra.mxu0 0
        %1197 = vmatprep.subr.bf16.mxu0 0
        %1198 = vmatpush1.bf16.msra.mxu0 0
        %1199 = vmatprep.subr.bf16.mxu0 0
        %1200 = vmatpush1.bf16.msra.mxu0 0
        %1201 = vmatprep.subr.bf16.mxu0 0
        %1202 = vmatpush1.bf16.msra.mxu0 0
        %1203 = vmatprep.subr.bf16.mxu0 0
        %1204 = vmatpush1.bf16.msra.mxu0 0
        %1205 = vmatprep.subr.bf16.mxu0 0
        %1206 = vmatpush1.bf16.msra.mxu0 0
        %1207 = vmatprep.subr.bf16.mxu0 0
        %1208 = vmatpush1.bf16.msra.mxu0 0
        %1209 = vmatprep.subr.bf16.mxu0 0
        %1210 = vmatpush1.bf16.msra.mxu0 0
        %1211 = vmatprep.mubr.bf16.mxu0 0
        %1212 = vmatmul.mubr.bf16.gmra.mrb[0].mxu0 %v1132
        %v1213 = vpop.f32.mrb[0].mxu0
        %v1214 = vadd.f32 0.0, %v1213
        %v1215 = vpop.f32.mrb[0].mxu0
        %v1216 = vpop.f32.mrb[0].mxu0
        %v1217 = vadd.f32 0.0, %v1216
        %v1218 = vpop.f32.mrb[0].mxu0
        %1219 = vmatprep.mubr.bf16.mxu0 0
        %1220 = vmatmul.mubr.bf16.gmra.mrb[0].mxu0 %v1135
        %v1221 = vpop.f32.mrb[0].mxu0
        %v1222 = vadd.f32 0.0, %v1221
        %v1223 = vpop.f32.mrb[0].mxu0
        %v1224 = vpop.f32.mrb[0].mxu0
        %v1225 = vadd.f32 0.0, %v1224
        %v1226 = vpop.f32.mrb[0].mxu0
        %1227 = vmatprep.mubr.bf16.mxu0 0
        %1228 = vmatmul.mubr.bf16.gmra.mrb[0].mxu0 %v1138
        %v1229 = vpop.f32.mrb[0].mxu0
        %v1230 = vadd.f32 0.0, %v1229
        %v1231 = vpop.f32.mrb[0].mxu0
        %v1232 = vpop.f32.mrb[0].mxu0
        %v1233 = vadd.f32 0.0, %v1232
        %v1234 = vpop.f32.mrb[0].mxu0
        %1235 = vmatprep.mubr.bf16.mxu0 0
        %1236 = vmatmul.mubr.bf16.gmra.mrb[0].mxu0 %v1141
        %v1237 = vpop.f32.mrb[0].mxu0
        %v1238 = vadd.f32 0.0, %v1237
        %v1239 = vpop.f32.mrb[0].mxu0
        %v1240 = vpop.f32.mrb[0].mxu0
        %v1241 = vadd.f32 0.0, %v1240
        %v1242 = vpop.f32.mrb[0].mxu0
        %1243 = vmatprep.mubr.bf16.mxu0 0
        %1244 = vmatmul.mubr.bf16.gmra.mrb[0].mxu0 %v1144
        %v1245 = vpop.f32.mrb[0].mxu0
        %v1246 = vadd.f32 0.0, %v1245
        %v1247 = vpop.f32.mrb[0].mxu0
        %v1248 = vpop.f32.mrb[0].mxu0
        %v1249 = vadd.f32 0.0, %v1248
        %v1250 = vpop.f32.mrb[0].mxu0
        %1251 = vmatprep.mubr.bf16.mxu0 0
        %1252 = vmatmul.mubr.bf16.gmra.mrb[0].mxu0 %v1147
        %v1253 = vpop.f32.mrb[0].mxu0
        %v1254 = vadd.f32 0.0, %v1253
        %v1255 = vpop.f32.mrb[0].mxu0
        %v1256 = vpop.f32.mrb[0].mxu0
        %v1257 = vadd.f32 0.0, %v1256
        %v1258 = vpop.f32.mrb[0].mxu0
        %1259 = vmatprep.mubr.bf16.mxu0 0
        %1260 = vmatmul.mubr.bf16.gmra.mrb[0].mxu0 %v1150
        %v1261 = vpop.f32.mrb[0].mxu0
        %v1262 = vadd.f32 0.0, %v1261
        %v1263 = vpop.f32.mrb[0].mxu0
        %v1264 = vpop.f32.mrb[0].mxu0
        %v1265 = vadd.f32 0.0, %v1264
        %v1266 = vpop.f32.mrb[0].mxu0
        %1267 = vmatprep.mubr.bf16.mxu0 0
        %1268 = vmatmul.mubr.bf16.gmra.mrb[0].mxu0 %v1153
        %v1269 = vpop.f32.mrb[0].mxu0
        %v1270 = vadd.f32 0.0, %v1269
        %v1271 = vpop.f32.mrb[0].mxu0
        %v1272 = vpop.f32.mrb[0].mxu0
        %v1273 = vadd.f32 0.0, %v1272
        %v1274 = vpop.f32.mrb[0].mxu0
        %1275 = vmatprep.mubr.bf16.mxu0 0
        %1276 = vmatmul.mubr.bf16.gmra.mrb[0].mxu0 %v1156
        %v1277 = vpop.f32.mrb[0].mxu0
        %v1278 = vadd.f32 0.0, %v1277
        %v1279 = vpop.f32.mrb[0].mxu0
        %v1280 = vpop.f32.mrb[0].mxu0
        %v1281 = vadd.f32 0.0, %v1280
        %v1282 = vpop.f32.mrb[0].mxu0
        %1283 = vmatprep.mubr.bf16.mxu0 0
        %1284 = vmatmul.mubr.bf16.gmra.mrb[0].mxu0 %v1159
        %v1285 = vpop.f32.mrb[0].mxu0
        %v1286 = vadd.f32 0.0, %v1285
        %v1287 = vpop.f32.mrb[0].mxu0
        %v1288 = vpop.f32.mrb[0].mxu0
        %v1289 = vadd.f32 0.0, %v1288
        %v1290 = vpop.f32.mrb[0].mxu0
        %1291 = vmatprep.mubr.bf16.mxu0 0
        %1292 = vmatmul.mubr.bf16.gmra.mrb[0].mxu0 %v1162
        %v1293 = vpop.f32.mrb[0].mxu0
        %v1294 = vadd.f32 0.0, %v1293
        %v1295 = vpop.f32.mrb[0].mxu0
        %v1296 = vpop.f32.mrb[0].mxu0
        %v1297 = vadd.f32 0.0, %v1296
        %v1298 = vpop.f32.mrb[0].mxu0
        %1299 = vmatprep.mubr.bf16.mxu0 0
        %1300 = vmatmul.mubr.bf16.gmra.mrb[0].mxu0 %v1165
        %v1301 = vpop.f32.mrb[0].mxu0
        %v1302 = vadd.f32 0.0, %v1301
        %v1303 = vpop.f32.mrb[0].mxu0
        %v1304 = vpop.f32.mrb[0].mxu0
        %v1305 = vadd.f32 0.0, %v1304
        %v1306 = vpop.f32.mrb[0].mxu0
        %1307 = vmatprep.mubr.bf16.mxu0 0
        %1308 = vmatmul.mubr.bf16.gmra.mrb[0].mxu0 %v1168
        %v1309 = vpop.f32.mrb[0].mxu0
        %v1310 = vadd.f32 0.0, %v1309
        %v1311 = vpop.f32.mrb[0].mxu0
        %v1312 = vpop.f32.mrb[0].mxu0
        %v1313 = vadd.f32 0.0, %v1312
        %v1314 = vpop.f32.mrb[0].mxu0
        %1315 = vmatprep.mubr.bf16.mxu0 0
        %1316 = vmatmul.mubr.bf16.gmra.mrb[0].mxu0 %v1171
        %v1317 = vpop.f32.mrb[0].mxu0
        %v1318 = vadd.f32 0.0, %v1317
        %v1319 = vpop.f32.mrb[0].mxu0
        %v1320 = vpop.f32.mrb[0].mxu0
        %v1321 = vadd.f32 0.0, %v1320
        %v1322 = vpop.f32.mrb[0].mxu0
        %1323 = vmatprep.mubr.bf16.mxu0 0
        %1324 = vmatmul.mubr.bf16.gmra.mrb[0].mxu0 %v1174
        %v1325 = vpop.f32.mrb[0].mxu0
        %v1326 = vadd.f32 0.0, %v1325
        %v1327 = vpop.f32.mrb[0].mxu0
        %v1328 = vpop.f32.mrb[0].mxu0
        %v1329 = vadd.f32 0.0, %v1328
        %v1330 = vpop.f32.mrb[0].mxu0
        %1331 = vmatprep.mubr.bf16.mxu0 0
        %1332 = vmatmul.mubr.bf16.gmra.mrb[0].mxu0 %v1177
        %v1333 = vpop.f32.mrb[0].mxu0
        %v1334 = vadd.f32 0.0, %v1333
        %v1335 = vpop.f32.mrb[0].mxu0
        %v1336 = vpop.f32.mrb[0].mxu0
        %v1337 = vadd.f32 0.0, %v1336
        %v1338 = vpop.f32.mrb[0].mxu0
        %1339 = vdwg.mxu0
        %v1340 = vadd.f32 %v600, %v1214
        %v1341 = vadd.f32 %v601, %v1217
        %v1342 = vadd.f32 %v602, %v1222
        %v1343 = vadd.f32 %v603, %v1225
        %v1344 = vadd.f32 %v604, %v1230
        %v1345 = vadd.f32 %v605, %v1233
        %v1346 = vadd.f32 %v606, %v1238
        %v1347 = vadd.f32 %v607, %v1241
        %v1348 = vadd.f32 %v608, %v1246
        %v1349 = vadd.f32 %v609, %v1249
        %v1350 = vadd.f32 %v610, %v1254
        %v1351 = vadd.f32 %v611, %v1257
        %v1352 = vadd.f32 %v612, %v1262
        %v1353 = vadd.f32 %v613, %v1265
        %v1354 = vadd.f32 %v614, %v1270
        %v1355 = vadd.f32 %v615, %v1273
        %v1356 = vadd.f32 %v616, %v1278
        %v1357 = vadd.f32 %v617, %v1281
        %v1358 = vadd.f32 %v618, %v1286
        %v1359 = vadd.f32 %v619, %v1289
        %v1360 = vadd.f32 %v620, %v1294
        %v1361 = vadd.f32 %v621, %v1297
        %v1362 = vadd.f32 %v622, %v1302
        %v1363 = vadd.f32 %v623, %v1305
        %v1364 = vadd.f32 %v624, %v1310
        %v1365 = vadd.f32 %v625, %v1313
        %v1366 = vadd.f32 %v626, %v1318
        %v1367 = vadd.f32 %v627, %v1321
        %v1368 = vadd.f32 %v628, %v1326
        %v1369 = vadd.f32 %v629, %v1329
        %v1370 = vadd.f32 %v630, %v1334
        %v1371 = vadd.f32 %v631, %v1337
        %v1372 = vld [vmem:[%s261] sm:$0xe]
        %v1373 = vld [vmem:[%s261 + $0xc] sm:$0xe]
        %v1374 = vld [vmem:[%s261 + $0x18] sm:$0xe]
        %v1375 = vld [vmem:[%s261 + $0x24] sm:$0xe]
        %v1376 = vld [vmem:[%s261 + $0x30] sm:$0xe]
        %v1377 = vld [vmem:[%s261 + $0x3c] sm:$0xe]
        %v1378 = vld [vmem:[%s261 + $0x48] sm:$0xe]
        %v1379 = vld [vmem:[%s261 + $0x54] sm:$0xe]
        %v1380 = vld [vmem:[%s261 + $0x60] sm:$0xe]
        %v1381 = vld [vmem:[%s261 + $0x6c] sm:$0xe]
        %v1382 = vld [vmem:[%s261 + $0x78] sm:$0xe]
        %v1383 = vld [vmem:[%s261 + $0x84] sm:$0xe]
        %v1384 = vld [vmem:[%s261 + $0x90] sm:$0xe]
        %v1385 = vld [vmem:[%s261 + $0x9c] sm:$0xe]
        %v1386 = vld [vmem:[%s261 + $0xa8] sm:$0xe]
        %v1387 = vld [vmem:[%s261 + $0xb4] sm:$0xe]
        %vm1436 = vcmask 1042432
        %vm1437 = vcmask 1046532
        %vm1438 = vmor %vm1436, %vm1437
        %v1439 = vrot.slane %v1372, 5
        %v1440 = vrot.slane %v1439, 4
        %v1441 = vrot.slane %v633, 5
        %v1442 = vsel %vm1438, %v1440, %v1441
        %v1443 = vrot.slane %v1441, 4
        %v1444 = vrot.slane %v634, 5
        %v1445 = vsel %vm1438, %v1443, %v1444
        %v1446 = vrot.slane %v1373, 5
        %v1447 = vrot.slane %v1446, 4
        %v1448 = vrot.slane %v636, 5
        %v1449 = vsel %vm1438, %v1447, %v1448
        %v1450 = vrot.slane %v1448, 4
        %v1451 = vrot.slane %v637, 5
        %v1452 = vsel %vm1438, %v1450, %v1451
        %v1453 = vrot.slane %v1374, 5
        %v1454 = vrot.slane %v1453, 4
        %v1455 = vrot.slane %v639, 5
        %v1456 = vsel %vm1438, %v1454, %v1455
        %v1457 = vrot.slane %v1455, 4
        %v1458 = vrot.slane %v640, 5
        %v1459 = vsel %vm1438, %v1457, %v1458
        %v1460 = vrot.slane %v1375, 5
        %v1461 = vrot.slane %v1460, 4
        %v1462 = vrot.slane %v642, 5
        %v1463 = vsel %vm1438, %v1461, %v1462
        %v1464 = vrot.slane %v1462, 4
        %v1465 = vrot.slane %v643, 5
        %v1466 = vsel %vm1438, %v1464, %v1465
        %v1467 = vrot.slane %v1376, 5
        %v1468 = vrot.slane %v1467, 4
        %v1469 = vrot.slane %v645, 5
        %v1470 = vsel %vm1438, %v1468, %v1469
        %v1471 = vrot.slane %v1469, 4
        %v1472 = vrot.slane %v646, 5
        %v1473 = vsel %vm1438, %v1471, %v1472
        %v1474 = vrot.slane %v1377, 5
        %v1475 = vrot.slane %v1474, 4
        %v1476 = vrot.slane %v648, 5
        %v1477 = vsel %vm1438, %v1475, %v1476
        %v1478 = vrot.slane %v1476, 4
        %v1479 = vrot.slane %v649, 5
        %v1480 = vsel %vm1438, %v1478, %v1479
        %v1481 = vrot.slane %v1378, 5
        %v1482 = vrot.slane %v1481, 4
        %v1483 = vrot.slane %v651, 5
        %v1484 = vsel %vm1438, %v1482, %v1483
        %v1485 = vrot.slane %v1483, 4
        %v1486 = vrot.slane %v652, 5
        %v1487 = vsel %vm1438, %v1485, %v1486
        %v1488 = vrot.slane %v1379, 5
        %v1489 = vrot.slane %v1488, 4
        %v1490 = vrot.slane %v654, 5
        %v1491 = vsel %vm1438, %v1489, %v1490
        %v1492 = vrot.slane %v1490, 4
        %v1493 = vrot.slane %v655, 5
        %v1494 = vsel %vm1438, %v1492, %v1493
        %v1495 = vrot.slane %v1380, 5
        %v1496 = vrot.slane %v1495, 4
        %v1497 = vrot.slane %v657, 5
        %v1498 = vsel %vm1438, %v1496, %v1497
        %v1499 = vrot.slane %v1497, 4
        %v1500 = vrot.slane %v658, 5
        %v1501 = vsel %vm1438, %v1499, %v1500
        %v1502 = vrot.slane %v1381, 5
        %v1503 = vrot.slane %v1502, 4
        %v1504 = vrot.slane %v660, 5
        %v1505 = vsel %vm1438, %v1503, %v1504
        %v1506 = vrot.slane %v1504, 4
        %v1507 = vrot.slane %v661, 5
        %v1508 = vsel %vm1438, %v1506, %v1507
        %v1509 = vrot.slane %v1382, 5
        %v1510 = vrot.slane %v1509, 4
        %v1511 = vrot.slane %v663, 5
        %v1512 = vsel %vm1438, %v1510, %v1511
        %v1513 = vrot.slane %v1511, 4
        %v1514 = vrot.slane %v664, 5
        %v1515 = vsel %vm1438, %v1513, %v1514
        %v1516 = vrot.slane %v1383, 5
        %v1517 = vrot.slane %v1516, 4
        %v1518 = vrot.slane %v666, 5
        %v1519 = vsel %vm1438, %v1517, %v1518
        %v1520 = vrot.slane %v1518, 4
        %v1521 = vrot.slane %v667, 5
        %v1522 = vsel %vm1438, %v1520, %v1521
        %v1523 = vrot.slane %v1384, 5
        %v1524 = vrot.slane %v1523, 4
        %v1525 = vrot.slane %v669, 5
        %v1526 = vsel %vm1438, %v1524, %v1525
        %v1527 = vrot.slane %v1525, 4
        %v1528 = vrot.slane %v670, 5
        %v1529 = vsel %vm1438, %v1527, %v1528
        %v1530 = vrot.slane %v1385, 5
        %v1531 = vrot.slane %v1530, 4
        %v1532 = vrot.slane %v672, 5
        %v1533 = vsel %vm1438, %v1531, %v1532
        %v1534 = vrot.slane %v1532, 4
        %v1535 = vrot.slane %v673, 5
        %v1536 = vsel %vm1438, %v1534, %v1535
        %v1537 = vrot.slane %v1386, 5
        %v1538 = vrot.slane %v1537, 4
        %v1539 = vrot.slane %v675, 5
        %v1540 = vsel %vm1438, %v1538, %v1539
        %v1541 = vrot.slane %v1539, 4
        %v1542 = vrot.slane %v676, 5
        %v1543 = vsel %vm1438, %v1541, %v1542
        %v1544 = vrot.slane %v1387, 5
        %v1545 = vrot.slane %v1544, 4
        %v1546 = vrot.slane %v678, 5
        %v1547 = vsel %vm1438, %v1545, %v1546
        %v1548 = vrot.slane %v1546, 4
        %v1549 = vrot.slane %v679, 5
        %v1550 = vsel %vm1438, %v1548, %v1549
        %v1551 = vld [vmem:[%s1 + $0x20] sm:$0xf]
        %v1552 = vld [vmem:[%s1 + $0x24] sm:$0xf]
        %v1553 = vld [vmem:[%s1 + $0x28] sm:$0xf]
        %v1554 = vld [vmem:[%s1 + $0x2c] sm:$0xf]
        %v1555 = vunpack.c.l.b16 %v1442
        %v1556 = vunpack.c.l.b16 %v1445
        %v1557 = vunpack.c.l.b16 %v1449
        %v1558 = vunpack.c.l.b16 %v1452
        %v1559 = vunpack.c.l.b16 %v1456
        %v1560 = vunpack.c.l.b16 %v1459
        %v1561 = vunpack.c.l.b16 %v1463
        %v1562 = vunpack.c.l.b16 %v1466
        %v1563 = vunpack.c.l.b16 %v1470
        %v1564 = vunpack.c.l.b16 %v1473
        %v1565 = vunpack.c.l.b16 %v1477
        %v1566 = vunpack.c.l.b16 %v1480
        %v1567 = vunpack.c.l.b16 %v1484
        %v1568 = vunpack.c.l.b16 %v1487
        %v1569 = vunpack.c.l.b16 %v1491
        %v1570 = vunpack.c.l.b16 %v1494
        %v1571 = vunpack.c.l.b16 %v1498
        %v1572 = vunpack.c.l.b16 %v1501
        %v1573 = vunpack.c.l.b16 %v1505
        %v1574 = vunpack.c.l.b16 %v1508
        %v1575 = vunpack.c.l.b16 %v1512
        %v1576 = vunpack.c.l.b16 %v1515
        %v1577 = vunpack.c.l.b16 %v1519
        %v1578 = vunpack.c.l.b16 %v1522
        %v1579 = vunpack.c.l.b16 %v1526
        %v1580 = vunpack.c.l.b16 %v1529
        %v1581 = vunpack.c.l.b16 %v1533
        %v1582 = vunpack.c.l.b16 %v1536
        %v1583 = vunpack.c.l.b16 %v1540
        %v1584 = vunpack.c.l.b16 %v1543
        %v1585 = vunpack.c.l.b16 %v1547
        %v1586 = vunpack.c.l.b16 %v1550
        %v1587 = vpack.c.b16 %v1556, %v1555
        %v1588 = vpack.c.b16 %v1558, %v1557
        %v1589 = vpack.c.b16 %v1560, %v1559
        %v1590 = vpack.c.b16 %v1562, %v1561
        %v1591 = vpack.c.b16 %v1564, %v1563
        %v1592 = vpack.c.b16 %v1566, %v1565
        %v1593 = vpack.c.b16 %v1568, %v1567
        %v1594 = vpack.c.b16 %v1570, %v1569
        %v1595 = vpack.c.b16 %v1572, %v1571
        %v1596 = vpack.c.b16 %v1574, %v1573
        %v1597 = vpack.c.b16 %v1576, %v1575
        %v1598 = vpack.c.b16 %v1578, %v1577
        %v1599 = vpack.c.b16 %v1580, %v1579
        %v1600 = vpack.c.b16 %v1582, %v1581
        %v1601 = vpack.c.b16 %v1584, %v1583
        %v1602 = vpack.c.b16 %v1586, %v1585
        %v1607 = vunpack.c.l.b16 %v1551
        %v1608 = vunpack.c.l.b16 %v1552
        %v1609 = vunpack.c.l.b16 %v1553
        %v1610 = vunpack.c.l.b16 %v1554
        %v1611 = vpack.c.b16 %v1608, %v1607
        %v1612 = vpack.c.b16 %v1610, %v1609
        %v1616 = vsel %vm390, %v1587, 0
        %v1619 = vsel %vm390, %v1588, 0
        %v1622 = vsel %vm390, %v1589, 0
        %v1625 = vsel %vm390, %v1590, 0
        %v1628 = vsel %vm390, %v1591, 0
        %v1631 = vsel %vm390, %v1592, 0
        %v1634 = vsel %vm390, %v1593, 0
        %v1637 = vsel %vm390, %v1594, 0
        %v1640 = vsel %vm390, %v1595, 0
        %v1643 = vsel %vm390, %v1596, 0
        %v1646 = vsel %vm390, %v1597, 0
        %v1649 = vsel %vm390, %v1598, 0
        %v1652 = vsel %vm390, %v1599, 0
        %v1655 = vsel %vm390, %v1600, 0
        %v1658 = vsel %vm390, %v1601, 0
        %v1661 = vsel %vm390, %v1602, 0
        %1663 = vmatprep.subr.bf16.mxu0 0
        %1664 = vmatpush1.bf16.msra.mxu0 %v1611
        %1665 = vmatprep.subr.bf16.mxu0 0
        %1666 = vmatpush1.bf16.msra.mxu0 %v1612
        %1667 = vmatprep.subr.bf16.mxu0 0
        %1668 = vmatpush1.bf16.msra.mxu0 0
        %1669 = vmatprep.subr.bf16.mxu0 0
        %1670 = vmatpush1.bf16.msra.mxu0 0
        %1671 = vmatprep.subr.bf16.mxu0 0
        %1672 = vmatpush1.bf16.msra.mxu0 0
        %1673 = vmatprep.subr.bf16.mxu0 0
        %1674 = vmatpush1.bf16.msra.mxu0 0
        %1675 = vmatprep.subr.bf16.mxu0 0
        %1676 = vmatpush1.bf16.msra.mxu0 0
        %1677 = vmatprep.subr.bf16.mxu0 0
        %1678 = vmatpush1.bf16.msra.mxu0 0
        %1679 = vmatprep.subr.bf16.mxu0 0
        %1680 = vmatpush1.bf16.msra.mxu0 0
        %1681 = vmatprep.subr.bf16.mxu0 0
        %1682 = vmatpush1.bf16.msra.mxu0 0
        %1683 = vmatprep.subr.bf16.mxu0 0
        %1684 = vmatpush1.bf16.msra.mxu0 0
        %1685 = vmatprep.subr.bf16.mxu0 0
        %1686 = vmatpush1.bf16.msra.mxu0 0
        %1687 = vmatprep.subr.bf16.mxu0 0
        %1688 = vmatpush1.bf16.msra.mxu0 0
        %1689 = vmatprep.subr.bf16.mxu0 0
        %1690 = vmatpush1.bf16.msra.mxu0 0
        %1691 = vmatprep.subr.bf16.mxu0 0
        %1692 = vmatpush1.bf16.msra.mxu0 0
        %1693 = vmatprep.subr.bf16.mxu0 0
        %1694 = vmatpush1.bf16.msra.mxu0 0
        %1695 = vmatprep.mubr.bf16.mxu0 0
        %1696 = vmatmul.mubr.bf16.gmra.mrb[0].mxu0 %v1616
        %v1697 = vpop.f32.mrb[0].mxu0
        %v1698 = vadd.f32 0.0, %v1697
        %v1699 = vpop.f32.mrb[0].mxu0
        %v1700 = vpop.f32.mrb[0].mxu0
        %v1701 = vadd.f32 0.0, %v1700
        %v1702 = vpop.f32.mrb[0].mxu0
        %1703 = vmatprep.mubr.bf16.mxu0 0
        %1704 = vmatmul.mubr.bf16.gmra.mrb[0].mxu0 %v1619
        %v1705 = vpop.f32.mrb[0].mxu0
        %v1706 = vadd.f32 0.0, %v1705
        %v1707 = vpop.f32.mrb[0].mxu0
        %v1708 = vpop.f32.mrb[0].mxu0
        %v1709 = vadd.f32 0.0, %v1708
        %v1710 = vpop.f32.mrb[0].mxu0
        %1711 = vmatprep.mubr.bf16.mxu0 0
        %1712 = vmatmul.mubr.bf16.gmra.mrb[0].mxu0 %v1622
        %v1713 = vpop.f32.mrb[0].mxu0
        %v1714 = vadd.f32 0.0, %v1713
        %v1715 = vpop.f32.mrb[0].mxu0
        %v1716 = vpop.f32.mrb[0].mxu0
        %v1717 = vadd.f32 0.0, %v1716
        %v1718 = vpop.f32.mrb[0].mxu0
        %1719 = vmatprep.mubr.bf16.mxu0 0
        %1720 = vmatmul.mubr.bf16.gmra.mrb[0].mxu0 %v1625
        %v1721 = vpop.f32.mrb[0].mxu0
        %v1722 = vadd.f32 0.0, %v1721
        %v1723 = vpop.f32.mrb[0].mxu0
        %v1724 = vpop.f32.mrb[0].mxu0
        %v1725 = vadd.f32 0.0, %v1724
        %v1726 = vpop.f32.mrb[0].mxu0
        %1727 = vmatprep.mubr.bf16.mxu0 0
        %1728 = vmatmul.mubr.bf16.gmra.mrb[0].mxu0 %v1628
        %v1729 = vpop.f32.mrb[0].mxu0
        %v1730 = vadd.f32 0.0, %v1729
        %v1731 = vpop.f32.mrb[0].mxu0
        %v1732 = vpop.f32.mrb[0].mxu0
        %v1733 = vadd.f32 0.0, %v1732
        %v1734 = vpop.f32.mrb[0].mxu0
        %1735 = vmatprep.mubr.bf16.mxu0 0
        %1736 = vmatmul.mubr.bf16.gmra.mrb[0].mxu0 %v1631
        %v1737 = vpop.f32.mrb[0].mxu0
        %v1738 = vadd.f32 0.0, %v1737
        %v1739 = vpop.f32.mrb[0].mxu0
        %v1740 = vpop.f32.mrb[0].mxu0
        %v1741 = vadd.f32 0.0, %v1740
        %v1742 = vpop.f32.mrb[0].mxu0
        %1743 = vmatprep.mubr.bf16.mxu0 0
        %1744 = vmatmul.mubr.bf16.gmra.mrb[0].mxu0 %v1634
        %v1745 = vpop.f32.mrb[0].mxu0
        %v1746 = vadd.f32 0.0, %v1745
        %v1747 = vpop.f32.mrb[0].mxu0
        %v1748 = vpop.f32.mrb[0].mxu0
        %v1749 = vadd.f32 0.0, %v1748
        %v1750 = vpop.f32.mrb[0].mxu0
        %1751 = vmatprep.mubr.bf16.mxu0 0
        %1752 = vmatmul.mubr.bf16.gmra.mrb[0].mxu0 %v1637
        %v1753 = vpop.f32.mrb[0].mxu0
        %v1754 = vadd.f32 0.0, %v1753
        %v1755 = vpop.f32.mrb[0].mxu0
        %v1756 = vpop.f32.mrb[0].mxu0
        %v1757 = vadd.f32 0.0, %v1756
        %v1758 = vpop.f32.mrb[0].mxu0
        %1759 = vmatprep.mubr.bf16.mxu0 0
        %1760 = vmatmul.mubr.bf16.gmra.mrb[0].mxu0 %v1640
        %v1761 = vpop.f32.mrb[0].mxu0
        %v1762 = vadd.f32 0.0, %v1761
        %v1763 = vpop.f32.mrb[0].mxu0
        %v1764 = vpop.f32.mrb[0].mxu0
        %v1765 = vadd.f32 0.0, %v1764
        %v1766 = vpop.f32.mrb[0].mxu0
        %1767 = vmatprep.mubr.bf16.mxu0 0
        %1768 = vmatmul.mubr.bf16.gmra.mrb[0].mxu0 %v1643
        %v1769 = vpop.f32.mrb[0].mxu0
        %v1770 = vadd.f32 0.0, %v1769
        %v1771 = vpop.f32.mrb[0].mxu0
        %v1772 = vpop.f32.mrb[0].mxu0
        %v1773 = vadd.f32 0.0, %v1772
        %v1774 = vpop.f32.mrb[0].mxu0
        %1775 = vmatprep.mubr.bf16.mxu0 0
        %1776 = vmatmul.mubr.bf16.gmra.mrb[0].mxu0 %v1646
        %v1777 = vpop.f32.mrb[0].mxu0
        %v1778 = vadd.f32 0.0, %v1777
        %v1779 = vpop.f32.mrb[0].mxu0
        %v1780 = vpop.f32.mrb[0].mxu0
        %v1781 = vadd.f32 0.0, %v1780
        %v1782 = vpop.f32.mrb[0].mxu0
        %1783 = vmatprep.mubr.bf16.mxu0 0
        %1784 = vmatmul.mubr.bf16.gmra.mrb[0].mxu0 %v1649
        %v1785 = vpop.f32.mrb[0].mxu0
        %v1786 = vadd.f32 0.0, %v1785
        %v1787 = vpop.f32.mrb[0].mxu0
        %v1788 = vpop.f32.mrb[0].mxu0
        %v1789 = vadd.f32 0.0, %v1788
        %v1790 = vpop.f32.mrb[0].mxu0
        %1791 = vmatprep.mubr.bf16.mxu0 0
        %1792 = vmatmul.mubr.bf16.gmra.mrb[0].mxu0 %v1652
        %v1793 = vpop.f32.mrb[0].mxu0
        %v1794 = vadd.f32 0.0, %v1793
        %v1795 = vpop.f32.mrb[0].mxu0
        %v1796 = vpop.f32.mrb[0].mxu0
        %v1797 = vadd.f32 0.0, %v1796
        %v1798 = vpop.f32.mrb[0].mxu0
        %1799 = vmatprep.mubr.bf16.mxu0 0
        %1800 = vmatmul.mubr.bf16.gmra.mrb[0].mxu0 %v1655
        %v1801 = vpop.f32.mrb[0].mxu0
        %v1802 = vadd.f32 0.0, %v1801
        %v1803 = vpop.f32.mrb[0].mxu0
        %v1804 = vpop.f32.mrb[0].mxu0
        %v1805 = vadd.f32 0.0, %v1804
        %v1806 = vpop.f32.mrb[0].mxu0
        %1807 = vmatprep.mubr.bf16.mxu0 0
        %1808 = vmatmul.mubr.bf16.gmra.mrb[0].mxu0 %v1658
        %v1809 = vpop.f32.mrb[0].mxu0
        %v1810 = vadd.f32 0.0, %v1809
        %v1811 = vpop.f32.mrb[0].mxu0
        %v1812 = vpop.f32.mrb[0].mxu0
        %v1813 = vadd.f32 0.0, %v1812
        %v1814 = vpop.f32.mrb[0].mxu0
        %1815 = vmatprep.mubr.bf16.mxu0 0
        %1816 = vmatmul.mubr.bf16.gmra.mrb[0].mxu0 %v1661
        %v1817 = vpop.f32.mrb[0].mxu0
        %v1818 = vadd.f32 0.0, %v1817
        %v1819 = vpop.f32.mrb[0].mxu0
        %v1820 = vpop.f32.mrb[0].mxu0
        %v1821 = vadd.f32 0.0, %v1820
        %v1822 = vpop.f32.mrb[0].mxu0
        %1823 = vdwg.mxu0
        %v1824 = vadd.f32 %v1340, %v1698
        %v1825 = vadd.f32 %v1341, %v1701
        %v1826 = vadd.f32 %v1342, %v1706
        %v1827 = vadd.f32 %v1343, %v1709
        %v1828 = vadd.f32 %v1344, %v1714
        %v1829 = vadd.f32 %v1345, %v1717
        %v1830 = vadd.f32 %v1346, %v1722
        %v1831 = vadd.f32 %v1347, %v1725
        %v1832 = vadd.f32 %v1348, %v1730
        %v1833 = vadd.f32 %v1349, %v1733
        %v1834 = vadd.f32 %v1350, %v1738
        %v1835 = vadd.f32 %v1351, %v1741
        %v1836 = vadd.f32 %v1352, %v1746
        %v1837 = vadd.f32 %v1353, %v1749
        %v1838 = vadd.f32 %v1354, %v1754
        %v1839 = vadd.f32 %v1355, %v1757
        %v1840 = vadd.f32 %v1356, %v1762
        %v1841 = vadd.f32 %v1357, %v1765
        %v1842 = vadd.f32 %v1358, %v1770
        %v1843 = vadd.f32 %v1359, %v1773
        %v1844 = vadd.f32 %v1360, %v1778
        %v1845 = vadd.f32 %v1361, %v1781
        %v1846 = vadd.f32 %v1362, %v1786
        %v1847 = vadd.f32 %v1363, %v1789
        %v1848 = vadd.f32 %v1364, %v1794
        %v1849 = vadd.f32 %v1365, %v1797
        %v1850 = vadd.f32 %v1366, %v1802
        %v1851 = vadd.f32 %v1367, %v1805
        %v1852 = vadd.f32 %v1368, %v1810
        %v1853 = vadd.f32 %v1369, %v1813
        %v1854 = vadd.f32 %v1370, %v1818
        %v1855 = vadd.f32 %v1371, %v1821
        %s1856 = sadd.s32 %s251, 1
        %s1857 = smul.u32 %s1856, 3
        %s1858 = smul.addr %s1857, 4
        %s1859 = scalar_lea.vmem %s237, %s1858
        %v1860 = vld [vmem:[%s1859] sm:$0xf]
        %v1861 = vld [vmem:[%s1859 + $0x4] sm:$0xf]
        %v1862 = vld [vmem:[%s1859 + $0xc] sm:$0xf]
        %v1863 = vld [vmem:[%s1859 + $0x10] sm:$0xf]
        %v1864 = vld [vmem:[%s1859 + $0x18] sm:$0xf]
        %v1865 = vld [vmem:[%s1859 + $0x1c] sm:$0xf]
        %v1866 = vld [vmem:[%s1859 + $0x24] sm:$0xf]
        %v1867 = vld [vmem:[%s1859 + $0x28] sm:$0xf]
        %v1868 = vld [vmem:[%s1859 + $0x30] sm:$0xf]
        %v1869 = vld [vmem:[%s1859 + $0x34] sm:$0xf]
        %v1870 = vld [vmem:[%s1859 + $0x3c] sm:$0xf]
        %v1871 = vld [vmem:[%s1859 + $0x40] sm:$0xf]
        %v1872 = vld [vmem:[%s1859 + $0x48] sm:$0xf]
        %v1873 = vld [vmem:[%s1859 + $0x4c] sm:$0xf]
        %v1874 = vld [vmem:[%s1859 + $0x54] sm:$0xf]
        %v1875 = vld [vmem:[%s1859 + $0x58] sm:$0xf]
        %v1876 = vld [vmem:[%s1859 + $0x60] sm:$0xf]
        %v1877 = vld [vmem:[%s1859 + $0x64] sm:$0xf]
        %v1878 = vld [vmem:[%s1859 + $0x6c] sm:$0xf]
        %v1879 = vld [vmem:[%s1859 + $0x70] sm:$0xf]
        %v1880 = vld [vmem:[%s1859 + $0x78] sm:$0xf]
        %v1881 = vld [vmem:[%s1859 + $0x7c] sm:$0xf]
        %v1882 = vld [vmem:[%s1859 + $0x84] sm:$0xf]
        %v1883 = vld [vmem:[%s1859 + $0x88] sm:$0xf]
        %v1884 = vld [vmem:[%s1859 + $0x90] sm:$0xf]
        %v1885 = vld [vmem:[%s1859 + $0x94] sm:$0xf]
        %v1886 = vld [vmem:[%s1859 + $0x9c] sm:$0xf]
        %v1887 = vld [vmem:[%s1859 + $0xa0] sm:$0xf]
        %v1888 = vld [vmem:[%s1859 + $0xa8] sm:$0xf]
        %v1889 = vld [vmem:[%s1859 + $0xac] sm:$0xf]
        %v1890 = vld [vmem:[%s1859 + $0xb4] sm:$0xf]
        %v1891 = vld [vmem:[%s1859 + $0xb8] sm:$0xf]
        %v1892 = vld [vmem:[%s1 + $0x30] sm:$0xf]
        %v1893 = vld [vmem:[%s1 + $0x34] sm:$0xf]
        %v1894 = vld [vmem:[%s1 + $0x38] sm:$0xf]
        %v1895 = vld [vmem:[%s1 + $0x3c] sm:$0xf]
        %v1928 = vunpack.c.l.b16 %v1860
        %v1929 = vunpack.c.l.b16 %v1861
        %v1930 = vunpack.c.l.b16 %v1862
        %v1931 = vunpack.c.l.b16 %v1863
        %v1932 = vunpack.c.l.b16 %v1864
        %v1933 = vunpack.c.l.b16 %v1865
        %v1934 = vunpack.c.l.b16 %v1866
        %v1935 = vunpack.c.l.b16 %v1867
        %v1936 = vunpack.c.l.b16 %v1868
        %v1937 = vunpack.c.l.b16 %v1869
        %v1938 = vunpack.c.l.b16 %v1870
        %v1939 = vunpack.c.l.b16 %v1871
        %v1940 = vunpack.c.l.b16 %v1872
        %v1941 = vunpack.c.l.b16 %v1873
        %v1942 = vunpack.c.l.b16 %v1874
        %v1943 = vunpack.c.l.b16 %v1875
        %v1944 = vunpack.c.l.b16 %v1876
        %v1945 = vunpack.c.l.b16 %v1877
        %v1946 = vunpack.c.l.b16 %v1878
        %v1947 = vunpack.c.l.b16 %v1879
        %v1948 = vunpack.c.l.b16 %v1880
        %v1949 = vunpack.c.l.b16 %v1881
        %v1950 = vunpack.c.l.b16 %v1882
        %v1951 = vunpack.c.l.b16 %v1883
        %v1952 = vunpack.c.l.b16 %v1884
        %v1953 = vunpack.c.l.b16 %v1885
        %v1954 = vunpack.c.l.b16 %v1886
        %v1955 = vunpack.c.l.b16 %v1887
        %v1956 = vunpack.c.l.b16 %v1888
        %v1957 = vunpack.c.l.b16 %v1889
        %v1958 = vunpack.c.l.b16 %v1890
        %v1959 = vunpack.c.l.b16 %v1891
        %v1960 = vpack.c.b16 %v1929, %v1928
        %v1961 = vpack.c.b16 %v1931, %v1930
        %v1962 = vpack.c.b16 %v1933, %v1932
        %v1963 = vpack.c.b16 %v1935, %v1934
        %v1964 = vpack.c.b16 %v1937, %v1936
        %v1965 = vpack.c.b16 %v1939, %v1938
        %v1966 = vpack.c.b16 %v1941, %v1940
        %v1967 = vpack.c.b16 %v1943, %v1942
        %v1968 = vpack.c.b16 %v1945, %v1944
        %v1969 = vpack.c.b16 %v1947, %v1946
        %v1970 = vpack.c.b16 %v1949, %v1948
        %v1971 = vpack.c.b16 %v1951, %v1950
        %v1972 = vpack.c.b16 %v1953, %v1952
        %v1973 = vpack.c.b16 %v1955, %v1954
        %v1974 = vpack.c.b16 %v1957, %v1956
        %v1975 = vpack.c.b16 %v1959, %v1958
        %v1980 = vunpack.c.l.b16 %v1892
        %v1981 = vunpack.c.l.b16 %v1893
        %v1982 = vunpack.c.l.b16 %v1894
        %v1983 = vunpack.c.l.b16 %v1895
        %v1984 = vpack.c.b16 %v1981, %v1980
        %v1985 = vpack.c.b16 %v1983, %v1982
        %v1989 = vsel %vm390, %v1960, 0
        %v1992 = vsel %vm390, %v1961, 0
        %v1995 = vsel %vm390, %v1962, 0
        %v1998 = vsel %vm390, %v1963, 0
        %v2001 = vsel %vm390, %v1964, 0
        %v2004 = vsel %vm390, %v1965, 0
        %v2007 = vsel %vm390, %v1966, 0
        %v2010 = vsel %vm390, %v1967, 0
        %v2013 = vsel %vm390, %v1968, 0
        %v2016 = vsel %vm390, %v1969, 0
        %v2019 = vsel %vm390, %v1970, 0
        %v2022 = vsel %vm390, %v1971, 0
        %v2025 = vsel %vm390, %v1972, 0
        %v2028 = vsel %vm390, %v1973, 0
        %v2031 = vsel %vm390, %v1974, 0
        %v2034 = vsel %vm390, %v1975, 0
        %2036 = vmatprep.subr.bf16.mxu0 0
        %2037 = vmatpush1.bf16.msra.mxu0 %v1984
        %2038 = vmatprep.subr.bf16.mxu0 0
        %2039 = vmatpush1.bf16.msra.mxu0 %v1985
        %2040 = vmatprep.subr.bf16.mxu0 0
        %2041 = vmatpush1.bf16.msra.mxu0 0
        %2042 = vmatprep.subr.bf16.mxu0 0
        %2043 = vmatpush1.bf16.msra.mxu0 0
        %2044 = vmatprep.subr.bf16.mxu0 0
        %2045 = vmatpush1.bf16.msra.mxu0 0
        %2046 = vmatprep.subr.bf16.mxu0 0
        %2047 = vmatpush1.bf16.msra.mxu0 0
        %2048 = vmatprep.subr.bf16.mxu0 0
        %2049 = vmatpush1.bf16.msra.mxu0 0
        %2050 = vmatprep.subr.bf16.mxu0 0
        %2051 = vmatpush1.bf16.msra.mxu0 0
        %2052 = vmatprep.subr.bf16.mxu0 0
        %2053 = vmatpush1.bf16.msra.mxu0 0
        %2054 = vmatprep.subr.bf16.mxu0 0
        %2055 = vmatpush1.bf16.msra.mxu0 0
        %2056 = vmatprep.subr.bf16.mxu0 0
        %2057 = vmatpush1.bf16.msra.mxu0 0
        %2058 = vmatprep.subr.bf16.mxu0 0
        %2059 = vmatpush1.bf16.msra.mxu0 0
        %2060 = vmatprep.subr.bf16.mxu0 0
        %2061 = vmatpush1.bf16.msra.mxu0 0
        %2062 = vmatprep.subr.bf16.mxu0 0
        %2063 = vmatpush1.bf16.msra.mxu0 0
        %2064 = vmatprep.subr.bf16.mxu0 0
        %2065 = vmatpush1.bf16.msra.mxu0 0
        %2066 = vmatprep.subr.bf16.mxu0 0
        %2067 = vmatpush1.bf16.msra.mxu0 0
        %2068 = vmatprep.mubr.bf16.mxu0 0
        %2069 = vmatmul.mubr.bf16.gmra.mrb[0].mxu0 %v1989
        %v2070 = vpop.f32.mrb[0].mxu0
        %v2071 = vadd.f32 0.0, %v2070
        %v2072 = vpop.f32.mrb[0].mxu0
        %v2073 = vpop.f32.mrb[0].mxu0
        %v2074 = vadd.f32 0.0, %v2073
        %v2075 = vpop.f32.mrb[0].mxu0
        %2076 = vmatprep.mubr.bf16.mxu0 0
        %2077 = vmatmul.mubr.bf16.gmra.mrb[0].mxu0 %v1992
        %v2078 = vpop.f32.mrb[0].mxu0
        %v2079 = vadd.f32 0.0, %v2078
        %v2080 = vpop.f32.mrb[0].mxu0
        %v2081 = vpop.f32.mrb[0].mxu0
        %v2082 = vadd.f32 0.0, %v2081
        %v2083 = vpop.f32.mrb[0].mxu0
        %2084 = vmatprep.mubr.bf16.mxu0 0
        %2085 = vmatmul.mubr.bf16.gmra.mrb[0].mxu0 %v1995
        %v2086 = vpop.f32.mrb[0].mxu0
        %v2087 = vadd.f32 0.0, %v2086
        %v2088 = vpop.f32.mrb[0].mxu0
        %v2089 = vpop.f32.mrb[0].mxu0
        %v2090 = vadd.f32 0.0, %v2089
        %v2091 = vpop.f32.mrb[0].mxu0
        %2092 = vmatprep.mubr.bf16.mxu0 0
        %2093 = vmatmul.mubr.bf16.gmra.mrb[0].mxu0 %v1998
        %v2094 = vpop.f32.mrb[0].mxu0
        %v2095 = vadd.f32 0.0, %v2094
        %v2096 = vpop.f32.mrb[0].mxu0
        %v2097 = vpop.f32.mrb[0].mxu0
        %v2098 = vadd.f32 0.0, %v2097
        %v2099 = vpop.f32.mrb[0].mxu0
        %2100 = vmatprep.mubr.bf16.mxu0 0
        %2101 = vmatmul.mubr.bf16.gmra.mrb[0].mxu0 %v2001
        %v2102 = vpop.f32.mrb[0].mxu0
        %v2103 = vadd.f32 0.0, %v2102
        %v2104 = vpop.f32.mrb[0].mxu0
        %v2105 = vpop.f32.mrb[0].mxu0
        %v2106 = vadd.f32 0.0, %v2105
        %v2107 = vpop.f32.mrb[0].mxu0
        %2108 = vmatprep.mubr.bf16.mxu0 0
        %2109 = vmatmul.mubr.bf16.gmra.mrb[0].mxu0 %v2004
        %v2110 = vpop.f32.mrb[0].mxu0
        %v2111 = vadd.f32 0.0, %v2110
        %v2112 = vpop.f32.mrb[0].mxu0
        %v2113 = vpop.f32.mrb[0].mxu0
        %v2114 = vadd.f32 0.0, %v2113
        %v2115 = vpop.f32.mrb[0].mxu0
        %2116 = vmatprep.mubr.bf16.mxu0 0
        %2117 = vmatmul.mubr.bf16.gmra.mrb[0].mxu0 %v2007
        %v2118 = vpop.f32.mrb[0].mxu0
        %v2119 = vadd.f32 0.0, %v2118
        %v2120 = vpop.f32.mrb[0].mxu0
        %v2121 = vpop.f32.mrb[0].mxu0
        %v2122 = vadd.f32 0.0, %v2121
        %v2123 = vpop.f32.mrb[0].mxu0
        %2124 = vmatprep.mubr.bf16.mxu0 0
        %2125 = vmatmul.mubr.bf16.gmra.mrb[0].mxu0 %v2010
        %v2126 = vpop.f32.mrb[0].mxu0
        %v2127 = vadd.f32 0.0, %v2126
        %v2128 = vpop.f32.mrb[0].mxu0
        %v2129 = vpop.f32.mrb[0].mxu0
        %v2130 = vadd.f32 0.0, %v2129
        %v2131 = vpop.f32.mrb[0].mxu0
        %2132 = vmatprep.mubr.bf16.mxu0 0
        %2133 = vmatmul.mubr.bf16.gmra.mrb[0].mxu0 %v2013
        %v2134 = vpop.f32.mrb[0].mxu0
        %v2135 = vadd.f32 0.0, %v2134
        %v2136 = vpop.f32.mrb[0].mxu0
        %v2137 = vpop.f32.mrb[0].mxu0
        %v2138 = vadd.f32 0.0, %v2137
        %v2139 = vpop.f32.mrb[0].mxu0
        %2140 = vmatprep.mubr.bf16.mxu0 0
        %2141 = vmatmul.mubr.bf16.gmra.mrb[0].mxu0 %v2016
        %v2142 = vpop.f32.mrb[0].mxu0
        %v2143 = vadd.f32 0.0, %v2142
        %v2144 = vpop.f32.mrb[0].mxu0
        %v2145 = vpop.f32.mrb[0].mxu0
        %v2146 = vadd.f32 0.0, %v2145
        %v2147 = vpop.f32.mrb[0].mxu0
        %2148 = vmatprep.mubr.bf16.mxu0 0
        %2149 = vmatmul.mubr.bf16.gmra.mrb[0].mxu0 %v2019
        %v2150 = vpop.f32.mrb[0].mxu0
        %v2151 = vadd.f32 0.0, %v2150
        %v2152 = vpop.f32.mrb[0].mxu0
        %v2153 = vpop.f32.mrb[0].mxu0
        %v2154 = vadd.f32 0.0, %v2153
        %v2155 = vpop.f32.mrb[0].mxu0
        %2156 = vmatprep.mubr.bf16.mxu0 0
        %2157 = vmatmul.mubr.bf16.gmra.mrb[0].mxu0 %v2022
        %v2158 = vpop.f32.mrb[0].mxu0
        %v2159 = vadd.f32 0.0, %v2158
        %v2160 = vpop.f32.mrb[0].mxu0
        %v2161 = vpop.f32.mrb[0].mxu0
        %v2162 = vadd.f32 0.0, %v2161
        %v2163 = vpop.f32.mrb[0].mxu0
        %2164 = vmatprep.mubr.bf16.mxu0 0
        %2165 = vmatmul.mubr.bf16.gmra.mrb[0].mxu0 %v2025
        %v2166 = vpop.f32.mrb[0].mxu0
        %v2167 = vadd.f32 0.0, %v2166
        %v2168 = vpop.f32.mrb[0].mxu0
        %v2169 = vpop.f32.mrb[0].mxu0
        %v2170 = vadd.f32 0.0, %v2169
        %v2171 = vpop.f32.mrb[0].mxu0
        %2172 = vmatprep.mubr.bf16.mxu0 0
        %2173 = vmatmul.mubr.bf16.gmra.mrb[0].mxu0 %v2028
        %v2174 = vpop.f32.mrb[0].mxu0
        %v2175 = vadd.f32 0.0, %v2174
        %v2176 = vpop.f32.mrb[0].mxu0
        %v2177 = vpop.f32.mrb[0].mxu0
        %v2178 = vadd.f32 0.0, %v2177
        %v2179 = vpop.f32.mrb[0].mxu0
        %2180 = vmatprep.mubr.bf16.mxu0 0
        %2181 = vmatmul.mubr.bf16.gmra.mrb[0].mxu0 %v2031
        %v2182 = vpop.f32.mrb[0].mxu0
        %v2183 = vadd.f32 0.0, %v2182
        %v2184 = vpop.f32.mrb[0].mxu0
        %v2185 = vpop.f32.mrb[0].mxu0
        %v2186 = vadd.f32 0.0, %v2185
        %v2187 = vpop.f32.mrb[0].mxu0
        %2188 = vmatprep.mubr.bf16.mxu0 0
        %2189 = vmatmul.mubr.bf16.gmra.mrb[0].mxu0 %v2034
        %v2190 = vpop.f32.mrb[0].mxu0
        %v2191 = vadd.f32 0.0, %v2190
        %v2192 = vpop.f32.mrb[0].mxu0
        %v2193 = vpop.f32.mrb[0].mxu0
        %v2194 = vadd.f32 0.0, %v2193
        %v2195 = vpop.f32.mrb[0].mxu0
        %2196 = vdwg.mxu0
        %v2197 = vadd.f32 %v1824, %v2071
        %v2198 = vadd.f32 %v1825, %v2074
        %v2199 = vadd.f32 %v1826, %v2079
        %v2200 = vadd.f32 %v1827, %v2082
        %v2201 = vadd.f32 %v1828, %v2087
        %v2202 = vadd.f32 %v1829, %v2090
        %v2203 = vadd.f32 %v1830, %v2095
        %v2204 = vadd.f32 %v1831, %v2098
        %v2205 = vadd.f32 %v1832, %v2103
        %v2206 = vadd.f32 %v1833, %v2106
        %v2207 = vadd.f32 %v1834, %v2111
        %v2208 = vadd.f32 %v1835, %v2114
        %v2209 = vadd.f32 %v1836, %v2119
        %v2210 = vadd.f32 %v1837, %v2122
        %v2211 = vadd.f32 %v1838, %v2127
        %v2212 = vadd.f32 %v1839, %v2130
        %v2213 = vadd.f32 %v1840, %v2135
        %v2214 = vadd.f32 %v1841, %v2138
        %v2215 = vadd.f32 %v1842, %v2143
        %v2216 = vadd.f32 %v1843, %v2146
        %v2217 = vadd.f32 %v1844, %v2151
        %v2218 = vadd.f32 %v1845, %v2154
        %v2219 = vadd.f32 %v1846, %v2159
        %v2220 = vadd.f32 %v1847, %v2162
        %v2221 = vadd.f32 %v1848, %v2167
        %v2222 = vadd.f32 %v1849, %v2170
        %v2223 = vadd.f32 %v1850, %v2175
        %v2224 = vadd.f32 %v1851, %v2178
        %v2225 = vadd.f32 %v1852, %v2183
        %v2226 = vadd.f32 %v1853, %v2186
        %v2227 = vadd.f32 %v1854, %v2191
        %v2228 = vadd.f32 %v1855, %v2194
        %v2229 = vld [vmem:[%s1859] sm:$0xf]
        %v2230 = vld [vmem:[%s1859 + $0x4] sm:$0xf]
        %v2231 = vld [vmem:[%s1859 + $0x8] sm:$0x1]
        %v2232 = vld [vmem:[%s1859 + $0xc] sm:$0xf]
        %v2233 = vld [vmem:[%s1859 + $0x10] sm:$0xf]
        %v2234 = vld [vmem:[%s1859 + $0x14] sm:$0x1]
        %v2235 = vld [vmem:[%s1859 + $0x18] sm:$0xf]
        %v2236 = vld [vmem:[%s1859 + $0x1c] sm:$0xf]
        %v2237 = vld [vmem:[%s1859 + $0x20] sm:$0x1]
        %v2238 = vld [vmem:[%s1859 + $0x24] sm:$0xf]
        %v2239 = vld [vmem:[%s1859 + $0x28] sm:$0xf]
        %v2240 = vld [vmem:[%s1859 + $0x2c] sm:$0x1]
        %v2241 = vld [vmem:[%s1859 + $0x30] sm:$0xf]
        %v2242 = vld [vmem:[%s1859 + $0x34] sm:$0xf]
        %v2243 = vld [vmem:[%s1859 + $0x38] sm:$0x1]
        %v2244 = vld [vmem:[%s1859 + $0x3c] sm:$0xf]
        %v2245 = vld [vmem:[%s1859 + $0x40] sm:$0xf]
        %v2246 = vld [vmem:[%s1859 + $0x44] sm:$0x1]
        %v2247 = vld [vmem:[%s1859 + $0x48] sm:$0xf]
        %v2248 = vld [vmem:[%s1859 + $0x4c] sm:$0xf]
        %v2249 = vld [vmem:[%s1859 + $0x50] sm:$0x1]
        %v2250 = vld [vmem:[%s1859 + $0x54] sm:$0xf]
        %v2251 = vld [vmem:[%s1859 + $0x58] sm:$0xf]
        %v2252 = vld [vmem:[%s1859 + $0x5c] sm:$0x1]
        %v2253 = vld [vmem:[%s1859 + $0x60] sm:$0xf]
        %v2254 = vld [vmem:[%s1859 + $0x64] sm:$0xf]
        %v2255 = vld [vmem:[%s1859 + $0x68] sm:$0x1]
        %v2256 = vld [vmem:[%s1859 + $0x6c] sm:$0xf]
        %v2257 = vld [vmem:[%s1859 + $0x70] sm:$0xf]
        %v2258 = vld [vmem:[%s1859 + $0x74] sm:$0x1]
        %v2259 = vld [vmem:[%s1859 + $0x78] sm:$0xf]
        %v2260 = vld [vmem:[%s1859 + $0x7c] sm:$0xf]
        %v2261 = vld [vmem:[%s1859 + $0x80] sm:$0x1]
        %v2262 = vld [vmem:[%s1859 + $0x84] sm:$0xf]
        %v2263 = vld [vmem:[%s1859 + $0x88] sm:$0xf]
        %v2264 = vld [vmem:[%s1859 + $0x8c] sm:$0x1]
        %v2265 = vld [vmem:[%s1859 + $0x90] sm:$0xf]
        %v2266 = vld [vmem:[%s1859 + $0x94] sm:$0xf]
        %v2267 = vld [vmem:[%s1859 + $0x98] sm:$0x1]
        %v2268 = vld [vmem:[%s1859 + $0x9c] sm:$0xf]
        %v2269 = vld [vmem:[%s1859 + $0xa0] sm:$0xf]
        %v2270 = vld [vmem:[%s1859 + $0xa4] sm:$0x1]
        %v2271 = vld [vmem:[%s1859 + $0xa8] sm:$0xf]
        %v2272 = vld [vmem:[%s1859 + $0xac] sm:$0xf]
        %v2273 = vld [vmem:[%s1859 + $0xb0] sm:$0x1]
        %v2274 = vld [vmem:[%s1859 + $0xb4] sm:$0xf]
        %v2275 = vld [vmem:[%s1859 + $0xb8] sm:$0xf]
        %v2276 = vld [vmem:[%s1859 + $0xbc] sm:$0x1]
        %v2278 = vshrl.u32 %v2229, 16
        %v2280 = vrot.slane %v2278, 4
        %v2281 = vshll.u32 %v2229, 16
        %v2283 = vrot.slane %v2281, 5
        %v2284 = vor.u32 %v2280, %v2283
        %v2285 = vrot.slane %v2284, 4
        %v2287 = vshll.u32 %v2230, 16
        %v2289 = vrot.slane %v2287, 5
        %v2290 = vsel %vm682, %v2285, %v2289
        %v2291 = vshrl.u32 %v2230, 16
        %v2293 = vrot.slane %v2291, 4
        %v2294 = vor.u32 %v2293, %v2289
        %v2295 = vrot.slane %v2294, 4
        %v2297 = vshll.u32 %v2231, 16
        %v2299 = vrot.slane %v2297, 5
        %v2300 = vsel %vm682, %v2295, %v2299
        %v2302 = vshrl.u32 %v2232, 16
        %v2304 = vrot.slane %v2302, 4
        %v2305 = vshll.u32 %v2232, 16
        %v2307 = vrot.slane %v2305, 5
        %v2308 = vor.u32 %v2304, %v2307
        %v2309 = vrot.slane %v2308, 4
        %v2311 = vshll.u32 %v2233, 16
        %v2313 = vrot.slane %v2311, 5
        %v2314 = vsel %vm682, %v2309, %v2313
        %v2315 = vshrl.u32 %v2233, 16
        %v2317 = vrot.slane %v2315, 4
        %v2318 = vor.u32 %v2317, %v2313
        %v2319 = vrot.slane %v2318, 4
        %v2321 = vshll.u32 %v2234, 16
        %v2323 = vrot.slane %v2321, 5
        %v2324 = vsel %vm682, %v2319, %v2323
        %v2326 = vshrl.u32 %v2235, 16
        %v2328 = vrot.slane %v2326, 4
        %v2329 = vshll.u32 %v2235, 16
        %v2331 = vrot.slane %v2329, 5
        %v2332 = vor.u32 %v2328, %v2331
        %v2333 = vrot.slane %v2332, 4
        %v2335 = vshll.u32 %v2236, 16
        %v2337 = vrot.slane %v2335, 5
        %v2338 = vsel %vm682, %v2333, %v2337
        %v2339 = vshrl.u32 %v2236, 16
        %v2341 = vrot.slane %v2339, 4
        %v2342 = vor.u32 %v2341, %v2337
        %v2343 = vrot.slane %v2342, 4
        %v2345 = vshll.u32 %v2237, 16
        %v2347 = vrot.slane %v2345, 5
        %v2348 = vsel %vm682, %v2343, %v2347
        %v2350 = vshrl.u32 %v2238, 16
        %v2352 = vrot.slane %v2350, 4
        %v2353 = vshll.u32 %v2238, 16
        %v2355 = vrot.slane %v2353, 5
        %v2356 = vor.u32 %v2352, %v2355
        %v2357 = vrot.slane %v2356, 4
        %v2359 = vshll.u32 %v2239, 16
        %v2361 = vrot.slane %v2359, 5
        %v2362 = vsel %vm682, %v2357, %v2361
        %v2363 = vshrl.u32 %v2239, 16
        %v2365 = vrot.slane %v2363, 4
        %v2366 = vor.u32 %v2365, %v2361
        %v2367 = vrot.slane %v2366, 4
        %v2369 = vshll.u32 %v2240, 16
        %v2371 = vrot.slane %v2369, 5
        %v2372 = vsel %vm682, %v2367, %v2371
        %v2374 = vshrl.u32 %v2241, 16
        %v2376 = vrot.slane %v2374, 4
        %v2377 = vshll.u32 %v2241, 16
        %v2379 = vrot.slane %v2377, 5
        %v2380 = vor.u32 %v2376, %v2379
        %v2381 = vrot.slane %v2380, 4
        %v2383 = vshll.u32 %v2242, 16
        %v2385 = vrot.slane %v2383, 5
        %v2386 = vsel %vm682, %v2381, %v2385
        %v2387 = vshrl.u32 %v2242, 16
        %v2389 = vrot.slane %v2387, 4
        %v2390 = vor.u32 %v2389, %v2385
        %v2391 = vrot.slane %v2390, 4
        %v2393 = vshll.u32 %v2243, 16
        %v2395 = vrot.slane %v2393, 5
        %v2396 = vsel %vm682, %v2391, %v2395
        %v2398 = vshrl.u32 %v2244, 16
        %v2400 = vrot.slane %v2398, 4
        %v2401 = vshll.u32 %v2244, 16
        %v2403 = vrot.slane %v2401, 5
        %v2404 = vor.u32 %v2400, %v2403
        %v2405 = vrot.slane %v2404, 4
        %v2407 = vshll.u32 %v2245, 16
        %v2409 = vrot.slane %v2407, 5
        %v2410 = vsel %vm682, %v2405, %v2409
        %v2411 = vshrl.u32 %v2245, 16
        %v2413 = vrot.slane %v2411, 4
        %v2414 = vor.u32 %v2413, %v2409
        %v2415 = vrot.slane %v2414, 4
        %v2417 = vshll.u32 %v2246, 16
        %v2419 = vrot.slane %v2417, 5
        %v2420 = vsel %vm682, %v2415, %v2419
        %v2422 = vshrl.u32 %v2247, 16
        %v2424 = vrot.slane %v2422, 4
        %v2425 = vshll.u32 %v2247, 16
        %v2427 = vrot.slane %v2425, 5
        %v2428 = vor.u32 %v2424, %v2427
        %v2429 = vrot.slane %v2428, 4
        %v2431 = vshll.u32 %v2248, 16
        %v2433 = vrot.slane %v2431, 5
        %v2434 = vsel %vm682, %v2429, %v2433
        %v2435 = vshrl.u32 %v2248, 16
        %v2437 = vrot.slane %v2435, 4
        %v2438 = vor.u32 %v2437, %v2433
        %v2439 = vrot.slane %v2438, 4
        %v2441 = vshll.u32 %v2249, 16
        %v2443 = vrot.slane %v2441, 5
        %v2444 = vsel %vm682, %v2439, %v2443
        %v2446 = vshrl.u32 %v2250, 16
        %v2448 = vrot.slane %v2446, 4
        %v2449 = vshll.u32 %v2250, 16
        %v2451 = vrot.slane %v2449, 5
        %v2452 = vor.u32 %v2448, %v2451
        %v2453 = vrot.slane %v2452, 4
        %v2455 = vshll.u32 %v2251, 16
        %v2457 = vrot.slane %v2455, 5
        %v2458 = vsel %vm682, %v2453, %v2457
        %v2459 = vshrl.u32 %v2251, 16
        %v2461 = vrot.slane %v2459, 4
        %v2462 = vor.u32 %v2461, %v2457
        %v2463 = vrot.slane %v2462, 4
        %v2465 = vshll.u32 %v2252, 16
        %v2467 = vrot.slane %v2465, 5
        %v2468 = vsel %vm682, %v2463, %v2467
        %v2470 = vshrl.u32 %v2253, 16
        %v2472 = vrot.slane %v2470, 4
        %v2473 = vshll.u32 %v2253, 16
        %v2475 = vrot.slane %v2473, 5
        %v2476 = vor.u32 %v2472, %v2475
        %v2477 = vrot.slane %v2476, 4
        %v2479 = vshll.u32 %v2254, 16
        %v2481 = vrot.slane %v2479, 5
        %v2482 = vsel %vm682, %v2477, %v2481
        %v2483 = vshrl.u32 %v2254, 16
        %v2485 = vrot.slane %v2483, 4
        %v2486 = vor.u32 %v2485, %v2481
        %v2487 = vrot.slane %v2486, 4
        %v2489 = vshll.u32 %v2255, 16
        %v2491 = vrot.slane %v2489, 5
        %v2492 = vsel %vm682, %v2487, %v2491
        %v2494 = vshrl.u32 %v2256, 16
        %v2496 = vrot.slane %v2494, 4
        %v2497 = vshll.u32 %v2256, 16
        %v2499 = vrot.slane %v2497, 5
        %v2500 = vor.u32 %v2496, %v2499
        %v2501 = vrot.slane %v2500, 4
        %v2503 = vshll.u32 %v2257, 16
        %v2505 = vrot.slane %v2503, 5
        %v2506 = vsel %vm682, %v2501, %v2505
        %v2507 = vshrl.u32 %v2257, 16
        %v2509 = vrot.slane %v2507, 4
        %v2510 = vor.u32 %v2509, %v2505
        %v2511 = vrot.slane %v2510, 4
        %v2513 = vshll.u32 %v2258, 16
        %v2515 = vrot.slane %v2513, 5
        %v2516 = vsel %vm682, %v2511, %v2515
        %v2518 = vshrl.u32 %v2259, 16
        %v2520 = vrot.slane %v2518, 4
        %v2521 = vshll.u32 %v2259, 16
        %v2523 = vrot.slane %v2521, 5
        %v2524 = vor.u32 %v2520, %v2523
        %v2525 = vrot.slane %v2524, 4
        %v2527 = vshll.u32 %v2260, 16
        %v2529 = vrot.slane %v2527, 5
        %v2530 = vsel %vm682, %v2525, %v2529
        %v2531 = vshrl.u32 %v2260, 16
        %v2533 = vrot.slane %v2531, 4
        %v2534 = vor.u32 %v2533, %v2529
        %v2535 = vrot.slane %v2534, 4
        %v2537 = vshll.u32 %v2261, 16
        %v2539 = vrot.slane %v2537, 5
        %v2540 = vsel %vm682, %v2535, %v2539
        %v2542 = vshrl.u32 %v2262, 16
        %v2544 = vrot.slane %v2542, 4
        %v2545 = vshll.u32 %v2262, 16
        %v2547 = vrot.slane %v2545, 5
        %v2548 = vor.u32 %v2544, %v2547
        %v2549 = vrot.slane %v2548, 4
        %v2551 = vshll.u32 %v2263, 16
        %v2553 = vrot.slane %v2551, 5
        %v2554 = vsel %vm682, %v2549, %v2553
        %v2555 = vshrl.u32 %v2263, 16
        %v2557 = vrot.slane %v2555, 4
        %v2558 = vor.u32 %v2557, %v2553
        %v2559 = vrot.slane %v2558, 4
        %v2561 = vshll.u32 %v2264, 16
        %v2563 = vrot.slane %v2561, 5
        %v2564 = vsel %vm682, %v2559, %v2563
        %v2566 = vshrl.u32 %v2265, 16
        %v2568 = vrot.slane %v2566, 4
        %v2569 = vshll.u32 %v2265, 16
        %v2571 = vrot.slane %v2569, 5
        %v2572 = vor.u32 %v2568, %v2571
        %v2573 = vrot.slane %v2572, 4
        %v2575 = vshll.u32 %v2266, 16
        %v2577 = vrot.slane %v2575, 5
        %v2578 = vsel %vm682, %v2573, %v2577
        %v2579 = vshrl.u32 %v2266, 16
        %v2581 = vrot.slane %v2579, 4
        %v2582 = vor.u32 %v2581, %v2577
        %v2583 = vrot.slane %v2582, 4
        %v2585 = vshll.u32 %v2267, 16
        %v2587 = vrot.slane %v2585, 5
        %v2588 = vsel %vm682, %v2583, %v2587
        %v2590 = vshrl.u32 %v2268, 16
        %v2592 = vrot.slane %v2590, 4
        %v2593 = vshll.u32 %v2268, 16
        %v2595 = vrot.slane %v2593, 5
        %v2596 = vor.u32 %v2592, %v2595
        %v2597 = vrot.slane %v2596, 4
        %v2599 = vshll.u32 %v2269, 16
        %v2601 = vrot.slane %v2599, 5
        %v2602 = vsel %vm682, %v2597, %v2601
        %v2603 = vshrl.u32 %v2269, 16
        %v2605 = vrot.slane %v2603, 4
        %v2606 = vor.u32 %v2605, %v2601
        %v2607 = vrot.slane %v2606, 4
        %v2609 = vshll.u32 %v2270, 16
        %v2611 = vrot.slane %v2609, 5
        %v2612 = vsel %vm682, %v2607, %v2611
        %v2614 = vshrl.u32 %v2271, 16
        %v2616 = vrot.slane %v2614, 4
        %v2617 = vshll.u32 %v2271, 16
        %v2619 = vrot.slane %v2617, 5
        %v2620 = vor.u32 %v2616, %v2619
        %v2621 = vrot.slane %v2620, 4
        %v2623 = vshll.u32 %v2272, 16
        %v2625 = vrot.slane %v2623, 5
        %v2626 = vsel %vm682, %v2621, %v2625
        %v2627 = vshrl.u32 %v2272, 16
        %v2629 = vrot.slane %v2627, 4
        %v2630 = vor.u32 %v2629, %v2625
        %v2631 = vrot.slane %v2630, 4
        %v2633 = vshll.u32 %v2273, 16
        %v2635 = vrot.slane %v2633, 5
        %v2636 = vsel %vm682, %v2631, %v2635
        %v2638 = vshrl.u32 %v2274, 16
        %v2640 = vrot.slane %v2638, 4
        %v2641 = vshll.u32 %v2274, 16
        %v2643 = vrot.slane %v2641, 5
        %v2644 = vor.u32 %v2640, %v2643
        %v2645 = vrot.slane %v2644, 4
        %v2647 = vshll.u32 %v2275, 16
        %v2649 = vrot.slane %v2647, 5
        %v2650 = vsel %vm682, %v2645, %v2649
        %v2651 = vshrl.u32 %v2275, 16
        %v2653 = vrot.slane %v2651, 4
        %v2654 = vor.u32 %v2653, %v2649
        %v2655 = vrot.slane %v2654, 4
        %v2657 = vshll.u32 %v2276, 16
        %v2659 = vrot.slane %v2657, 5
        %v2660 = vsel %vm682, %v2655, %v2659
        %v2661 = vld [vmem:[%s1 + $0x40] sm:$0xf]
        %v2662 = vld [vmem:[%s1 + $0x44] sm:$0xf]
        %v2663 = vld [vmem:[%s1 + $0x48] sm:$0xf]
        %v2664 = vld [vmem:[%s1 + $0x4c] sm:$0xf]
        %v2665 = vunpack.c.l.b16 %v2290
        %v2666 = vunpack.c.l.b16 %v2300
        %v2667 = vunpack.c.l.b16 %v2314
        %v2668 = vunpack.c.l.b16 %v2324
        %v2669 = vunpack.c.l.b16 %v2338
        %v2670 = vunpack.c.l.b16 %v2348
        %v2671 = vunpack.c.l.b16 %v2362
        %v2672 = vunpack.c.l.b16 %v2372
        %v2673 = vunpack.c.l.b16 %v2386
        %v2674 = vunpack.c.l.b16 %v2396
        %v2675 = vunpack.c.l.b16 %v2410
        %v2676 = vunpack.c.l.b16 %v2420
        %v2677 = vunpack.c.l.b16 %v2434
        %v2678 = vunpack.c.l.b16 %v2444
        %v2679 = vunpack.c.l.b16 %v2458
        %v2680 = vunpack.c.l.b16 %v2468
        %v2681 = vunpack.c.l.b16 %v2482
        %v2682 = vunpack.c.l.b16 %v2492
        %v2683 = vunpack.c.l.b16 %v2506
        %v2684 = vunpack.c.l.b16 %v2516
        %v2685 = vunpack.c.l.b16 %v2530
        %v2686 = vunpack.c.l.b16 %v2540
        %v2687 = vunpack.c.l.b16 %v2554
        %v2688 = vunpack.c.l.b16 %v2564
        %v2689 = vunpack.c.l.b16 %v2578
        %v2690 = vunpack.c.l.b16 %v2588
        %v2691 = vunpack.c.l.b16 %v2602
        %v2692 = vunpack.c.l.b16 %v2612
        %v2693 = vunpack.c.l.b16 %v2626
        %v2694 = vunpack.c.l.b16 %v2636
        %v2695 = vunpack.c.l.b16 %v2650
        %v2696 = vunpack.c.l.b16 %v2660
        %v2697 = vpack.c.b16 %v2666, %v2665
        %v2698 = vpack.c.b16 %v2668, %v2667
        %v2699 = vpack.c.b16 %v2670, %v2669
        %v2700 = vpack.c.b16 %v2672, %v2671
        %v2701 = vpack.c.b16 %v2674, %v2673
        %v2702 = vpack.c.b16 %v2676, %v2675
        %v2703 = vpack.c.b16 %v2678, %v2677
        %v2704 = vpack.c.b16 %v2680, %v2679
        %v2705 = vpack.c.b16 %v2682, %v2681
        %v2706 = vpack.c.b16 %v2684, %v2683
        %v2707 = vpack.c.b16 %v2686, %v2685
        %v2708 = vpack.c.b16 %v2688, %v2687
        %v2709 = vpack.c.b16 %v2690, %v2689
        %v2710 = vpack.c.b16 %v2692, %v2691
        %v2711 = vpack.c.b16 %v2694, %v2693
        %v2712 = vpack.c.b16 %v2696, %v2695
        %v2717 = vunpack.c.l.b16 %v2661
        %v2718 = vunpack.c.l.b16 %v2662
        %v2719 = vunpack.c.l.b16 %v2663
        %v2720 = vunpack.c.l.b16 %v2664
        %v2721 = vpack.c.b16 %v2718, %v2717
        %v2722 = vpack.c.b16 %v2720, %v2719
        %v2726 = vsel %vm390, %v2697, 0
        %v2729 = vsel %vm390, %v2698, 0
        %v2732 = vsel %vm390, %v2699, 0
        %v2735 = vsel %vm390, %v2700, 0
        %v2738 = vsel %vm390, %v2701, 0
        %v2741 = vsel %vm390, %v2702, 0
        %v2744 = vsel %vm390, %v2703, 0
        %v2747 = vsel %vm390, %v2704, 0
        %v2750 = vsel %vm390, %v2705, 0
        %v2753 = vsel %vm390, %v2706, 0
        %v2756 = vsel %vm390, %v2707, 0
        %v2759 = vsel %vm390, %v2708, 0
        %v2762 = vsel %vm390, %v2709, 0
        %v2765 = vsel %vm390, %v2710, 0
        %v2768 = vsel %vm390, %v2711, 0
        %v2771 = vsel %vm390, %v2712, 0
        %2773 = vmatprep.subr.bf16.mxu0 0
        %2774 = vmatpush1.bf16.msra.mxu0 %v2721
        %2775 = vmatprep.subr.bf16.mxu0 0
        %2776 = vmatpush1.bf16.msra.mxu0 %v2722
        %2777 = vmatprep.subr.bf16.mxu0 0
        %2778 = vmatpush1.bf16.msra.mxu0 0
        %2779 = vmatprep.subr.bf16.mxu0 0
        %2780 = vmatpush1.bf16.msra.mxu0 0
        %2781 = vmatprep.subr.bf16.mxu0 0
        %2782 = vmatpush1.bf16.msra.mxu0 0
        %2783 = vmatprep.subr.bf16.mxu0 0
        %2784 = vmatpush1.bf16.msra.mxu0 0
        %2785 = vmatprep.subr.bf16.mxu0 0
        %2786 = vmatpush1.bf16.msra.mxu0 0
        %2787 = vmatprep.subr.bf16.mxu0 0
        %2788 = vmatpush1.bf16.msra.mxu0 0
        %2789 = vmatprep.subr.bf16.mxu0 0
        %2790 = vmatpush1.bf16.msra.mxu0 0
        %2791 = vmatprep.subr.bf16.mxu0 0
        %2792 = vmatpush1.bf16.msra.mxu0 0
        %2793 = vmatprep.subr.bf16.mxu0 0
        %2794 = vmatpush1.bf16.msra.mxu0 0
        %2795 = vmatprep.subr.bf16.mxu0 0
        %2796 = vmatpush1.bf16.msra.mxu0 0
        %2797 = vmatprep.subr.bf16.mxu0 0
        %2798 = vmatpush1.bf16.msra.mxu0 0
        %2799 = vmatprep.subr.bf16.mxu0 0
        %2800 = vmatpush1.bf16.msra.mxu0 0
        %2801 = vmatprep.subr.bf16.mxu0 0
        %2802 = vmatpush1.bf16.msra.mxu0 0
        %2803 = vmatprep.subr.bf16.mxu0 0
        %2804 = vmatpush1.bf16.msra.mxu0 0
        %2805 = vmatprep.mubr.bf16.mxu0 0
        %2806 = vmatmul.mubr.bf16.gmra.mrb[0].mxu0 %v2726
        %v2807 = vpop.f32.mrb[0].mxu0
        %v2808 = vadd.f32 0.0, %v2807
        %v2809 = vpop.f32.mrb[0].mxu0
        %v2810 = vpop.f32.mrb[0].mxu0
        %v2811 = vadd.f32 0.0, %v2810
        %v2812 = vpop.f32.mrb[0].mxu0
        %2813 = vmatprep.mubr.bf16.mxu0 0
        %2814 = vmatmul.mubr.bf16.gmra.mrb[0].mxu0 %v2729
        %v2815 = vpop.f32.mrb[0].mxu0
        %v2816 = vadd.f32 0.0, %v2815
        %v2817 = vpop.f32.mrb[0].mxu0
        %v2818 = vpop.f32.mrb[0].mxu0
        %v2819 = vadd.f32 0.0, %v2818
        %v2820 = vpop.f32.mrb[0].mxu0
        %2821 = vmatprep.mubr.bf16.mxu0 0
        %2822 = vmatmul.mubr.bf16.gmra.mrb[0].mxu0 %v2732
        %v2823 = vpop.f32.mrb[0].mxu0
        %v2824 = vadd.f32 0.0, %v2823
        %v2825 = vpop.f32.mrb[0].mxu0
        %v2826 = vpop.f32.mrb[0].mxu0
        %v2827 = vadd.f32 0.0, %v2826
        %v2828 = vpop.f32.mrb[0].mxu0
        %2829 = vmatprep.mubr.bf16.mxu0 0
        %2830 = vmatmul.mubr.bf16.gmra.mrb[0].mxu0 %v2735
        %v2831 = vpop.f32.mrb[0].mxu0
        %v2832 = vadd.f32 0.0, %v2831
        %v2833 = vpop.f32.mrb[0].mxu0
        %v2834 = vpop.f32.mrb[0].mxu0
        %v2835 = vadd.f32 0.0, %v2834
        %v2836 = vpop.f32.mrb[0].mxu0
        %2837 = vmatprep.mubr.bf16.mxu0 0
        %2838 = vmatmul.mubr.bf16.gmra.mrb[0].mxu0 %v2738
        %v2839 = vpop.f32.mrb[0].mxu0
        %v2840 = vadd.f32 0.0, %v2839
        %v2841 = vpop.f32.mrb[0].mxu0
        %v2842 = vpop.f32.mrb[0].mxu0
        %v2843 = vadd.f32 0.0, %v2842
        %v2844 = vpop.f32.mrb[0].mxu0
        %2845 = vmatprep.mubr.bf16.mxu0 0
        %2846 = vmatmul.mubr.bf16.gmra.mrb[0].mxu0 %v2741
        %v2847 = vpop.f32.mrb[0].mxu0
        %v2848 = vadd.f32 0.0, %v2847
        %v2849 = vpop.f32.mrb[0].mxu0
        %v2850 = vpop.f32.mrb[0].mxu0
        %v2851 = vadd.f32 0.0, %v2850
        %v2852 = vpop.f32.mrb[0].mxu0
        %2853 = vmatprep.mubr.bf16.mxu0 0
        %2854 = vmatmul.mubr.bf16.gmra.mrb[0].mxu0 %v2744
        %v2855 = vpop.f32.mrb[0].mxu0
        %v2856 = vadd.f32 0.0, %v2855
        %v2857 = vpop.f32.mrb[0].mxu0
        %v2858 = vpop.f32.mrb[0].mxu0
        %v2859 = vadd.f32 0.0, %v2858
        %v2860 = vpop.f32.mrb[0].mxu0
        %2861 = vmatprep.mubr.bf16.mxu0 0
        %2862 = vmatmul.mubr.bf16.gmra.mrb[0].mxu0 %v2747
        %v2863 = vpop.f32.mrb[0].mxu0
        %v2864 = vadd.f32 0.0, %v2863
        %v2865 = vpop.f32.mrb[0].mxu0
        %v2866 = vpop.f32.mrb[0].mxu0
        %v2867 = vadd.f32 0.0, %v2866
        %v2868 = vpop.f32.mrb[0].mxu0
        %2869 = vmatprep.mubr.bf16.mxu0 0
        %2870 = vmatmul.mubr.bf16.gmra.mrb[0].mxu0 %v2750
        %v2871 = vpop.f32.mrb[0].mxu0
        %v2872 = vadd.f32 0.0, %v2871
        %v2873 = vpop.f32.mrb[0].mxu0
        %v2874 = vpop.f32.mrb[0].mxu0
        %v2875 = vadd.f32 0.0, %v2874
        %v2876 = vpop.f32.mrb[0].mxu0
        %2877 = vmatprep.mubr.bf16.mxu0 0
        %2878 = vmatmul.mubr.bf16.gmra.mrb[0].mxu0 %v2753
        %v2879 = vpop.f32.mrb[0].mxu0
        %v2880 = vadd.f32 0.0, %v2879
        %v2881 = vpop.f32.mrb[0].mxu0
        %v2882 = vpop.f32.mrb[0].mxu0
        %v2883 = vadd.f32 0.0, %v2882
        %v2884 = vpop.f32.mrb[0].mxu0
        %2885 = vmatprep.mubr.bf16.mxu0 0
        %2886 = vmatmul.mubr.bf16.gmra.mrb[0].mxu0 %v2756
        %v2887 = vpop.f32.mrb[0].mxu0
        %v2888 = vadd.f32 0.0, %v2887
        %v2889 = vpop.f32.mrb[0].mxu0
        %v2890 = vpop.f32.mrb[0].mxu0
        %v2891 = vadd.f32 0.0, %v2890
        %v2892 = vpop.f32.mrb[0].mxu0
        %2893 = vmatprep.mubr.bf16.mxu0 0
        %2894 = vmatmul.mubr.bf16.gmra.mrb[0].mxu0 %v2759
        %v2895 = vpop.f32.mrb[0].mxu0
        %v2896 = vadd.f32 0.0, %v2895
        %v2897 = vpop.f32.mrb[0].mxu0
        %v2898 = vpop.f32.mrb[0].mxu0
        %v2899 = vadd.f32 0.0, %v2898
        %v2900 = vpop.f32.mrb[0].mxu0
        %2901 = vmatprep.mubr.bf16.mxu0 0
        %2902 = vmatmul.mubr.bf16.gmra.mrb[0].mxu0 %v2762
        %v2903 = vpop.f32.mrb[0].mxu0
        %v2904 = vadd.f32 0.0, %v2903
        %v2905 = vpop.f32.mrb[0].mxu0
        %v2906 = vpop.f32.mrb[0].mxu0
        %v2907 = vadd.f32 0.0, %v2906
        %v2908 = vpop.f32.mrb[0].mxu0
        %2909 = vmatprep.mubr.bf16.mxu0 0
        %2910 = vmatmul.mubr.bf16.gmra.mrb[0].mxu0 %v2765
        %v2911 = vpop.f32.mrb[0].mxu0
        %v2912 = vadd.f32 0.0, %v2911
        %v2913 = vpop.f32.mrb[0].mxu0
        %v2914 = vpop.f32.mrb[0].mxu0
        %v2915 = vadd.f32 0.0, %v2914
        %v2916 = vpop.f32.mrb[0].mxu0
        %2917 = vmatprep.mubr.bf16.mxu0 0
        %2918 = vmatmul.mubr.bf16.gmra.mrb[0].mxu0 %v2768
        %v2919 = vpop.f32.mrb[0].mxu0
        %v2920 = vadd.f32 0.0, %v2919
        %v2921 = vpop.f32.mrb[0].mxu0
        %v2922 = vpop.f32.mrb[0].mxu0
        %v2923 = vadd.f32 0.0, %v2922
        %v2924 = vpop.f32.mrb[0].mxu0
        %2925 = vmatprep.mubr.bf16.mxu0 0
        %2926 = vmatmul.mubr.bf16.gmra.mrb[0].mxu0 %v2771
        %v2927 = vpop.f32.mrb[0].mxu0
        %v2928 = vadd.f32 0.0, %v2927
        %v2929 = vpop.f32.mrb[0].mxu0
        %v2930 = vpop.f32.mrb[0].mxu0
        %v2931 = vadd.f32 0.0, %v2930
        %v2932 = vpop.f32.mrb[0].mxu0
        %2933 = vdwg.mxu0
        %v2934 = vadd.f32 %v2197, %v2808
        %v2935 = vadd.f32 %v2198, %v2811
        %v2936 = vadd.f32 %v2199, %v2816
        %v2937 = vadd.f32 %v2200, %v2819
        %v2938 = vadd.f32 %v2201, %v2824
        %v2939 = vadd.f32 %v2202, %v2827
        %v2940 = vadd.f32 %v2203, %v2832
        %v2941 = vadd.f32 %v2204, %v2835
        %v2942 = vadd.f32 %v2205, %v2840
        %v2943 = vadd.f32 %v2206, %v2843
        %v2944 = vadd.f32 %v2207, %v2848
        %v2945 = vadd.f32 %v2208, %v2851
        %v2946 = vadd.f32 %v2209, %v2856
        %v2947 = vadd.f32 %v2210, %v2859
        %v2948 = vadd.f32 %v2211, %v2864
        %v2949 = vadd.f32 %v2212, %v2867
        %v2950 = vadd.f32 %v2213, %v2872
        %v2951 = vadd.f32 %v2214, %v2875
        %v2952 = vadd.f32 %v2215, %v2880
        %v2953 = vadd.f32 %v2216, %v2883
        %v2954 = vadd.f32 %v2217, %v2888
        %v2955 = vadd.f32 %v2218, %v2891
        %v2956 = vadd.f32 %v2219, %v2896
        %v2957 = vadd.f32 %v2220, %v2899
        %v2958 = vadd.f32 %v2221, %v2904
        %v2959 = vadd.f32 %v2222, %v2907
        %v2960 = vadd.f32 %v2223, %v2912
        %v2961 = vadd.f32 %v2224, %v2915
        %v2962 = vadd.f32 %v2225, %v2920
        %v2963 = vadd.f32 %v2226, %v2923
        %v2964 = vadd.f32 %v2227, %v2928
        %v2965 = vadd.f32 %v2228, %v2931
        %v2966 = vld [vmem:[%s1859] sm:$0xe]
        %v2967 = vld [vmem:[%s1859 + $0xc] sm:$0xe]
        %v2968 = vld [vmem:[%s1859 + $0x18] sm:$0xe]
        %v2969 = vld [vmem:[%s1859 + $0x24] sm:$0xe]
        %v2970 = vld [vmem:[%s1859 + $0x30] sm:$0xe]
        %v2971 = vld [vmem:[%s1859 + $0x3c] sm:$0xe]
        %v2972 = vld [vmem:[%s1859 + $0x48] sm:$0xe]
        %v2973 = vld [vmem:[%s1859 + $0x54] sm:$0xe]
        %v2974 = vld [vmem:[%s1859 + $0x60] sm:$0xe]
        %v2975 = vld [vmem:[%s1859 + $0x6c] sm:$0xe]
        %v2976 = vld [vmem:[%s1859 + $0x78] sm:$0xe]
        %v2977 = vld [vmem:[%s1859 + $0x84] sm:$0xe]
        %v2978 = vld [vmem:[%s1859 + $0x90] sm:$0xe]
        %v2979 = vld [vmem:[%s1859 + $0x9c] sm:$0xe]
        %v2980 = vld [vmem:[%s1859 + $0xa8] sm:$0xe]
        %v2981 = vld [vmem:[%s1859 + $0xb4] sm:$0xe]
        %v3030 = vrot.slane %v2966, 5
        %v3031 = vrot.slane %v3030, 4
        %v3032 = vrot.slane %v2230, 5
        %v3033 = vsel %vm1438, %v3031, %v3032
        %v3034 = vrot.slane %v3032, 4
        %v3035 = vrot.slane %v2231, 5
        %v3036 = vsel %vm1438, %v3034, %v3035
        %v3037 = vrot.slane %v2967, 5
        %v3038 = vrot.slane %v3037, 4
        %v3039 = vrot.slane %v2233, 5
        %v3040 = vsel %vm1438, %v3038, %v3039
        %v3041 = vrot.slane %v3039, 4
        %v3042 = vrot.slane %v2234, 5
        %v3043 = vsel %vm1438, %v3041, %v3042
        %v3044 = vrot.slane %v2968, 5
        %v3045 = vrot.slane %v3044, 4
        %v3046 = vrot.slane %v2236, 5
        %v3047 = vsel %vm1438, %v3045, %v3046
        %v3048 = vrot.slane %v3046, 4
        %v3049 = vrot.slane %v2237, 5
        %v3050 = vsel %vm1438, %v3048, %v3049
        %v3051 = vrot.slane %v2969, 5
        %v3052 = vrot.slane %v3051, 4
        %v3053 = vrot.slane %v2239, 5
        %v3054 = vsel %vm1438, %v3052, %v3053
        %v3055 = vrot.slane %v3053, 4
        %v3056 = vrot.slane %v2240, 5
        %v3057 = vsel %vm1438, %v3055, %v3056
        %v3058 = vrot.slane %v2970, 5
        %v3059 = vrot.slane %v3058, 4
        %v3060 = vrot.slane %v2242, 5
        %v3061 = vsel %vm1438, %v3059, %v3060
        %v3062 = vrot.slane %v3060, 4
        %v3063 = vrot.slane %v2243, 5
        %v3064 = vsel %vm1438, %v3062, %v3063
        %v3065 = vrot.slane %v2971, 5
        %v3066 = vrot.slane %v3065, 4
        %v3067 = vrot.slane %v2245, 5
        %v3068 = vsel %vm1438, %v3066, %v3067
        %v3069 = vrot.slane %v3067, 4
        %v3070 = vrot.slane %v2246, 5
        %v3071 = vsel %vm1438, %v3069, %v3070
        %v3072 = vrot.slane %v2972, 5
        %v3073 = vrot.slane %v3072, 4
        %v3074 = vrot.slane %v2248, 5
        %v3075 = vsel %vm1438, %v3073, %v3074
        %v3076 = vrot.slane %v3074, 4
        %v3077 = vrot.slane %v2249, 5
        %v3078 = vsel %vm1438, %v3076, %v3077
        %v3079 = vrot.slane %v2973, 5
        %v3080 = vrot.slane %v3079, 4
        %v3081 = vrot.slane %v2251, 5
        %v3082 = vsel %vm1438, %v3080, %v3081
        %v3083 = vrot.slane %v3081, 4
        %v3084 = vrot.slane %v2252, 5
        %v3085 = vsel %vm1438, %v3083, %v3084
        %v3086 = vrot.slane %v2974, 5
        %v3087 = vrot.slane %v3086, 4
        %v3088 = vrot.slane %v2254, 5
        %v3089 = vsel %vm1438, %v3087, %v3088
        %v3090 = vrot.slane %v3088, 4
        %v3091 = vrot.slane %v2255, 5
        %v3092 = vsel %vm1438, %v3090, %v3091
        %v3093 = vrot.slane %v2975, 5
        %v3094 = vrot.slane %v3093, 4
        %v3095 = vrot.slane %v2257, 5
        %v3096 = vsel %vm1438, %v3094, %v3095
        %v3097 = vrot.slane %v3095, 4
        %v3098 = vrot.slane %v2258, 5
        %v3099 = vsel %vm1438, %v3097, %v3098
        %v3100 = vrot.slane %v2976, 5
        %v3101 = vrot.slane %v3100, 4
        %v3102 = vrot.slane %v2260, 5
        %v3103 = vsel %vm1438, %v3101, %v3102
        %v3104 = vrot.slane %v3102, 4
        %v3105 = vrot.slane %v2261, 5
        %v3106 = vsel %vm1438, %v3104, %v3105
        %v3107 = vrot.slane %v2977, 5
        %v3108 = vrot.slane %v3107, 4
        %v3109 = vrot.slane %v2263, 5
        %v3110 = vsel %vm1438, %v3108, %v3109
        %v3111 = vrot.slane %v3109, 4
        %v3112 = vrot.slane %v2264, 5
        %v3113 = vsel %vm1438, %v3111, %v3112
        %v3114 = vrot.slane %v2978, 5
        %v3115 = vrot.slane %v3114, 4
        %v3116 = vrot.slane %v2266, 5
        %v3117 = vsel %vm1438, %v3115, %v3116
        %v3118 = vrot.slane %v3116, 4
        %v3119 = vrot.slane %v2267, 5
        %v3120 = vsel %vm1438, %v3118, %v3119
        %v3121 = vrot.slane %v2979, 5
        %v3122 = vrot.slane %v3121, 4
        %v3123 = vrot.slane %v2269, 5
        %v3124 = vsel %vm1438, %v3122, %v3123
        %v3125 = vrot.slane %v3123, 4
        %v3126 = vrot.slane %v2270, 5
        %v3127 = vsel %vm1438, %v3125, %v3126
        %v3128 = vrot.slane %v2980, 5
        %v3129 = vrot.slane %v3128, 4
        %v3130 = vrot.slane %v2272, 5
        %v3131 = vsel %vm1438, %v3129, %v3130
        %v3132 = vrot.slane %v3130, 4
        %v3133 = vrot.slane %v2273, 5
        %v3134 = vsel %vm1438, %v3132, %v3133
        %v3135 = vrot.slane %v2981, 5
        %v3136 = vrot.slane %v3135, 4
        %v3137 = vrot.slane %v2275, 5
        %v3138 = vsel %vm1438, %v3136, %v3137
        %v3139 = vrot.slane %v3137, 4
        %v3140 = vrot.slane %v2276, 5
        %v3141 = vsel %vm1438, %v3139, %v3140
        %v3142 = vld [vmem:[%s1 + $0x50] sm:$0xf]
        %v3143 = vld [vmem:[%s1 + $0x54] sm:$0xf]
        %v3144 = vld [vmem:[%s1 + $0x58] sm:$0xf]
        %v3145 = vld [vmem:[%s1 + $0x5c] sm:$0xf]
        %v3146 = vunpack.c.l.b16 %v3033
        %v3147 = vunpack.c.l.b16 %v3036
        %v3148 = vunpack.c.l.b16 %v3040
        %v3149 = vunpack.c.l.b16 %v3043
        %v3150 = vunpack.c.l.b16 %v3047
        %v3151 = vunpack.c.l.b16 %v3050
        %v3152 = vunpack.c.l.b16 %v3054
        %v3153 = vunpack.c.l.b16 %v3057
        %v3154 = vunpack.c.l.b16 %v3061
        %v3155 = vunpack.c.l.b16 %v3064
        %v3156 = vunpack.c.l.b16 %v3068
        %v3157 = vunpack.c.l.b16 %v3071
        %v3158 = vunpack.c.l.b16 %v3075
        %v3159 = vunpack.c.l.b16 %v3078
        %v3160 = vunpack.c.l.b16 %v3082
        %v3161 = vunpack.c.l.b16 %v3085
        %v3162 = vunpack.c.l.b16 %v3089
        %v3163 = vunpack.c.l.b16 %v3092
        %v3164 = vunpack.c.l.b16 %v3096
        %v3165 = vunpack.c.l.b16 %v3099
        %v3166 = vunpack.c.l.b16 %v3103
        %v3167 = vunpack.c.l.b16 %v3106
        %v3168 = vunpack.c.l.b16 %v3110
        %v3169 = vunpack.c.l.b16 %v3113
        %v3170 = vunpack.c.l.b16 %v3117
        %v3171 = vunpack.c.l.b16 %v3120
        %v3172 = vunpack.c.l.b16 %v3124
        %v3173 = vunpack.c.l.b16 %v3127
        %v3174 = vunpack.c.l.b16 %v3131
        %v3175 = vunpack.c.l.b16 %v3134
        %v3176 = vunpack.c.l.b16 %v3138
        %v3177 = vunpack.c.l.b16 %v3141
        %v3178 = vpack.c.b16 %v3147, %v3146
        %v3179 = vpack.c.b16 %v3149, %v3148
        %v3180 = vpack.c.b16 %v3151, %v3150
        %v3181 = vpack.c.b16 %v3153, %v3152
        %v3182 = vpack.c.b16 %v3155, %v3154
        %v3183 = vpack.c.b16 %v3157, %v3156
        %v3184 = vpack.c.b16 %v3159, %v3158
        %v3185 = vpack.c.b16 %v3161, %v3160
        %v3186 = vpack.c.b16 %v3163, %v3162
        %v3187 = vpack.c.b16 %v3165, %v3164
        %v3188 = vpack.c.b16 %v3167, %v3166
        %v3189 = vpack.c.b16 %v3169, %v3168
        %v3190 = vpack.c.b16 %v3171, %v3170
        %v3191 = vpack.c.b16 %v3173, %v3172
        %v3192 = vpack.c.b16 %v3175, %v3174
        %v3193 = vpack.c.b16 %v3177, %v3176
        %v3198 = vunpack.c.l.b16 %v3142
        %v3199 = vunpack.c.l.b16 %v3143
        %v3200 = vunpack.c.l.b16 %v3144
        %v3201 = vunpack.c.l.b16 %v3145
        %v3202 = vpack.c.b16 %v3199, %v3198
        %v3203 = vpack.c.b16 %v3201, %v3200
        %v3207 = vsel %vm390, %v3178, 0
        %v3210 = vsel %vm390, %v3179, 0
        %v3213 = vsel %vm390, %v3180, 0
        %v3216 = vsel %vm390, %v3181, 0
        %v3219 = vsel %vm390, %v3182, 0
        %v3222 = vsel %vm390, %v3183, 0
        %v3225 = vsel %vm390, %v3184, 0
        %v3228 = vsel %vm390, %v3185, 0
        %v3231 = vsel %vm390, %v3186, 0
        %v3234 = vsel %vm390, %v3187, 0
        %v3237 = vsel %vm390, %v3188, 0
        %v3240 = vsel %vm390, %v3189, 0
        %v3243 = vsel %vm390, %v3190, 0
        %v3246 = vsel %vm390, %v3191, 0
        %v3249 = vsel %vm390, %v3192, 0
        %v3252 = vsel %vm390, %v3193, 0
        %3254 = vmatprep.subr.bf16.mxu0 0
        %3255 = vmatpush1.bf16.msra.mxu0 %v3202
        %3256 = vmatprep.subr.bf16.mxu0 0
        %3257 = vmatpush1.bf16.msra.mxu0 %v3203
        %3258 = vmatprep.subr.bf16.mxu0 0
        %3259 = vmatpush1.bf16.msra.mxu0 0
        %3260 = vmatprep.subr.bf16.mxu0 0
        %3261 = vmatpush1.bf16.msra.mxu0 0
        %3262 = vmatprep.subr.bf16.mxu0 0
        %3263 = vmatpush1.bf16.msra.mxu0 0
        %3264 = vmatprep.subr.bf16.mxu0 0
        %3265 = vmatpush1.bf16.msra.mxu0 0
        %3266 = vmatprep.subr.bf16.mxu0 0
        %3267 = vmatpush1.bf16.msra.mxu0 0
        %3268 = vmatprep.subr.bf16.mxu0 0
        %3269 = vmatpush1.bf16.msra.mxu0 0
        %3270 = vmatprep.subr.bf16.mxu0 0
        %3271 = vmatpush1.bf16.msra.mxu0 0
        %3272 = vmatprep.subr.bf16.mxu0 0
        %3273 = vmatpush1.bf16.msra.mxu0 0
        %3274 = vmatprep.subr.bf16.mxu0 0
        %3275 = vmatpush1.bf16.msra.mxu0 0
        %3276 = vmatprep.subr.bf16.mxu0 0
        %3277 = vmatpush1.bf16.msra.mxu0 0
        %3278 = vmatprep.subr.bf16.mxu0 0
        %3279 = vmatpush1.bf16.msra.mxu0 0
        %3280 = vmatprep.subr.bf16.mxu0 0
        %3281 = vmatpush1.bf16.msra.mxu0 0
        %3282 = vmatprep.subr.bf16.mxu0 0
        %3283 = vmatpush1.bf16.msra.mxu0 0
        %3284 = vmatprep.subr.bf16.mxu0 0
        %3285 = vmatpush1.bf16.msra.mxu0 0
        %3286 = vmatprep.mubr.bf16.mxu0 0
        %3287 = vmatmul.mubr.bf16.gmra.mrb[0].mxu0 %v3207
        %v3288 = vpop.f32.mrb[0].mxu0
        %v3289 = vadd.f32 0.0, %v3288
        %v3290 = vpop.f32.mrb[0].mxu0
        %v3291 = vpop.f32.mrb[0].mxu0
        %v3292 = vadd.f32 0.0, %v3291
        %v3293 = vpop.f32.mrb[0].mxu0
        %3294 = vmatprep.mubr.bf16.mxu0 0
        %3295 = vmatmul.mubr.bf16.gmra.mrb[0].mxu0 %v3210
        %v3296 = vpop.f32.mrb[0].mxu0
        %v3297 = vadd.f32 0.0, %v3296
        %v3298 = vpop.f32.mrb[0].mxu0
        %v3299 = vpop.f32.mrb[0].mxu0
        %v3300 = vadd.f32 0.0, %v3299
        %v3301 = vpop.f32.mrb[0].mxu0
        %3302 = vmatprep.mubr.bf16.mxu0 0
        %3303 = vmatmul.mubr.bf16.gmra.mrb[0].mxu0 %v3213
        %v3304 = vpop.f32.mrb[0].mxu0
        %v3305 = vadd.f32 0.0, %v3304
        %v3306 = vpop.f32.mrb[0].mxu0
        %v3307 = vpop.f32.mrb[0].mxu0
        %v3308 = vadd.f32 0.0, %v3307
        %v3309 = vpop.f32.mrb[0].mxu0
        %3310 = vmatprep.mubr.bf16.mxu0 0
        %3311 = vmatmul.mubr.bf16.gmra.mrb[0].mxu0 %v3216
        %v3312 = vpop.f32.mrb[0].mxu0
        %v3313 = vadd.f32 0.0, %v3312
        %v3314 = vpop.f32.mrb[0].mxu0
        %v3315 = vpop.f32.mrb[0].mxu0
        %v3316 = vadd.f32 0.0, %v3315
        %v3317 = vpop.f32.mrb[0].mxu0
        %3318 = vmatprep.mubr.bf16.mxu0 0
        %3319 = vmatmul.mubr.bf16.gmra.mrb[0].mxu0 %v3219
        %v3320 = vpop.f32.mrb[0].mxu0
        %v3321 = vadd.f32 0.0, %v3320
        %v3322 = vpop.f32.mrb[0].mxu0
        %v3323 = vpop.f32.mrb[0].mxu0
        %v3324 = vadd.f32 0.0, %v3323
        %v3325 = vpop.f32.mrb[0].mxu0
        %3326 = vmatprep.mubr.bf16.mxu0 0
        %3327 = vmatmul.mubr.bf16.gmra.mrb[0].mxu0 %v3222
        %v3328 = vpop.f32.mrb[0].mxu0
        %v3329 = vadd.f32 0.0, %v3328
        %v3330 = vpop.f32.mrb[0].mxu0
        %v3331 = vpop.f32.mrb[0].mxu0
        %v3332 = vadd.f32 0.0, %v3331
        %v3333 = vpop.f32.mrb[0].mxu0
        %3334 = vmatprep.mubr.bf16.mxu0 0
        %3335 = vmatmul.mubr.bf16.gmra.mrb[0].mxu0 %v3225
        %v3336 = vpop.f32.mrb[0].mxu0
        %v3337 = vadd.f32 0.0, %v3336
        %v3338 = vpop.f32.mrb[0].mxu0
        %v3339 = vpop.f32.mrb[0].mxu0
        %v3340 = vadd.f32 0.0, %v3339
        %v3341 = vpop.f32.mrb[0].mxu0
        %3342 = vmatprep.mubr.bf16.mxu0 0
        %3343 = vmatmul.mubr.bf16.gmra.mrb[0].mxu0 %v3228
        %v3344 = vpop.f32.mrb[0].mxu0
        %v3345 = vadd.f32 0.0, %v3344
        %v3346 = vpop.f32.mrb[0].mxu0
        %v3347 = vpop.f32.mrb[0].mxu0
        %v3348 = vadd.f32 0.0, %v3347
        %v3349 = vpop.f32.mrb[0].mxu0
        %3350 = vmatprep.mubr.bf16.mxu0 0
        %3351 = vmatmul.mubr.bf16.gmra.mrb[0].mxu0 %v3231
        %v3352 = vpop.f32.mrb[0].mxu0
        %v3353 = vadd.f32 0.0, %v3352
        %v3354 = vpop.f32.mrb[0].mxu0
        %v3355 = vpop.f32.mrb[0].mxu0
        %v3356 = vadd.f32 0.0, %v3355
        %v3357 = vpop.f32.mrb[0].mxu0
        %3358 = vmatprep.mubr.bf16.mxu0 0
        %3359 = vmatmul.mubr.bf16.gmra.mrb[0].mxu0 %v3234
        %v3360 = vpop.f32.mrb[0].mxu0
        %v3361 = vadd.f32 0.0, %v3360
        %v3362 = vpop.f32.mrb[0].mxu0
        %v3363 = vpop.f32.mrb[0].mxu0
        %v3364 = vadd.f32 0.0, %v3363
        %v3365 = vpop.f32.mrb[0].mxu0
        %3366 = vmatprep.mubr.bf16.mxu0 0
        %3367 = vmatmul.mubr.bf16.gmra.mrb[0].mxu0 %v3237
        %v3368 = vpop.f32.mrb[0].mxu0
        %v3369 = vadd.f32 0.0, %v3368
        %v3370 = vpop.f32.mrb[0].mxu0
        %v3371 = vpop.f32.mrb[0].mxu0
        %v3372 = vadd.f32 0.0, %v3371
        %v3373 = vpop.f32.mrb[0].mxu0
        %3374 = vmatprep.mubr.bf16.mxu0 0
        %3375 = vmatmul.mubr.bf16.gmra.mrb[0].mxu0 %v3240
        %v3376 = vpop.f32.mrb[0].mxu0
        %v3377 = vadd.f32 0.0, %v3376
        %v3378 = vpop.f32.mrb[0].mxu0
        %v3379 = vpop.f32.mrb[0].mxu0
        %v3380 = vadd.f32 0.0, %v3379
        %v3381 = vpop.f32.mrb[0].mxu0
        %3382 = vmatprep.mubr.bf16.mxu0 0
        %3383 = vmatmul.mubr.bf16.gmra.mrb[0].mxu0 %v3243
        %v3384 = vpop.f32.mrb[0].mxu0
        %v3385 = vadd.f32 0.0, %v3384
        %v3386 = vpop.f32.mrb[0].mxu0
        %v3387 = vpop.f32.mrb[0].mxu0
        %v3388 = vadd.f32 0.0, %v3387
        %v3389 = vpop.f32.mrb[0].mxu0
        %3390 = vmatprep.mubr.bf16.mxu0 0
        %3391 = vmatmul.mubr.bf16.gmra.mrb[0].mxu0 %v3246
        %v3392 = vpop.f32.mrb[0].mxu0
        %v3393 = vadd.f32 0.0, %v3392
        %v3394 = vpop.f32.mrb[0].mxu0
        %v3395 = vpop.f32.mrb[0].mxu0
        %v3396 = vadd.f32 0.0, %v3395
        %v3397 = vpop.f32.mrb[0].mxu0
        %3398 = vmatprep.mubr.bf16.mxu0 0
        %3399 = vmatmul.mubr.bf16.gmra.mrb[0].mxu0 %v3249
        %v3400 = vpop.f32.mrb[0].mxu0
        %v3401 = vadd.f32 0.0, %v3400
        %v3402 = vpop.f32.mrb[0].mxu0
        %v3403 = vpop.f32.mrb[0].mxu0
        %v3404 = vadd.f32 0.0, %v3403
        %v3405 = vpop.f32.mrb[0].mxu0
        %3406 = vmatprep.mubr.bf16.mxu0 0
        %3407 = vmatmul.mubr.bf16.gmra.mrb[0].mxu0 %v3252
        %v3408 = vpop.f32.mrb[0].mxu0
        %v3409 = vadd.f32 0.0, %v3408
        %v3410 = vpop.f32.mrb[0].mxu0
        %v3411 = vpop.f32.mrb[0].mxu0
        %v3412 = vadd.f32 0.0, %v3411
        %v3413 = vpop.f32.mrb[0].mxu0
        %3414 = vdwg.mxu0
        %v3415 = vadd.f32 %v2934, %v3289
        %v3416 = vadd.f32 %v2935, %v3292
        %v3417 = vadd.f32 %v2936, %v3297
        %v3418 = vadd.f32 %v2937, %v3300
        %v3419 = vadd.f32 %v2938, %v3305
        %v3420 = vadd.f32 %v2939, %v3308
        %v3421 = vadd.f32 %v2940, %v3313
        %v3422 = vadd.f32 %v2941, %v3316
        %v3423 = vadd.f32 %v2942, %v3321
        %v3424 = vadd.f32 %v2943, %v3324
        %v3425 = vadd.f32 %v2944, %v3329
        %v3426 = vadd.f32 %v2945, %v3332
        %v3427 = vadd.f32 %v2946, %v3337
        %v3428 = vadd.f32 %v2947, %v3340
        %v3429 = vadd.f32 %v2948, %v3345
        %v3430 = vadd.f32 %v2949, %v3348
        %v3431 = vadd.f32 %v2950, %v3353
        %v3432 = vadd.f32 %v2951, %v3356
        %v3433 = vadd.f32 %v2952, %v3361
        %v3434 = vadd.f32 %v2953, %v3364
        %v3435 = vadd.f32 %v2954, %v3369
        %v3436 = vadd.f32 %v2955, %v3372
        %v3437 = vadd.f32 %v2956, %v3377
        %v3438 = vadd.f32 %v2957, %v3380
        %v3439 = vadd.f32 %v2958, %v3385
        %v3440 = vadd.f32 %v2959, %v3388
        %v3441 = vadd.f32 %v2960, %v3393
        %v3442 = vadd.f32 %v2961, %v3396
        %v3443 = vadd.f32 %v2962, %v3401
        %v3444 = vadd.f32 %v2963, %v3404
        %v3445 = vadd.f32 %v2964, %v3409
        %v3446 = vadd.f32 %v2965, %v3412
        %s3447 = sadd.s32 %s251, 2
        %s3448 = smul.u32 %s3447, 3
        %s3449 = smul.addr %s3448, 4
        %s3450 = scalar_lea.vmem %s237, %s3449
        %v3451 = vld [vmem:[%s3450] sm:$0xf]
        %v3452 = vld [vmem:[%s3450 + $0x4] sm:$0xf]
        %v3453 = vld [vmem:[%s3450 + $0xc] sm:$0xf]
        %v3454 = vld [vmem:[%s3450 + $0x10] sm:$0xf]
        %v3455 = vld [vmem:[%s3450 + $0x18] sm:$0xf]
        %v3456 = vld [vmem:[%s3450 + $0x1c] sm:$0xf]
        %v3457 = vld [vmem:[%s3450 + $0x24] sm:$0xf]
        %v3458 = vld [vmem:[%s3450 + $0x28] sm:$0xf]
        %v3459 = vld [vmem:[%s3450 + $0x30] sm:$0xf]
        %v3460 = vld [vmem:[%s3450 + $0x34] sm:$0xf]
        %v3461 = vld [vmem:[%s3450 + $0x3c] sm:$0xf]
        %v3462 = vld [vmem:[%s3450 + $0x40] sm:$0xf]
        %v3463 = vld [vmem:[%s3450 + $0x48] sm:$0xf]
        %v3464 = vld [vmem:[%s3450 + $0x4c] sm:$0xf]
        %v3465 = vld [vmem:[%s3450 + $0x54] sm:$0xf]
        %v3466 = vld [vmem:[%s3450 + $0x58] sm:$0xf]
        %v3467 = vld [vmem:[%s3450 + $0x60] sm:$0xf]
        %v3468 = vld [vmem:[%s3450 + $0x64] sm:$0xf]
        %v3469 = vld [vmem:[%s3450 + $0x6c] sm:$0xf]
        %v3470 = vld [vmem:[%s3450 + $0x70] sm:$0xf]
        %v3471 = vld [vmem:[%s3450 + $0x78] sm:$0xf]
        %v3472 = vld [vmem:[%s3450 + $0x7c] sm:$0xf]
        %v3473 = vld [vmem:[%s3450 + $0x84] sm:$0xf]
        %v3474 = vld [vmem:[%s3450 + $0x88] sm:$0xf]
        %v3475 = vld [vmem:[%s3450 + $0x90] sm:$0xf]
        %v3476 = vld [vmem:[%s3450 + $0x94] sm:$0xf]
        %v3477 = vld [vmem:[%s3450 + $0x9c] sm:$0xf]
        %v3478 = vld [vmem:[%s3450 + $0xa0] sm:$0xf]
        %v3479 = vld [vmem:[%s3450 + $0xa8] sm:$0xf]
        %v3480 = vld [vmem:[%s3450 + $0xac] sm:$0xf]
        %v3481 = vld [vmem:[%s3450 + $0xb4] sm:$0xf]
        %v3482 = vld [vmem:[%s3450 + $0xb8] sm:$0xf]
        %v3483 = vld [vmem:[%s1 + $0x60] sm:$0xf]
        %v3484 = vld [vmem:[%s1 + $0x64] sm:$0xf]
        %v3485 = vld [vmem:[%s1 + $0x68] sm:$0xf]
        %v3486 = vld [vmem:[%s1 + $0x6c] sm:$0xf]
        %v3519 = vunpack.c.l.b16 %v3451
        %v3520 = vunpack.c.l.b16 %v3452
        %v3521 = vunpack.c.l.b16 %v3453
        %v3522 = vunpack.c.l.b16 %v3454
        %v3523 = vunpack.c.l.b16 %v3455
        %v3524 = vunpack.c.l.b16 %v3456
        %v3525 = vunpack.c.l.b16 %v3457
        %v3526 = vunpack.c.l.b16 %v3458
        %v3527 = vunpack.c.l.b16 %v3459
        %v3528 = vunpack.c.l.b16 %v3460
        %v3529 = vunpack.c.l.b16 %v3461
        %v3530 = vunpack.c.l.b16 %v3462
        %v3531 = vunpack.c.l.b16 %v3463
        %v3532 = vunpack.c.l.b16 %v3464
        %v3533 = vunpack.c.l.b16 %v3465
        %v3534 = vunpack.c.l.b16 %v3466
        %v3535 = vunpack.c.l.b16 %v3467
        %v3536 = vunpack.c.l.b16 %v3468
        %v3537 = vunpack.c.l.b16 %v3469
        %v3538 = vunpack.c.l.b16 %v3470
        %v3539 = vunpack.c.l.b16 %v3471
        %v3540 = vunpack.c.l.b16 %v3472
        %v3541 = vunpack.c.l.b16 %v3473
        %v3542 = vunpack.c.l.b16 %v3474
        %v3543 = vunpack.c.l.b16 %v3475
        %v3544 = vunpack.c.l.b16 %v3476
        %v3545 = vunpack.c.l.b16 %v3477
        %v3546 = vunpack.c.l.b16 %v3478
        %v3547 = vunpack.c.l.b16 %v3479
        %v3548 = vunpack.c.l.b16 %v3480
        %v3549 = vunpack.c.l.b16 %v3481
        %v3550 = vunpack.c.l.b16 %v3482
        %v3551 = vpack.c.b16 %v3520, %v3519
        %v3552 = vpack.c.b16 %v3522, %v3521
        %v3553 = vpack.c.b16 %v3524, %v3523
        %v3554 = vpack.c.b16 %v3526, %v3525
        %v3555 = vpack.c.b16 %v3528, %v3527
        %v3556 = vpack.c.b16 %v3530, %v3529
        %v3557 = vpack.c.b16 %v3532, %v3531
        %v3558 = vpack.c.b16 %v3534, %v3533
        %v3559 = vpack.c.b16 %v3536, %v3535
        %v3560 = vpack.c.b16 %v3538, %v3537
        %v3561 = vpack.c.b16 %v3540, %v3539
        %v3562 = vpack.c.b16 %v3542, %v3541
        %v3563 = vpack.c.b16 %v3544, %v3543
        %v3564 = vpack.c.b16 %v3546, %v3545
        %v3565 = vpack.c.b16 %v3548, %v3547
        %v3566 = vpack.c.b16 %v3550, %v3549
        %v3571 = vunpack.c.l.b16 %v3483
        %v3572 = vunpack.c.l.b16 %v3484
        %v3573 = vunpack.c.l.b16 %v3485
        %v3574 = vunpack.c.l.b16 %v3486
        %v3575 = vpack.c.b16 %v3572, %v3571
        %v3576 = vpack.c.b16 %v3574, %v3573
        %v3580 = vsel %vm390, %v3551, 0
        %v3583 = vsel %vm390, %v3552, 0
        %v3586 = vsel %vm390, %v3553, 0
        %v3589 = vsel %vm390, %v3554, 0
        %v3592 = vsel %vm390, %v3555, 0
        %v3595 = vsel %vm390, %v3556, 0
        %v3598 = vsel %vm390, %v3557, 0
        %v3601 = vsel %vm390, %v3558, 0
        %v3604 = vsel %vm390, %v3559, 0
        %v3607 = vsel %vm390, %v3560, 0
        %v3610 = vsel %vm390, %v3561, 0
        %v3613 = vsel %vm390, %v3562, 0
        %v3616 = vsel %vm390, %v3563, 0
        %v3619 = vsel %vm390, %v3564, 0
        %v3622 = vsel %vm390, %v3565, 0
        %v3625 = vsel %vm390, %v3566, 0
        %3627 = vmatprep.subr.bf16.mxu0 0
        %3628 = vmatpush1.bf16.msra.mxu0 %v3575
        %3629 = vmatprep.subr.bf16.mxu0 0
        %3630 = vmatpush1.bf16.msra.mxu0 %v3576
        %3631 = vmatprep.subr.bf16.mxu0 0
        %3632 = vmatpush1.bf16.msra.mxu0 0
        %3633 = vmatprep.subr.bf16.mxu0 0
        %3634 = vmatpush1.bf16.msra.mxu0 0
        %3635 = vmatprep.subr.bf16.mxu0 0
        %3636 = vmatpush1.bf16.msra.mxu0 0
        %3637 = vmatprep.subr.bf16.mxu0 0
        %3638 = vmatpush1.bf16.msra.mxu0 0
        %3639 = vmatprep.subr.bf16.mxu0 0
        %3640 = vmatpush1.bf16.msra.mxu0 0
        %3641 = vmatprep.subr.bf16.mxu0 0
        %3642 = vmatpush1.bf16.msra.mxu0 0
        %3643 = vmatprep.subr.bf16.mxu0 0
        %3644 = vmatpush1.bf16.msra.mxu0 0
        %3645 = vmatprep.subr.bf16.mxu0 0
        %3646 = vmatpush1.bf16.msra.mxu0 0
        %3647 = vmatprep.subr.bf16.mxu0 0
        %3648 = vmatpush1.bf16.msra.mxu0 0
        %3649 = vmatprep.subr.bf16.mxu0 0
        %3650 = vmatpush1.bf16.msra.mxu0 0
        %3651 = vmatprep.subr.bf16.mxu0 0
        %3652 = vmatpush1.bf16.msra.mxu0 0
        %3653 = vmatprep.subr.bf16.mxu0 0
        %3654 = vmatpush1.bf16.msra.mxu0 0
        %3655 = vmatprep.subr.bf16.mxu0 0
        %3656 = vmatpush1.bf16.msra.mxu0 0
        %3657 = vmatprep.subr.bf16.mxu0 0
        %3658 = vmatpush1.bf16.msra.mxu0 0
        %3659 = vmatprep.mubr.bf16.mxu0 0
        %3660 = vmatmul.mubr.bf16.gmra.mrb[0].mxu0 %v3580
        %v3661 = vpop.f32.mrb[0].mxu0
        %v3662 = vadd.f32 0.0, %v3661
        %v3663 = vpop.f32.mrb[0].mxu0
        %v3664 = vpop.f32.mrb[0].mxu0
        %v3665 = vadd.f32 0.0, %v3664
        %v3666 = vpop.f32.mrb[0].mxu0
        %3667 = vmatprep.mubr.bf16.mxu0 0
        %3668 = vmatmul.mubr.bf16.gmra.mrb[0].mxu0 %v3583
        %v3669 = vpop.f32.mrb[0].mxu0
        %v3670 = vadd.f32 0.0, %v3669
        %v3671 = vpop.f32.mrb[0].mxu0
        %v3672 = vpop.f32.mrb[0].mxu0
        %v3673 = vadd.f32 0.0, %v3672
        %v3674 = vpop.f32.mrb[0].mxu0
        %3675 = vmatprep.mubr.bf16.mxu0 0
        %3676 = vmatmul.mubr.bf16.gmra.mrb[0].mxu0 %v3586
        %v3677 = vpop.f32.mrb[0].mxu0
        %v3678 = vadd.f32 0.0, %v3677
        %v3679 = vpop.f32.mrb[0].mxu0
        %v3680 = vpop.f32.mrb[0].mxu0
        %v3681 = vadd.f32 0.0, %v3680
        %v3682 = vpop.f32.mrb[0].mxu0
        %3683 = vmatprep.mubr.bf16.mxu0 0
        %3684 = vmatmul.mubr.bf16.gmra.mrb[0].mxu0 %v3589
        %v3685 = vpop.f32.mrb[0].mxu0
        %v3686 = vadd.f32 0.0, %v3685
        %v3687 = vpop.f32.mrb[0].mxu0
        %v3688 = vpop.f32.mrb[0].mxu0
        %v3689 = vadd.f32 0.0, %v3688
        %v3690 = vpop.f32.mrb[0].mxu0
        %3691 = vmatprep.mubr.bf16.mxu0 0
        %3692 = vmatmul.mubr.bf16.gmra.mrb[0].mxu0 %v3592
        %v3693 = vpop.f32.mrb[0].mxu0
        %v3694 = vadd.f32 0.0, %v3693
        %v3695 = vpop.f32.mrb[0].mxu0
        %v3696 = vpop.f32.mrb[0].mxu0
        %v3697 = vadd.f32 0.0, %v3696
        %v3698 = vpop.f32.mrb[0].mxu0
        %3699 = vmatprep.mubr.bf16.mxu0 0
        %3700 = vmatmul.mubr.bf16.gmra.mrb[0].mxu0 %v3595
        %v3701 = vpop.f32.mrb[0].mxu0
        %v3702 = vadd.f32 0.0, %v3701
        %v3703 = vpop.f32.mrb[0].mxu0
        %v3704 = vpop.f32.mrb[0].mxu0
        %v3705 = vadd.f32 0.0, %v3704
        %v3706 = vpop.f32.mrb[0].mxu0
        %3707 = vmatprep.mubr.bf16.mxu0 0
        %3708 = vmatmul.mubr.bf16.gmra.mrb[0].mxu0 %v3598
        %v3709 = vpop.f32.mrb[0].mxu0
        %v3710 = vadd.f32 0.0, %v3709
        %v3711 = vpop.f32.mrb[0].mxu0
        %v3712 = vpop.f32.mrb[0].mxu0
        %v3713 = vadd.f32 0.0, %v3712
        %v3714 = vpop.f32.mrb[0].mxu0
        %3715 = vmatprep.mubr.bf16.mxu0 0
        %3716 = vmatmul.mubr.bf16.gmra.mrb[0].mxu0 %v3601
        %v3717 = vpop.f32.mrb[0].mxu0
        %v3718 = vadd.f32 0.0, %v3717
        %v3719 = vpop.f32.mrb[0].mxu0
        %v3720 = vpop.f32.mrb[0].mxu0
        %v3721 = vadd.f32 0.0, %v3720
        %v3722 = vpop.f32.mrb[0].mxu0
        %3723 = vmatprep.mubr.bf16.mxu0 0
        %3724 = vmatmul.mubr.bf16.gmra.mrb[0].mxu0 %v3604
        %v3725 = vpop.f32.mrb[0].mxu0
        %v3726 = vadd.f32 0.0, %v3725
        %v3727 = vpop.f32.mrb[0].mxu0
        %v3728 = vpop.f32.mrb[0].mxu0
        %v3729 = vadd.f32 0.0, %v3728
        %v3730 = vpop.f32.mrb[0].mxu0
        %3731 = vmatprep.mubr.bf16.mxu0 0
        %3732 = vmatmul.mubr.bf16.gmra.mrb[0].mxu0 %v3607
        %v3733 = vpop.f32.mrb[0].mxu0
        %v3734 = vadd.f32 0.0, %v3733
        %v3735 = vpop.f32.mrb[0].mxu0
        %v3736 = vpop.f32.mrb[0].mxu0
        %v3737 = vadd.f32 0.0, %v3736
        %v3738 = vpop.f32.mrb[0].mxu0
        %3739 = vmatprep.mubr.bf16.mxu0 0
        %3740 = vmatmul.mubr.bf16.gmra.mrb[0].mxu0 %v3610
        %v3741 = vpop.f32.mrb[0].mxu0
        %v3742 = vadd.f32 0.0, %v3741
        %v3743 = vpop.f32.mrb[0].mxu0
        %v3744 = vpop.f32.mrb[0].mxu0
        %v3745 = vadd.f32 0.0, %v3744
        %v3746 = vpop.f32.mrb[0].mxu0
        %3747 = vmatprep.mubr.bf16.mxu0 0
        %3748 = vmatmul.mubr.bf16.gmra.mrb[0].mxu0 %v3613
        %v3749 = vpop.f32.mrb[0].mxu0
        %v3750 = vadd.f32 0.0, %v3749
        %v3751 = vpop.f32.mrb[0].mxu0
        %v3752 = vpop.f32.mrb[0].mxu0
        %v3753 = vadd.f32 0.0, %v3752
        %v3754 = vpop.f32.mrb[0].mxu0
        %3755 = vmatprep.mubr.bf16.mxu0 0
        %3756 = vmatmul.mubr.bf16.gmra.mrb[0].mxu0 %v3616
        %v3757 = vpop.f32.mrb[0].mxu0
        %v3758 = vadd.f32 0.0, %v3757
        %v3759 = vpop.f32.mrb[0].mxu0
        %v3760 = vpop.f32.mrb[0].mxu0
        %v3761 = vadd.f32 0.0, %v3760
        %v3762 = vpop.f32.mrb[0].mxu0
        %3763 = vmatprep.mubr.bf16.mxu0 0
        %3764 = vmatmul.mubr.bf16.gmra.mrb[0].mxu0 %v3619
        %v3765 = vpop.f32.mrb[0].mxu0
        %v3766 = vadd.f32 0.0, %v3765
        %v3767 = vpop.f32.mrb[0].mxu0
        %v3768 = vpop.f32.mrb[0].mxu0
        %v3769 = vadd.f32 0.0, %v3768
        %v3770 = vpop.f32.mrb[0].mxu0
        %3771 = vmatprep.mubr.bf16.mxu0 0
        %3772 = vmatmul.mubr.bf16.gmra.mrb[0].mxu0 %v3622
        %v3773 = vpop.f32.mrb[0].mxu0
        %v3774 = vadd.f32 0.0, %v3773
        %v3775 = vpop.f32.mrb[0].mxu0
        %v3776 = vpop.f32.mrb[0].mxu0
        %v3777 = vadd.f32 0.0, %v3776
        %v3778 = vpop.f32.mrb[0].mxu0
        %3779 = vmatprep.mubr.bf16.mxu0 0
        %3780 = vmatmul.mubr.bf16.gmra.mrb[0].mxu0 %v3625
        %v3781 = vpop.f32.mrb[0].mxu0
        %v3782 = vadd.f32 0.0, %v3781
        %v3783 = vpop.f32.mrb[0].mxu0
        %v3784 = vpop.f32.mrb[0].mxu0
        %v3785 = vadd.f32 0.0, %v3784
        %v3786 = vpop.f32.mrb[0].mxu0
        %3787 = vdwg.mxu0
        %v3788 = vadd.f32 %v3415, %v3662
        %v3789 = vadd.f32 %v3416, %v3665
        %v3790 = vadd.f32 %v3417, %v3670
        %v3791 = vadd.f32 %v3418, %v3673
        %v3792 = vadd.f32 %v3419, %v3678
        %v3793 = vadd.f32 %v3420, %v3681
        %v3794 = vadd.f32 %v3421, %v3686
        %v3795 = vadd.f32 %v3422, %v3689
        %v3796 = vadd.f32 %v3423, %v3694
        %v3797 = vadd.f32 %v3424, %v3697
        %v3798 = vadd.f32 %v3425, %v3702
        %v3799 = vadd.f32 %v3426, %v3705
        %v3800 = vadd.f32 %v3427, %v3710
        %v3801 = vadd.f32 %v3428, %v3713
        %v3802 = vadd.f32 %v3429, %v3718
        %v3803 = vadd.f32 %v3430, %v3721
        %v3804 = vadd.f32 %v3431, %v3726
        %v3805 = vadd.f32 %v3432, %v3729
        %v3806 = vadd.f32 %v3433, %v3734
        %v3807 = vadd.f32 %v3434, %v3737
        %v3808 = vadd.f32 %v3435, %v3742
        %v3809 = vadd.f32 %v3436, %v3745
        %v3810 = vadd.f32 %v3437, %v3750
        %v3811 = vadd.f32 %v3438, %v3753
        %v3812 = vadd.f32 %v3439, %v3758
        %v3813 = vadd.f32 %v3440, %v3761
        %v3814 = vadd.f32 %v3441, %v3766
        %v3815 = vadd.f32 %v3442, %v3769
        %v3816 = vadd.f32 %v3443, %v3774
        %v3817 = vadd.f32 %v3444, %v3777
        %v3818 = vadd.f32 %v3445, %v3782
        %v3819 = vadd.f32 %v3446, %v3785
        %v3820 = vld [vmem:[%s3450] sm:$0xf]
        %v3821 = vld [vmem:[%s3450 + $0x4] sm:$0xf]
        %v3822 = vld [vmem:[%s3450 + $0x8] sm:$0x1]
        %v3823 = vld [vmem:[%s3450 + $0xc] sm:$0xf]
        %v3824 = vld [vmem:[%s3450 + $0x10] sm:$0xf]
        %v3825 = vld [vmem:[%s3450 + $0x14] sm:$0x1]
        %v3826 = vld [vmem:[%s3450 + $0x18] sm:$0xf]
        %v3827 = vld [vmem:[%s3450 + $0x1c] sm:$0xf]
        %v3828 = vld [vmem:[%s3450 + $0x20] sm:$0x1]
        %v3829 = vld [vmem:[%s3450 + $0x24] sm:$0xf]
        %v3830 = vld [vmem:[%s3450 + $0x28] sm:$0xf]
        %v3831 = vld [vmem:[%s3450 + $0x2c] sm:$0x1]
        %v3832 = vld [vmem:[%s3450 + $0x30] sm:$0xf]
        %v3833 = vld [vmem:[%s3450 + $0x34] sm:$0xf]
        %v3834 = vld [vmem:[%s3450 + $0x38] sm:$0x1]
        %v3835 = vld [vmem:[%s3450 + $0x3c] sm:$0xf]
        %v3836 = vld [vmem:[%s3450 + $0x40] sm:$0xf]
        %v3837 = vld [vmem:[%s3450 + $0x44] sm:$0x1]
        %v3838 = vld [vmem:[%s3450 + $0x48] sm:$0xf]
        %v3839 = vld [vmem:[%s3450 + $0x4c] sm:$0xf]
        %v3840 = vld [vmem:[%s3450 + $0x50] sm:$0x1]
        %v3841 = vld [vmem:[%s3450 + $0x54] sm:$0xf]
        %v3842 = vld [vmem:[%s3450 + $0x58] sm:$0xf]
        %v3843 = vld [vmem:[%s3450 + $0x5c] sm:$0x1]
        %v3844 = vld [vmem:[%s3450 + $0x60] sm:$0xf]
        %v3845 = vld [vmem:[%s3450 + $0x64] sm:$0xf]
        %v3846 = vld [vmem:[%s3450 + $0x68] sm:$0x1]
        %v3847 = vld [vmem:[%s3450 + $0x6c] sm:$0xf]
        %v3848 = vld [vmem:[%s3450 + $0x70] sm:$0xf]
        %v3849 = vld [vmem:[%s3450 + $0x74] sm:$0x1]
        %v3850 = vld [vmem:[%s3450 + $0x78] sm:$0xf]
        %v3851 = vld [vmem:[%s3450 + $0x7c] sm:$0xf]
        %v3852 = vld [vmem:[%s3450 + $0x80] sm:$0x1]
        %v3853 = vld [vmem:[%s3450 + $0x84] sm:$0xf]
        %v3854 = vld [vmem:[%s3450 + $0x88] sm:$0xf]
        %v3855 = vld [vmem:[%s3450 + $0x8c] sm:$0x1]
        %v3856 = vld [vmem:[%s3450 + $0x90] sm:$0xf]
        %v3857 = vld [vmem:[%s3450 + $0x94] sm:$0xf]
        %v3858 = vld [vmem:[%s3450 + $0x98] sm:$0x1]
        %v3859 = vld [vmem:[%s3450 + $0x9c] sm:$0xf]
        %v3860 = vld [vmem:[%s3450 + $0xa0] sm:$0xf]
        %v3861 = vld [vmem:[%s3450 + $0xa4] sm:$0x1]
        %v3862 = vld [vmem:[%s3450 + $0xa8] sm:$0xf]
        %v3863 = vld [vmem:[%s3450 + $0xac] sm:$0xf]
        %v3864 = vld [vmem:[%s3450 + $0xb0] sm:$0x1]
        %v3865 = vld [vmem:[%s3450 + $0xb4] sm:$0xf]
        %v3866 = vld [vmem:[%s3450 + $0xb8] sm:$0xf]
        %v3867 = vld [vmem:[%s3450 + $0xbc] sm:$0x1]
        %v3869 = vshrl.u32 %v3820, 16
        %v3871 = vrot.slane %v3869, 4
        %v3872 = vshll.u32 %v3820, 16
        %v3874 = vrot.slane %v3872, 5
        %v3875 = vor.u32 %v3871, %v3874
        %v3876 = vrot.slane %v3875, 4
        %v3878 = vshll.u32 %v3821, 16
        %v3880 = vrot.slane %v3878, 5
        %v3881 = vsel %vm682, %v3876, %v3880
        %v3882 = vshrl.u32 %v3821, 16
        %v3884 = vrot.slane %v3882, 4
        %v3885 = vor.u32 %v3884, %v3880
        %v3886 = vrot.slane %v3885, 4
        %v3888 = vshll.u32 %v3822, 16
        %v3890 = vrot.slane %v3888, 5
        %v3891 = vsel %vm682, %v3886, %v3890
        %v3893 = vshrl.u32 %v3823, 16
        %v3895 = vrot.slane %v3893, 4
        %v3896 = vshll.u32 %v3823, 16
        %v3898 = vrot.slane %v3896, 5
        %v3899 = vor.u32 %v3895, %v3898
        %v3900 = vrot.slane %v3899, 4
        %v3902 = vshll.u32 %v3824, 16
        %v3904 = vrot.slane %v3902, 5
        %v3905 = vsel %vm682, %v3900, %v3904
        %v3906 = vshrl.u32 %v3824, 16
        %v3908 = vrot.slane %v3906, 4
        %v3909 = vor.u32 %v3908, %v3904
        %v3910 = vrot.slane %v3909, 4
        %v3912 = vshll.u32 %v3825, 16
        %v3914 = vrot.slane %v3912, 5
        %v3915 = vsel %vm682, %v3910, %v3914
        %v3917 = vshrl.u32 %v3826, 16
        %v3919 = vrot.slane %v3917, 4
        %v3920 = vshll.u32 %v3826, 16
        %v3922 = vrot.slane %v3920, 5
        %v3923 = vor.u32 %v3919, %v3922
        %v3924 = vrot.slane %v3923, 4
        %v3926 = vshll.u32 %v3827, 16
        %v3928 = vrot.slane %v3926, 5
        %v3929 = vsel %vm682, %v3924, %v3928
        %v3930 = vshrl.u32 %v3827, 16
        %v3932 = vrot.slane %v3930, 4
        %v3933 = vor.u32 %v3932, %v3928
        %v3934 = vrot.slane %v3933, 4
        %v3936 = vshll.u32 %v3828, 16
        %v3938 = vrot.slane %v3936, 5
        %v3939 = vsel %vm682, %v3934, %v3938
        %v3941 = vshrl.u32 %v3829, 16
        %v3943 = vrot.slane %v3941, 4
        %v3944 = vshll.u32 %v3829, 16
        %v3946 = vrot.slane %v3944, 5
        %v3947 = vor.u32 %v3943, %v3946
        %v3948 = vrot.slane %v3947, 4
        %v3950 = vshll.u32 %v3830, 16
        %v3952 = vrot.slane %v3950, 5
        %v3953 = vsel %vm682, %v3948, %v3952
        %v3954 = vshrl.u32 %v3830, 16
        %v3956 = vrot.slane %v3954, 4
        %v3957 = vor.u32 %v3956, %v3952
        %v3958 = vrot.slane %v3957, 4
        %v3960 = vshll.u32 %v3831, 16
        %v3962 = vrot.slane %v3960, 5
        %v3963 = vsel %vm682, %v3958, %v3962
        %v3965 = vshrl.u32 %v3832, 16
        %v3967 = vrot.slane %v3965, 4
        %v3968 = vshll.u32 %v3832, 16
        %v3970 = vrot.slane %v3968, 5
        %v3971 = vor.u32 %v3967, %v3970
        %v3972 = vrot.slane %v3971, 4
        %v3974 = vshll.u32 %v3833, 16
        %v3976 = vrot.slane %v3974, 5
        %v3977 = vsel %vm682, %v3972, %v3976
        %v3978 = vshrl.u32 %v3833, 16
        %v3980 = vrot.slane %v3978, 4
        %v3981 = vor.u32 %v3980, %v3976
        %v3982 = vrot.slane %v3981, 4
        %v3984 = vshll.u32 %v3834, 16
        %v3986 = vrot.slane %v3984, 5
        %v3987 = vsel %vm682, %v3982, %v3986
        %v3989 = vshrl.u32 %v3835, 16
        %v3991 = vrot.slane %v3989, 4
        %v3992 = vshll.u32 %v3835, 16
        %v3994 = vrot.slane %v3992, 5
        %v3995 = vor.u32 %v3991, %v3994
        %v3996 = vrot.slane %v3995, 4
        %v3998 = vshll.u32 %v3836, 16
        %v4000 = vrot.slane %v3998, 5
        %v4001 = vsel %vm682, %v3996, %v4000
        %v4002 = vshrl.u32 %v3836, 16
        %v4004 = vrot.slane %v4002, 4
        %v4005 = vor.u32 %v4004, %v4000
        %v4006 = vrot.slane %v4005, 4
        %v4008 = vshll.u32 %v3837, 16
        %v4010 = vrot.slane %v4008, 5
        %v4011 = vsel %vm682, %v4006, %v4010
        %v4013 = vshrl.u32 %v3838, 16
        %v4015 = vrot.slane %v4013, 4
        %v4016 = vshll.u32 %v3838, 16
        %v4018 = vrot.slane %v4016, 5
        %v4019 = vor.u32 %v4015, %v4018
        %v4020 = vrot.slane %v4019, 4
        %v4022 = vshll.u32 %v3839, 16
        %v4024 = vrot.slane %v4022, 5
        %v4025 = vsel %vm682, %v4020, %v4024
        %v4026 = vshrl.u32 %v3839, 16
        %v4028 = vrot.slane %v4026, 4
        %v4029 = vor.u32 %v4028, %v4024
        %v4030 = vrot.slane %v4029, 4
        %v4032 = vshll.u32 %v3840, 16
        %v4034 = vrot.slane %v4032, 5
        %v4035 = vsel %vm682, %v4030, %v4034
        %v4037 = vshrl.u32 %v3841, 16
        %v4039 = vrot.slane %v4037, 4
        %v4040 = vshll.u32 %v3841, 16
        %v4042 = vrot.slane %v4040, 5
        %v4043 = vor.u32 %v4039, %v4042
        %v4044 = vrot.slane %v4043, 4
        %v4046 = vshll.u32 %v3842, 16
        %v4048 = vrot.slane %v4046, 5
        %v4049 = vsel %vm682, %v4044, %v4048
        %v4050 = vshrl.u32 %v3842, 16
        %v4052 = vrot.slane %v4050, 4
        %v4053 = vor.u32 %v4052, %v4048
        %v4054 = vrot.slane %v4053, 4
        %v4056 = vshll.u32 %v3843, 16
        %v4058 = vrot.slane %v4056, 5
        %v4059 = vsel %vm682, %v4054, %v4058
        %v4061 = vshrl.u32 %v3844, 16
        %v4063 = vrot.slane %v4061, 4
        %v4064 = vshll.u32 %v3844, 16
        %v4066 = vrot.slane %v4064, 5
        %v4067 = vor.u32 %v4063, %v4066
        %v4068 = vrot.slane %v4067, 4
        %v4070 = vshll.u32 %v3845, 16
        %v4072 = vrot.slane %v4070, 5
        %v4073 = vsel %vm682, %v4068, %v4072
        %v4074 = vshrl.u32 %v3845, 16
        %v4076 = vrot.slane %v4074, 4
        %v4077 = vor.u32 %v4076, %v4072
        %v4078 = vrot.slane %v4077, 4
        %v4080 = vshll.u32 %v3846, 16
        %v4082 = vrot.slane %v4080, 5
        %v4083 = vsel %vm682, %v4078, %v4082
        %v4085 = vshrl.u32 %v3847, 16
        %v4087 = vrot.slane %v4085, 4
        %v4088 = vshll.u32 %v3847, 16
        %v4090 = vrot.slane %v4088, 5
        %v4091 = vor.u32 %v4087, %v4090
        %v4092 = vrot.slane %v4091, 4
        %v4094 = vshll.u32 %v3848, 16
        %v4096 = vrot.slane %v4094, 5
        %v4097 = vsel %vm682, %v4092, %v4096
        %v4098 = vshrl.u32 %v3848, 16
        %v4100 = vrot.slane %v4098, 4
        %v4101 = vor.u32 %v4100, %v4096
        %v4102 = vrot.slane %v4101, 4
        %v4104 = vshll.u32 %v3849, 16
        %v4106 = vrot.slane %v4104, 5
        %v4107 = vsel %vm682, %v4102, %v4106
        %v4109 = vshrl.u32 %v3850, 16
        %v4111 = vrot.slane %v4109, 4
        %v4112 = vshll.u32 %v3850, 16
        %v4114 = vrot.slane %v4112, 5
        %v4115 = vor.u32 %v4111, %v4114
        %v4116 = vrot.slane %v4115, 4
        %v4118 = vshll.u32 %v3851, 16
        %v4120 = vrot.slane %v4118, 5
        %v4121 = vsel %vm682, %v4116, %v4120
        %v4122 = vshrl.u32 %v3851, 16
        %v4124 = vrot.slane %v4122, 4
        %v4125 = vor.u32 %v4124, %v4120
        %v4126 = vrot.slane %v4125, 4
        %v4128 = vshll.u32 %v3852, 16
        %v4130 = vrot.slane %v4128, 5
        %v4131 = vsel %vm682, %v4126, %v4130
        %v4133 = vshrl.u32 %v3853, 16
        %v4135 = vrot.slane %v4133, 4
        %v4136 = vshll.u32 %v3853, 16
        %v4138 = vrot.slane %v4136, 5
        %v4139 = vor.u32 %v4135, %v4138
        %v4140 = vrot.slane %v4139, 4
        %v4142 = vshll.u32 %v3854, 16
        %v4144 = vrot.slane %v4142, 5
        %v4145 = vsel %vm682, %v4140, %v4144
        %v4146 = vshrl.u32 %v3854, 16
        %v4148 = vrot.slane %v4146, 4
        %v4149 = vor.u32 %v4148, %v4144
        %v4150 = vrot.slane %v4149, 4
        %v4152 = vshll.u32 %v3855, 16
        %v4154 = vrot.slane %v4152, 5
        %v4155 = vsel %vm682, %v4150, %v4154
        %v4157 = vshrl.u32 %v3856, 16
        %v4159 = vrot.slane %v4157, 4
        %v4160 = vshll.u32 %v3856, 16
        %v4162 = vrot.slane %v4160, 5
        %v4163 = vor.u32 %v4159, %v4162
        %v4164 = vrot.slane %v4163, 4
        %v4166 = vshll.u32 %v3857, 16
        %v4168 = vrot.slane %v4166, 5
        %v4169 = vsel %vm682, %v4164, %v4168
        %v4170 = vshrl.u32 %v3857, 16
        %v4172 = vrot.slane %v4170, 4
        %v4173 = vor.u32 %v4172, %v4168
        %v4174 = vrot.slane %v4173, 4
        %v4176 = vshll.u32 %v3858, 16
        %v4178 = vrot.slane %v4176, 5
        %v4179 = vsel %vm682, %v4174, %v4178
        %v4181 = vshrl.u32 %v3859, 16
        %v4183 = vrot.slane %v4181, 4
        %v4184 = vshll.u32 %v3859, 16
        %v4186 = vrot.slane %v4184, 5
        %v4187 = vor.u32 %v4183, %v4186
        %v4188 = vrot.slane %v4187, 4
        %v4190 = vshll.u32 %v3860, 16
        %v4192 = vrot.slane %v4190, 5
        %v4193 = vsel %vm682, %v4188, %v4192
        %v4194 = vshrl.u32 %v3860, 16
        %v4196 = vrot.slane %v4194, 4
        %v4197 = vor.u32 %v4196, %v4192
        %v4198 = vrot.slane %v4197, 4
        %v4200 = vshll.u32 %v3861, 16
        %v4202 = vrot.slane %v4200, 5
        %v4203 = vsel %vm682, %v4198, %v4202
        %v4205 = vshrl.u32 %v3862, 16
        %v4207 = vrot.slane %v4205, 4
        %v4208 = vshll.u32 %v3862, 16
        %v4210 = vrot.slane %v4208, 5
        %v4211 = vor.u32 %v4207, %v4210
        %v4212 = vrot.slane %v4211, 4
        %v4214 = vshll.u32 %v3863, 16
        %v4216 = vrot.slane %v4214, 5
        %v4217 = vsel %vm682, %v4212, %v4216
        %v4218 = vshrl.u32 %v3863, 16
        %v4220 = vrot.slane %v4218, 4
        %v4221 = vor.u32 %v4220, %v4216
        %v4222 = vrot.slane %v4221, 4
        %v4224 = vshll.u32 %v3864, 16
        %v4226 = vrot.slane %v4224, 5
        %v4227 = vsel %vm682, %v4222, %v4226
        %v4229 = vshrl.u32 %v3865, 16
        %v4231 = vrot.slane %v4229, 4
        %v4232 = vshll.u32 %v3865, 16
        %v4234 = vrot.slane %v4232, 5
        %v4235 = vor.u32 %v4231, %v4234
        %v4236 = vrot.slane %v4235, 4
        %v4238 = vshll.u32 %v3866, 16
        %v4240 = vrot.slane %v4238, 5
        %v4241 = vsel %vm682, %v4236, %v4240
        %v4242 = vshrl.u32 %v3866, 16
        %v4244 = vrot.slane %v4242, 4
        %v4245 = vor.u32 %v4244, %v4240
        %v4246 = vrot.slane %v4245, 4
        %v4248 = vshll.u32 %v3867, 16
        %v4250 = vrot.slane %v4248, 5
        %v4251 = vsel %vm682, %v4246, %v4250
        %v4252 = vld [vmem:[%s1 + $0x70] sm:$0xf]
        %v4253 = vld [vmem:[%s1 + $0x74] sm:$0xf]
        %v4254 = vld [vmem:[%s1 + $0x78] sm:$0xf]
        %v4255 = vld [vmem:[%s1 + $0x7c] sm:$0xf]
        %v4256 = vunpack.c.l.b16 %v3881
        %v4257 = vunpack.c.l.b16 %v3891
        %v4258 = vunpack.c.l.b16 %v3905
        %v4259 = vunpack.c.l.b16 %v3915
        %v4260 = vunpack.c.l.b16 %v3929
        %v4261 = vunpack.c.l.b16 %v3939
        %v4262 = vunpack.c.l.b16 %v3953
        %v4263 = vunpack.c.l.b16 %v3963
        %v4264 = vunpack.c.l.b16 %v3977
        %v4265 = vunpack.c.l.b16 %v3987
        %v4266 = vunpack.c.l.b16 %v4001
        %v4267 = vunpack.c.l.b16 %v4011
        %v4268 = vunpack.c.l.b16 %v4025
        %v4269 = vunpack.c.l.b16 %v4035
        %v4270 = vunpack.c.l.b16 %v4049
        %v4271 = vunpack.c.l.b16 %v4059
        %v4272 = vunpack.c.l.b16 %v4073
        %v4273 = vunpack.c.l.b16 %v4083
        %v4274 = vunpack.c.l.b16 %v4097
        %v4275 = vunpack.c.l.b16 %v4107
        %v4276 = vunpack.c.l.b16 %v4121
        %v4277 = vunpack.c.l.b16 %v4131
        %v4278 = vunpack.c.l.b16 %v4145
        %v4279 = vunpack.c.l.b16 %v4155
        %v4280 = vunpack.c.l.b16 %v4169
        %v4281 = vunpack.c.l.b16 %v4179
        %v4282 = vunpack.c.l.b16 %v4193
        %v4283 = vunpack.c.l.b16 %v4203
        %v4284 = vunpack.c.l.b16 %v4217
        %v4285 = vunpack.c.l.b16 %v4227
        %v4286 = vunpack.c.l.b16 %v4241
        %v4287 = vunpack.c.l.b16 %v4251
        %v4288 = vpack.c.b16 %v4257, %v4256
        %v4289 = vpack.c.b16 %v4259, %v4258
        %v4290 = vpack.c.b16 %v4261, %v4260
        %v4291 = vpack.c.b16 %v4263, %v4262
        %v4292 = vpack.c.b16 %v4265, %v4264
        %v4293 = vpack.c.b16 %v4267, %v4266
        %v4294 = vpack.c.b16 %v4269, %v4268
        %v4295 = vpack.c.b16 %v4271, %v4270
        %v4296 = vpack.c.b16 %v4273, %v4272
        %v4297 = vpack.c.b16 %v4275, %v4274
        %v4298 = vpack.c.b16 %v4277, %v4276
        %v4299 = vpack.c.b16 %v4279, %v4278
        %v4300 = vpack.c.b16 %v4281, %v4280
        %v4301 = vpack.c.b16 %v4283, %v4282
        %v4302 = vpack.c.b16 %v4285, %v4284
        %v4303 = vpack.c.b16 %v4287, %v4286
        %v4308 = vunpack.c.l.b16 %v4252
        %v4309 = vunpack.c.l.b16 %v4253
        %v4310 = vunpack.c.l.b16 %v4254
        %v4311 = vunpack.c.l.b16 %v4255
        %v4312 = vpack.c.b16 %v4309, %v4308
        %v4313 = vpack.c.b16 %v4311, %v4310
        %v4317 = vsel %vm390, %v4288, 0
        %v4320 = vsel %vm390, %v4289, 0
        %v4323 = vsel %vm390, %v4290, 0
        %v4326 = vsel %vm390, %v4291, 0
        %v4329 = vsel %vm390, %v4292, 0
        %v4332 = vsel %vm390, %v4293, 0
        %v4335 = vsel %vm390, %v4294, 0
        %v4338 = vsel %vm390, %v4295, 0
        %v4341 = vsel %vm390, %v4296, 0
        %v4344 = vsel %vm390, %v4297, 0
        %v4347 = vsel %vm390, %v4298, 0
        %v4350 = vsel %vm390, %v4299, 0
        %v4353 = vsel %vm390, %v4300, 0
        %v4356 = vsel %vm390, %v4301, 0
        %v4359 = vsel %vm390, %v4302, 0
        %v4362 = vsel %vm390, %v4303, 0
        %4364 = vmatprep.subr.bf16.mxu0 0
        %4365 = vmatpush1.bf16.msra.mxu0 %v4312
        %4366 = vmatprep.subr.bf16.mxu0 0
        %4367 = vmatpush1.bf16.msra.mxu0 %v4313
        %4368 = vmatprep.subr.bf16.mxu0 0
        %4369 = vmatpush1.bf16.msra.mxu0 0
        %4370 = vmatprep.subr.bf16.mxu0 0
        %4371 = vmatpush1.bf16.msra.mxu0 0
        %4372 = vmatprep.subr.bf16.mxu0 0
        %4373 = vmatpush1.bf16.msra.mxu0 0
        %4374 = vmatprep.subr.bf16.mxu0 0
        %4375 = vmatpush1.bf16.msra.mxu0 0
        %4376 = vmatprep.subr.bf16.mxu0 0
        %4377 = vmatpush1.bf16.msra.mxu0 0
        %4378 = vmatprep.subr.bf16.mxu0 0
        %4379 = vmatpush1.bf16.msra.mxu0 0
        %4380 = vmatprep.subr.bf16.mxu0 0
        %4381 = vmatpush1.bf16.msra.mxu0 0
        %4382 = vmatprep.subr.bf16.mxu0 0
        %4383 = vmatpush1.bf16.msra.mxu0 0
        %4384 = vmatprep.subr.bf16.mxu0 0
        %4385 = vmatpush1.bf16.msra.mxu0 0
        %4386 = vmatprep.subr.bf16.mxu0 0
        %4387 = vmatpush1.bf16.msra.mxu0 0
        %4388 = vmatprep.subr.bf16.mxu0 0
        %4389 = vmatpush1.bf16.msra.mxu0 0
        %4390 = vmatprep.subr.bf16.mxu0 0
        %4391 = vmatpush1.bf16.msra.mxu0 0
        %4392 = vmatprep.subr.bf16.mxu0 0
        %4393 = vmatpush1.bf16.msra.mxu0 0
        %4394 = vmatprep.subr.bf16.mxu0 0
        %4395 = vmatpush1.bf16.msra.mxu0 0
        %4396 = vmatprep.mubr.bf16.mxu0 0
        %4397 = vmatmul.mubr.bf16.gmra.mrb[0].mxu0 %v4317
        %v4398 = vpop.f32.mrb[0].mxu0
        %v4399 = vadd.f32 0.0, %v4398
        %v4400 = vpop.f32.mrb[0].mxu0
        %v4401 = vpop.f32.mrb[0].mxu0
        %v4402 = vadd.f32 0.0, %v4401
        %v4403 = vpop.f32.mrb[0].mxu0
        %4404 = vmatprep.mubr.bf16.mxu0 0
        %4405 = vmatmul.mubr.bf16.gmra.mrb[0].mxu0 %v4320
        %v4406 = vpop.f32.mrb[0].mxu0
        %v4407 = vadd.f32 0.0, %v4406
        %v4408 = vpop.f32.mrb[0].mxu0
        %v4409 = vpop.f32.mrb[0].mxu0
        %v4410 = vadd.f32 0.0, %v4409
        %v4411 = vpop.f32.mrb[0].mxu0
        %4412 = vmatprep.mubr.bf16.mxu0 0
        %4413 = vmatmul.mubr.bf16.gmra.mrb[0].mxu0 %v4323
        %v4414 = vpop.f32.mrb[0].mxu0
        %v4415 = vadd.f32 0.0, %v4414
        %v4416 = vpop.f32.mrb[0].mxu0
        %v4417 = vpop.f32.mrb[0].mxu0
        %v4418 = vadd.f32 0.0, %v4417
        %v4419 = vpop.f32.mrb[0].mxu0
        %4420 = vmatprep.mubr.bf16.mxu0 0
        %4421 = vmatmul.mubr.bf16.gmra.mrb[0].mxu0 %v4326
        %v4422 = vpop.f32.mrb[0].mxu0
        %v4423 = vadd.f32 0.0, %v4422
        %v4424 = vpop.f32.mrb[0].mxu0
        %v4425 = vpop.f32.mrb[0].mxu0
        %v4426 = vadd.f32 0.0, %v4425
        %v4427 = vpop.f32.mrb[0].mxu0
        %4428 = vmatprep.mubr.bf16.mxu0 0
        %4429 = vmatmul.mubr.bf16.gmra.mrb[0].mxu0 %v4329
        %v4430 = vpop.f32.mrb[0].mxu0
        %v4431 = vadd.f32 0.0, %v4430
        %v4432 = vpop.f32.mrb[0].mxu0
        %v4433 = vpop.f32.mrb[0].mxu0
        %v4434 = vadd.f32 0.0, %v4433
        %v4435 = vpop.f32.mrb[0].mxu0
        %4436 = vmatprep.mubr.bf16.mxu0 0
        %4437 = vmatmul.mubr.bf16.gmra.mrb[0].mxu0 %v4332
        %v4438 = vpop.f32.mrb[0].mxu0
        %v4439 = vadd.f32 0.0, %v4438
        %v4440 = vpop.f32.mrb[0].mxu0
        %v4441 = vpop.f32.mrb[0].mxu0
        %v4442 = vadd.f32 0.0, %v4441
        %v4443 = vpop.f32.mrb[0].mxu0
        %4444 = vmatprep.mubr.bf16.mxu0 0
        %4445 = vmatmul.mubr.bf16.gmra.mrb[0].mxu0 %v4335
        %v4446 = vpop.f32.mrb[0].mxu0
        %v4447 = vadd.f32 0.0, %v4446
        %v4448 = vpop.f32.mrb[0].mxu0
        %v4449 = vpop.f32.mrb[0].mxu0
        %v4450 = vadd.f32 0.0, %v4449
        %v4451 = vpop.f32.mrb[0].mxu0
        %4452 = vmatprep.mubr.bf16.mxu0 0
        %4453 = vmatmul.mubr.bf16.gmra.mrb[0].mxu0 %v4338
        %v4454 = vpop.f32.mrb[0].mxu0
        %v4455 = vadd.f32 0.0, %v4454
        %v4456 = vpop.f32.mrb[0].mxu0
        %v4457 = vpop.f32.mrb[0].mxu0
        %v4458 = vadd.f32 0.0, %v4457
        %v4459 = vpop.f32.mrb[0].mxu0
        %4460 = vmatprep.mubr.bf16.mxu0 0
        %4461 = vmatmul.mubr.bf16.gmra.mrb[0].mxu0 %v4341
        %v4462 = vpop.f32.mrb[0].mxu0
        %v4463 = vadd.f32 0.0, %v4462
        %v4464 = vpop.f32.mrb[0].mxu0
        %v4465 = vpop.f32.mrb[0].mxu0
        %v4466 = vadd.f32 0.0, %v4465
        %v4467 = vpop.f32.mrb[0].mxu0
        %4468 = vmatprep.mubr.bf16.mxu0 0
        %4469 = vmatmul.mubr.bf16.gmra.mrb[0].mxu0 %v4344
        %v4470 = vpop.f32.mrb[0].mxu0
        %v4471 = vadd.f32 0.0, %v4470
        %v4472 = vpop.f32.mrb[0].mxu0
        %v4473 = vpop.f32.mrb[0].mxu0
        %v4474 = vadd.f32 0.0, %v4473
        %v4475 = vpop.f32.mrb[0].mxu0
        %4476 = vmatprep.mubr.bf16.mxu0 0
        %4477 = vmatmul.mubr.bf16.gmra.mrb[0].mxu0 %v4347
        %v4478 = vpop.f32.mrb[0].mxu0
        %v4479 = vadd.f32 0.0, %v4478
        %v4480 = vpop.f32.mrb[0].mxu0
        %v4481 = vpop.f32.mrb[0].mxu0
        %v4482 = vadd.f32 0.0, %v4481
        %v4483 = vpop.f32.mrb[0].mxu0
        %4484 = vmatprep.mubr.bf16.mxu0 0
        %4485 = vmatmul.mubr.bf16.gmra.mrb[0].mxu0 %v4350
        %v4486 = vpop.f32.mrb[0].mxu0
        %v4487 = vadd.f32 0.0, %v4486
        %v4488 = vpop.f32.mrb[0].mxu0
        %v4489 = vpop.f32.mrb[0].mxu0
        %v4490 = vadd.f32 0.0, %v4489
        %v4491 = vpop.f32.mrb[0].mxu0
        %4492 = vmatprep.mubr.bf16.mxu0 0
        %4493 = vmatmul.mubr.bf16.gmra.mrb[0].mxu0 %v4353
        %v4494 = vpop.f32.mrb[0].mxu0
        %v4495 = vadd.f32 0.0, %v4494
        %v4496 = vpop.f32.mrb[0].mxu0
        %v4497 = vpop.f32.mrb[0].mxu0
        %v4498 = vadd.f32 0.0, %v4497
        %v4499 = vpop.f32.mrb[0].mxu0
        %4500 = vmatprep.mubr.bf16.mxu0 0
        %4501 = vmatmul.mubr.bf16.gmra.mrb[0].mxu0 %v4356
        %v4502 = vpop.f32.mrb[0].mxu0
        %v4503 = vadd.f32 0.0, %v4502
        %v4504 = vpop.f32.mrb[0].mxu0
        %v4505 = vpop.f32.mrb[0].mxu0
        %v4506 = vadd.f32 0.0, %v4505
        %v4507 = vpop.f32.mrb[0].mxu0
        %4508 = vmatprep.mubr.bf16.mxu0 0
        %4509 = vmatmul.mubr.bf16.gmra.mrb[0].mxu0 %v4359
        %v4510 = vpop.f32.mrb[0].mxu0
        %v4511 = vadd.f32 0.0, %v4510
        %v4512 = vpop.f32.mrb[0].mxu0
        %v4513 = vpop.f32.mrb[0].mxu0
        %v4514 = vadd.f32 0.0, %v4513
        %v4515 = vpop.f32.mrb[0].mxu0
        %4516 = vmatprep.mubr.bf16.mxu0 0
        %4517 = vmatmul.mubr.bf16.gmra.mrb[0].mxu0 %v4362
        %v4518 = vpop.f32.mrb[0].mxu0
        %v4519 = vadd.f32 0.0, %v4518
        %v4520 = vpop.f32.mrb[0].mxu0
        %v4521 = vpop.f32.mrb[0].mxu0
        %v4522 = vadd.f32 0.0, %v4521
        %v4523 = vpop.f32.mrb[0].mxu0
        %4524 = vdwg.mxu0
        %v4525 = vadd.f32 %v3788, %v4399
        %v4526 = vadd.f32 %v3789, %v4402
        %v4527 = vadd.f32 %v3790, %v4407
        %v4528 = vadd.f32 %v3791, %v4410
        %v4529 = vadd.f32 %v3792, %v4415
        %v4530 = vadd.f32 %v3793, %v4418
        %v4531 = vadd.f32 %v3794, %v4423
        %v4532 = vadd.f32 %v3795, %v4426
        %v4533 = vadd.f32 %v3796, %v4431
        %v4534 = vadd.f32 %v3797, %v4434
        %v4535 = vadd.f32 %v3798, %v4439
        %v4536 = vadd.f32 %v3799, %v4442
        %v4537 = vadd.f32 %v3800, %v4447
        %v4538 = vadd.f32 %v3801, %v4450
        %v4539 = vadd.f32 %v3802, %v4455
        %v4540 = vadd.f32 %v3803, %v4458
        %v4541 = vadd.f32 %v3804, %v4463
        %v4542 = vadd.f32 %v3805, %v4466
        %v4543 = vadd.f32 %v3806, %v4471
        %v4544 = vadd.f32 %v3807, %v4474
        %v4545 = vadd.f32 %v3808, %v4479
        %v4546 = vadd.f32 %v3809, %v4482
        %v4547 = vadd.f32 %v3810, %v4487
        %v4548 = vadd.f32 %v3811, %v4490
        %v4549 = vadd.f32 %v3812, %v4495
        %v4550 = vadd.f32 %v3813, %v4498
        %v4551 = vadd.f32 %v3814, %v4503
        %v4552 = vadd.f32 %v3815, %v4506
        %v4553 = vadd.f32 %v3816, %v4511
        %v4554 = vadd.f32 %v3817, %v4514
        %v4555 = vadd.f32 %v3818, %v4519
        %v4556 = vadd.f32 %v3819, %v4522
        %v4557 = vld [vmem:[%s3450] sm:$0xe]
        %v4558 = vld [vmem:[%s3450 + $0xc] sm:$0xe]
        %v4559 = vld [vmem:[%s3450 + $0x18] sm:$0xe]
        %v4560 = vld [vmem:[%s3450 + $0x24] sm:$0xe]
        %v4561 = vld [vmem:[%s3450 + $0x30] sm:$0xe]
        %v4562 = vld [vmem:[%s3450 + $0x3c] sm:$0xe]
        %v4563 = vld [vmem:[%s3450 + $0x48] sm:$0xe]
        %v4564 = vld [vmem:[%s3450 + $0x54] sm:$0xe]
        %v4565 = vld [vmem:[%s3450 + $0x60] sm:$0xe]
        %v4566 = vld [vmem:[%s3450 + $0x6c] sm:$0xe]
        %v4567 = vld [vmem:[%s3450 + $0x78] sm:$0xe]
        %v4568 = vld [vmem:[%s3450 + $0x84] sm:$0xe]
        %v4569 = vld [vmem:[%s3450 + $0x90] sm:$0xe]
        %v4570 = vld [vmem:[%s3450 + $0x9c] sm:$0xe]
        %v4571 = vld [vmem:[%s3450 + $0xa8] sm:$0xe]
        %v4572 = vld [vmem:[%s3450 + $0xb4] sm:$0xe]
        %v4621 = vrot.slane %v4557, 5
        %v4622 = vrot.slane %v4621, 4
        %v4623 = vrot.slane %v3821, 5
        %v4624 = vsel %vm1438, %v4622, %v4623
        %v4625 = vrot.slane %v4623, 4
        %v4626 = vrot.slane %v3822, 5
        %v4627 = vsel %vm1438, %v4625, %v4626
        %v4628 = vrot.slane %v4558, 5
        %v4629 = vrot.slane %v4628, 4
        %v4630 = vrot.slane %v3824, 5
        %v4631 = vsel %vm1438, %v4629, %v4630
        %v4632 = vrot.slane %v4630, 4
        %v4633 = vrot.slane %v3825, 5
        %v4634 = vsel %vm1438, %v4632, %v4633
        %v4635 = vrot.slane %v4559, 5
        %v4636 = vrot.slane %v4635, 4
        %v4637 = vrot.slane %v3827, 5
        %v4638 = vsel %vm1438, %v4636, %v4637
        %v4639 = vrot.slane %v4637, 4
        %v4640 = vrot.slane %v3828, 5
        %v4641 = vsel %vm1438, %v4639, %v4640
        %v4642 = vrot.slane %v4560, 5
        %v4643 = vrot.slane %v4642, 4
        %v4644 = vrot.slane %v3830, 5
        %v4645 = vsel %vm1438, %v4643, %v4644
        %v4646 = vrot.slane %v4644, 4
        %v4647 = vrot.slane %v3831, 5
        %v4648 = vsel %vm1438, %v4646, %v4647
        %v4649 = vrot.slane %v4561, 5
        %v4650 = vrot.slane %v4649, 4
        %v4651 = vrot.slane %v3833, 5
        %v4652 = vsel %vm1438, %v4650, %v4651
        %v4653 = vrot.slane %v4651, 4
        %v4654 = vrot.slane %v3834, 5
        %v4655 = vsel %vm1438, %v4653, %v4654
        %v4656 = vrot.slane %v4562, 5
        %v4657 = vrot.slane %v4656, 4
        %v4658 = vrot.slane %v3836, 5
        %v4659 = vsel %vm1438, %v4657, %v4658
        %v4660 = vrot.slane %v4658, 4
        %v4661 = vrot.slane %v3837, 5
        %v4662 = vsel %vm1438, %v4660, %v4661
        %v4663 = vrot.slane %v4563, 5
        %v4664 = vrot.slane %v4663, 4
        %v4665 = vrot.slane %v3839, 5
        %v4666 = vsel %vm1438, %v4664, %v4665
        %v4667 = vrot.slane %v4665, 4
        %v4668 = vrot.slane %v3840, 5
        %v4669 = vsel %vm1438, %v4667, %v4668
        %v4670 = vrot.slane %v4564, 5
        %v4671 = vrot.slane %v4670, 4
        %v4672 = vrot.slane %v3842, 5
        %v4673 = vsel %vm1438, %v4671, %v4672
        %v4674 = vrot.slane %v4672, 4
        %v4675 = vrot.slane %v3843, 5
        %v4676 = vsel %vm1438, %v4674, %v4675
        %v4677 = vrot.slane %v4565, 5
        %v4678 = vrot.slane %v4677, 4
        %v4679 = vrot.slane %v3845, 5
        %v4680 = vsel %vm1438, %v4678, %v4679
        %v4681 = vrot.slane %v4679, 4
        %v4682 = vrot.slane %v3846, 5
        %v4683 = vsel %vm1438, %v4681, %v4682
        %v4684 = vrot.slane %v4566, 5
        %v4685 = vrot.slane %v4684, 4
        %v4686 = vrot.slane %v3848, 5
        %v4687 = vsel %vm1438, %v4685, %v4686
        %v4688 = vrot.slane %v4686, 4
        %v4689 = vrot.slane %v3849, 5
        %v4690 = vsel %vm1438, %v4688, %v4689
        %v4691 = vrot.slane %v4567, 5
        %v4692 = vrot.slane %v4691, 4
        %v4693 = vrot.slane %v3851, 5
        %v4694 = vsel %vm1438, %v4692, %v4693
        %v4695 = vrot.slane %v4693, 4
        %v4696 = vrot.slane %v3852, 5
        %v4697 = vsel %vm1438, %v4695, %v4696
        %v4698 = vrot.slane %v4568, 5
        %v4699 = vrot.slane %v4698, 4
        %v4700 = vrot.slane %v3854, 5
        %v4701 = vsel %vm1438, %v4699, %v4700
        %v4702 = vrot.slane %v4700, 4
        %v4703 = vrot.slane %v3855, 5
        %v4704 = vsel %vm1438, %v4702, %v4703
        %v4705 = vrot.slane %v4569, 5
        %v4706 = vrot.slane %v4705, 4
        %v4707 = vrot.slane %v3857, 5
        %v4708 = vsel %vm1438, %v4706, %v4707
        %v4709 = vrot.slane %v4707, 4
        %v4710 = vrot.slane %v3858, 5
        %v4711 = vsel %vm1438, %v4709, %v4710
        %v4712 = vrot.slane %v4570, 5
        %v4713 = vrot.slane %v4712, 4
        %v4714 = vrot.slane %v3860, 5
        %v4715 = vsel %vm1438, %v4713, %v4714
        %v4716 = vrot.slane %v4714, 4
        %v4717 = vrot.slane %v3861, 5
        %v4718 = vsel %vm1438, %v4716, %v4717
        %v4719 = vrot.slane %v4571, 5
        %v4720 = vrot.slane %v4719, 4
        %v4721 = vrot.slane %v3863, 5
        %v4722 = vsel %vm1438, %v4720, %v4721
        %v4723 = vrot.slane %v4721, 4
        %v4724 = vrot.slane %v3864, 5
        %v4725 = vsel %vm1438, %v4723, %v4724
        %v4726 = vrot.slane %v4572, 5
        %v4727 = vrot.slane %v4726, 4
        %v4728 = vrot.slane %v3866, 5
        %v4729 = vsel %vm1438, %v4727, %v4728
        %v4730 = vrot.slane %v4728, 4
        %v4731 = vrot.slane %v3867, 5
        %v4732 = vsel %vm1438, %v4730, %v4731
        %v4733 = vld [vmem:[%s1 + $0x80] sm:$0xf]
        %v4734 = vld [vmem:[%s1 + $0x84] sm:$0xf]
        %v4735 = vld [vmem:[%s1 + $0x88] sm:$0xf]
        %v4736 = vld [vmem:[%s1 + $0x8c] sm:$0xf]
        %v4737 = vunpack.c.l.b16 %v4624
        %v4738 = vunpack.c.l.b16 %v4627
        %v4739 = vunpack.c.l.b16 %v4631
        %v4740 = vunpack.c.l.b16 %v4634
        %v4741 = vunpack.c.l.b16 %v4638
        %v4742 = vunpack.c.l.b16 %v4641
        %v4743 = vunpack.c.l.b16 %v4645
        %v4744 = vunpack.c.l.b16 %v4648
        %v4745 = vunpack.c.l.b16 %v4652
        %v4746 = vunpack.c.l.b16 %v4655
        %v4747 = vunpack.c.l.b16 %v4659
        %v4748 = vunpack.c.l.b16 %v4662
        %v4749 = vunpack.c.l.b16 %v4666
        %v4750 = vunpack.c.l.b16 %v4669
        %v4751 = vunpack.c.l.b16 %v4673
        %v4752 = vunpack.c.l.b16 %v4676
        %v4753 = vunpack.c.l.b16 %v4680
        %v4754 = vunpack.c.l.b16 %v4683
        %v4755 = vunpack.c.l.b16 %v4687
        %v4756 = vunpack.c.l.b16 %v4690
        %v4757 = vunpack.c.l.b16 %v4694
        %v4758 = vunpack.c.l.b16 %v4697
        %v4759 = vunpack.c.l.b16 %v4701
        %v4760 = vunpack.c.l.b16 %v4704
        %v4761 = vunpack.c.l.b16 %v4708
        %v4762 = vunpack.c.l.b16 %v4711
        %v4763 = vunpack.c.l.b16 %v4715
        %v4764 = vunpack.c.l.b16 %v4718
        %v4765 = vunpack.c.l.b16 %v4722
        %v4766 = vunpack.c.l.b16 %v4725
        %v4767 = vunpack.c.l.b16 %v4729
        %v4768 = vunpack.c.l.b16 %v4732
        %v4769 = vpack.c.b16 %v4738, %v4737
        %v4770 = vpack.c.b16 %v4740, %v4739
        %v4771 = vpack.c.b16 %v4742, %v4741
        %v4772 = vpack.c.b16 %v4744, %v4743
        %v4773 = vpack.c.b16 %v4746, %v4745
        %v4774 = vpack.c.b16 %v4748, %v4747
        %v4775 = vpack.c.b16 %v4750, %v4749
        %v4776 = vpack.c.b16 %v4752, %v4751
        %v4777 = vpack.c.b16 %v4754, %v4753
        %v4778 = vpack.c.b16 %v4756, %v4755
        %v4779 = vpack.c.b16 %v4758, %v4757
        %v4780 = vpack.c.b16 %v4760, %v4759
        %v4781 = vpack.c.b16 %v4762, %v4761
        %v4782 = vpack.c.b16 %v4764, %v4763
        %v4783 = vpack.c.b16 %v4766, %v4765
        %v4784 = vpack.c.b16 %v4768, %v4767
        %v4789 = vunpack.c.l.b16 %v4733
        %v4790 = vunpack.c.l.b16 %v4734
        %v4791 = vunpack.c.l.b16 %v4735
        %v4792 = vunpack.c.l.b16 %v4736
        %v4793 = vpack.c.b16 %v4790, %v4789
        %v4794 = vpack.c.b16 %v4792, %v4791
        %v4798 = vsel %vm390, %v4769, 0
        %v4801 = vsel %vm390, %v4770, 0
        %v4804 = vsel %vm390, %v4771, 0
        %v4807 = vsel %vm390, %v4772, 0
        %v4810 = vsel %vm390, %v4773, 0
        %v4813 = vsel %vm390, %v4774, 0
        %v4816 = vsel %vm390, %v4775, 0
        %v4819 = vsel %vm390, %v4776, 0
        %v4822 = vsel %vm390, %v4777, 0
        %v4825 = vsel %vm390, %v4778, 0
        %v4828 = vsel %vm390, %v4779, 0
        %v4831 = vsel %vm390, %v4780, 0
        %v4834 = vsel %vm390, %v4781, 0
        %v4837 = vsel %vm390, %v4782, 0
        %v4840 = vsel %vm390, %v4783, 0
        %v4843 = vsel %vm390, %v4784, 0
        %4845 = vmatprep.subr.bf16.mxu0 0
        %4846 = vmatpush1.bf16.msra.mxu0 %v4793
        %4847 = vmatprep.subr.bf16.mxu0 0
        %4848 = vmatpush1.bf16.msra.mxu0 %v4794
        %4849 = vmatprep.subr.bf16.mxu0 0
        %4850 = vmatpush1.bf16.msra.mxu0 0
        %4851 = vmatprep.subr.bf16.mxu0 0
        %4852 = vmatpush1.bf16.msra.mxu0 0
        %4853 = vmatprep.subr.bf16.mxu0 0
        %4854 = vmatpush1.bf16.msra.mxu0 0
        %4855 = vmatprep.subr.bf16.mxu0 0
        %4856 = vmatpush1.bf16.msra.mxu0 0
        %4857 = vmatprep.subr.bf16.mxu0 0
        %4858 = vmatpush1.bf16.msra.mxu0 0
        %4859 = vmatprep.subr.bf16.mxu0 0
        %4860 = vmatpush1.bf16.msra.mxu0 0
        %4861 = vmatprep.subr.bf16.mxu0 0
        %4862 = vmatpush1.bf16.msra.mxu0 0
        %4863 = vmatprep.subr.bf16.mxu0 0
        %4864 = vmatpush1.bf16.msra.mxu0 0
        %4865 = vmatprep.subr.bf16.mxu0 0
        %4866 = vmatpush1.bf16.msra.mxu0 0
        %4867 = vmatprep.subr.bf16.mxu0 0
        %4868 = vmatpush1.bf16.msra.mxu0 0
        %4869 = vmatprep.subr.bf16.mxu0 0
        %4870 = vmatpush1.bf16.msra.mxu0 0
        %4871 = vmatprep.subr.bf16.mxu0 0
        %4872 = vmatpush1.bf16.msra.mxu0 0
        %4873 = vmatprep.subr.bf16.mxu0 0
        %4874 = vmatpush1.bf16.msra.mxu0 0
        %4875 = vmatprep.subr.bf16.mxu0 0
        %4876 = vmatpush1.bf16.msra.mxu0 0
        %4877 = vmatprep.mubr.bf16.mxu0 0
        %4878 = vmatmul.mubr.bf16.gmra.mrb[0].mxu0 %v4798
        %v4879 = vpop.f32.mrb[0].mxu0
        %v4880 = vadd.f32 0.0, %v4879
        %v4881 = vpop.f32.mrb[0].mxu0
        %v4882 = vpop.f32.mrb[0].mxu0
        %v4883 = vadd.f32 0.0, %v4882
        %v4884 = vpop.f32.mrb[0].mxu0
        %4885 = vmatprep.mubr.bf16.mxu0 0
        %4886 = vmatmul.mubr.bf16.gmra.mrb[0].mxu0 %v4801
        %v4887 = vpop.f32.mrb[0].mxu0
        %v4888 = vadd.f32 0.0, %v4887
        %v4889 = vpop.f32.mrb[0].mxu0
        %v4890 = vpop.f32.mrb[0].mxu0
        %v4891 = vadd.f32 0.0, %v4890
        %v4892 = vpop.f32.mrb[0].mxu0
        %4893 = vmatprep.mubr.bf16.mxu0 0
        %4894 = vmatmul.mubr.bf16.gmra.mrb[0].mxu0 %v4804
        %v4895 = vpop.f32.mrb[0].mxu0
        %v4896 = vadd.f32 0.0, %v4895
        %v4897 = vpop.f32.mrb[0].mxu0
        %v4898 = vpop.f32.mrb[0].mxu0
        %v4899 = vadd.f32 0.0, %v4898
        %v4900 = vpop.f32.mrb[0].mxu0
        %4901 = vmatprep.mubr.bf16.mxu0 0
        %4902 = vmatmul.mubr.bf16.gmra.mrb[0].mxu0 %v4807
        %v4903 = vpop.f32.mrb[0].mxu0
        %v4904 = vadd.f32 0.0, %v4903
        %v4905 = vpop.f32.mrb[0].mxu0
        %v4906 = vpop.f32.mrb[0].mxu0
        %v4907 = vadd.f32 0.0, %v4906
        %v4908 = vpop.f32.mrb[0].mxu0
        %4909 = vmatprep.mubr.bf16.mxu0 0
        %4910 = vmatmul.mubr.bf16.gmra.mrb[0].mxu0 %v4810
        %v4911 = vpop.f32.mrb[0].mxu0
        %v4912 = vadd.f32 0.0, %v4911
        %v4913 = vpop.f32.mrb[0].mxu0
        %v4914 = vpop.f32.mrb[0].mxu0
        %v4915 = vadd.f32 0.0, %v4914
        %v4916 = vpop.f32.mrb[0].mxu0
        %4917 = vmatprep.mubr.bf16.mxu0 0
        %4918 = vmatmul.mubr.bf16.gmra.mrb[0].mxu0 %v4813
        %v4919 = vpop.f32.mrb[0].mxu0
        %v4920 = vadd.f32 0.0, %v4919
        %v4921 = vpop.f32.mrb[0].mxu0
        %v4922 = vpop.f32.mrb[0].mxu0
        %v4923 = vadd.f32 0.0, %v4922
        %v4924 = vpop.f32.mrb[0].mxu0
        %4925 = vmatprep.mubr.bf16.mxu0 0
        %4926 = vmatmul.mubr.bf16.gmra.mrb[0].mxu0 %v4816
        %v4927 = vpop.f32.mrb[0].mxu0
        %v4928 = vadd.f32 0.0, %v4927
        %v4929 = vpop.f32.mrb[0].mxu0
        %v4930 = vpop.f32.mrb[0].mxu0
        %v4931 = vadd.f32 0.0, %v4930
        %v4932 = vpop.f32.mrb[0].mxu0
        %4933 = vmatprep.mubr.bf16.mxu0 0
        %4934 = vmatmul.mubr.bf16.gmra.mrb[0].mxu0 %v4819
        %v4935 = vpop.f32.mrb[0].mxu0
        %v4936 = vadd.f32 0.0, %v4935
        %v4937 = vpop.f32.mrb[0].mxu0
        %v4938 = vpop.f32.mrb[0].mxu0
        %v4939 = vadd.f32 0.0, %v4938
        %v4940 = vpop.f32.mrb[0].mxu0
        %4941 = vmatprep.mubr.bf16.mxu0 0
        %4942 = vmatmul.mubr.bf16.gmra.mrb[0].mxu0 %v4822
        %v4943 = vpop.f32.mrb[0].mxu0
        %v4944 = vadd.f32 0.0, %v4943
        %v4945 = vpop.f32.mrb[0].mxu0
        %v4946 = vpop.f32.mrb[0].mxu0
        %v4947 = vadd.f32 0.0, %v4946
        %v4948 = vpop.f32.mrb[0].mxu0
        %4949 = vmatprep.mubr.bf16.mxu0 0
        %4950 = vmatmul.mubr.bf16.gmra.mrb[0].mxu0 %v4825
        %v4951 = vpop.f32.mrb[0].mxu0
        %v4952 = vadd.f32 0.0, %v4951
        %v4953 = vpop.f32.mrb[0].mxu0
        %v4954 = vpop.f32.mrb[0].mxu0
        %v4955 = vadd.f32 0.0, %v4954
        %v4956 = vpop.f32.mrb[0].mxu0
        %4957 = vmatprep.mubr.bf16.mxu0 0
        %4958 = vmatmul.mubr.bf16.gmra.mrb[0].mxu0 %v4828
        %v4959 = vpop.f32.mrb[0].mxu0
        %v4960 = vadd.f32 0.0, %v4959
        %v4961 = vpop.f32.mrb[0].mxu0
        %v4962 = vpop.f32.mrb[0].mxu0
        %v4963 = vadd.f32 0.0, %v4962
        %v4964 = vpop.f32.mrb[0].mxu0
        %4965 = vmatprep.mubr.bf16.mxu0 0
        %4966 = vmatmul.mubr.bf16.gmra.mrb[0].mxu0 %v4831
        %v4967 = vpop.f32.mrb[0].mxu0
        %v4968 = vadd.f32 0.0, %v4967
        %v4969 = vpop.f32.mrb[0].mxu0
        %v4970 = vpop.f32.mrb[0].mxu0
        %v4971 = vadd.f32 0.0, %v4970
        %v4972 = vpop.f32.mrb[0].mxu0
        %4973 = vmatprep.mubr.bf16.mxu0 0
        %4974 = vmatmul.mubr.bf16.gmra.mrb[0].mxu0 %v4834
        %v4975 = vpop.f32.mrb[0].mxu0
        %v4976 = vadd.f32 0.0, %v4975
        %v4977 = vpop.f32.mrb[0].mxu0
        %v4978 = vpop.f32.mrb[0].mxu0
        %v4979 = vadd.f32 0.0, %v4978
        %v4980 = vpop.f32.mrb[0].mxu0
        %4981 = vmatprep.mubr.bf16.mxu0 0
        %4982 = vmatmul.mubr.bf16.gmra.mrb[0].mxu0 %v4837
        %v4983 = vpop.f32.mrb[0].mxu0
        %v4984 = vadd.f32 0.0, %v4983
        %v4985 = vpop.f32.mrb[0].mxu0
        %v4986 = vpop.f32.mrb[0].mxu0
        %v4987 = vadd.f32 0.0, %v4986
        %v4988 = vpop.f32.mrb[0].mxu0
        %4989 = vmatprep.mubr.bf16.mxu0 0
        %4990 = vmatmul.mubr.bf16.gmra.mrb[0].mxu0 %v4840
        %v4991 = vpop.f32.mrb[0].mxu0
        %v4992 = vadd.f32 0.0, %v4991
        %v4993 = vpop.f32.mrb[0].mxu0
        %v4994 = vpop.f32.mrb[0].mxu0
        %v4995 = vadd.f32 0.0, %v4994
        %v4996 = vpop.f32.mrb[0].mxu0
        %4997 = vmatprep.mubr.bf16.mxu0 0
        %4998 = vmatmul.mubr.bf16.gmra.mrb[0].mxu0 %v4843
        %v4999 = vpop.f32.mrb[0].mxu0
        %v5000 = vadd.f32 0.0, %v4999
        %v5001 = vpop.f32.mrb[0].mxu0
        %v5002 = vpop.f32.mrb[0].mxu0
        %v5003 = vadd.f32 0.0, %v5002
        %v5004 = vpop.f32.mrb[0].mxu0
        %5005 = vdwg.mxu0
        %v5006 = vadd.f32 %v4525, %v4880
        %v5007 = vadd.f32 %v4526, %v4883
        %v5008 = vadd.f32 %v4527, %v4888
        %v5009 = vadd.f32 %v4528, %v4891
        %v5010 = vadd.f32 %v4529, %v4896
        %v5011 = vadd.f32 %v4530, %v4899
        %v5012 = vadd.f32 %v4531, %v4904
        %v5013 = vadd.f32 %v4532, %v4907
        %v5014 = vadd.f32 %v4533, %v4912
        %v5015 = vadd.f32 %v4534, %v4915
        %v5016 = vadd.f32 %v4535, %v4920
        %v5017 = vadd.f32 %v4536, %v4923
        %v5018 = vadd.f32 %v4537, %v4928
        %v5019 = vadd.f32 %v4538, %v4931
        %v5020 = vadd.f32 %v4539, %v4936
        %v5021 = vadd.f32 %v4540, %v4939
        %v5022 = vadd.f32 %v4541, %v4944
        %v5023 = vadd.f32 %v4542, %v4947
        %v5024 = vadd.f32 %v4543, %v4952
        %v5025 = vadd.f32 %v4544, %v4955
        %v5026 = vadd.f32 %v4545, %v4960
        %v5027 = vadd.f32 %v4546, %v4963
        %v5028 = vadd.f32 %v4547, %v4968
        %v5029 = vadd.f32 %v4548, %v4971
        %v5030 = vadd.f32 %v4549, %v4976
        %v5031 = vadd.f32 %v4550, %v4979
        %v5032 = vadd.f32 %v4551, %v4984
        %v5033 = vadd.f32 %v4552, %v4987
        %v5034 = vadd.f32 %v4553, %v4992
        %v5035 = vadd.f32 %v4554, %v4995
        %v5036 = vadd.f32 %v4555, %v5000
        %v5037 = vadd.f32 %v4556, %v5003
        %v5038 = vmax.f32 %v5006, 0.0
        %v5039 = vmax.f32 %v5007, 0.0
        %v5040 = vmax.f32 %v5008, 0.0
        %v5041 = vmax.f32 %v5009, 0.0
        %v5042 = vmax.f32 %v5010, 0.0
        %v5043 = vmax.f32 %v5011, 0.0
        %v5044 = vmax.f32 %v5012, 0.0
        %v5045 = vmax.f32 %v5013, 0.0
        %v5046 = vmax.f32 %v5014, 0.0
        %v5047 = vmax.f32 %v5015, 0.0
        %v5048 = vmax.f32 %v5016, 0.0
        %v5049 = vmax.f32 %v5017, 0.0
        %v5050 = vmax.f32 %v5018, 0.0
        %v5051 = vmax.f32 %v5019, 0.0
        %v5052 = vmax.f32 %v5020, 0.0
        %v5053 = vmax.f32 %v5021, 0.0
        %v5054 = vmax.f32 %v5022, 0.0
        %v5055 = vmax.f32 %v5023, 0.0
        %v5056 = vmax.f32 %v5024, 0.0
        %v5057 = vmax.f32 %v5025, 0.0
        %v5058 = vmax.f32 %v5026, 0.0
        %v5059 = vmax.f32 %v5027, 0.0
        %v5060 = vmax.f32 %v5028, 0.0
        %v5061 = vmax.f32 %v5029, 0.0
        %v5062 = vmax.f32 %v5030, 0.0
        %v5063 = vmax.f32 %v5031, 0.0
        %v5064 = vmax.f32 %v5032, 0.0
        %v5065 = vmax.f32 %v5033, 0.0
        %v5066 = vmax.f32 %v5034, 0.0
        %v5067 = vmax.f32 %v5035, 0.0
        %v5068 = vmax.f32 %v5036, 0.0
        %v5069 = vmax.f32 %v5037, 0.0
        %v5070 = vld [vmem:[%s247] sm:$0xff]
        %v5071 = vld [vmem:[%s247 + $0x8] sm:$0xff]
        %v5072 = vld [vmem:[%s247 + $0x10] sm:$0xff]
        %v5073 = vld [vmem:[%s247 + $0x18] sm:$0xff]
        %v5074 = vld [vmem:[%s247 + $0x20] sm:$0xff]
        %v5075 = vld [vmem:[%s247 + $0x28] sm:$0xff]
        %v5076 = vld [vmem:[%s247 + $0x30] sm:$0xff]
        %v5077 = vld [vmem:[%s247 + $0x38] sm:$0xff]
        %v5078 = vld [vmem:[%s247 + $0x40] sm:$0xff]
        %v5079 = vld [vmem:[%s247 + $0x48] sm:$0xff]
        %v5080 = vld [vmem:[%s247 + $0x50] sm:$0xff]
        %v5081 = vld [vmem:[%s247 + $0x58] sm:$0xff]
        %v5082 = vld [vmem:[%s247 + $0x60] sm:$0xff]
        %v5083 = vld [vmem:[%s247 + $0x68] sm:$0xff]
        %v5084 = vld [vmem:[%s247 + $0x70] sm:$0xff]
        %v5085 = vld [vmem:[%s247 + $0x78] sm:$0xff]
        %v5086 = vadd.f32 %v5038, %v5070
        %v5087 = vadd.f32 %v5039, %v5071
        %v5088 = vadd.f32 %v5040, %v5070
        %v5089 = vadd.f32 %v5041, %v5071
        %v5090 = vadd.f32 %v5042, %v5072
        %v5091 = vadd.f32 %v5043, %v5073
        %v5092 = vadd.f32 %v5044, %v5072
        %v5093 = vadd.f32 %v5045, %v5073
        %v5094 = vadd.f32 %v5046, %v5074
        %v5095 = vadd.f32 %v5047, %v5075
        %v5096 = vadd.f32 %v5048, %v5074
        %v5097 = vadd.f32 %v5049, %v5075
        %v5098 = vadd.f32 %v5050, %v5076
        %v5099 = vadd.f32 %v5051, %v5077
        %v5100 = vadd.f32 %v5052, %v5076
        %v5101 = vadd.f32 %v5053, %v5077
        %v5102 = vadd.f32 %v5054, %v5078
        %v5103 = vadd.f32 %v5055, %v5079
        %v5104 = vadd.f32 %v5056, %v5078
        %v5105 = vadd.f32 %v5057, %v5079
        %v5106 = vadd.f32 %v5058, %v5080
        %v5107 = vadd.f32 %v5059, %v5081
        %v5108 = vadd.f32 %v5060, %v5080
        %v5109 = vadd.f32 %v5061, %v5081
        %v5110 = vadd.f32 %v5062, %v5082
        %v5111 = vadd.f32 %v5063, %v5083
        %v5112 = vadd.f32 %v5064, %v5082
        %v5113 = vadd.f32 %v5065, %v5083
        %v5114 = vadd.f32 %v5066, %v5084
        %v5115 = vadd.f32 %v5067, %v5085
        %v5116 = vadd.f32 %v5068, %v5084
        %v5117 = vadd.f32 %v5069, %v5085
        %5118 = vst.msk [vmem:[%s232] sm:$0xff] %vm390, %v5086
        %5119 = vst.msk [vmem:[%s232 + $0x8] sm:$0xff] %vm390, %v5087
        %5120 = vst.msk [vmem:[%s232 + $0x10] sm:$0xff] %vm390, %v5088
        %5121 = vst.msk [vmem:[%s232 + $0x18] sm:$0xff] %vm390, %v5089
        %5122 = vst.msk [vmem:[%s232 + $0x20] sm:$0xff] %vm390, %v5090
        %5123 = vst.msk [vmem:[%s232 + $0x28] sm:$0xff] %vm390, %v5091
        %5124 = vst.msk [vmem:[%s232 + $0x30] sm:$0xff] %vm390, %v5092
        %5125 = vst.msk [vmem:[%s232 + $0x38] sm:$0xff] %vm390, %v5093
        %5126 = vst.msk [vmem:[%s232 + $0x40] sm:$0xff] %vm390, %v5094
        %5127 = vst.msk [vmem:[%s232 + $0x48] sm:$0xff] %vm390, %v5095
        %5128 = vst.msk [vmem:[%s232 + $0x50] sm:$0xff] %vm390, %v5096
        %5129 = vst.msk [vmem:[%s232 + $0x58] sm:$0xff] %vm390, %v5097
        %5130 = vst.msk [vmem:[%s232 + $0x60] sm:$0xff] %vm390, %v5098
        %5131 = vst.msk [vmem:[%s232 + $0x68] sm:$0xff] %vm390, %v5099
        %5132 = vst.msk [vmem:[%s232 + $0x70] sm:$0xff] %vm390, %v5100
        %5133 = vst.msk [vmem:[%s232 + $0x78] sm:$0xff] %vm390, %v5101
        %5134 = vst.msk [vmem:[%s232 + $0x80] sm:$0xff] %vm390, %v5102
        %5135 = vst.msk [vmem:[%s232 + $0x88] sm:$0xff] %vm390, %v5103
        %5136 = vst.msk [vmem:[%s232 + $0x90] sm:$0xff] %vm390, %v5104
        %5137 = vst.msk [vmem:[%s232 + $0x98] sm:$0xff] %vm390, %v5105
        %5138 = vst.msk [vmem:[%s232 + $0xa0] sm:$0xff] %vm390, %v5106
        %5139 = vst.msk [vmem:[%s232 + $0xa8] sm:$0xff] %vm390, %v5107
        %5140 = vst.msk [vmem:[%s232 + $0xb0] sm:$0xff] %vm390, %v5108
        %5141 = vst.msk [vmem:[%s232 + $0xb8] sm:$0xff] %vm390, %v5109
        %5142 = vst.msk [vmem:[%s232 + $0xc0] sm:$0xff] %vm390, %v5110
        %5143 = vst.msk [vmem:[%s232 + $0xc8] sm:$0xff] %vm390, %v5111
        %5144 = vst.msk [vmem:[%s232 + $0xd0] sm:$0xff] %vm390, %v5112
        %5145 = vst.msk [vmem:[%s232 + $0xd8] sm:$0xff] %vm390, %v5113
        %5146 = vst.msk [vmem:[%s232 + $0xe0] sm:$0xff] %vm390, %v5114
        %5147 = vst.msk [vmem:[%s232 + $0xe8] sm:$0xff] %vm390, %v5115
        %5148 = vst.msk [vmem:[%s232 + $0xf0] sm:$0xff] %vm390, %v5116
        %5149 = vst.msk [vmem:[%s232 + $0xf8] sm:$0xff] %vm390, %v5117
        %s5150 = sand.u32 %s136, 1
        %s5151 = scalar_lea.sflag [#allocation3], %s5150
        %s5152 = sand.u32 %s136, 1
        %s5153 = smul.addr %s5152, 256
        %s5154 = scalar_lea.vmem [#allocation2], %s5153
        // Predicated region
        $region37: #{two_d_branch_forward.5} parent=35 // pred_check
          %p5155 = pneg %p146
        $region38: #{two_d_branch_forward.5} parent=35 // pred_check_branch
          %5157 = sbr.rel (%p5155) target = $region40
        $region39: #{two_d_branch_forward.5} parent=35 // pred_region
          %s5158 = smul.u32 16, %s23
          %s5160 = ssub.s32 4096, 4096
          %5161 = vsyncadd %s5151, %s5160
          %s5162 = smul.addr %s5158, 2
          %s5163 = smul.addr %s22, 32
          %s5164 = sadd.s32 %s5162, %s5163
          %s5165 = smul.addr %s5164, 128
          %s5166 = scalar_lea.hbm %s4, %s5165
          %s5167 = sshll.u32 %s5154, 4
          %s5168 = int_to_ptr.vmem [resolvable:$true] %s5167
          %5173 = dma.vmem_to_hbm [thread:$0]  %s5168, 4096, %s5166, %s5151, 128, 128, 8
        $region40: #{two_d_branch_forward.5} parent=35 // pred_fallthru
          _
      $region36: #{two_d_branch_forward.5} parent=5 // pred_fallthru
        _
      %p5174 = scmp.le.s32.totalorder 2, %s13
      // Predicated region
      $region41: #{two_d_branch_forward.5} parent=5 // pred_check
        %p5175 = pneg %p5174
      $region42: #{two_d_branch_forward.5} parent=5 // pred_check_branch
        %5177 = sbr.rel (%p5175) target = $region44
      $region43: #{two_d_branch_forward.5} parent=5 // pred_region
        %s5178 = ssub.s32 %s13, 2
        // Predicated region
        $region45: #{two_d_branch_forward.5} parent=43 // pred_check
          %p5179 = pneg %p152
        $region46: #{two_d_branch_forward.5} parent=43 // pred_check_branch
          %5181 = sbr.rel (%p5179) target = $region48
        $region47: #{two_d_branch_forward.5} parent=43 // pred_region
          %s5182 = sand.u32 %s137, 1
          %s5183 = scalar_lea.sflag [#allocation3], %s5182
          %s5184 = sand.u32 %s137, 1
          %s5185 = smul.addr %s5184, 256
          %s5186 = scalar_lea.vmem [#allocation2], %s5185
          %5187 = dma.done %s5183, 4096
        $region48: #{two_d_branch_forward.5} parent=43 // pred_fallthru
          _
      $region44: #{two_d_branch_forward.5} parent=5 // pred_fallthru
        _
    $region6: #{two_d_branch_forward.5} parent=1 // loop_footer
      %s17 = sadd.s32 1, %s13
    $region7: #{two_d_branch_forward.5} parent=1 // loop_footer_branch
      %12 = sbr.rel target = $region3
    $region8: #{two_d_branch_forward.5} parent=1 // loop_exit
      _
    %5188 = vsyncpa [#allocation3], 1
    %s5189 = scalar_lea.sflag [#allocation3], 1
    %5190 = vsyncpa %s5189, 1

</llo_original>
